<compile_context>
chip_gen: v7x
topology: tpu7x:2x2x1
jax: 0.10.0
libtpu: 0.0.40
codegen_flags: <defaults>
</compile_context>

<pallas_src>
import functools
import math

import numpy as np
import jax
import jax.numpy as jnp
from jax.experimental import pallas as pl
from jax.experimental.pallas import tpu as pltpu


# ----------------------------------------------------------------------------
# Per-generation VMEM budget / default tile sizes
# ----------------------------------------------------------------------------
def _vmem_budget_bytes():
    """~half of physical VMEM, clamped to [32 MiB, 96 MiB].
    v5e/v6e (128 MiB physical) -> 64 MiB scoped; v7x (64 MiB physical) -> 32 MiB."""
    cap = 128 * 1024 * 1024
    try:
        cap = int(pltpu.get_tpu_info().vmem_capacity_bytes)
    except Exception:
        try:
            kind = jax.devices()[0].device_kind.lower()
            if "v7" in kind:
                cap = 64 * 1024 * 1024
        except Exception:
            pass
    return int(min(max(cap // 2, 32 * 1024 * 1024), 96 * 1024 * 1024))


_VMEM_BUDGET = _vmem_budget_bytes()
_TM_DEFAULT = 512 if _VMEM_BUDGET >= 64 * 1024 * 1024 else 256


# ----------------------------------------------------------------------------
# Kernel helpers
# ----------------------------------------------------------------------------
def _apply_ln_f32(x, g, beta):
    mu = jnp.mean(x, axis=-1, keepdims=True)
    xc = x - mu
    var = jnp.mean(xc * xc, axis=-1, keepdims=True)
    return (xc * jax.lax.rsqrt(var + 1e-5)) * g + beta  # torch LayerNorm eps default


def _finalize(y, act, r_ref, has_res):
    if act == "gelu":  # exact (erf) GELU, matches torch.nn.GELU default
        y = 0.5 * y * (1.0 + jax.lax.erf(y * (1.0 / math.sqrt(2.0))))
    elif act == "relu":
        y = jnp.maximum(y, 0.0)
    if has_res:
        y = y + r_ref[...].astype(jnp.float32)
    return y


# ----------------------------------------------------------------------------
# Pallas kernels
# ----------------------------------------------------------------------------
def _linear_single_kernel(*refs, act, has_ln, has_res):
    # Weight-resident path: single grid axis over M, no accumulator scratch.
    idx = 0
    x_ref = refs[idx]; idx += 1
    w_ref = refs[idx]; idx += 1
    b_ref = refs[idx]; idx += 1
    g_ref = beta_ref = r_ref = None
    if has_ln:
        g_ref = refs[idx]; idx += 1
        beta_ref = refs[idx]; idx += 1
    if has_res:
        r_ref = refs[idx]; idx += 1
    o_ref = refs[idx]

    if has_ln:
        x = _apply_ln_f32(x_ref[...].astype(jnp.float32), g_ref[...], beta_ref[...])
        xb = x.astype(jnp.bfloat16)
    else:
        xb = x_ref[...].astype(jnp.bfloat16)

    y = jnp.dot(xb, w_ref[...].astype(jnp.bfloat16),
                preferred_element_type=jnp.float32) + b_ref[...].astype(jnp.float32)
    y = _finalize(y, act, r_ref, has_res)
    o_ref[...] = y.astype(o_ref.dtype)


def _linear_tiled_kernel(*refs, act, has_ln, has_res):
    # Large-weight fallback: (M, N, K)-tiled grid with f32 accumulator scratch.
    idx = 0
    x_ref = refs[idx]; idx += 1
    w_ref = refs[idx]; idx += 1
    b_ref = refs[idx]; idx += 1
    g_ref = beta_ref = r_ref = None
    if has_ln:
        g_ref = refs[idx]; idx += 1
        beta_ref = refs[idx]; idx += 1
    if has_res:
        r_ref = refs[idx]; idx += 1
    o_ref = refs[idx]; idx += 1
    acc_ref = refs[idx]

    k = pl.program_id(2)

    @pl.when(k == 0)
    def _():
        acc_ref[...] = jnp.zeros_like(acc_ref)

    if has_ln:
        x = _apply_ln_f32(x_ref[...].astype(jnp.float32), g_ref[...], beta_ref[...])
        xb = x.astype(jnp.bfloat16)
    else:
        xb = x_ref[...].astype(jnp.bfloat16)
    acc_ref[...] += jnp.dot(xb, w_ref[...].astype(jnp.bfloat16),
                            preferred_element_type=jnp.float32)

    @pl.when(k == pl.num_programs(2) - 1)
    def _():
        y = acc_ref[...] + b_ref[...].astype(jnp.float32)
        y = _finalize(y, act, r_ref, has_res)
        o_ref[...] = y.astype(o_ref.dtype)


def linear_pallas(x, w, b, act=None, ln_g=None, ln_b=None, residual=None,
                  out_dtype=jnp.float32):
    """y = [residual +] act(LN?(x) @ w + b).

    x: (M, K) f32/bf16, w: (K, N) bf16, b: (N,) f32.
    ln_g/ln_b: optional (K,) LayerNorm params fused on the input.
    residual: optional (M, N) added after activation.
    """
    M, K = x.shape
    N = w.shape[1]
    has_ln = ln_g is not None
    has_res = residual is not None

    tm = min(M, _TM_DEFAULT)
    bias = b.reshape(1, N)

    # --- Weight-resident path: full (K, N) bf16 weight held in VMEM, DMA'd once. ---
    w_bytes = 2 * K * N * 2                                  # double-buffered weight
    x_bytes = 2 * tm * K * x.dtype.itemsize
    o_bytes = 2 * tm * N * jnp.dtype(out_dtype).itemsize
    r_bytes = 2 * tm * N * residual.dtype.itemsize if has_res else 0
    tmp_bytes = 6 * tm * max(K, N) * 4                       # f32 temporaries slack
    resident = (w_bytes + x_bytes + o_bytes + r_bytes + tmp_bytes) <= _VMEM_BUDGET

    if resident:
        in_specs = [pl.BlockSpec((tm, K), lambda i: (i, 0)),
                    pl.BlockSpec((K, N), lambda i: (0, 0)),   # constant index -> DMA once
                    pl.BlockSpec((1, N), lambda i: (0, 0))]
        args = [x, w, bias]
        if has_ln:
            in_specs += [pl.BlockSpec((1, K), lambda i: (0, 0)),
                         pl.BlockSpec((1, K), lambda i: (0, 0))]
            args += [ln_g.reshape(1, K), ln_b.reshape(1, K)]
        if has_res:
            in_specs.append(pl.BlockSpec((tm, N), lambda i: (i, 0)))
            args.append(residual)
        return pl.pallas_call(
            functools.partial(_linear_single_kernel, act=act, has_ln=has_ln, has_res=has_res),
            out_shape=jax.ShapeDtypeStruct((M, N), out_dtype),
            grid=(pl.cdiv(M, tm),),
            in_specs=in_specs,
            out_specs=pl.BlockSpec((tm, N), lambda i: (i, 0)),
            compiler_params=pltpu.CompilerParams(
                dimension_semantics=("parallel",),
                vmem_limit_bytes=_VMEM_BUDGET),
        )(*args)

    # --- Large-weight fallback: tile N / K with accumulator scratch. ---
    tn = N
    for cand in (512, 256, 128):
        if N % cand == 0:
            tn = cand
            break
    if has_ln:
        tk = K                                               # LN needs the full row resident
    else:
        tk = K
        for cand in (1024, 512, 256):
            if K % cand == 0:
                tk = cand
                break

    grid = (pl.cdiv(M, tm), N // tn, K // tk)
    in_specs = [pl.BlockSpec((tm, tk), lambda i, j, k: (i, k)),
                pl.BlockSpec((tk, tn), lambda i, j, k: (k, j)),
                pl.BlockSpec((1, tn), lambda i, j, k: (0, j))]
    args = [x, w, bias]
    if has_ln:
        in_specs += [pl.BlockSpec((1, K), lambda i, j, k: (0, 0)),
                     pl.BlockSpec((1, K), lambda i, j, k: (0, 0))]
        args += [ln_g.reshape(1, K), ln_b.reshape(1, K)]
    if has_res:
        in_specs.append(pl.BlockSpec((tm, tn), lambda i, j, k: (i, j)))
        args.append(residual)
    return pl.pallas_call(
        functools.partial(_linear_tiled_kernel, act=act, has_ln=has_ln, has_res=has_res),
        out_shape=jax.ShapeDtypeStruct((M, N), out_dtype),
        grid=grid,
        in_specs=in_specs,
        out_specs=pl.BlockSpec((tm, tn), lambda i, j, k: (i, j)),
        scratch_shapes=[pltpu.VMEM((tm, tn), jnp.float32)],
        compiler_params=pltpu.CompilerParams(
            dimension_semantics=("parallel", "parallel", "arbitrary"),
            vmem_limit_bytes=_VMEM_BUDGET),
    )(*args)


def _layernorm_kernel(x_ref, g_ref, b_ref, o_ref):
    x = x_ref[...].astype(jnp.float32)
    o_ref[...] = _apply_ln_f32(x, g_ref[...], b_ref[...]).astype(o_ref.dtype)


def layernorm_pallas(x, g, b, tm=None):
    """x: (M, D), g/b: (D,). Row-tiled standalone LayerNorm (only used for z)."""
    M, D = x.shape
    tm = _TM_DEFAULT if tm is None else tm
    tm = min(M, tm)
    return pl.pallas_call(
        _layernorm_kernel,
        out_shape=jax.ShapeDtypeStruct((M, D), jnp.float32),
        grid=(pl.cdiv(M, tm),),
        in_specs=[pl.BlockSpec((tm, D), lambda i: (i, 0)),
                  pl.BlockSpec((1, D), lambda i: (0, 0)),
                  pl.BlockSpec((1, D), lambda i: (0, 0))],
        out_specs=pl.BlockSpec((tm, D), lambda i: (i, 0)),
        compiler_params=pltpu.CompilerParams(
            dimension_semantics=("parallel",),
            vmem_limit_bytes=_VMEM_BUDGET),
    )(x, g.reshape(1, D), b.reshape(1, D))


def _attention_kernel(qkv_ref, o_ref, *, num_heads, scale):
    # qkv block: (1, S, 3D) bf16. Column layout is [Q | K | V], head-major within each.
    qkv = qkv_ref[0]                         # (S, 3D)
    S, D3 = qkv.shape
    D = D3 // 3
    Dh = D // num_heads

    q = jnp.swapaxes(qkv[:, :D].reshape(S, num_heads, Dh), 0, 1)         # (H, S, Dh)
    k = jnp.swapaxes(qkv[:, D:2 * D].reshape(S, num_heads, Dh), 0, 1)    # (H, S, Dh)
    v = jnp.swapaxes(qkv[:, 2 * D:].reshape(S, num_heads, Dh), 0, 1)     # (H, S, Dh)
    # TODO(synk): when Dh (or head pairs) is 128-lane aligned, move the head split into
    # BlockSpec column slices with a head-group grid axis (better v7x 2-TC occupancy,
    # no in-VMEM relayouts); impossible for the toy head dims used here.

    qb = (q.astype(jnp.float32) * scale).astype(jnp.bfloat16)
    kb = k.astype(jnp.bfloat16)
    s = jnp.einsum("hqd,hkd->hqk", qb, kb, preferred_element_type=jnp.float32)
    s = s - jnp.max(s, axis=-1, keepdims=True)
    p = jnp.exp(s)
    denom = jnp.sum(p, axis=-1, keepdims=True)
    p = p * pl.reciprocal(denom, approx=True)

    o = jnp.einsum("hqk,hkd->hqd", p.astype(jnp.bfloat16), v.astype(jnp.bfloat16),
                   preferred_element_type=jnp.float32)
    o = jnp.swapaxes(o, 0, 1).reshape(S, D)  # heads merged -> matches torch transpose/reshape
    o_ref[0] = o.astype(o_ref.dtype)
    # TODO(synk): for long sequences (S >= ~256 on v7x, ~512 on v5e/v6e) switch to a
    # KV-tiled online-softmax (flash-style) loop so (H, S, S) scores never live in VMEM.


def attention_pallas(qkv, num_heads, out_dtype=jnp.bfloat16):
    """qkv: (B, S, 3*D) bf16 (fused QKV projection output) -> (B, S, D)."""
    B, S, D3 = qkv.shape
    D = D3 // 3
    Dh = D // num_heads
    scale = Dh ** -0.5
    return pl.pallas_call(
        functools.partial(_attention_kernel, num_heads=num_heads, scale=scale),
        out_shape=jax.ShapeDtypeStruct((B, S, D), out_dtype),
        grid=(B,),
        in_specs=[pl.BlockSpec((1, S, D3), lambda b: (b, 0, 0))],
        out_specs=pl.BlockSpec((1, S, D), lambda b: (b, 0, 0)),
        compiler_params=pltpu.CompilerParams(
            dimension_semantics=("parallel",),
            vmem_limit_bytes=_VMEM_BUDGET),
    )(qkv)


# ----------------------------------------------------------------------------
# Parameter initialization (deterministic, mirrors AEFormer.__init__ shapes)
# ----------------------------------------------------------------------------
def _get_1d_sincos(embed_dim, pos):
    omega = np.arange(embed_dim // 2, dtype=np.float64)
    omega /= embed_dim / 2.0
    omega = 1.0 / 10000 ** omega
    out = np.einsum("m,d->md", pos.reshape(-1), omega)
    return np.concatenate([np.sin(out), np.cos(out)], axis=1)


def get_2d_sincos_pos_embed(embed_dim, grid_size, cls_token=False):
    grid_h = np.arange(grid_size, dtype=np.float32)
    grid_w = np.arange(grid_size, dtype=np.float32)
    grid = np.meshgrid(grid_w, grid_h)
    grid = np.stack(grid, axis=0).reshape([2, 1, grid_size, grid_size])
    emb_h = _get_1d_sincos(embed_dim // 2, grid[0])
    emb_w = _get_1d_sincos(embed_dim // 2, grid[1])
    pos = np.concatenate([emb_h, emb_w], axis=1)
    if cls_token:
        pos = np.concatenate([np.zeros([1, embed_dim]), pos], axis=0)
    return pos.astype(np.float32)


def xavier_uniform(key, fan_in, fan_out, dtype=jnp.bfloat16):
    # Matmul weights are stored bf16 (MXU-native, halves weight HBM traffic);
    # accumulation stays f32 inside the kernels.
    a = math.sqrt(6.0 / (fan_in + fan_out))
    return jax.random.uniform(key, (fan_in, fan_out), jnp.float32, -a, a).astype(dtype)


def init_block(keys, dim, hidden):
    return dict(
        ln1_g=jnp.ones((dim,), jnp.float32), ln1_b=jnp.zeros((dim,), jnp.float32),
        qkv_w=xavier_uniform(next(keys), dim, 3 * dim), qkv_b=jnp.zeros((3 * dim,), jnp.float32),
        proj_w=xavier_uniform(next(keys), dim, dim), proj_b=jnp.zeros((dim,), jnp.float32),
        ln2_g=jnp.ones((dim,), jnp.float32), ln2_b=jnp.zeros((dim,), jnp.float32),
        fc1_w=xavier_uniform(next(keys), dim, hidden), fc1_b=jnp.zeros((hidden,), jnp.float32),
        fc2_w=xavier_uniform(next(keys), hidden, dim), fc2_b=jnp.zeros((dim,), jnp.float32),
    )


def init_params(key, cfg):
    keys = iter(jax.random.split(key, 256))
    p_sz = cfg["patch"]
    D, Dd = cfg["embed_dim"], cfg["dec_dim"]
    Cpp = cfg["in_chans"] * p_sz * p_sz
    gs = cfg["img_size"] // p_sz
    out_dim = p_sz * p_sz * cfg["in_chans"]
    hidden_e = int(D * cfg["mlp_ratio"])
    hidden_d = int(Dd * cfg["mlp_ratio"])

    params = {
        "patch_w": xavier_uniform(next(keys), Cpp, D),          # conv-as-matmul weight
        "patch_b": jnp.zeros((D,), jnp.float32),
        "cls_token": 0.02 * jax.random.normal(next(keys), (1, 1, D), jnp.float32),
        "pos_embed": jnp.asarray(get_2d_sincos_pos_embed(D, gs, cls_token=True)),        # (L+1, D)
        "dec_pos_embed": jnp.asarray(get_2d_sincos_pos_embed(Dd, gs, cls_token=True)),   # (L+1, Dd)
        "norm_g": jnp.ones((D,), jnp.float32), "norm_b": jnp.zeros((D,), jnp.float32),
        "dec_embed_w": xavier_uniform(next(keys), D, Dd), "dec_embed_b": jnp.zeros((Dd,), jnp.float32),
        "dec_norm_g": jnp.ones((Dd,), jnp.float32), "dec_norm_b": jnp.zeros((Dd,), jnp.float32),
        # decoder_pred_mlp: Linear(Dd,256) ReLU Linear(256,512) ReLU Linear(512,out_dim)
        "mlp1_w": xavier_uniform(next(keys), Dd, 256), "mlp1_b": jnp.zeros((256,), jnp.float32),
        "mlp2_w": xavier_uniform(next(keys), 256, 512), "mlp2_b": jnp.zeros((512,), jnp.float32),
        "mlp3_w": xavier_uniform(next(keys), 512, out_dim), "mlp3_b": jnp.zeros((out_dim,), jnp.float32),
    }
    params["enc_blocks"] = [init_block(keys, D, hidden_e) for _ in range(cfg["depth"])]
    params["dec_blocks"] = [init_block(keys, Dd, hidden_d) for _ in range(cfg["dec_depth"])]
    # TODO(synk): mask_token and decoder_pred (unused in forward), quantize() (buggy / train-only) omitted.
    return params


# ----------------------------------------------------------------------------
# Forward pass (glue in JAX, compute in Pallas kernels)
# ----------------------------------------------------------------------------
def patchify_for_conv(imgs, p):
    """(N, C, H, W) -> (N, L, C*p*p), flatten order matching Conv2d weight (out, C, p, p)."""
    N, C, H, W = imgs.shape
    h, w = H // p, W // p
    x = imgs.reshape(N, C, h, p, w, p)
    x = jnp.transpose(x, (0, 2, 4, 1, 3, 5))  # N, h, w, C, p, p
    return x.reshape(N, h * w, C * p * p)


def block_forward(x2, bp, num_heads, B, S):
    """x2: (B*S, D) f32 token-major slab. Timm Block: x += attn(ln1(x)); x += mlp(ln2(x))."""
    D = x2.shape[-1]
    # attention branch: LN fused into the QKV matmul, residual fused into the proj matmul.
    qkv = linear_pallas(x2, bp["qkv_w"], bp["qkv_b"],
                        ln_g=bp["ln1_g"], ln_b=bp["ln1_b"],
                        out_dtype=jnp.bfloat16)                      # (B*S, 3D) bf16
    attn = attention_pallas(qkv.reshape(B, S, 3 * D), num_heads)     # (B, S, D) bf16
    x2 = linear_pallas(attn.reshape(B * S, D), bp["proj_w"], bp["proj_b"],
                       residual=x2, out_dtype=jnp.float32)
    # MLP branch: LN fused into fc1, residual fused into fc2; hidden h kept bf16.
    h = linear_pallas(x2, bp["fc1_w"], bp["fc1_b"], act="gelu",
                      ln_g=bp["ln2_g"], ln_b=bp["ln2_b"], out_dtype=jnp.bfloat16)
    x2 = linear_pallas(h, bp["fc2_w"], bp["fc2_b"], residual=x2, out_dtype=jnp.float32)
    return x2


def aeformer_forward(params, imgs, cfg):
    N = imgs.shape[0]
    p_sz, D, Dd = cfg["patch"], cfg["embed_dim"], cfg["dec_dim"]

    # ---------------- encoder ----------------
    patches = patchify_for_conv(imgs, p_sz)                              # (N, L, C*p*p)
    L = patches.shape[1]
    x = linear_pallas(patches.reshape(N * L, -1), params["patch_w"], params["patch_b"])
    x = x.reshape(N, L, D)
    # TODO(synk): pos-embed adds could be fused into the patch/dec_embed finalize with a
    # modular index_map; kept in plain JAX for clarity (modest HBM round-trip cost).
    pos = params["pos_embed"]                                            # (L+1, D)
    x = x + pos[1:][None]
    cls = params["cls_token"] + pos[:1][None]                            # (1, 1, D)
    cls = jnp.broadcast_to(cls, (N, 1, D))
    x = jnp.concatenate([cls, x], axis=1)                                # (N, L+1, D)
    S = L + 1
    x2 = x.reshape(N * S, D)
    for bp in params["enc_blocks"]:
        x2 = block_forward(x2, bp, cfg["num_heads"], N, S)
    z2 = layernorm_pallas(x2, params["norm_g"], params["norm_b"])        # z must be materialized
    z = z2.reshape(N, S, D)

    # ---------------- decoder ----------------
    y2 = linear_pallas(z2, params["dec_embed_w"], params["dec_embed_b"])  # (N*S, Dd) f32
    y = y2.reshape(N, S, Dd) + params["dec_pos_embed"][None]
    y2 = y.reshape(N * S, Dd)
    for bp in params["dec_blocks"]:
        y2 = block_forward(y2, bp, cfg["dec_heads"], N, S)
    # decoder_norm fused into mlp1; ReLU fused into mlp1/mlp2; hidden activations bf16.
    h = linear_pallas(y2, params["mlp1_w"], params["mlp1_b"], act="relu",
                      ln_g=params["dec_norm_g"], ln_b=params["dec_norm_b"],
                      out_dtype=jnp.bfloat16)
    h = linear_pallas(h, params["mlp2_w"], params["mlp2_b"], act="relu",
                      out_dtype=jnp.bfloat16)
    y_out = linear_pallas(h, params["mlp3_w"], params["mlp3_b"])          # f32
    out_dim = y_out.shape[-1]
    y_out = y_out.reshape(N, S, out_dim)

    pred = y_out[:, 1:, :]        # drop cls position (as in the PyTorch code)
    cls_token = pred[:, 0, :]     # NOTE: matches reference: taken AFTER slicing off index 0
    return pred, z, cls_token


# ----------------------------------------------------------------------------
if __name__ == "__main__":
    # NOTE: toy dims (<128 lanes) are for correctness only; do not tune tiles against them.
    cfg = dict(
        img_size=16, patch=4, in_chans=3,
        embed_dim=32, depth=2, num_heads=4,
        dec_dim=16, dec_depth=2, dec_heads=4,
        mlp_ratio=4.0,
    )
    key = jax.random.PRNGKey(0)
    k_param, k_img = jax.random.split(key)
    params = init_params(k_param, cfg)

    imgs = jax.random.normal(k_img, (2, cfg["in_chans"], cfg["img_size"], cfg["img_size"]), jnp.float32)

    fwd = jax.jit(functools.partial(aeformer_forward, cfg=cfg))
    pred, z, cls_token = fwd(params, imgs)
    jax.block_until_ready((pred, z, cls_token))

    assert pred.shape == (2, 16, cfg["patch"] ** 2 * cfg["in_chans"])
    assert z.shape == (2, 17, cfg["embed_dim"])
    assert cls_token.shape == (2, cfg["patch"] ** 2 * cfg["in_chans"])
    print("KERNEL_OK")
</pallas_src>

<mosaic_0001>
module attributes {stable_mosaic.version = 11 : i64} {
  func.func @_linear_single_kernel(%arg0: i32, %arg1: memref<32x48xf32, #tpu.memory_space<vmem>>, %arg2: memref<48x32xbf16, #tpu.memory_space<vmem>>, %arg3: memref<1x32xf32, #tpu.memory_space<vmem>>, %arg4: memref<32x32xf32, #tpu.memory_space<vmem>>) attributes {dimension_semantics = [#tpu.dimension_semantics<parallel>], iteration_bounds = array<i64: 1>, scalar_prefetch = 0 : i64, scratch_operands = 0 : i64, tpu.core_type = #tpu.core_type<tc>, window_params = [{transform_indices = @transform_0, window_bounds = array<i64: 32, 48>}, {pipeline_mode = #tpu.pipeline_mode<synchronous>, transform_indices = @transform_1, window_bounds = array<i64: 48, 32>}, {pipeline_mode = #tpu.pipeline_mode<synchronous>, transform_indices = @transform_2, window_bounds = array<i64: 1, 32>}, {transform_indices = @transform_3, window_bounds = array<i64: 32, 32>}]} {
    %c0 = arith.constant 0 : index
    %c0_0 = arith.constant 0 : index
    %0 = vector.load %arg1[%c0, %c0_0] : memref<32x48xf32, #tpu.memory_space<vmem>>, vector<32x48xf32>
    %1 = arith.truncf %0 : vector<32x48xf32> to vector<32x48xbf16>
    %c0_1 = arith.constant 0 : index
    %c0_2 = arith.constant 0 : index
    %2 = vector.load %arg2[%c0_1, %c0_2] : memref<48x32xbf16, #tpu.memory_space<vmem>>, vector<48x32xbf16>
    %cst = arith.constant dense<0.000000e+00> : vector<32x32xf32>
    %3 = tpu.matmul %1, %2, %cst {dimension_numbers = #tpu.dot_dimension_numbers<[1], [0], [0], [1], [0, 0, 1, 1], [], []>} : vector<32x48xbf16>, vector<48x32xbf16>, vector<32x32xf32> -> vector<32x32xf32>
    %c0_3 = arith.constant 0 : index
    %c0_4 = arith.constant 0 : index
    %4 = vector.load %arg3[%c0_3, %c0_4] : memref<1x32xf32, #tpu.memory_space<vmem>>, vector<1x32xf32>
    %5 = vector.broadcast %4 : vector<1x32xf32> to vector<32x32xf32>
    %6 = arith.addf %3, %5 : vector<32x32xf32>
    %c0_5 = arith.constant 0 : index
    %c0_6 = arith.constant 0 : index
    %7 = vector.load %arg4[%c0_5, %c0_6] : memref<32x32xf32, #tpu.memory_space<vmem>>, vector<32x32xf32>
    tpu.vector_store %arg4[%c0_5, %c0_6], %6 {strides = array<i32>} : memref<32x32xf32, #tpu.memory_space<vmem>>, vector<32x32xf32>,
    return
  }
  func.func @transform_0(%arg0: i32) -> (i32, i32) {
    %c0_i32 = arith.constant 0 : i32
    %c0_i32_0 = arith.constant 0 : i32
    return %arg0, %c0_i32 : i32, i32
  }
  func.func @transform_1(%arg0: i32) -> (i32, i32) {
    %c0_i32 = arith.constant 0 : i32
    %c0_i32_0 = arith.constant 0 : i32
    %c0_i32_1 = arith.constant 0 : i32
    return %c0_i32, %c0_i32_0 : i32, i32
  }
  func.func @transform_2(%arg0: i32) -> (i32, i32) {
    %c0_i32 = arith.constant 0 : i32
    %c0_i32_0 = arith.constant 0 : i32
    %c0_i32_1 = arith.constant 0 : i32
    return %c0_i32, %c0_i32_0 : i32, i32
  }
  func.func @transform_3(%arg0: i32) -> (i32, i32) {
    %c0_i32 = arith.constant 0 : i32
    %c0_i32_0 = arith.constant 0 : i32
    return %arg0, %c0_i32 : i32, i32
  }
}

module attributes {stable_mosaic.version = 11 : i64} {
  func.func @_linear_single_kernel(%arg0: i32, %arg1: memref<34x32xf32, #tpu.memory_space<vmem>>, %arg2: memref<32x96xbf16, #tpu.memory_space<vmem>>, %arg3: memref<1x96xf32, #tpu.memory_space<vmem>>, %arg4: memref<1x32xf32, #tpu.memory_space<vmem>>, %arg5: memref<1x32xf32, #tpu.memory_space<vmem>>, %arg6: memref<34x96xbf16, #tpu.memory_space<vmem>>) attributes {dimension_semantics = [#tpu.dimension_semantics<parallel>], iteration_bounds = array<i64: 1>, scalar_prefetch = 0 : i64, scratch_operands = 0 : i64, tpu.core_type = #tpu.core_type<tc>, window_params = [{transform_indices = @transform_0, window_bounds = array<i64: 34, 32>}, {pipeline_mode = #tpu.pipeline_mode<synchronous>, transform_indices = @transform_1, window_bounds = array<i64: 32, 96>}, {pipeline_mode = #tpu.pipeline_mode<synchronous>, transform_indices = @transform_2, window_bounds = array<i64: 1, 96>}, {pipeline_mode = #tpu.pipeline_mode<synchronous>, transform_indices = @transform_3, window_bounds = array<i64: 1, 32>}, {pipeline_mode = #tpu.pipeline_mode<synchronous>, transform_indices = @transform_4, window_bounds = array<i64: 1, 32>}, {transform_indices = @transform_5, window_bounds = array<i64: 34, 96>}]} {
    %c0 = arith.constant 0 : index
    %c0_0 = arith.constant 0 : index
    %0 = vector.load %arg1[%c0, %c0_0] : memref<34x32xf32, #tpu.memory_space<vmem>>, vector<34x32xf32>
    %c0_1 = arith.constant 0 : index
    %c0_2 = arith.constant 0 : index
    %1 = vector.load %arg4[%c0_1, %c0_2] : memref<1x32xf32, #tpu.memory_space<vmem>>, vector<1x32xf32>
    %c0_3 = arith.constant 0 : index
    %c0_4 = arith.constant 0 : index
    %2 = vector.load %arg5[%c0_3, %c0_4] : memref<1x32xf32, #tpu.memory_space<vmem>>, vector<1x32xf32>
    %cst = arith.constant dense<0.000000e+00> : vector<34xf32>
    %3 = vector.multi_reduction <add>, %0, %cst [1] : vector<34x32xf32> to vector<34xf32>
    %4 = vector.shape_cast %3 : vector<34xf32> to vector<34x1xf32>
    %cst_5 = arith.constant 3.200000e+01 : f32
    %5 = vector.broadcast %cst_5 : f32 to vector<34x1xf32>
    %6 = arith.divf %4, %5 : vector<34x1xf32>
    %7 = vector.broadcast %6 : vector<34x1xf32> to vector<34x32xf32>
    %8 = arith.subf %0, %7 : vector<34x32xf32>
    %9 = arith.mulf %8, %8 : vector<34x32xf32>
    %cst_6 = arith.constant dense<0.000000e+00> : vector<34xf32>
    %10 = vector.multi_reduction <add>, %9, %cst_6 [1] : vector<34x32xf32> to vector<34xf32>
    %11 = vector.shape_cast %10 : vector<34xf32> to vector<34x1xf32>
    %cst_7 = arith.constant 3.200000e+01 : f32
    %12 = vector.broadcast %cst_7 : f32 to vector<34x1xf32>
    %13 = arith.divf %11, %12 : vector<34x1xf32>
    %cst_8 = arith.constant 9.99999974E-6 : f32
    %14 = vector.broadcast %cst_8 : f32 to vector<34x1xf32>
    %15 = arith.addf %13, %14 : vector<34x1xf32>
    %16 = math.rsqrt %15 : vector<34x1xf32>
    %17 = vector.broadcast %16 : vector<34x1xf32> to vector<34x32xf32>
    %18 = arith.mulf %8, %17 : vector<34x32xf32>
    %19 = vector.broadcast %1 : vector<1x32xf32> to vector<34x32xf32>
    %20 = arith.mulf %18, %19 : vector<34x32xf32>
    %21 = vector.broadcast %2 : vector<1x32xf32> to vector<34x32xf32>
    %22 = arith.addf %20, %21 : vector<34x32xf32>
    %23 = arith.truncf %22 : vector<34x32xf32> to vector<34x32xbf16>
    %c0_9 = arith.constant 0 : index
    %c0_10 = arith.constant 0 : index
    %24 = vector.load %arg2[%c0_9, %c0_10] : memref<32x96xbf16, #tpu.memory_space<vmem>>, vector<32x96xbf16>
    %cst_11 = arith.constant dense<0.000000e+00> : vector<34x96xf32>
    %25 = tpu.matmul %23, %24, %cst_11 {dimension_numbers = #tpu.dot_dimension_numbers<[1], [0], [0], [1], [0, 0, 1, 1], [], []>} : vector<34x32xbf16>, vector<32x96xbf16>, vector<34x96xf32> -> vector<34x96xf32>
    %c0_12 = arith.constant 0 : index
    %c0_13 = arith.constant 0 : index
    %26 = vector.load %arg3[%c0_12, %c0_13] : memref<1x96xf32, #tpu.memory_space<vmem>>, vector<1x96xf32>
    %27 = vector.broadcast %26 : vector<1x96xf32> to vector<34x96xf32>
    %28 = arith.addf %25, %27 : vector<34x96xf32>
    %29 = arith.truncf %28 : vector<34x96xf32> to vector<34x96xbf16>
    %c0_14 = arith.constant 0 : index
    %c0_15 = arith.constant 0 : index
    %30 = vector.load %arg6[%c0_14, %c0_15] : memref<34x96xbf16, #tpu.memory_space<vmem>>, vector<34x96xbf16>
    tpu.vector_store %arg6[%c0_14, %c0_15], %29 {strides = array<i32>} : memref<34x96xbf16, #tpu.memory_space<vmem>>, vector<34x96xbf16>,
    return
  }
  func.func @transform_0(%arg0: i32) -> (i32, i32) {
    %c0_i32 = arith.constant 0 : i32
    %c0_i32_0 = arith.constant 0 : i32
    return %arg0, %c0_i32 : i32, i32
  }
  func.func @transform_1(%arg0: i32) -> (i32, i32) {
    %c0_i32 = arith.constant 0 : i32
    %c0_i32_0 = arith.constant 0 : i32
    %c0_i32_1 = arith.constant 0 : i32
    return %c0_i32, %c0_i32_0 : i32, i32
  }
  func.func @transform_2(%arg0: i32) -> (i32, i32) {
    %c0_i32 = arith.constant 0 : i32
    %c0_i32_0 = arith.constant 0 : i32
    %c0_i32_1 = arith.constant 0 : i32
    return %c0_i32, %c0_i32_0 : i32, i32
  }
  func.func @transform_3(%arg0: i32) -> (i32, i32) {
    %c0_i32 = arith.constant 0 : i32
    %c0_i32_0 = arith.constant 0 : i32
    %c0_i32_1 = arith.constant 0 : i32
    return %c0_i32, %c0_i32_0 : i32, i32
  }
  func.func @transform_4(%arg0: i32) -> (i32, i32) {
    %c0_i32 = arith.constant 0 : i32
    %c0_i32_0 = arith.constant 0 : i32
    %c0_i32_1 = arith.constant 0 : i32
    return %c0_i32, %c0_i32_0 : i32, i32
  }
  func.func @transform_5(%arg0: i32) -> (i32, i32) {
    %c0_i32 = arith.constant 0 : i32
    %c0_i32_0 = arith.constant 0 : i32
    return %arg0, %c0_i32 : i32, i32
  }
}

module attributes {stable_mosaic.version = 11 : i64} {
  func.func @_attention_kernel(%arg0: i32, %arg1: memref<1x17x96xbf16, #tpu.memory_space<vmem>>, %arg2: memref<1x17x32xbf16, #tpu.memory_space<vmem>>) attributes {dimension_semantics = [#tpu.dimension_semantics<parallel>], iteration_bounds = array<i64: 2>, scalar_prefetch = 0 : i64, scratch_operands = 0 : i64, tpu.core_type = #tpu.core_type<tc>, window_params = [{transform_indices = @transform_0, window_bounds = array<i64: 1, 17, 96>}, {transform_indices = @transform_1, window_bounds = array<i64: 1, 17, 32>}]} {
    %c0 = arith.constant 0 : index
    %c0_0 = arith.constant 0 : index
    %c0_1 = arith.constant 0 : index
    %0 = vector.load %arg1[%c0, %c0_0, %c0_1] : memref<1x17x96xbf16, #tpu.memory_space<vmem>>, vector<1x17x96xbf16>
    %1 = vector.shape_cast %0 : vector<1x17x96xbf16> to vector<17x96xbf16>
    %2 = vector.extract_strided_slice %1 {offsets = [0, 0], sizes = [17, 32], strides = [1, 1]} : vector<17x96xbf16> to vector<17x32xbf16>
    %3 = vector.shape_cast %2 : vector<17x32xbf16> to vector<17x4x8xbf16>
    %4 = tpu.transpose %3, [1, 0, 2] : vector<17x4x8xbf16> -> vector<4x17x8xbf16>
    %5 = vector.extract_strided_slice %1 {offsets = [0, 32], sizes = [17, 32], strides = [1, 1]} : vector<17x96xbf16> to vector<17x32xbf16>
    %6 = vector.shape_cast %5 : vector<17x32xbf16> to vector<17x4x8xbf16>
    %7 = tpu.transpose %6, [1, 0, 2] : vector<17x4x8xbf16> -> vector<4x17x8xbf16>
    %8 = vector.extract_strided_slice %1 {offsets = [0, 64], sizes = [17, 32], strides = [1, 1]} : vector<17x96xbf16> to vector<17x32xbf16>
    %9 = vector.shape_cast %8 : vector<17x32xbf16> to vector<17x4x8xbf16>
    %10 = tpu.transpose %9, [1, 0, 2] : vector<17x4x8xbf16> -> vector<4x17x8xbf16>
    %11 = arith.extf %4 : vector<4x17x8xbf16> to vector<4x17x8xf32>
    %cst = arith.constant 0.353553385 : f32
    %12 = vector.broadcast %cst : f32 to vector<4x17x8xf32>
    %13 = arith.mulf %11, %12 : vector<4x17x8xf32>
    %14 = arith.truncf %13 : vector<4x17x8xf32> to vector<4x17x8xbf16>
    "tpu.trace_start"() <{level = 10 : i32, message = "hqd,hkd->hqk"}> : () -> ()
    %cst_2 = arith.constant dense<0.000000e+00> : vector<4x17x17xf32>
    %15 = tpu.matmul %14, %7, %cst_2 {dimension_numbers = #tpu.dot_dimension_numbers<[2], [2], [1], [1], [0, 0, 0, 1, 1, 1], [0], [0]>} : vector<4x17x8xbf16>, vector<4x17x8xbf16>, vector<4x17x17xf32> -> vector<4x17x17xf32>
    "tpu.trace_stop"() : () -> ()
    %cst_3 = arith.constant dense<0xFF800000> : vector<4x17xf32>
    %16 = vector.multi_reduction <maximumf>, %15, %cst_3 [2] : vector<4x17x17xf32> to vector<4x17xf32>
    %17 = vector.shape_cast %16 : vector<4x17xf32> to vector<4x17x1xf32>
    %18 = vector.broadcast %17 : vector<4x17x1xf32> to vector<4x17x17xf32>
    %19 = arith.subf %15, %18 : vector<4x17x17xf32>
    %20 = math.exp %19 : vector<4x17x17xf32>
    %cst_4 = arith.constant dense<0.000000e+00> : vector<4x17xf32>
    %21 = vector.multi_reduction <add>, %20, %cst_4 [2] : vector<4x17x17xf32> to vector<4x17xf32>
    %22 = vector.shape_cast %21 : vector<4x17xf32> to vector<4x17x1xf32>
    %23 = tpu.reciprocal %22 {approx = true} : vector<4x17x1xf32> -> vector<4x17x1xf32>
    %24 = vector.broadcast %23 : vector<4x17x1xf32> to vector<4x17x17xf32>
    %25 = arith.mulf %20, %24 : vector<4x17x17xf32>
    %26 = arith.truncf %25 : vector<4x17x17xf32> to vector<4x17x17xbf16>
    "tpu.trace_start"() <{level = 10 : i32, message = "hqk,hkd->hqd"}> : () -> ()
    %cst_5 = arith.constant dense<0.000000e+00> : vector<4x17x8xf32>
    %27 = tpu.matmul %26, %10, %cst_5 {dimension_numbers = #tpu.dot_dimension_numbers<[2], [1], [1], [2], [0, 0, 0, 1, 1, 2], [0], [0]>} : vector<4x17x17xbf16>, vector<4x17x8xbf16>, vector<4x17x8xf32> -> vector<4x17x8xf32>
    "tpu.trace_stop"() : () -> ()
    %28 = tpu.transpose %27, [1, 0, 2] : vector<4x17x8xf32> -> vector<17x4x8xf32>
    %29 = vector.shape_cast %28 : vector<17x4x8xf32> to vector<17x32xf32>
    %30 = arith.truncf %29 : vector<17x32xf32> to vector<17x32xbf16>
    %c0_6 = arith.constant 0 : index
    %c0_7 = arith.constant 0 : index
    %c0_8 = arith.constant 0 : index
    %31 = vector.load %arg2[%c0_6, %c0_7, %c0_8] : memref<1x17x32xbf16, #tpu.memory_space<vmem>>, vector<1x17x32xbf16>
    %32 = vector.shape_cast %31 : vector<1x17x32xbf16> to vector<17x32xbf16>
    %33 = vector.shape_cast %30 : vector<17x32xbf16> to vector<1x17x32xbf16>
    tpu.vector_store %arg2[%c0_6, %c0_7, %c0_8], %33 {strides = array<i32>} : memref<1x17x32xbf16, #tpu.memory_space<vmem>>, vector<1x17x32xbf16>,
    return
  }
  func.func @transform_0(%arg0: i32) -> (i32, i32, i32) {
    %c0_i32 = arith.constant 0 : i32
    %c0_i32_0 = arith.constant 0 : i32
    %c0_i32_1 = arith.constant 0 : i32
    return %arg0, %c0_i32, %c0_i32_0 : i32, i32, i32
  }
  func.func @transform_1(%arg0: i32) -> (i32, i32, i32) {
    %c0_i32 = arith.constant 0 : i32
    %c0_i32_0 = arith.constant 0 : i32
    %c0_i32_1 = arith.constant 0 : i32
    return %arg0, %c0_i32, %c0_i32_0 : i32, i32, i32
  }
}

module attributes {stable_mosaic.version = 11 : i64} {
  func.func @_linear_single_kernel(%arg0: i32, %arg1: memref<34x32xbf16, #tpu.memory_space<vmem>>, %arg2: memref<32x32xbf16, #tpu.memory_space<vmem>>, %arg3: memref<1x32xf32, #tpu.memory_space<vmem>>, %arg4: memref<34x32xf32, #tpu.memory_space<vmem>>, %arg5: memref<34x32xf32, #tpu.memory_space<vmem>>) attributes {dimension_semantics = [#tpu.dimension_semantics<parallel>], iteration_bounds = array<i64: 1>, scalar_prefetch = 0 : i64, scratch_operands = 0 : i64, tpu.core_type = #tpu.core_type<tc>, window_params = [{transform_indices = @transform_0, window_bounds = array<i64: 34, 32>}, {pipeline_mode = #tpu.pipeline_mode<synchronous>, transform_indices = @transform_1, window_bounds = array<i64: 32, 32>}, {pipeline_mode = #tpu.pipeline_mode<synchronous>, transform_indices = @transform_2, window_bounds = array<i64: 1, 32>}, {transform_indices = @transform_3, window_bounds = array<i64: 34, 32>}, {transform_indices = @transform_4, window_bounds = array<i64: 34, 32>}]} {
    %c0 = arith.constant 0 : index
    %c0_0 = arith.constant 0 : index
    %0 = vector.load %arg1[%c0, %c0_0] : memref<34x32xbf16, #tpu.memory_space<vmem>>, vector<34x32xbf16>
    %c0_1 = arith.constant 0 : index
    %c0_2 = arith.constant 0 : index
    %1 = vector.load %arg2[%c0_1, %c0_2] : memref<32x32xbf16, #tpu.memory_space<vmem>>, vector<32x32xbf16>
    %cst = arith.constant dense<0.000000e+00> : vector<34x32xf32>
    %2 = tpu.matmul %0, %1, %cst {dimension_numbers = #tpu.dot_dimension_numbers<[1], [0], [0], [1], [0, 0, 1, 1], [], []>} : vector<34x32xbf16>, vector<32x32xbf16>, vector<34x32xf32> -> vector<34x32xf32>
    %c0_3 = arith.constant 0 : index
    %c0_4 = arith.constant 0 : index
    %3 = vector.load %arg3[%c0_3, %c0_4] : memref<1x32xf32, #tpu.memory_space<vmem>>, vector<1x32xf32>
    %4 = vector.broadcast %3 : vector<1x32xf32> to vector<34x32xf32>
    %5 = arith.addf %2, %4 : vector<34x32xf32>
    %c0_5 = arith.constant 0 : index
    %c0_6 = arith.constant 0 : index
    %6 = vector.load %arg4[%c0_5, %c0_6] : memref<34x32xf32, #tpu.memory_space<vmem>>, vector<34x32xf32>
    %7 = arith.addf %5, %6 : vector<34x32xf32>
    %c0_7 = arith.constant 0 : index
    %c0_8 = arith.constant 0 : index
    %8 = vector.load %arg5[%c0_7, %c0_8] : memref<34x32xf32, #tpu.memory_space<vmem>>, vector<34x32xf32>
    tpu.vector_store %arg5[%c0_7, %c0_8], %7 {strides = array<i32>} : memref<34x32xf32, #tpu.memory_space<vmem>>, vector<34x32xf32>,
    return
  }
  func.func @transform_0(%arg0: i32) -> (i32, i32) {
    %c0_i32 = arith.constant 0 : i32
    %c0_i32_0 = arith.constant 0 : i32
    return %arg0, %c0_i32 : i32, i32
  }
  func.func @transform_1(%arg0: i32) -> (i32, i32) {
    %c0_i32 = arith.constant 0 : i32
    %c0_i32_0 = arith.constant 0 : i32
    %c0_i32_1 = arith.constant 0 : i32
    return %c0_i32, %c0_i32_0 : i32, i32
  }
  func.func @transform_2(%arg0: i32) -> (i32, i32) {
    %c0_i32 = arith.constant 0 : i32
    %c0_i32_0 = arith.constant 0 : i32
    %c0_i32_1 = arith.constant 0 : i32
    return %c0_i32, %c0_i32_0 : i32, i32
  }
  func.func @transform_3(%arg0: i32) -> (i32, i32) {
    %c0_i32 = arith.constant 0 : i32
    %c0_i32_0 = arith.constant 0 : i32
    return %arg0, %c0_i32 : i32, i32
  }
  func.func @transform_4(%arg0: i32) -> (i32, i32) {
    %c0_i32 = arith.constant 0 : i32
    %c0_i32_0 = arith.constant 0 : i32
    return %arg0, %c0_i32 : i32, i32
  }
}

module attributes {stable_mosaic.version = 11 : i64} {
  func.func @_linear_single_kernel(%arg0: i32, %arg1: memref<34x32xf32, #tpu.memory_space<vmem>>, %arg2: memref<32x128xbf16, #tpu.memory_space<vmem>>, %arg3: memref<1x128xf32, #tpu.memory_space<vmem>>, %arg4: memref<1x32xf32, #tpu.memory_space<vmem>>, %arg5: memref<1x32xf32, #tpu.memory_space<vmem>>, %arg6: memref<34x128xbf16, #tpu.memory_space<vmem>>) attributes {dimension_semantics = [#tpu.dimension_semantics<parallel>], iteration_bounds = array<i64: 1>, scalar_prefetch = 0 : i64, scratch_operands = 0 : i64, tpu.core_type = #tpu.core_type<tc>, window_params = [{transform_indices = @transform_0, window_bounds = array<i64: 34, 32>}, {pipeline_mode = #tpu.pipeline_mode<synchronous>, transform_indices = @transform_1, window_bounds = array<i64: 32, 128>}, {pipeline_mode = #tpu.pipeline_mode<synchronous>, transform_indices = @transform_2, window_bounds = array<i64: 1, 128>}, {pipeline_mode = #tpu.pipeline_mode<synchronous>, transform_indices = @transform_3, window_bounds = array<i64: 1, 32>}, {pipeline_mode = #tpu.pipeline_mode<synchronous>, transform_indices = @transform_4, window_bounds = array<i64: 1, 32>}, {transform_indices = @transform_5, window_bounds = array<i64: 34, 128>}]} {
    %c0 = arith.constant 0 : index
    %c0_0 = arith.constant 0 : index
    %0 = vector.load %arg1[%c0, %c0_0] : memref<34x32xf32, #tpu.memory_space<vmem>>, vector<34x32xf32>
    %c0_1 = arith.constant 0 : index
    %c0_2 = arith.constant 0 : index
    %1 = vector.load %arg4[%c0_1, %c0_2] : memref<1x32xf32, #tpu.memory_space<vmem>>, vector<1x32xf32>
    %c0_3 = arith.constant 0 : index
    %c0_4 = arith.constant 0 : index
    %2 = vector.load %arg5[%c0_3, %c0_4] : memref<1x32xf32, #tpu.memory_space<vmem>>, vector<1x32xf32>
    %cst = arith.constant dense<0.000000e+00> : vector<34xf32>
    %3 = vector.multi_reduction <add>, %0, %cst [1] : vector<34x32xf32> to vector<34xf32>
    %4 = vector.shape_cast %3 : vector<34xf32> to vector<34x1xf32>
    %cst_5 = arith.constant 3.200000e+01 : f32
    %5 = vector.broadcast %cst_5 : f32 to vector<34x1xf32>
    %6 = arith.divf %4, %5 : vector<34x1xf32>
    %7 = vector.broadcast %6 : vector<34x1xf32> to vector<34x32xf32>
    %8 = arith.subf %0, %7 : vector<34x32xf32>
    %9 = arith.mulf %8, %8 : vector<34x32xf32>
    %cst_6 = arith.constant dense<0.000000e+00> : vector<34xf32>
    %10 = vector.multi_reduction <add>, %9, %cst_6 [1] : vector<34x32xf32> to vector<34xf32>
    %11 = vector.shape_cast %10 : vector<34xf32> to vector<34x1xf32>
    %cst_7 = arith.constant 3.200000e+01 : f32
    %12 = vector.broadcast %cst_7 : f32 to vector<34x1xf32>
    %13 = arith.divf %11, %12 : vector<34x1xf32>
    %cst_8 = arith.constant 9.99999974E-6 : f32
    %14 = vector.broadcast %cst_8 : f32 to vector<34x1xf32>
    %15 = arith.addf %13, %14 : vector<34x1xf32>
    %16 = math.rsqrt %15 : vector<34x1xf32>
    %17 = vector.broadcast %16 : vector<34x1xf32> to vector<34x32xf32>
    %18 = arith.mulf %8, %17 : vector<34x32xf32>
    %19 = vector.broadcast %1 : vector<1x32xf32> to vector<34x32xf32>
    %20 = arith.mulf %18, %19 : vector<34x32xf32>
    %21 = vector.broadcast %2 : vector<1x32xf32> to vector<34x32xf32>
    %22 = arith.addf %20, %21 : vector<34x32xf32>
    %23 = arith.truncf %22 : vector<34x32xf32> to vector<34x32xbf16>
    %c0_9 = arith.constant 0 : index
    %c0_10 = arith.constant 0 : index
    %24 = vector.load %arg2[%c0_9, %c0_10] : memref<32x128xbf16, #tpu.memory_space<vmem>>, vector<32x128xbf16>
    %cst_11 = arith.constant dense<0.000000e+00> : vector<34x128xf32>
    %25 = tpu.matmul %23, %24, %cst_11 {dimension_numbers = #tpu.dot_dimension_numbers<[1], [0], [0], [1], [0, 0, 1, 1], [], []>} : vector<34x32xbf16>, vector<32x128xbf16>, vector<34x128xf32> -> vector<34x128xf32>
    %c0_12 = arith.constant 0 : index
    %c0_13 = arith.constant 0 : index
    %26 = vector.load %arg3[%c0_12, %c0_13] : memref<1x128xf32, #tpu.memory_space<vmem>>, vector<1x128xf32>
    %27 = vector.broadcast %26 : vector<1x128xf32> to vector<34x128xf32>
    %28 = arith.addf %25, %27 : vector<34x128xf32>
    %cst_14 = arith.constant 5.000000e-01 : f32
    %29 = vector.broadcast %cst_14 : f32 to vector<34x128xf32>
    %30 = arith.mulf %29, %28 : vector<34x128xf32>
    %cst_15 = arith.constant 0.707106769 : f32
    %31 = vector.broadcast %cst_15 : f32 to vector<34x128xf32>
    %32 = arith.mulf %28, %31 : vector<34x128xf32>
    %33 = math.erf %32 : vector<34x128xf32>
    %cst_16 = arith.constant 1.000000e+00 : f32
    %34 = vector.broadcast %cst_16 : f32 to vector<34x128xf32>
    %35 = arith.addf %34, %33 : vector<34x128xf32>
    %36 = arith.mulf %30, %35 : vector<34x128xf32>
    %37 = arith.truncf %36 : vector<34x128xf32> to vector<34x128xbf16>
    %c0_17 = arith.constant 0 : index
    %c0_18 = arith.constant 0 : index
    %38 = vector.load %arg6[%c0_17, %c0_18] : memref<34x128xbf16, #tpu.memory_space<vmem>>, vector<34x128xbf16>
    tpu.vector_store %arg6[%c0_17, %c0_18], %37 {strides = array<i32>} : memref<34x128xbf16, #tpu.memory_space<vmem>>, vector<34x128xbf16>,
    return
  }
  func.func @transform_0(%arg0: i32) -> (i32, i32) {
    %c0_i32 = arith.constant 0 : i32
    %c0_i32_0 = arith.constant 0 : i32
    return %arg0, %c0_i32 : i32, i32
  }
  func.func @transform_1(%arg0: i32) -> (i32, i32) {
    %c0_i32 = arith.constant 0 : i32
    %c0_i32_0 = arith.constant 0 : i32
    %c0_i32_1 = arith.constant 0 : i32
    return %c0_i32, %c0_i32_0 : i32, i32
  }
  func.func @transform_2(%arg0: i32) -> (i32, i32) {
    %c0_i32 = arith.constant 0 : i32
    %c0_i32_0 = arith.constant 0 : i32
    %c0_i32_1 = arith.constant 0 : i32
    return %c0_i32, %c0_i32_0 : i32, i32
  }
  func.func @transform_3(%arg0: i32) -> (i32, i32) {
    %c0_i32 = arith.constant 0 : i32
    %c0_i32_0 = arith.constant 0 : i32
    %c0_i32_1 = arith.constant 0 : i32
    return %c0_i32, %c0_i32_0 : i32, i32
  }
  func.func @transform_4(%arg0: i32) -> (i32, i32) {
    %c0_i32 = arith.constant 0 : i32
    %c0_i32_0 = arith.constant 0 : i32
    %c0_i32_1 = arith.constant 0 : i32
    return %c0_i32, %c0_i32_0 : i32, i32
  }
  func.func @transform_5(%arg0: i32) -> (i32, i32) {
    %c0_i32 = arith.constant 0 : i32
    %c0_i32_0 = arith.constant 0 : i32
    return %arg0, %c0_i32 : i32, i32
  }
}

module attributes {stable_mosaic.version = 11 : i64} {
  func.func @_linear_single_kernel(%arg0: i32, %arg1: memref<34x128xbf16, #tpu.memory_space<vmem>>, %arg2: memref<128x32xbf16, #tpu.memory_space<vmem>>, %arg3: memref<1x32xf32, #tpu.memory_space<vmem>>, %arg4: memref<34x32xf32, #tpu.memory_space<vmem>>, %arg5: memref<34x32xf32, #tpu.memory_space<vmem>>) attributes {dimension_semantics = [#tpu.dimension_semantics<parallel>], iteration_bounds = array<i64: 1>, scalar_prefetch = 0 : i64, scratch_operands = 0 : i64, tpu.core_type = #tpu.core_type<tc>, window_params = [{transform_indices = @transform_0, window_bounds = array<i64: 34, 128>}, {pipeline_mode = #tpu.pipeline_mode<synchronous>, transform_indices = @transform_1, window_bounds = array<i64: 128, 32>}, {pipeline_mode = #tpu.pipeline_mode<synchronous>, transform_indices = @transform_2, window_bounds = array<i64: 1, 32>}, {transform_indices = @transform_3, window_bounds = array<i64: 34, 32>}, {transform_indices = @transform_4, window_bounds = array<i64: 34, 32>}]} {
    %c0 = arith.constant 0 : index
    %c0_0 = arith.constant 0 : index
    %0 = vector.load %arg1[%c0, %c0_0] : memref<34x128xbf16, #tpu.memory_space<vmem>>, vector<34x128xbf16>
    %c0_1 = arith.constant 0 : index
    %c0_2 = arith.constant 0 : index
    %1 = vector.load %arg2[%c0_1, %c0_2] : memref<128x32xbf16, #tpu.memory_space<vmem>>, vector<128x32xbf16>
    %cst = arith.constant dense<0.000000e+00> : vector<34x32xf32>
    %2 = tpu.matmul %0, %1, %cst {dimension_numbers = #tpu.dot_dimension_numbers<[1], [0], [0], [1], [0, 0, 1, 1], [], []>} : vector<34x128xbf16>, vector<128x32xbf16>, vector<34x32xf32> -> vector<34x32xf32>
    %c0_3 = arith.constant 0 : index
    %c0_4 = arith.constant 0 : index
    %3 = vector.load %arg3[%c0_3, %c0_4] : memref<1x32xf32, #tpu.memory_space<vmem>>, vector<1x32xf32>
    %4 = vector.broadcast %3 : vector<1x32xf32> to vector<34x32xf32>
    %5 = arith.addf %2, %4 : vector<34x32xf32>
    %c0_5 = arith.constant 0 : index
    %c0_6 = arith.constant 0 : index
    %6 = vector.load %arg4[%c0_5, %c0_6] : memref<34x32xf32, #tpu.memory_space<vmem>>, vector<34x32xf32>
    %7 = arith.addf %5, %6 : vector<34x32xf32>
    %c0_7 = arith.constant 0 : index
    %c0_8 = arith.constant 0 : index
    %8 = vector.load %arg5[%c0_7, %c0_8] : memref<34x32xf32, #tpu.memory_space<vmem>>, vector<34x32xf32>
    tpu.vector_store %arg5[%c0_7, %c0_8], %7 {strides = array<i32>} : memref<34x32xf32, #tpu.memory_space<vmem>>, vector<34x32xf32>,
    return
  }
  func.func @transform_0(%arg0: i32) -> (i32, i32) {
    %c0_i32 = arith.constant 0 : i32
    %c0_i32_0 = arith.constant 0 : i32
    return %arg0, %c0_i32 : i32, i32
  }
  func.func @transform_1(%arg0: i32) -> (i32, i32) {
    %c0_i32 = arith.constant 0 : i32
    %c0_i32_0 = arith.constant 0 : i32
    %c0_i32_1 = arith.constant 0 : i32
    return %c0_i32, %c0_i32_0 : i32, i32
  }
  func.func @transform_2(%arg0: i32) -> (i32, i32) {
    %c0_i32 = arith.constant 0 : i32
    %c0_i32_0 = arith.constant 0 : i32
    %c0_i32_1 = arith.constant 0 : i32
    return %c0_i32, %c0_i32_0 : i32, i32
  }
  func.func @transform_3(%arg0: i32) -> (i32, i32) {
    %c0_i32 = arith.constant 0 : i32
    %c0_i32_0 = arith.constant 0 : i32
    return %arg0, %c0_i32 : i32, i32
  }
  func.func @transform_4(%arg0: i32) -> (i32, i32) {
    %c0_i32 = arith.constant 0 : i32
    %c0_i32_0 = arith.constant 0 : i32
    return %arg0, %c0_i32 : i32, i32
  }
}

module attributes {stable_mosaic.version = 11 : i64} {
  func.func @_layernorm_kernel(%arg0: i32, %arg1: memref<34x32xf32, #tpu.memory_space<vmem>>, %arg2: memref<1x32xf32, #tpu.memory_space<vmem>>, %arg3: memref<1x32xf32, #tpu.memory_space<vmem>>, %arg4: memref<34x32xf32, #tpu.memory_space<vmem>>) attributes {dimension_semantics = [#tpu.dimension_semantics<parallel>], iteration_bounds = array<i64: 1>, scalar_prefetch = 0 : i64, scratch_operands = 0 : i64, tpu.core_type = #tpu.core_type<tc>, window_params = [{transform_indices = @transform_0, window_bounds = array<i64: 34, 32>}, {pipeline_mode = #tpu.pipeline_mode<synchronous>, transform_indices = @transform_1, window_bounds = array<i64: 1, 32>}, {pipeline_mode = #tpu.pipeline_mode<synchronous>, transform_indices = @transform_2, window_bounds = array<i64: 1, 32>}, {transform_indices = @transform_3, window_bounds = array<i64: 34, 32>}]} {
    %c0 = arith.constant 0 : index
    %c0_0 = arith.constant 0 : index
    %0 = vector.load %arg1[%c0, %c0_0] : memref<34x32xf32, #tpu.memory_space<vmem>>, vector<34x32xf32>
    %c0_1 = arith.constant 0 : index
    %c0_2 = arith.constant 0 : index
    %1 = vector.load %arg2[%c0_1, %c0_2] : memref<1x32xf32, #tpu.memory_space<vmem>>, vector<1x32xf32>
    %c0_3 = arith.constant 0 : index
    %c0_4 = arith.constant 0 : index
    %2 = vector.load %arg3[%c0_3, %c0_4] : memref<1x32xf32, #tpu.memory_space<vmem>>, vector<1x32xf32>
    %cst = arith.constant dense<0.000000e+00> : vector<34xf32>
    %3 = vector.multi_reduction <add>, %0, %cst [1] : vector<34x32xf32> to vector<34xf32>
    %4 = vector.shape_cast %3 : vector<34xf32> to vector<34x1xf32>
    %cst_5 = arith.constant 3.200000e+01 : f32
    %5 = vector.broadcast %cst_5 : f32 to vector<34x1xf32>
    %6 = arith.divf %4, %5 : vector<34x1xf32>
    %7 = vector.broadcast %6 : vector<34x1xf32> to vector<34x32xf32>
    %8 = arith.subf %0, %7 : vector<34x32xf32>
    %9 = arith.mulf %8, %8 : vector<34x32xf32>
    %cst_6 = arith.constant dense<0.000000e+00> : vector<34xf32>
    %10 = vector.multi_reduction <add>, %9, %cst_6 [1] : vector<34x32xf32> to vector<34xf32>
    %11 = vector.shape_cast %10 : vector<34xf32> to vector<34x1xf32>
    %cst_7 = arith.constant 3.200000e+01 : f32
    %12 = vector.broadcast %cst_7 : f32 to vector<34x1xf32>
    %13 = arith.divf %11, %12 : vector<34x1xf32>
    %cst_8 = arith.constant 9.99999974E-6 : f32
    %14 = vector.broadcast %cst_8 : f32 to vector<34x1xf32>
    %15 = arith.addf %13, %14 : vector<34x1xf32>
    %16 = math.rsqrt %15 : vector<34x1xf32>
    %17 = vector.broadcast %16 : vector<34x1xf32> to vector<34x32xf32>
    %18 = arith.mulf %8, %17 : vector<34x32xf32>
    %19 = vector.broadcast %1 : vector<1x32xf32> to vector<34x32xf32>
    %20 = arith.mulf %18, %19 : vector<34x32xf32>
    %21 = vector.broadcast %2 : vector<1x32xf32> to vector<34x32xf32>
    %22 = arith.addf %20, %21 : vector<34x32xf32>
    %c0_9 = arith.constant 0 : index
    %c0_10 = arith.constant 0 : index
    %23 = vector.load %arg4[%c0_9, %c0_10] : memref<34x32xf32, #tpu.memory_space<vmem>>, vector<34x32xf32>
    tpu.vector_store %arg4[%c0_9, %c0_10], %22 {strides = array<i32>} : memref<34x32xf32, #tpu.memory_space<vmem>>, vector<34x32xf32>,
    return
  }
  func.func @transform_0(%arg0: i32) -> (i32, i32) {
    %c0_i32 = arith.constant 0 : i32
    %c0_i32_0 = arith.constant 0 : i32
    return %arg0, %c0_i32 : i32, i32
  }
  func.func @transform_1(%arg0: i32) -> (i32, i32) {
    %c0_i32 = arith.constant 0 : i32
    %c0_i32_0 = arith.constant 0 : i32
    %c0_i32_1 = arith.constant 0 : i32
    return %c0_i32, %c0_i32_0 : i32, i32
  }
  func.func @transform_2(%arg0: i32) -> (i32, i32) {
    %c0_i32 = arith.constant 0 : i32
    %c0_i32_0 = arith.constant 0 : i32
    %c0_i32_1 = arith.constant 0 : i32
    return %c0_i32, %c0_i32_0 : i32, i32
  }
  func.func @transform_3(%arg0: i32) -> (i32, i32) {
    %c0_i32 = arith.constant 0 : i32
    %c0_i32_0 = arith.constant 0 : i32
    return %arg0, %c0_i32 : i32, i32
  }
}

module attributes {stable_mosaic.version = 11 : i64} {
  func.func @_linear_single_kernel(%arg0: i32, %arg1: memref<34x32xf32, #tpu.memory_space<vmem>>, %arg2: memref<32x16xbf16, #tpu.memory_space<vmem>>, %arg3: memref<1x16xf32, #tpu.memory_space<vmem>>, %arg4: memref<34x16xf32, #tpu.memory_space<vmem>>) attributes {dimension_semantics = [#tpu.dimension_semantics<parallel>], iteration_bounds = array<i64: 1>, scalar_prefetch = 0 : i64, scratch_operands = 0 : i64, tpu.core_type = #tpu.core_type<tc>, window_params = [{transform_indices = @transform_0, window_bounds = array<i64: 34, 32>}, {pipeline_mode = #tpu.pipeline_mode<synchronous>, transform_indices = @transform_1, window_bounds = array<i64: 32, 16>}, {pipeline_mode = #tpu.pipeline_mode<synchronous>, transform_indices = @transform_2, window_bounds = array<i64: 1, 16>}, {transform_indices = @transform_3, window_bounds = array<i64: 34, 16>}]} {
    %c0 = arith.constant 0 : index
    %c0_0 = arith.constant 0 : index
    %0 = vector.load %arg1[%c0, %c0_0] : memref<34x32xf32, #tpu.memory_space<vmem>>, vector<34x32xf32>
    %1 = arith.truncf %0 : vector<34x32xf32> to vector<34x32xbf16>
    %c0_1 = arith.constant 0 : index
    %c0_2 = arith.constant 0 : index
    %2 = vector.load %arg2[%c0_1, %c0_2] : memref<32x16xbf16, #tpu.memory_space<vmem>>, vector<32x16xbf16>
    %cst = arith.constant dense<0.000000e+00> : vector<34x16xf32>
    %3 = tpu.matmul %1, %2, %cst {dimension_numbers = #tpu.dot_dimension_numbers<[1], [0], [0], [1], [0, 0, 1, 1], [], []>} : vector<34x32xbf16>, vector<32x16xbf16>, vector<34x16xf32> -> vector<34x16xf32>
    %c0_3 = arith.constant 0 : index
    %c0_4 = arith.constant 0 : index
    %4 = vector.load %arg3[%c0_3, %c0_4] : memref<1x16xf32, #tpu.memory_space<vmem>>, vector<1x16xf32>
    %5 = vector.broadcast %4 : vector<1x16xf32> to vector<34x16xf32>
    %6 = arith.addf %3, %5 : vector<34x16xf32>
    %c0_5 = arith.constant 0 : index
    %c0_6 = arith.constant 0 : index
    %7 = vector.load %arg4[%c0_5, %c0_6] : memref<34x16xf32, #tpu.memory_space<vmem>>, vector<34x16xf32>
    tpu.vector_store %arg4[%c0_5, %c0_6], %6 {strides = array<i32>} : memref<34x16xf32, #tpu.memory_space<vmem>>, vector<34x16xf32>,
    return
  }
  func.func @transform_0(%arg0: i32) -> (i32, i32) {
    %c0_i32 = arith.constant 0 : i32
    %c0_i32_0 = arith.constant 0 : i32
    return %arg0, %c0_i32 : i32, i32
  }
  func.func @transform_1(%arg0: i32) -> (i32, i32) {
    %c0_i32 = arith.constant 0 : i32
    %c0_i32_0 = arith.constant 0 : i32
    %c0_i32_1 = arith.constant 0 : i32
    return %c0_i32, %c0_i32_0 : i32, i32
  }
  func.func @transform_2(%arg0: i32) -> (i32, i32) {
    %c0_i32 = arith.constant 0 : i32
    %c0_i32_0 = arith.constant 0 : i32
    %c0_i32_1 = arith.constant 0 : i32
    return %c0_i32, %c0_i32_0 : i32, i32
  }
  func.func @transform_3(%arg0: i32) -> (i32, i32) {
    %c0_i32 = arith.constant 0 : i32
    %c0_i32_0 = arith.constant 0 : i32
    return %arg0, %c0_i32 : i32, i32
  }
}

module attributes {stable_mosaic.version = 11 : i64} {
  func.func @_linear_single_kernel(%arg0: i32, %arg1: memref<34x16xf32, #tpu.memory_space<vmem>>, %arg2: memref<16x48xbf16, #tpu.memory_space<vmem>>, %arg3: memref<1x48xf32, #tpu.memory_space<vmem>>, %arg4: memref<1x16xf32, #tpu.memory_space<vmem>>, %arg5: memref<1x16xf32, #tpu.memory_space<vmem>>, %arg6: memref<34x48xbf16, #tpu.memory_space<vmem>>) attributes {dimension_semantics = [#tpu.dimension_semantics<parallel>], iteration_bounds = array<i64: 1>, scalar_prefetch = 0 : i64, scratch_operands = 0 : i64, tpu.core_type = #tpu.core_type<tc>, window_params = [{transform_indices = @transform_0, window_bounds = array<i64: 34, 16>}, {pipeline_mode = #tpu.pipeline_mode<synchronous>, transform_indices = @transform_1, window_bounds = array<i64: 16, 48>}, {pipeline_mode = #tpu.pipeline_mode<synchronous>, transform_indices = @transform_2, window_bounds = array<i64: 1, 48>}, {pipeline_mode = #tpu.pipeline_mode<synchronous>, transform_indices = @transform_3, window_bounds = array<i64: 1, 16>}, {pipeline_mode = #tpu.pipeline_mode<synchronous>, transform_indices = @transform_4, window_bounds = array<i64: 1, 16>}, {transform_indices = @transform_5, window_bounds = array<i64: 34, 48>}]} {
    %c0 = arith.constant 0 : index
    %c0_0 = arith.constant 0 : index
    %0 = vector.load %arg1[%c0, %c0_0] : memref<34x16xf32, #tpu.memory_space<vmem>>, vector<34x16xf32>
    %c0_1 = arith.constant 0 : index
    %c0_2 = arith.constant 0 : index
    %1 = vector.load %arg4[%c0_1, %c0_2] : memref<1x16xf32, #tpu.memory_space<vmem>>, vector<1x16xf32>
    %c0_3 = arith.constant 0 : index
    %c0_4 = arith.constant 0 : index
    %2 = vector.load %arg5[%c0_3, %c0_4] : memref<1x16xf32, #tpu.memory_space<vmem>>, vector<1x16xf32>
    %cst = arith.constant dense<0.000000e+00> : vector<34xf32>
    %3 = vector.multi_reduction <add>, %0, %cst [1] : vector<34x16xf32> to vector<34xf32>
    %4 = vector.shape_cast %3 : vector<34xf32> to vector<34x1xf32>
    %cst_5 = arith.constant 1.600000e+01 : f32
    %5 = vector.broadcast %cst_5 : f32 to vector<34x1xf32>
    %6 = arith.divf %4, %5 : vector<34x1xf32>
    %7 = vector.broadcast %6 : vector<34x1xf32> to vector<34x16xf32>
    %8 = arith.subf %0, %7 : vector<34x16xf32>
    %9 = arith.mulf %8, %8 : vector<34x16xf32>
    %cst_6 = arith.constant dense<0.000000e+00> : vector<34xf32>
    %10 = vector.multi_reduction <add>, %9, %cst_6 [1] : vector<34x16xf32> to vector<34xf32>
    %11 = vector.shape_cast %10 : vector<34xf32> to vector<34x1xf32>
    %cst_7 = arith.constant 1.600000e+01 : f32
    %12 = vector.broadcast %cst_7 : f32 to vector<34x1xf32>
    %13 = arith.divf %11, %12 : vector<34x1xf32>
    %cst_8 = arith.constant 9.99999974E-6 : f32
    %14 = vector.broadcast %cst_8 : f32 to vector<34x1xf32>
    %15 = arith.addf %13, %14 : vector<34x1xf32>
    %16 = math.rsqrt %15 : vector<34x1xf32>
    %17 = vector.broadcast %16 : vector<34x1xf32> to vector<34x16xf32>
    %18 = arith.mulf %8, %17 : vector<34x16xf32>
    %19 = vector.broadcast %1 : vector<1x16xf32> to vector<34x16xf32>
    %20 = arith.mulf %18, %19 : vector<34x16xf32>
    %21 = vector.broadcast %2 : vector<1x16xf32> to vector<34x16xf32>
    %22 = arith.addf %20, %21 : vector<34x16xf32>
    %23 = arith.truncf %22 : vector<34x16xf32> to vector<34x16xbf16>
    %c0_9 = arith.constant 0 : index
    %c0_10 = arith.constant 0 : index
    %24 = vector.load %arg2[%c0_9, %c0_10] : memref<16x48xbf16, #tpu.memory_space<vmem>>, vector<16x48xbf16>
    %cst_11 = arith.constant dense<0.000000e+00> : vector<34x48xf32>
    %25 = tpu.matmul %23, %24, %cst_11 {dimension_numbers = #tpu.dot_dimension_numbers<[1], [0], [0], [1], [0, 0, 1, 1], [], []>} : vector<34x16xbf16>, vector<16x48xbf16>, vector<34x48xf32> -> vector<34x48xf32>
    %c0_12 = arith.constant 0 : index
    %c0_13 = arith.constant 0 : index
    %26 = vector.load %arg3[%c0_12, %c0_13] : memref<1x48xf32, #tpu.memory_space<vmem>>, vector<1x48xf32>
    %27 = vector.broadcast %26 : vector<1x48xf32> to vector<34x48xf32>
    %28 = arith.addf %25, %27 : vector<34x48xf32>
    %29 = arith.truncf %28 : vector<34x48xf32> to vector<34x48xbf16>
    %c0_14 = arith.constant 0 : index
    %c0_15 = arith.constant 0 : index
    %30 = vector.load %arg6[%c0_14, %c0_15] : memref<34x48xbf16, #tpu.memory_space<vmem>>, vector<34x48xbf16>
    tpu.vector_store %arg6[%c0_14, %c0_15], %29 {strides = array<i32>} : memref<34x48xbf16, #tpu.memory_space<vmem>>, vector<34x48xbf16>,
    return
  }
  func.func @transform_0(%arg0: i32) -> (i32, i32) {
    %c0_i32 = arith.constant 0 : i32
    %c0_i32_0 = arith.constant 0 : i32
    return %arg0, %c0_i32 : i32, i32
  }
  func.func @transform_1(%arg0: i32) -> (i32, i32) {
    %c0_i32 = arith.constant 0 : i32
    %c0_i32_0 = arith.constant 0 : i32
    %c0_i32_1 = arith.constant 0 : i32
    return %c0_i32, %c0_i32_0 : i32, i32
  }
  func.func @transform_2(%arg0: i32) -> (i32, i32) {
    %c0_i32 = arith.constant 0 : i32
    %c0_i32_0 = arith.constant 0 : i32
    %c0_i32_1 = arith.constant 0 : i32
    return %c0_i32, %c0_i32_0 : i32, i32
  }
  func.func @transform_3(%arg0: i32) -> (i32, i32) {
    %c0_i32 = arith.constant 0 : i32
    %c0_i32_0 = arith.constant 0 : i32
    %c0_i32_1 = arith.constant 0 : i32
    return %c0_i32, %c0_i32_0 : i32, i32
  }
  func.func @transform_4(%arg0: i32) -> (i32, i32) {
    %c0_i32 = arith.constant 0 : i32
    %c0_i32_0 = arith.constant 0 : i32
    %c0_i32_1 = arith.constant 0 : i32
    return %c0_i32, %c0_i32_0 : i32, i32
  }
  func.func @transform_5(%arg0: i32) -> (i32, i32) {
    %c0_i32 = arith.constant 0 : i32
    %c0_i32_0 = arith.constant 0 : i32
    return %arg0, %c0_i32 : i32, i32
  }
}

module attributes {stable_mosaic.version = 11 : i64} {
  func.func @_attention_kernel(%arg0: i32, %arg1: memref<1x17x48xbf16, #tpu.memory_space<vmem>>, %arg2: memref<1x17x16xbf16, #tpu.memory_space<vmem>>) attributes {dimension_semantics = [#tpu.dimension_semantics<parallel>], iteration_bounds = array<i64: 2>, scalar_prefetch = 0 : i64, scratch_operands = 0 : i64, tpu.core_type = #tpu.core_type<tc>, window_params = [{transform_indices = @transform_0, window_bounds = array<i64: 1, 17, 48>}, {transform_indices = @transform_1, window_bounds = array<i64: 1, 17, 16>}]} {
    %c0 = arith.constant 0 : index
    %c0_0 = arith.constant 0 : index
    %c0_1 = arith.constant 0 : index
    %0 = vector.load %arg1[%c0, %c0_0, %c0_1] : memref<1x17x48xbf16, #tpu.memory_space<vmem>>, vector<1x17x48xbf16>
    %1 = vector.shape_cast %0 : vector<1x17x48xbf16> to vector<17x48xbf16>
    %2 = vector.extract_strided_slice %1 {offsets = [0, 0], sizes = [17, 16], strides = [1, 1]} : vector<17x48xbf16> to vector<17x16xbf16>
    %3 = vector.shape_cast %2 : vector<17x16xbf16> to vector<17x4x4xbf16>
    %4 = tpu.transpose %3, [1, 0, 2] : vector<17x4x4xbf16> -> vector<4x17x4xbf16>
    %5 = vector.extract_strided_slice %1 {offsets = [0, 16], sizes = [17, 16], strides = [1, 1]} : vector<17x48xbf16> to vector<17x16xbf16>
    %6 = vector.shape_cast %5 : vector<17x16xbf16> to vector<17x4x4xbf16>
    %7 = tpu.transpose %6, [1, 0, 2] : vector<17x4x4xbf16> -> vector<4x17x4xbf16>
    %8 = vector.extract_strided_slice %1 {offsets = [0, 32], sizes = [17, 16], strides = [1, 1]} : vector<17x48xbf16> to vector<17x16xbf16>
    %9 = vector.shape_cast %8 : vector<17x16xbf16> to vector<17x4x4xbf16>
    %10 = tpu.transpose %9, [1, 0, 2] : vector<17x4x4xbf16> -> vector<4x17x4xbf16>
    %11 = arith.extf %4 : vector<4x17x4xbf16> to vector<4x17x4xf32>
    %cst = arith.constant 5.000000e-01 : f32
    %12 = vector.broadcast %cst : f32 to vector<4x17x4xf32>
    %13 = arith.mulf %11, %12 : vector<4x17x4xf32>
    %14 = arith.truncf %13 : vector<4x17x4xf32> to vector<4x17x4xbf16>
    "tpu.trace_start"() <{level = 10 : i32, message = "hqd,hkd->hqk"}> : () -> ()
    %cst_2 = arith.constant dense<0.000000e+00> : vector<4x17x17xf32>
    %15 = tpu.matmul %14, %7, %cst_2 {dimension_numbers = #tpu.dot_dimension_numbers<[2], [2], [1], [1], [0, 0, 0, 1, 1, 1], [0], [0]>} : vector<4x17x4xbf16>, vector<4x17x4xbf16>, vector<4x17x17xf32> -> vector<4x17x17xf32>
    "tpu.trace_stop"() : () -> ()
    %cst_3 = arith.constant dense<0xFF800000> : vector<4x17xf32>
    %16 = vector.multi_reduction <maximumf>, %15, %cst_3 [2] : vector<4x17x17xf32> to vector<4x17xf32>
    %17 = vector.shape_cast %16 : vector<4x17xf32> to vector<4x17x1xf32>
    %18 = vector.broadcast %17 : vector<4x17x1xf32> to vector<4x17x17xf32>
    %19 = arith.subf %15, %18 : vector<4x17x17xf32>
    %20 = math.exp %19 : vector<4x17x17xf32>
    %cst_4 = arith.constant dense<0.000000e+00> : vector<4x17xf32>
    %21 = vector.multi_reduction <add>, %20, %cst_4 [2] : vector<4x17x17xf32> to vector<4x17xf32>
    %22 = vector.shape_cast %21 : vector<4x17xf32> to vector<4x17x1xf32>
    %23 = tpu.reciprocal %22 {approx = true} : vector<4x17x1xf32> -> vector<4x17x1xf32>
    %24 = vector.broadcast %23 : vector<4x17x1xf32> to vector<4x17x17xf32>
    %25 = arith.mulf %20, %24 : vector<4x17x17xf32>
    %26 = arith.truncf %25 : vector<4x17x17xf32> to vector<4x17x17xbf16>
    "tpu.trace_start"() <{level = 10 : i32, message = "hqk,hkd->hqd"}> : () -> ()
    %cst_5 = arith.constant dense<0.000000e+00> : vector<4x17x4xf32>
    %27 = tpu.matmul %26, %10, %cst_5 {dimension_numbers = #tpu.dot_dimension_numbers<[2], [1], [1], [2], [0, 0, 0, 1, 1, 2], [0], [0]>} : vector<4x17x17xbf16>, vector<4x17x4xbf16>, vector<4x17x4xf32> -> vector<4x17x4xf32>
    "tpu.trace_stop"() : () -> ()
    %28 = tpu.transpose %27, [1, 0, 2] : vector<4x17x4xf32> -> vector<17x4x4xf32>
    %29 = vector.shape_cast %28 : vector<17x4x4xf32> to vector<17x16xf32>
    %30 = arith.truncf %29 : vector<17x16xf32> to vector<17x16xbf16>
    %c0_6 = arith.constant 0 : index
    %c0_7 = arith.constant 0 : index
    %c0_8 = arith.constant 0 : index
    %31 = vector.load %arg2[%c0_6, %c0_7, %c0_8] : memref<1x17x16xbf16, #tpu.memory_space<vmem>>, vector<1x17x16xbf16>
    %32 = vector.shape_cast %31 : vector<1x17x16xbf16> to vector<17x16xbf16>
    %33 = vector.shape_cast %30 : vector<17x16xbf16> to vector<1x17x16xbf16>
    tpu.vector_store %arg2[%c0_6, %c0_7, %c0_8], %33 {strides = array<i32>} : memref<1x17x16xbf16, #tpu.memory_space<vmem>>, vector<1x17x16xbf16>,
    return
  }
  func.func @transform_0(%arg0: i32) -> (i32, i32, i32) {
    %c0_i32 = arith.constant 0 : i32
    %c0_i32_0 = arith.constant 0 : i32
    %c0_i32_1 = arith.constant 0 : i32
    return %arg0, %c0_i32, %c0_i32_0 : i32, i32, i32
  }
  func.func @transform_1(%arg0: i32) -> (i32, i32, i32) {
    %c0_i32 = arith.constant 0 : i32
    %c0_i32_0 = arith.constant 0 : i32
    %c0_i32_1 = arith.constant 0 : i32
    return %arg0, %c0_i32, %c0_i32_0 : i32, i32, i32
  }
}

module attributes {stable_mosaic.version = 11 : i64} {
  func.func @_linear_single_kernel(%arg0: i32, %arg1: memref<34x16xf32, #tpu.memory_space<vmem>>, %arg2: memref<16x64xbf16, #tpu.memory_space<vmem>>, %arg3: memref<1x64xf32, #tpu.memory_space<vmem>>, %arg4: memref<1x16xf32, #tpu.memory_space<vmem>>, %arg5: memref<1x16xf32, #tpu.memory_space<vmem>>, %arg6: memref<34x64xbf16, #tpu.memory_space<vmem>>) attributes {dimension_semantics = [#tpu.dimension_semantics<parallel>], iteration_bounds = array<i64: 1>, scalar_prefetch = 0 : i64, scratch_operands = 0 : i64, tpu.core_type = #tpu.core_type<tc>, window_params = [{transform_indices = @transform_0, window_bounds = array<i64: 34, 16>}, {pipeline_mode = #tpu.pipeline_mode<synchronous>, transform_indices = @transform_1, window_bounds = array<i64: 16, 64>}, {pipeline_mode = #tpu.pipeline_mode<synchronous>, transform_indices = @transform_2, window_bounds = array<i64: 1, 64>}, {pipeline_mode = #tpu.pipeline_mode<synchronous>, transform_indices = @transform_3, window_bounds = array<i64: 1, 16>}, {pipeline_mode = #tpu.pipeline_mode<synchronous>, transform_indices = @transform_4, window_bounds = array<i64: 1, 16>}, {transform_indices = @transform_5, window_bounds = array<i64: 34, 64>}]} {
    %c0 = arith.constant 0 : index
    %c0_0 = arith.constant 0 : index
    %0 = vector.load %arg1[%c0, %c0_0] : memref<34x16xf32, #tpu.memory_space<vmem>>, vector<34x16xf32>
    %c0_1 = arith.constant 0 : index
    %c0_2 = arith.constant 0 : index
    %1 = vector.load %arg4[%c0_1, %c0_2] : memref<1x16xf32, #tpu.memory_space<vmem>>, vector<1x16xf32>
    %c0_3 = arith.constant 0 : index
    %c0_4 = arith.constant 0 : index
    %2 = vector.load %arg5[%c0_3, %c0_4] : memref<1x16xf32, #tpu.memory_space<vmem>>, vector<1x16xf32>
    %cst = arith.constant dense<0.000000e+00> : vector<34xf32>
    %3 = vector.multi_reduction <add>, %0, %cst [1] : vector<34x16xf32> to vector<34xf32>
    %4 = vector.shape_cast %3 : vector<34xf32> to vector<34x1xf32>
    %cst_5 = arith.constant 1.600000e+01 : f32
    %5 = vector.broadcast %cst_5 : f32 to vector<34x1xf32>
    %6 = arith.divf %4, %5 : vector<34x1xf32>
    %7 = vector.broadcast %6 : vector<34x1xf32> to vector<34x16xf32>
    %8 = arith.subf %0, %7 : vector<34x16xf32>
    %9 = arith.mulf %8, %8 : vector<34x16xf32>
    %cst_6 = arith.constant dense<0.000000e+00> : vector<34xf32>
    %10 = vector.multi_reduction <add>, %9, %cst_6 [1] : vector<34x16xf32> to vector<34xf32>
    %11 = vector.shape_cast %10 : vector<34xf32> to vector<34x1xf32>
    %cst_7 = arith.constant 1.600000e+01 : f32
    %12 = vector.broadcast %cst_7 : f32 to vector<34x1xf32>
    %13 = arith.divf %11, %12 : vector<34x1xf32>
    %cst_8 = arith.constant 9.99999974E-6 : f32
    %14 = vector.broadcast %cst_8 : f32 to vector<34x1xf32>
    %15 = arith.addf %13, %14 : vector<34x1xf32>
    %16 = math.rsqrt %15 : vector<34x1xf32>
    %17 = vector.broadcast %16 : vector<34x1xf32> to vector<34x16xf32>
    %18 = arith.mulf %8, %17 : vector<34x16xf32>
    %19 = vector.broadcast %1 : vector<1x16xf32> to vector<34x16xf32>
    %20 = arith.mulf %18, %19 : vector<34x16xf32>
    %21 = vector.broadcast %2 : vector<1x16xf32> to vector<34x16xf32>
    %22 = arith.addf %20, %21 : vector<34x16xf32>
    %23 = arith.truncf %22 : vector<34x16xf32> to vector<34x16xbf16>
    %c0_9 = arith.constant 0 : index
    %c0_10 = arith.constant 0 : index
    %24 = vector.load %arg2[%c0_9, %c0_10] : memref<16x64xbf16, #tpu.memory_space<vmem>>, vector<16x64xbf16>
    %cst_11 = arith.constant dense<0.000000e+00> : vector<34x64xf32>
    %25 = tpu.matmul %23, %24, %cst_11 {dimension_numbers = #tpu.dot_dimension_numbers<[1], [0], [0], [1], [0, 0, 1, 1], [], []>} : vector<34x16xbf16>, vector<16x64xbf16>, vector<34x64xf32> -> vector<34x64xf32>
    %c0_12 = arith.constant 0 : index
    %c0_13 = arith.constant 0 : index
    %26 = vector.load %arg3[%c0_12, %c0_13] : memref<1x64xf32, #tpu.memory_space<vmem>>, vector<1x64xf32>
    %27 = vector.broadcast %26 : vector<1x64xf32> to vector<34x64xf32>
    %28 = arith.addf %25, %27 : vector<34x64xf32>
    %cst_14 = arith.constant 5.000000e-01 : f32
    %29 = vector.broadcast %cst_14 : f32 to vector<34x64xf32>
    %30 = arith.mulf %29, %28 : vector<34x64xf32>
    %cst_15 = arith.constant 0.707106769 : f32
    %31 = vector.broadcast %cst_15 : f32 to vector<34x64xf32>
    %32 = arith.mulf %28, %31 : vector<34x64xf32>
    %33 = math.erf %32 : vector<34x64xf32>
    %cst_16 = arith.constant 1.000000e+00 : f32
    %34 = vector.broadcast %cst_16 : f32 to vector<34x64xf32>
    %35 = arith.addf %34, %33 : vector<34x64xf32>
    %36 = arith.mulf %30, %35 : vector<34x64xf32>
    %37 = arith.truncf %36 : vector<34x64xf32> to vector<34x64xbf16>
    %c0_17 = arith.constant 0 : index
    %c0_18 = arith.constant 0 : index
    %38 = vector.load %arg6[%c0_17, %c0_18] : memref<34x64xbf16, #tpu.memory_space<vmem>>, vector<34x64xbf16>
    tpu.vector_store %arg6[%c0_17, %c0_18], %37 {strides = array<i32>} : memref<34x64xbf16, #tpu.memory_space<vmem>>, vector<34x64xbf16>,
    return
  }
  func.func @transform_0(%arg0: i32) -> (i32, i32) {
    %c0_i32 = arith.constant 0 : i32
    %c0_i32_0 = arith.constant 0 : i32
    return %arg0, %c0_i32 : i32, i32
  }
  func.func @transform_1(%arg0: i32) -> (i32, i32) {
    %c0_i32 = arith.constant 0 : i32
    %c0_i32_0 = arith.constant 0 : i32
    %c0_i32_1 = arith.constant 0 : i32
    return %c0_i32, %c0_i32_0 : i32, i32
  }
  func.func @transform_2(%arg0: i32) -> (i32, i32) {
    %c0_i32 = arith.constant 0 : i32
    %c0_i32_0 = arith.constant 0 : i32
    %c0_i32_1 = arith.constant 0 : i32
    return %c0_i32, %c0_i32_0 : i32, i32
  }
  func.func @transform_3(%arg0: i32) -> (i32, i32) {
    %c0_i32 = arith.constant 0 : i32
    %c0_i32_0 = arith.constant 0 : i32
    %c0_i32_1 = arith.constant 0 : i32
    return %c0_i32, %c0_i32_0 : i32, i32
  }
  func.func @transform_4(%arg0: i32) -> (i32, i32) {
    %c0_i32 = arith.constant 0 : i32
    %c0_i32_0 = arith.constant 0 : i32
    %c0_i32_1 = arith.constant 0 : i32
    return %c0_i32, %c0_i32_0 : i32, i32
  }
  func.func @transform_5(%arg0: i32) -> (i32, i32) {
    %c0_i32 = arith.constant 0 : i32
    %c0_i32_0 = arith.constant 0 : i32
    return %arg0, %c0_i32 : i32, i32
  }
}

module attributes {stable_mosaic.version = 11 : i64} {
  func.func @_linear_single_kernel(%arg0: i32, %arg1: memref<34x16xbf16, #tpu.memory_space<vmem>>, %arg2: memref<16x16xbf16, #tpu.memory_space<vmem>>, %arg3: memref<1x16xf32, #tpu.memory_space<vmem>>, %arg4: memref<34x16xf32, #tpu.memory_space<vmem>>, %arg5: memref<34x16xf32, #tpu.memory_space<vmem>>) attributes {dimension_semantics = [#tpu.dimension_semantics<parallel>], iteration_bounds = array<i64: 1>, scalar_prefetch = 0 : i64, scratch_operands = 0 : i64, tpu.core_type = #tpu.core_type<tc>, window_params = [{transform_indices = @transform_0, window_bounds = array<i64: 34, 16>}, {pipeline_mode = #tpu.pipeline_mode<synchronous>, transform_indices = @transform_1, window_bounds = array<i64: 16, 16>}, {pipeline_mode = #tpu.pipeline_mode<synchronous>, transform_indices = @transform_2, window_bounds = array<i64: 1, 16>}, {transform_indices = @transform_3, window_bounds = array<i64: 34, 16>}, {transform_indices = @transform_4, window_bounds = array<i64: 34, 16>}]} {
    %c0 = arith.constant 0 : index
    %c0_0 = arith.constant 0 : index
    %0 = vector.load %arg1[%c0, %c0_0] : memref<34x16xbf16, #tpu.memory_space<vmem>>, vector<34x16xbf16>
    %c0_1 = arith.constant 0 : index
    %c0_2 = arith.constant 0 : index
    %1 = vector.load %arg2[%c0_1, %c0_2] : memref<16x16xbf16, #tpu.memory_space<vmem>>, vector<16x16xbf16>
    %cst = arith.constant dense<0.000000e+00> : vector<34x16xf32>
    %2 = tpu.matmul %0, %1, %cst {dimension_numbers = #tpu.dot_dimension_numbers<[1], [0], [0], [1], [0, 0, 1, 1], [], []>} : vector<34x16xbf16>, vector<16x16xbf16>, vector<34x16xf32> -> vector<34x16xf32>
    %c0_3 = arith.constant 0 : index
    %c0_4 = arith.constant 0 : index
    %3 = vector.load %arg3[%c0_3, %c0_4] : memref<1x16xf32, #tpu.memory_space<vmem>>, vector<1x16xf32>
    %4 = vector.broadcast %3 : vector<1x16xf32> to vector<34x16xf32>
    %5 = arith.addf %2, %4 : vector<34x16xf32>
    %c0_5 = arith.constant 0 : index
    %c0_6 = arith.constant 0 : index
    %6 = vector.load %arg4[%c0_5, %c0_6] : memref<34x16xf32, #tpu.memory_space<vmem>>, vector<34x16xf32>
    %7 = arith.addf %5, %6 : vector<34x16xf32>
    %c0_7 = arith.constant 0 : index
    %c0_8 = arith.constant 0 : index
    %8 = vector.load %arg5[%c0_7, %c0_8] : memref<34x16xf32, #tpu.memory_space<vmem>>, vector<34x16xf32>
    tpu.vector_store %arg5[%c0_7, %c0_8], %7 {strides = array<i32>} : memref<34x16xf32, #tpu.memory_space<vmem>>, vector<34x16xf32>,
    return
  }
  func.func @transform_0(%arg0: i32) -> (i32, i32) {
    %c0_i32 = arith.constant 0 : i32
    %c0_i32_0 = arith.constant 0 : i32
    return %arg0, %c0_i32 : i32, i32
  }
  func.func @transform_1(%arg0: i32) -> (i32, i32) {
    %c0_i32 = arith.constant 0 : i32
    %c0_i32_0 = arith.constant 0 : i32
    %c0_i32_1 = arith.constant 0 : i32
    return %c0_i32, %c0_i32_0 : i32, i32
  }
  func.func @transform_2(%arg0: i32) -> (i32, i32) {
    %c0_i32 = arith.constant 0 : i32
    %c0_i32_0 = arith.constant 0 : i32
    %c0_i32_1 = arith.constant 0 : i32
    return %c0_i32, %c0_i32_0 : i32, i32
  }
  func.func @transform_3(%arg0: i32) -> (i32, i32) {
    %c0_i32 = arith.constant 0 : i32
    %c0_i32_0 = arith.constant 0 : i32
    return %arg0, %c0_i32 : i32, i32
  }
  func.func @transform_4(%arg0: i32) -> (i32, i32) {
    %c0_i32 = arith.constant 0 : i32
    %c0_i32_0 = arith.constant 0 : i32
    return %arg0, %c0_i32 : i32, i32
  }
}

module attributes {stable_mosaic.version = 11 : i64} {
  func.func @_linear_single_kernel(%arg0: i32, %arg1: memref<34x64xbf16, #tpu.memory_space<vmem>>, %arg2: memref<64x16xbf16, #tpu.memory_space<vmem>>, %arg3: memref<1x16xf32, #tpu.memory_space<vmem>>, %arg4: memref<34x16xf32, #tpu.memory_space<vmem>>, %arg5: memref<34x16xf32, #tpu.memory_space<vmem>>) attributes {dimension_semantics = [#tpu.dimension_semantics<parallel>], iteration_bounds = array<i64: 1>, scalar_prefetch = 0 : i64, scratch_operands = 0 : i64, tpu.core_type = #tpu.core_type<tc>, window_params = [{transform_indices = @transform_0, window_bounds = array<i64: 34, 64>}, {pipeline_mode = #tpu.pipeline_mode<synchronous>, transform_indices = @transform_1, window_bounds = array<i64: 64, 16>}, {pipeline_mode = #tpu.pipeline_mode<synchronous>, transform_indices = @transform_2, window_bounds = array<i64: 1, 16>}, {transform_indices = @transform_3, window_bounds = array<i64: 34, 16>}, {transform_indices = @transform_4, window_bounds = array<i64: 34, 16>}]} {
    %c0 = arith.constant 0 : index
    %c0_0 = arith.constant 0 : index
    %0 = vector.load %arg1[%c0, %c0_0] : memref<34x64xbf16, #tpu.memory_space<vmem>>, vector<34x64xbf16>
    %c0_1 = arith.constant 0 : index
    %c0_2 = arith.constant 0 : index
    %1 = vector.load %arg2[%c0_1, %c0_2] : memref<64x16xbf16, #tpu.memory_space<vmem>>, vector<64x16xbf16>
    %cst = arith.constant dense<0.000000e+00> : vector<34x16xf32>
    %2 = tpu.matmul %0, %1, %cst {dimension_numbers = #tpu.dot_dimension_numbers<[1], [0], [0], [1], [0, 0, 1, 1], [], []>} : vector<34x64xbf16>, vector<64x16xbf16>, vector<34x16xf32> -> vector<34x16xf32>
    %c0_3 = arith.constant 0 : index
    %c0_4 = arith.constant 0 : index
    %3 = vector.load %arg3[%c0_3, %c0_4] : memref<1x16xf32, #tpu.memory_space<vmem>>, vector<1x16xf32>
    %4 = vector.broadcast %3 : vector<1x16xf32> to vector<34x16xf32>
    %5 = arith.addf %2, %4 : vector<34x16xf32>
    %c0_5 = arith.constant 0 : index
    %c0_6 = arith.constant 0 : index
    %6 = vector.load %arg4[%c0_5, %c0_6] : memref<34x16xf32, #tpu.memory_space<vmem>>, vector<34x16xf32>
    %7 = arith.addf %5, %6 : vector<34x16xf32>
    %c0_7 = arith.constant 0 : index
    %c0_8 = arith.constant 0 : index
    %8 = vector.load %arg5[%c0_7, %c0_8] : memref<34x16xf32, #tpu.memory_space<vmem>>, vector<34x16xf32>
    tpu.vector_store %arg5[%c0_7, %c0_8], %7 {strides = array<i32>} : memref<34x16xf32, #tpu.memory_space<vmem>>, vector<34x16xf32>,
    return
  }
  func.func @transform_0(%arg0: i32) -> (i32, i32) {
    %c0_i32 = arith.constant 0 : i32
    %c0_i32_0 = arith.constant 0 : i32
    return %arg0, %c0_i32 : i32, i32
  }
  func.func @transform_1(%arg0: i32) -> (i32, i32) {
    %c0_i32 = arith.constant 0 : i32
    %c0_i32_0 = arith.constant 0 : i32
    %c0_i32_1 = arith.constant 0 : i32
    return %c0_i32, %c0_i32_0 : i32, i32
  }
  func.func @transform_2(%arg0: i32) -> (i32, i32) {
    %c0_i32 = arith.constant 0 : i32
    %c0_i32_0 = arith.constant 0 : i32
    %c0_i32_1 = arith.constant 0 : i32
    return %c0_i32, %c0_i32_0 : i32, i32
  }
  func.func @transform_3(%arg0: i32) -> (i32, i32) {
    %c0_i32 = arith.constant 0 : i32
    %c0_i32_0 = arith.constant 0 : i32
    return %arg0, %c0_i32 : i32, i32
  }
  func.func @transform_4(%arg0: i32) -> (i32, i32) {
    %c0_i32 = arith.constant 0 : i32
    %c0_i32_0 = arith.constant 0 : i32
    return %arg0, %c0_i32 : i32, i32
  }
}

module attributes {stable_mosaic.version = 11 : i64} {
  func.func @_linear_single_kernel(%arg0: i32, %arg1: memref<34x16xf32, #tpu.memory_space<vmem>>, %arg2: memref<16x256xbf16, #tpu.memory_space<vmem>>, %arg3: memref<1x256xf32, #tpu.memory_space<vmem>>, %arg4: memref<1x16xf32, #tpu.memory_space<vmem>>, %arg5: memref<1x16xf32, #tpu.memory_space<vmem>>, %arg6: memref<34x256xbf16, #tpu.memory_space<vmem>>) attributes {dimension_semantics = [#tpu.dimension_semantics<parallel>], iteration_bounds = array<i64: 1>, scalar_prefetch = 0 : i64, scratch_operands = 0 : i64, tpu.core_type = #tpu.core_type<tc>, window_params = [{transform_indices = @transform_0, window_bounds = array<i64: 34, 16>}, {pipeline_mode = #tpu.pipeline_mode<synchronous>, transform_indices = @transform_1, window_bounds = array<i64: 16, 256>}, {pipeline_mode = #tpu.pipeline_mode<synchronous>, transform_indices = @transform_2, window_bounds = array<i64: 1, 256>}, {pipeline_mode = #tpu.pipeline_mode<synchronous>, transform_indices = @transform_3, window_bounds = array<i64: 1, 16>}, {pipeline_mode = #tpu.pipeline_mode<synchronous>, transform_indices = @transform_4, window_bounds = array<i64: 1, 16>}, {transform_indices = @transform_5, window_bounds = array<i64: 34, 256>}]} {
    %c0 = arith.constant 0 : index
    %c0_0 = arith.constant 0 : index
    %0 = vector.load %arg1[%c0, %c0_0] : memref<34x16xf32, #tpu.memory_space<vmem>>, vector<34x16xf32>
    %c0_1 = arith.constant 0 : index
    %c0_2 = arith.constant 0 : index
    %1 = vector.load %arg4[%c0_1, %c0_2] : memref<1x16xf32, #tpu.memory_space<vmem>>, vector<1x16xf32>
    %c0_3 = arith.constant 0 : index
    %c0_4 = arith.constant 0 : index
    %2 = vector.load %arg5[%c0_3, %c0_4] : memref<1x16xf32, #tpu.memory_space<vmem>>, vector<1x16xf32>
    %cst = arith.constant dense<0.000000e+00> : vector<34xf32>
    %3 = vector.multi_reduction <add>, %0, %cst [1] : vector<34x16xf32> to vector<34xf32>
    %4 = vector.shape_cast %3 : vector<34xf32> to vector<34x1xf32>
    %cst_5 = arith.constant 1.600000e+01 : f32
    %5 = vector.broadcast %cst_5 : f32 to vector<34x1xf32>
    %6 = arith.divf %4, %5 : vector<34x1xf32>
    %7 = vector.broadcast %6 : vector<34x1xf32> to vector<34x16xf32>
    %8 = arith.subf %0, %7 : vector<34x16xf32>
    %9 = arith.mulf %8, %8 : vector<34x16xf32>
    %cst_6 = arith.constant dense<0.000000e+00> : vector<34xf32>
    %10 = vector.multi_reduction <add>, %9, %cst_6 [1] : vector<34x16xf32> to vector<34xf32>
    %11 = vector.shape_cast %10 : vector<34xf32> to vector<34x1xf32>
    %cst_7 = arith.constant 1.600000e+01 : f32
    %12 = vector.broadcast %cst_7 : f32 to vector<34x1xf32>
    %13 = arith.divf %11, %12 : vector<34x1xf32>
    %cst_8 = arith.constant 9.99999974E-6 : f32
    %14 = vector.broadcast %cst_8 : f32 to vector<34x1xf32>
    %15 = arith.addf %13, %14 : vector<34x1xf32>
    %16 = math.rsqrt %15 : vector<34x1xf32>
    %17 = vector.broadcast %16 : vector<34x1xf32> to vector<34x16xf32>
    %18 = arith.mulf %8, %17 : vector<34x16xf32>
    %19 = vector.broadcast %1 : vector<1x16xf32> to vector<34x16xf32>
    %20 = arith.mulf %18, %19 : vector<34x16xf32>
    %21 = vector.broadcast %2 : vector<1x16xf32> to vector<34x16xf32>
    %22 = arith.addf %20, %21 : vector<34x16xf32>
    %23 = arith.truncf %22 : vector<34x16xf32> to vector<34x16xbf16>
    %c0_9 = arith.constant 0 : index
    %c0_10 = arith.constant 0 : index
    %24 = vector.load %arg2[%c0_9, %c0_10] : memref<16x256xbf16, #tpu.memory_space<vmem>>, vector<16x256xbf16>
    %cst_11 = arith.constant dense<0.000000e+00> : vector<34x256xf32>
    %25 = tpu.matmul %23, %24, %cst_11 {dimension_numbers = #tpu.dot_dimension_numbers<[1], [0], [0], [1], [0, 0, 1, 1], [], []>} : vector<34x16xbf16>, vector<16x256xbf16>, vector<34x256xf32> -> vector<34x256xf32>
    %c0_12 = arith.constant 0 : index
    %c0_13 = arith.constant 0 : index
    %26 = vector.load %arg3[%c0_12, %c0_13] : memref<1x256xf32, #tpu.memory_space<vmem>>, vector<1x256xf32>
    %27 = vector.broadcast %26 : vector<1x256xf32> to vector<34x256xf32>
    %28 = arith.addf %25, %27 : vector<34x256xf32>
    %cst_14 = arith.constant 0.000000e+00 : f32
    %29 = vector.broadcast %cst_14 : f32 to vector<34x256xf32>
    %30 = arith.maximumf %28, %29 : vector<34x256xf32>
    %31 = arith.truncf %30 : vector<34x256xf32> to vector<34x256xbf16>
    %c0_15 = arith.constant 0 : index
    %c0_16 = arith.constant 0 : index
    %32 = vector.load %arg6[%c0_15, %c0_16] : memref<34x256xbf16, #tpu.memory_space<vmem>>, vector<34x256xbf16>
    tpu.vector_store %arg6[%c0_15, %c0_16], %31 {strides = array<i32>} : memref<34x256xbf16, #tpu.memory_space<vmem>>, vector<34x256xbf16>,
    return
  }
  func.func @transform_0(%arg0: i32) -> (i32, i32) {
    %c0_i32 = arith.constant 0 : i32
    %c0_i32_0 = arith.constant 0 : i32
    return %arg0, %c0_i32 : i32, i32
  }
  func.func @transform_1(%arg0: i32) -> (i32, i32) {
    %c0_i32 = arith.constant 0 : i32
    %c0_i32_0 = arith.constant 0 : i32
    %c0_i32_1 = arith.constant 0 : i32
    return %c0_i32, %c0_i32_0 : i32, i32
  }
  func.func @transform_2(%arg0: i32) -> (i32, i32) {
    %c0_i32 = arith.constant 0 : i32
    %c0_i32_0 = arith.constant 0 : i32
    %c0_i32_1 = arith.constant 0 : i32
    return %c0_i32, %c0_i32_0 : i32, i32
  }
  func.func @transform_3(%arg0: i32) -> (i32, i32) {
    %c0_i32 = arith.constant 0 : i32
    %c0_i32_0 = arith.constant 0 : i32
    %c0_i32_1 = arith.constant 0 : i32
    return %c0_i32, %c0_i32_0 : i32, i32
  }
  func.func @transform_4(%arg0: i32) -> (i32, i32) {
    %c0_i32 = arith.constant 0 : i32
    %c0_i32_0 = arith.constant 0 : i32
    %c0_i32_1 = arith.constant 0 : i32
    return %c0_i32, %c0_i32_0 : i32, i32
  }
  func.func @transform_5(%arg0: i32) -> (i32, i32) {
    %c0_i32 = arith.constant 0 : i32
    %c0_i32_0 = arith.constant 0 : i32
    return %arg0, %c0_i32 : i32, i32
  }
}

module attributes {stable_mosaic.version = 11 : i64} {
  func.func @_linear_single_kernel(%arg0: i32, %arg1: memref<34x256xbf16, #tpu.memory_space<vmem>>, %arg2: memref<256x512xbf16, #tpu.memory_space<vmem>>, %arg3: memref<1x512xf32, #tpu.memory_space<vmem>>, %arg4: memref<34x512xbf16, #tpu.memory_space<vmem>>) attributes {dimension_semantics = [#tpu.dimension_semantics<parallel>], iteration_bounds = array<i64: 1>, scalar_prefetch = 0 : i64, scratch_operands = 0 : i64, tpu.core_type = #tpu.core_type<tc>, window_params = [{transform_indices = @transform_0, window_bounds = array<i64: 34, 256>}, {pipeline_mode = #tpu.pipeline_mode<synchronous>, transform_indices = @transform_1, window_bounds = array<i64: 256, 512>}, {pipeline_mode = #tpu.pipeline_mode<synchronous>, transform_indices = @transform_2, window_bounds = array<i64: 1, 512>}, {transform_indices = @transform_3, window_bounds = array<i64: 34, 512>}]} {
    %c0 = arith.constant 0 : index
    %c0_0 = arith.constant 0 : index
    %0 = vector.load %arg1[%c0, %c0_0] : memref<34x256xbf16, #tpu.memory_space<vmem>>, vector<34x256xbf16>
    %c0_1 = arith.constant 0 : index
    %c0_2 = arith.constant 0 : index
    %1 = vector.load %arg2[%c0_1, %c0_2] : memref<256x512xbf16, #tpu.memory_space<vmem>>, vector<256x512xbf16>
    %cst = arith.constant dense<0.000000e+00> : vector<34x512xf32>
    %2 = tpu.matmul %0, %1, %cst {dimension_numbers = #tpu.dot_dimension_numbers<[1], [0], [0], [1], [0, 0, 1, 1], [], []>} : vector<34x256xbf16>, vector<256x512xbf16>, vector<34x512xf32> -> vector<34x512xf32>
    %c0_3 = arith.constant 0 : index
    %c0_4 = arith.constant 0 : index
    %3 = vector.load %arg3[%c0_3, %c0_4] : memref<1x512xf32, #tpu.memory_space<vmem>>, vector<1x512xf32>
    %4 = vector.broadcast %3 : vector<1x512xf32> to vector<34x512xf32>
    %5 = arith.addf %2, %4 : vector<34x512xf32>
    %cst_5 = arith.constant 0.000000e+00 : f32
    %6 = vector.broadcast %cst_5 : f32 to vector<34x512xf32>
    %7 = arith.maximumf %5, %6 : vector<34x512xf32>
    %8 = arith.truncf %7 : vector<34x512xf32> to vector<34x512xbf16>
    %c0_6 = arith.constant 0 : index
    %c0_7 = arith.constant 0 : index
    %9 = vector.load %arg4[%c0_6, %c0_7] : memref<34x512xbf16, #tpu.memory_space<vmem>>, vector<34x512xbf16>
    tpu.vector_store %arg4[%c0_6, %c0_7], %8 {strides = array<i32>} : memref<34x512xbf16, #tpu.memory_space<vmem>>, vector<34x512xbf16>,
    return
  }
  func.func @transform_0(%arg0: i32) -> (i32, i32) {
    %c0_i32 = arith.constant 0 : i32
    %c0_i32_0 = arith.constant 0 : i32
    return %arg0, %c0_i32 : i32, i32
  }
  func.func @transform_1(%arg0: i32) -> (i32, i32) {
    %c0_i32 = arith.constant 0 : i32
    %c0_i32_0 = arith.constant 0 : i32
    %c0_i32_1 = arith.constant 0 : i32
    return %c0_i32, %c0_i32_0 : i32, i32
  }
  func.func @transform_2(%arg0: i32) -> (i32, i32) {
    %c0_i32 = arith.constant 0 : i32
    %c0_i32_0 = arith.constant 0 : i32
    %c0_i32_1 = arith.constant 0 : i32
    return %c0_i32, %c0_i32_0 : i32, i32
  }
  func.func @transform_3(%arg0: i32) -> (i32, i32) {
    %c0_i32 = arith.constant 0 : i32
    %c0_i32_0 = arith.constant 0 : i32
    return %arg0, %c0_i32 : i32, i32
  }
}

module attributes {stable_mosaic.version = 11 : i64} {
  func.func @_linear_single_kernel(%arg0: i32, %arg1: memref<34x512xbf16, #tpu.memory_space<vmem>>, %arg2: memref<512x48xbf16, #tpu.memory_space<vmem>>, %arg3: memref<1x48xf32, #tpu.memory_space<vmem>>, %arg4: memref<34x48xf32, #tpu.memory_space<vmem>>) attributes {dimension_semantics = [#tpu.dimension_semantics<parallel>], iteration_bounds = array<i64: 1>, scalar_prefetch = 0 : i64, scratch_operands = 0 : i64, tpu.core_type = #tpu.core_type<tc>, window_params = [{transform_indices = @transform_0, window_bounds = array<i64: 34, 512>}, {pipeline_mode = #tpu.pipeline_mode<synchronous>, transform_indices = @transform_1, window_bounds = array<i64: 512, 48>}, {pipeline_mode = #tpu.pipeline_mode<synchronous>, transform_indices = @transform_2, window_bounds = array<i64: 1, 48>}, {transform_indices = @transform_3, window_bounds = array<i64: 34, 48>}]} {
    %c0 = arith.constant 0 : index
    %c0_0 = arith.constant 0 : index
    %0 = vector.load %arg1[%c0, %c0_0] : memref<34x512xbf16, #tpu.memory_space<vmem>>, vector<34x512xbf16>
    %c0_1 = arith.constant 0 : index
    %c0_2 = arith.constant 0 : index
    %1 = vector.load %arg2[%c0_1, %c0_2] : memref<512x48xbf16, #tpu.memory_space<vmem>>, vector<512x48xbf16>
    %cst = arith.constant dense<0.000000e+00> : vector<34x48xf32>
    %2 = tpu.matmul %0, %1, %cst {dimension_numbers = #tpu.dot_dimension_numbers<[1], [0], [0], [1], [0, 0, 1, 1], [], []>} : vector<34x512xbf16>, vector<512x48xbf16>, vector<34x48xf32> -> vector<34x48xf32>
    %c0_3 = arith.constant 0 : index
    %c0_4 = arith.constant 0 : index
    %3 = vector.load %arg3[%c0_3, %c0_4] : memref<1x48xf32, #tpu.memory_space<vmem>>, vector<1x48xf32>
    %4 = vector.broadcast %3 : vector<1x48xf32> to vector<34x48xf32>
    %5 = arith.addf %2, %4 : vector<34x48xf32>
    %c0_5 = arith.constant 0 : index
    %c0_6 = arith.constant 0 : index
    %6 = vector.load %arg4[%c0_5, %c0_6] : memref<34x48xf32, #tpu.memory_space<vmem>>, vector<34x48xf32>
    tpu.vector_store %arg4[%c0_5, %c0_6], %5 {strides = array<i32>} : memref<34x48xf32, #tpu.memory_space<vmem>>, vector<34x48xf32>,
    return
  }
  func.func @transform_0(%arg0: i32) -> (i32, i32) {
    %c0_i32 = arith.constant 0 : i32
    %c0_i32_0 = arith.constant 0 : i32
    return %arg0, %c0_i32 : i32, i32
  }
  func.func @transform_1(%arg0: i32) -> (i32, i32) {
    %c0_i32 = arith.constant 0 : i32
    %c0_i32_0 = arith.constant 0 : i32
    %c0_i32_1 = arith.constant 0 : i32
    return %c0_i32, %c0_i32_0 : i32, i32
  }
  func.func @transform_2(%arg0: i32) -> (i32, i32) {
    %c0_i32 = arith.constant 0 : i32
    %c0_i32_0 = arith.constant 0 : i32
    %c0_i32_1 = arith.constant 0 : i32
    return %c0_i32, %c0_i32_0 : i32, i32
  }
  func.func @transform_3(%arg0: i32) -> (i32, i32) {
    %c0_i32 = arith.constant 0 : i32
    %c0_i32_0 = arith.constant 0 : i32
    return %arg0, %c0_i32 : i32, i32
  }
}

</mosaic_0001>

<llo_original>
// kernel: aeformer_forward.26
$region0: #{aeformer_forward.26}
  #allocation0 [shape = 'u32[]', space=smem, size = 0x4, offset = 0x4, fixed_abs, tag = 'smem constant byte address 0x4 - core index']
  #allocation1 [shape = 'u32[144,128]{1,0:T(1,128)}', space=vmem, size = 0x12000, scoped, tag = 'internal scratch']
  %s0 = inlined_call_operand.hbm [shape: f32[32,48], index: 0, kind: input, shape index: {}]
  %s1 = inlined_call_operand.hbm [shape: bf16[48,32], index: 1, kind: input, shape index: {}]
  %s2 = inlined_call_operand.hbm [shape: f32[1,32], index: 2, kind: input, shape index: {}]
  %s3 = inlined_call_operand.hbm [shape: f32[32,32], index: 3, kind: output, shape index: {}]
  %s4 = sld [smem:[#allocation0]]
  $region34: #{aeformer_forward.26} parent=0
    _
  %s6 = ssub.s32 1, %s4
  %s7 = scalar_select 0, %s6, %s4
  $region1: #{aeformer_forward.26} parent=0
    #allocation2 [shape = 'u8[16384]{0}', space=vmem, size = 0x4000, scoped, tag = 'input window, operand 0, single buffered']
    #allocation3 [shape = 's32[1]{0}', space=sflag, size = 0x4, scoped, tag = 'scoped memory for aeformer_forward.26']
    #allocation4 [shape = 's32[1]{0}', space=sflag, size = 0x4, scoped, tag = 'scoped memory for aeformer_forward.26']
    #allocation5 [shape = 'u8[12288]{0}', space=vmem, size = 0x3000, scoped, tag = 'input window, operand 1, single buffered']
    #allocation6 [shape = 's32[1]{0}', space=sflag, size = 0x4, scoped, tag = 'scoped memory for aeformer_forward.26']
    #allocation7 [shape = 'u8[512]{0}', space=vmem, size = 0x400, scoped, tag = 'input window, operand 2, single buffered']
    #allocation8 [shape = 'u8[16384]{0}', space=vmem, size = 0x4000, scoped, tag = 'output window, operand 0, single buffered']
    %8 = vsyncpa [#allocation3], 0
    %9 = vsyncpa [#allocation6], 0
    %10 = vsyncpa [#allocation4], 0
    // Predicated region
    $region2: #{aeformer_forward.26} parent=1 // pred_check
      _
    $region3: #{aeformer_forward.26} parent=1 // pred_check_branch
      %12 = sbr.rel (0) target = $region5
    $region4: #{aeformer_forward.26} parent=1 // pred_region
      %s14 = ssub.s32 512, 512
      %15 = vsyncadd [#allocation3], %s14
      %s16 = sshll.u32 [#allocation2], 4
      %s17 = int_to_ptr.vmem [resolvable:$true] %s16
      %22 = dma.hbm_to_vmem [thread:$0]  %s0, 512, %s17, [#allocation3], 128, 128, 8
    $region5: #{aeformer_forward.26} parent=1 // pred_fallthru
      _
    // Predicated region
    $region6: #{aeformer_forward.26} parent=1 // pred_check
      _
    $region7: #{aeformer_forward.26} parent=1 // pred_check_branch
      %24 = sbr.rel (0) target = $region9
    $region8: #{aeformer_forward.26} parent=1 // pred_region
      %s26 = ssub.s32 384, 384
      %27 = vsyncadd [#allocation6], %s26
      %s28 = sshll.u32 [#allocation5], 4
      %s29 = int_to_ptr.vmem [resolvable:$true] %s28
      %34 = dma.hbm_to_vmem [thread:$0]  %s1, 384, %s29, [#allocation6], 64, 64, 4
    $region9: #{aeformer_forward.26} parent=1 // pred_fallthru
      _
    // Predicated region
    $region10: #{aeformer_forward.26} parent=1 // pred_check
      _
    $region11: #{aeformer_forward.26} parent=1 // pred_check_branch
      %36 = sbr.rel (0) target = $region13
    $region12: #{aeformer_forward.26} parent=1 // pred_region
      %s38 = ssub.s32 16, 16
      %39 = vsyncadd [#allocation6], %s38
      %s41 = sshll.u32 [#allocation7], 4
      %s42 = int_to_ptr.vmem [resolvable:$true] %s41
      %44 = dma.hbm_to_vmem [thread:$0]  %s2, 16, %s42, [#allocation6]
    $region13: #{aeformer_forward.26} parent=1 // pred_fallthru
      _
    // Predicated region
    $region14: #{aeformer_forward.26} parent=1 // pred_check
      _
    $region15: #{aeformer_forward.26} parent=1 // pred_check_branch
      %46 = sbr.rel (0) target = $region17
    $region16: #{aeformer_forward.26} parent=1 // pred_region
      %47 = dma.done [#allocation3], 512
    $region17: #{aeformer_forward.26} parent=1 // pred_fallthru
      _
    // Predicated region
    $region18: #{aeformer_forward.26} parent=1 // pred_check
      _
    $region19: #{aeformer_forward.26} parent=1 // pred_check_branch
      %49 = sbr.rel (0) target = $region21
    $region20: #{aeformer_forward.26} parent=1 // pred_region
      %50 = dma.done [#allocation6], 384
    $region21: #{aeformer_forward.26} parent=1 // pred_fallthru
      _
    // Predicated region
    $region22: #{aeformer_forward.26} parent=1 // pred_check
      _
    $region23: #{aeformer_forward.26} parent=1 // pred_check_branch
      %52 = sbr.rel (0) target = $region25
    $region24: #{aeformer_forward.26} parent=1 // pred_region
      %53 = dma.done [#allocation6], 16
    $region25: #{aeformer_forward.26} parent=1 // pred_fallthru
      _
    %v55 = vld [vmem:[#allocation2] sm:$0xff]
    %v56 = vld [vmem:[#allocation2 + $0x8] sm:$0xff]
    %v57 = vld [vmem:[#allocation2 + $0x10] sm:$0xff]
    %v58 = vld [vmem:[#allocation2 + $0x18] sm:$0xff]
    %v59 = vpack.c.bf16 %v56, %v55
    %v60 = vpack.c.bf16 %v58, %v57
    %v61 = vld [vmem:[#allocation5] sm:$0xf]
    %v62 = vld [vmem:[#allocation5 + $0x4] sm:$0xf]
    %v63 = vld [vmem:[#allocation5 + $0x8] sm:$0xf]
    %v64 = vld [vmem:[#allocation5 + $0xc] sm:$0xf]
    %v65 = vld [vmem:[#allocation5 + $0x10] sm:$0xf]
    %v66 = vld [vmem:[#allocation5 + $0x14] sm:$0xf]
    %v67 = vld [vmem:[#allocation7] sm:$0x1]
    %v69 = vlaneseq
    %v70 = vshrl.u32 %v69, 7
    %v71 = vsub.s32 0, %v70
    %v72 = vrot.slane %v67, %v71
    %v80 = vunpack.c.l.b16 %v61
    %v81 = vunpack.c.l.b16 %v62
    %v82 = vunpack.c.l.b16 %v63
    %v83 = vunpack.c.l.b16 %v64
    %v84 = vunpack.c.l.b16 %v65
    %v85 = vunpack.c.l.b16 %v66
    %v86 = vpack.c.b16 %v81, %v80
    %v87 = vpack.c.b16 %v83, %v82
    %v88 = vpack.c.b16 %v85, %v84
    %vm92 = vcmask 392192
    %v94 = vsel %vm92, %v59, 0
    %v97 = vsel %vm92, %v60, 0
    %99 = vmatprep.subr.bf16.mxu0 0
    %100 = vmatpush1.bf16.msra.mxu0 %v86
    %101 = vmatprep.subr.bf16.mxu0 0
    %102 = vmatpush1.bf16.msra.mxu0 %v87
    %103 = vmatprep.subr.bf16.mxu0 0
    %104 = vmatpush1.bf16.msra.mxu0 %v88
    %105 = vmatprep.subr.bf16.mxu0 0
    %106 = vmatpush1.bf16.msra.mxu0 0
    %107 = vmatprep.subr.bf16.mxu0 0
    %108 = vmatpush1.bf16.msra.mxu0 0
    %109 = vmatprep.subr.bf16.mxu0 0
    %110 = vmatpush1.bf16.msra.mxu0 0
    %111 = vmatprep.subr.bf16.mxu0 0
    %112 = vmatpush1.bf16.msra.mxu0 0
    %113 = vmatprep.subr.bf16.mxu0 0
    %114 = vmatpush1.bf16.msra.mxu0 0
    %115 = vmatprep.subr.bf16.mxu0 0
    %116 = vmatpush1.bf16.msra.mxu0 0
    %117 = vmatprep.subr.bf16.mxu0 0
    %118 = vmatpush1.bf16.msra.mxu0 0
    %119 = vmatprep.subr.bf16.mxu0 0
    %120 = vmatpush1.bf16.msra.mxu0 0
    %121 = vmatprep.subr.bf16.mxu0 0
    %122 = vmatpush1.bf16.msra.mxu0 0
    %123 = vmatprep.subr.bf16.mxu0 0
    %124 = vmatpush1.bf16.msra.mxu0 0
    %125 = vmatprep.subr.bf16.mxu0 0
    %126 = vmatpush1.bf16.msra.mxu0 0
    %127 = vmatprep.subr.bf16.mxu0 0
    %128 = vmatpush1.bf16.msra.mxu0 0
    %129 = vmatprep.subr.bf16.mxu0 0
    %130 = vmatpush1.bf16.msra.mxu0 0
    %131 = vmatprep.mubr.bf16.mxu0 0
    %132 = vmatmul.mubr.bf16.gmra.mrb[0].mxu0 %v94
    %v133 = vpop.f32.mrb[0].mxu0
    %v134 = vadd.f32 %v72, %v133
    %v135 = vpop.f32.mrb[0].mxu0
    %v136 = vpop.f32.mrb[0].mxu0
    %v137 = vadd.f32 %v72, %v136
    %v138 = vpop.f32.mrb[0].mxu0
    %139 = vmatprep.mubr.bf16.mxu0 0
    %140 = vmatmul.mubr.bf16.gmra.mrb[0].mxu0 %v97
    %v141 = vpop.f32.mrb[0].mxu0
    %v142 = vadd.f32 %v72, %v141
    %v143 = vpop.f32.mrb[0].mxu0
    %v144 = vpop.f32.mrb[0].mxu0
    %v145 = vadd.f32 %v72, %v144
    %v146 = vpop.f32.mrb[0].mxu0
    %147 = vdwg.mxu0
    %vm148 = vcmask 261120
    %149 = vst.msk [vmem:[#allocation8] sm:$0xff] %vm148, %v134
    %150 = vst.msk [vmem:[#allocation8 + $0x8] sm:$0xff] %vm148, %v137
    %151 = vst.msk [vmem:[#allocation8 + $0x10] sm:$0xff] %vm148, %v142
    %152 = vst.msk [vmem:[#allocation8 + $0x18] sm:$0xff] %vm148, %v145
    // Predicated region
    $region26: #{aeformer_forward.26} parent=1 // pred_check
      _
    $region27: #{aeformer_forward.26} parent=1 // pred_check_branch
      %154 = sbr.rel (0) target = $region29
    $region28: #{aeformer_forward.26} parent=1 // pred_region
      %s156 = ssub.s32 512, 512
      %157 = vsyncadd [#allocation4], %s156
      %s158 = sshll.u32 [#allocation8], 4
      %s159 = int_to_ptr.vmem [resolvable:$true] %s158
      %164 = dma.vmem_to_hbm [thread:$0]  %s159, 512, %s3, [#allocation4], 128, 128, 8
    $region29: #{aeformer_forward.26} parent=1 // pred_fallthru
      _
    // Predicated region
    $region30: #{aeformer_forward.26} parent=1 // pred_check
      _
    $region31: #{aeformer_forward.26} parent=1 // pred_check_branch
      %166 = sbr.rel (0) target = $region33
    $region32: #{aeformer_forward.26} parent=1 // pred_region
      %167 = dma.done [#allocation4], 512
    $region33: #{aeformer_forward.26} parent=1 // pred_fallthru
      _
    %168 = vsyncpa [#allocation3], 1
    %169 = vsyncpa [#allocation6], 1
    %170 = vsyncpa [#allocation4], 1

// kernel: aeformer_forward.27
$region0: #{aeformer_forward.27}
  #allocation0 [shape = 'u32[]', space=smem, size = 0x4, offset = 0x4, fixed_abs, tag = 'smem constant byte address 0x4 - core index']
  #allocation1 [shape = 'u32[144,128]{1,0:T(1,128)}', space=vmem, size = 0x12000, scoped, tag = 'internal scratch']
  %s0 = inlined_call_operand.hbm [shape: f32[34,32], index: 0, kind: input, shape index: {}]
  %s1 = inlined_call_operand.hbm [shape: bf16[32,96], index: 1, kind: input, shape index: {}]
  %s2 = inlined_call_operand.hbm [shape: f32[1,96], index: 2, kind: input, shape index: {}]
  %s3 = inlined_call_operand.hbm [shape: f32[1,32], index: 3, kind: input, shape index: {}]
  %s4 = inlined_call_operand.hbm [shape: f32[1,32], index: 4, kind: input, shape index: {}]
  %s5 = inlined_call_operand.hbm [shape: bf16[34,96], index: 5, kind: output, shape index: {}]
  %s6 = sld [smem:[#allocation0]]
  $region50: #{aeformer_forward.27} parent=0
    _
  %s8 = ssub.s32 1, %s6
  %s9 = scalar_select 0, %s8, %s6
  $region1: #{aeformer_forward.27} parent=0
    #allocation2 [shape = 'u8[20480]{0}', space=vmem, size = 0x5000, scoped, tag = 'input window, operand 0, single buffered']
    #allocation3 [shape = 's32[1]{0}', space=sflag, size = 0x4, scoped, tag = 'scoped memory for aeformer_forward.27']
    #allocation4 [shape = 's32[1]{0}', space=sflag, size = 0x4, scoped, tag = 'scoped memory for aeformer_forward.27']
    #allocation5 [shape = 'u8[8192]{0}', space=vmem, size = 0x2000, scoped, tag = 'input window, operand 1, single buffered']
    #allocation6 [shape = 's32[1]{0}', space=sflag, size = 0x4, scoped, tag = 'scoped memory for aeformer_forward.27']
    #allocation7 [shape = 'u8[512]{0}', space=vmem, size = 0x400, scoped, tag = 'input window, operand 2, single buffered']
    #allocation8 [shape = 'u8[512]{0}', space=vmem, size = 0x400, scoped, tag = 'input window, operand 3, single buffered']
    #allocation9 [shape = 's32[1]{0}', space=sflag, size = 0x4, scoped, tag = 'scoped memory for aeformer_forward.27']
    #allocation10 [shape = 'u8[512]{0}', space=vmem, size = 0x400, scoped, tag = 'input window, operand 4, single buffered']
    #allocation11 [shape = 'u8[10240]{0}', space=vmem, size = 0x2800, scoped, tag = 'output window, operand 0, single buffered']
    %10 = vsyncpa [#allocation3], 0
    %11 = vsyncpa [#allocation6], 0
    %12 = vsyncpa [#allocation9], 0
    %13 = vsyncpa [#allocation4], 0
    // Predicated region
    $region2: #{aeformer_forward.27} parent=1 // pred_check
      _
    $region3: #{aeformer_forward.27} parent=1 // pred_check_branch
      %15 = sbr.rel (0) target = $region5
    $region4: #{aeformer_forward.27} parent=1 // pred_region
      %s17 = ssub.s32 640, 640
      %18 = vsyncadd [#allocation3], %s17
      %s19 = sshll.u32 [#allocation2], 4
      %s20 = int_to_ptr.vmem [resolvable:$true] %s19
      %25 = dma.hbm_to_vmem [thread:$0]  %s0, 640, %s20, [#allocation3], 128, 128, 8
    $region5: #{aeformer_forward.27} parent=1 // pred_fallthru
      _
    // Predicated region
    $region6: #{aeformer_forward.27} parent=1 // pred_check
      _
    $region7: #{aeformer_forward.27} parent=1 // pred_check_branch
      %27 = sbr.rel (0) target = $region9
    $region8: #{aeformer_forward.27} parent=1 // pred_region
      %s29 = ssub.s32 256, 256
      %30 = vsyncadd [#allocation6], %s29
      %s31 = sshll.u32 [#allocation5], 4
      %s32 = int_to_ptr.vmem [resolvable:$true] %s31
      %37 = dma.hbm_to_vmem [thread:$0]  %s1, 256, %s32, [#allocation6], 64, 64, 4
    $region9: #{aeformer_forward.27} parent=1 // pred_fallthru
      _
    // Predicated region
    $region10: #{aeformer_forward.27} parent=1 // pred_check
      _
    $region11: #{aeformer_forward.27} parent=1 // pred_check_branch
      %39 = sbr.rel (0) target = $region13
    $region12: #{aeformer_forward.27} parent=1 // pred_region
      %s41 = ssub.s32 16, 16
      %42 = vsyncadd [#allocation6], %s41
      %s44 = sshll.u32 [#allocation7], 4
      %s45 = int_to_ptr.vmem [resolvable:$true] %s44
      %47 = dma.hbm_to_vmem [thread:$0]  %s2, 16, %s45, [#allocation6]
    $region13: #{aeformer_forward.27} parent=1 // pred_fallthru
      _
    // Predicated region
    $region14: #{aeformer_forward.27} parent=1 // pred_check
      _
    $region15: #{aeformer_forward.27} parent=1 // pred_check_branch
      %49 = sbr.rel (0) target = $region17
    $region16: #{aeformer_forward.27} parent=1 // pred_region
      %s51 = ssub.s32 16, 16
      %52 = vsyncadd [#allocation9], %s51
      %s54 = sshll.u32 [#allocation8], 4
      %s55 = int_to_ptr.vmem [resolvable:$true] %s54
      %57 = dma.hbm_to_vmem [thread:$0]  %s3, 16, %s55, [#allocation9]
    $region17: #{aeformer_forward.27} parent=1 // pred_fallthru
      _
    // Predicated region
    $region18: #{aeformer_forward.27} parent=1 // pred_check
      _
    $region19: #{aeformer_forward.27} parent=1 // pred_check_branch
      %59 = sbr.rel (0) target = $region21
    $region20: #{aeformer_forward.27} parent=1 // pred_region
      %s61 = ssub.s32 16, 16
      %62 = vsyncadd [#allocation9], %s61
      %s64 = sshll.u32 [#allocation10], 4
      %s65 = int_to_ptr.vmem [resolvable:$true] %s64
      %67 = dma.hbm_to_vmem [thread:$0]  %s4, 16, %s65, [#allocation9]
    $region21: #{aeformer_forward.27} parent=1 // pred_fallthru
      _
    // Predicated region
    $region22: #{aeformer_forward.27} parent=1 // pred_check
      _
    $region23: #{aeformer_forward.27} parent=1 // pred_check_branch
      %69 = sbr.rel (0) target = $region25
    $region24: #{aeformer_forward.27} parent=1 // pred_region
      %70 = dma.done [#allocation3], 640
    $region25: #{aeformer_forward.27} parent=1 // pred_fallthru
      _
    // Predicated region
    $region26: #{aeformer_forward.27} parent=1 // pred_check
      _
    $region27: #{aeformer_forward.27} parent=1 // pred_check_branch
      %72 = sbr.rel (0) target = $region29
    $region28: #{aeformer_forward.27} parent=1 // pred_region
      %73 = dma.done [#allocation6], 256
    $region29: #{aeformer_forward.27} parent=1 // pred_fallthru
      _
    // Predicated region
    $region30: #{aeformer_forward.27} parent=1 // pred_check
      _
    $region31: #{aeformer_forward.27} parent=1 // pred_check_branch
      %75 = sbr.rel (0) target = $region33
    $region32: #{aeformer_forward.27} parent=1 // pred_region
      %76 = dma.done [#allocation6], 16
    $region33: #{aeformer_forward.27} parent=1 // pred_fallthru
      _
    // Predicated region
    $region34: #{aeformer_forward.27} parent=1 // pred_check
      _
    $region35: #{aeformer_forward.27} parent=1 // pred_check_branch
      %78 = sbr.rel (0) target = $region37
    $region36: #{aeformer_forward.27} parent=1 // pred_region
      %79 = dma.done [#allocation9], 16
    $region37: #{aeformer_forward.27} parent=1 // pred_fallthru
      _
    // Predicated region
    $region38: #{aeformer_forward.27} parent=1 // pred_check
      _
    $region39: #{aeformer_forward.27} parent=1 // pred_check_branch
      %81 = sbr.rel (0) target = $region41
    $region40: #{aeformer_forward.27} parent=1 // pred_region
      %82 = dma.done [#allocation9], 16
    $region41: #{aeformer_forward.27} parent=1 // pred_fallthru
      _
    %v84 = vld [vmem:[#allocation2] sm:$0xff]
    %v85 = vld [vmem:[#allocation2 + $0x8] sm:$0xff]
    %v86 = vld [vmem:[#allocation2 + $0x10] sm:$0xff]
    %v87 = vld [vmem:[#allocation2 + $0x18] sm:$0xff]
    %v88 = vld [vmem:[#allocation2 + $0x20] sm:$0x3]
    %v89 = vld [vmem:[#allocation8] sm:$0x1]
    %v90 = vld [vmem:[#allocation10] sm:$0x1]
    %vm91 = vcmask 261120
    %v92 = vsel %vm91, %v84, 0.0
    %93 = vadd.xlane.f32.xlu0 %v92
    %v94 = vpop.xlane.xlu0 %93
    %v95 = vsel %vm91, %v85, 0.0
    %96 = vadd.xlane.f32.xlu0 %v95
    %v97 = vpop.xlane.xlu0 %96
    %v98 = vsel %vm91, %v86, 0.0
    %99 = vadd.xlane.f32.xlu0 %v98
    %v100 = vpop.xlane.xlu0 %99
    %v101 = vsel %vm91, %v87, 0.0
    %102 = vadd.xlane.f32.xlu0 %v101
    %v103 = vpop.xlane.xlu0 %102
    %vm104 = vcmask 254976
    %v105 = vsel %vm104, %v88, 0.0
    %106 = vadd.xlane.f32.xlu0 %v105
    %v107 = vpop.xlane.xlu0 %106
    %v108 = vrcp.pop 32.0
    %v109 = vmul.f32 %v94, %v108
    %v110 = vmul.f32 %v97, %v108
    %v111 = vmul.f32 %v100, %v108
    %v112 = vmul.f32 %v103, %v108
    %v113 = vmul.f32 %v107, %v108
    %v114 = vsub.f32 %v84, %v109
    %v115 = vsub.f32 %v85, %v110
    %v116 = vsub.f32 %v86, %v111
    %v117 = vsub.f32 %v87, %v112
    %v118 = vsub.f32 %v88, %v113
    %v119 = vmul.f32 %v114, %v114
    %v120 = vmul.f32 %v115, %v115
    %v121 = vmul.f32 %v116, %v116
    %v122 = vmul.f32 %v117, %v117
    %v123 = vmul.f32 %v118, %v118
    %v124 = vsel %vm91, %v119, 0.0
    %125 = vadd.xlane.f32.xlu0 %v124
    %v126 = vpop.xlane.xlu0 %125
    %v127 = vsel %vm91, %v120, 0.0
    %128 = vadd.xlane.f32.xlu0 %v127
    %v129 = vpop.xlane.xlu0 %128
    %v130 = vsel %vm91, %v121, 0.0
    %131 = vadd.xlane.f32.xlu0 %v130
    %v132 = vpop.xlane.xlu0 %131
    %v133 = vsel %vm91, %v122, 0.0
    %134 = vadd.xlane.f32.xlu0 %v133
    %v135 = vpop.xlane.xlu0 %134
    %v136 = vsel %vm104, %v123, 0.0
    %137 = vadd.xlane.f32.xlu0 %v136
    %v138 = vpop.xlane.xlu0 %137
    %v139 = vmul.f32 %v126, %v108
    %v140 = vmul.f32 %v129, %v108
    %v141 = vmul.f32 %v132, %v108
    %v142 = vmul.f32 %v135, %v108
    %v143 = vmul.f32 %v138, %v108
    %v144 = vadd.f32 %v139, 1e-05
    %v145 = vadd.f32 %v140, 1e-05
    %v146 = vadd.f32 %v141, 1e-05
    %v147 = vadd.f32 %v142, 1e-05
    %v148 = vadd.f32 %v143, 1e-05
    %v149 = vrsqrt.pop %v144
    %v150 = vrsqrt.pop %v145
    %v151 = vrsqrt.pop %v146
    %v152 = vrsqrt.pop %v147
    %v153 = vrsqrt.pop %v148
    %v154 = vmul.f32 %v114, %v149
    %v155 = vmul.f32 %v115, %v150
    %v156 = vmul.f32 %v116, %v151
    %v157 = vmul.f32 %v117, %v152
    %v158 = vmul.f32 %v118, %v153
    %v160 = vlaneseq
    %v161 = vshrl.u32 %v160, 7
    %v162 = vsub.s32 0, %v161
    %v163 = vrot.slane %v89, %v162
    %v165 = vmul.f32 %v154, %v163
    %v166 = vmul.f32 %v155, %v163
    %v167 = vmul.f32 %v156, %v163
    %v168 = vmul.f32 %v157, %v163
    %v169 = vmul.f32 %v158, %v163
    %v171 = vlaneseq
    %v172 = vshrl.u32 %v171, 7
    %v173 = vsub.s32 0, %v172
    %v174 = vrot.slane %v90, %v173
    %v176 = vadd.f32 %v165, %v174
    %v177 = vadd.f32 %v166, %v174
    %v178 = vadd.f32 %v167, %v174
    %v179 = vadd.f32 %v168, %v174
    %v180 = vadd.f32 %v169, %v174
    %v181 = vpack.c.bf16 %v177, %v176
    %v182 = vpack.c.bf16 %v179, %v178
    %v183 = vpack.c.bf16 %v180, %v180
    %v184 = vld [vmem:[#allocation5] sm:$0xf]
    %v185 = vld [vmem:[#allocation5 + $0x4] sm:$0xf]
    %v186 = vld [vmem:[#allocation5 + $0x8] sm:$0xf]
    %v187 = vld [vmem:[#allocation5 + $0xc] sm:$0xf]
    %v188 = vld [vmem:[#allocation7] sm:$0x1]
    %v190 = vlaneseq
    %v191 = vshrl.u32 %v190, 7
    %v192 = vsub.s32 0, %v191
    %v193 = vrot.slane %v188, %v192
    %v199 = vunpack.c.l.b16 %v184
    %v200 = vunpack.c.l.b16 %v185
    %v201 = vunpack.c.l.b16 %v186
    %v202 = vunpack.c.l.b16 %v187
    %v203 = vpack.c.b16 %v200, %v199
    %v204 = vpack.c.b16 %v202, %v201
    %v208 = vsel %vm91, %v181, 0
    %v211 = vsel %vm91, %v182, 0
    %v214 = vsel %vm91, %v183, 0
    %216 = vmatprep.subr.bf16.mxu0 0
    %217 = vmatpush1.bf16.msra.mxu0 %v203
    %218 = vmatprep.subr.bf16.mxu0 0
    %219 = vmatpush1.bf16.msra.mxu0 %v204
    %220 = vmatprep.subr.bf16.mxu0 0
    %221 = vmatpush1.bf16.msra.mxu0 0
    %222 = vmatprep.subr.bf16.mxu0 0
    %223 = vmatpush1.bf16.msra.mxu0 0
    %224 = vmatprep.subr.bf16.mxu0 0
    %225 = vmatpush1.bf16.msra.mxu0 0
    %226 = vmatprep.subr.bf16.mxu0 0
    %227 = vmatpush1.bf16.msra.mxu0 0
    %228 = vmatprep.subr.bf16.mxu0 0
    %229 = vmatpush1.bf16.msra.mxu0 0
    %230 = vmatprep.subr.bf16.mxu0 0
    %231 = vmatpush1.bf16.msra.mxu0 0
    %232 = vmatprep.subr.bf16.mxu0 0
    %233 = vmatpush1.bf16.msra.mxu0 0
    %234 = vmatprep.subr.bf16.mxu0 0
    %235 = vmatpush1.bf16.msra.mxu0 0
    %236 = vmatprep.subr.bf16.mxu0 0
    %237 = vmatpush1.bf16.msra.mxu0 0
    %238 = vmatprep.subr.bf16.mxu0 0
    %239 = vmatpush1.bf16.msra.mxu0 0
    %240 = vmatprep.subr.bf16.mxu0 0
    %241 = vmatpush1.bf16.msra.mxu0 0
    %242 = vmatprep.subr.bf16.mxu0 0
    %243 = vmatpush1.bf16.msra.mxu0 0
    %244 = vmatprep.subr.bf16.mxu0 0
    %245 = vmatpush1.bf16.msra.mxu0 0
    %246 = vmatprep.subr.bf16.mxu0 0
    %247 = vmatpush1.bf16.msra.mxu0 0
    %248 = vmatprep.mubr.bf16.mxu0 0
    %249 = vmatmul.mubr.bf16.gmra.mrb[0].mxu0 %v208
    %v250 = vpop.f32.mrb[0].mxu0
    %v251 = vadd.f32 %v193, %v250
    %v252 = vpop.f32.mrb[0].mxu0
    %v253 = vpop.f32.mrb[0].mxu0
    %v254 = vadd.f32 %v193, %v253
    %v255 = vpop.f32.mrb[0].mxu0
    %256 = vmatprep.mubr.bf16.mxu0 0
    %257 = vmatmul.mubr.bf16.gmra.mrb[0].mxu0 %v211
    %v258 = vpop.f32.mrb[0].mxu0
    %v259 = vadd.f32 %v193, %v258
    %v260 = vpop.f32.mrb[0].mxu0
    %v261 = vpop.f32.mrb[0].mxu0
    %v262 = vadd.f32 %v193, %v261
    %v263 = vpop.f32.mrb[0].mxu0
    %264 = vmatprep.mubr.bf16.mxu0 0
    %265 = vmatmul.mubr.bf16.gmra.mrb[0].mxu0 %v214
    %v266 = vpop.f32.mrb[0].mxu0
    %v267 = vadd.f32 %v193, %v266
    %v268 = vpop.f32.mrb[0].mxu0
    %v269 = vpop.f32.mrb[0].mxu0
    %v270 = vpop.f32.mrb[0].mxu0
    %271 = vdwg.mxu0
    %v272 = vpack.c.bf16 %v254, %v251
    %v273 = vpack.c.bf16 %v262, %v259
    %v274 = vpack.c.bf16 %v267, %v267
    %v278 = vunpack.c.l.b16 %v272
    %v279 = vunpack.c.h.b16 %v272
    %v280 = vunpack.c.l.b16 %v273
    %v281 = vunpack.c.h.b16 %v273
    %v282 = vunpack.c.l.b16 %v274
    %v283 = vpack.c.b16 %v278, %v278
    %v284 = vpack.c.b16 %v279, %v279
    %v285 = vpack.c.b16 %v280, %v280
    %v286 = vpack.c.b16 %v281, %v281
    %v287 = vpack.c.b16 %v282, %v282
    %vm293 = vcmask 781312
    %294 = vst.msk [vmem:[#allocation11] sm:$0xf] %vm293, %v283
    %295 = vst.msk [vmem:[#allocation11 + $0x4] sm:$0xf] %vm293, %v284
    %296 = vst.msk [vmem:[#allocation11 + $0x8] sm:$0xf] %vm293, %v285
    %297 = vst.msk [vmem:[#allocation11 + $0xc] sm:$0xf] %vm293, %v286
    %vm298 = vcmask 778240
    %299 = vst.msk [vmem:[#allocation11 + $0x10] sm:$0x1] %vm298, %v287
    // Predicated region
    $region42: #{aeformer_forward.27} parent=1 // pred_check
      _
    $region43: #{aeformer_forward.27} parent=1 // pred_check_branch
      %301 = sbr.rel (0) target = $region45
    $region44: #{aeformer_forward.27} parent=1 // pred_region
      %s303 = ssub.s32 320, 320
      %304 = vsyncadd [#allocation4], %s303
      %s305 = sshll.u32 [#allocation11], 4
      %s306 = int_to_ptr.vmem [resolvable:$true] %s305
      %311 = dma.vmem_to_hbm [thread:$0]  %s306, 320, %s5, [#allocation4], 64, 64, 4
    $region45: #{aeformer_forward.27} parent=1 // pred_fallthru
      _
    // Predicated region
    $region46: #{aeformer_forward.27} parent=1 // pred_check
      _
    $region47: #{aeformer_forward.27} parent=1 // pred_check_branch
      %313 = sbr.rel (0) target = $region49
    $region48: #{aeformer_forward.27} parent=1 // pred_region
      %314 = dma.done [#allocation4], 320
    $region49: #{aeformer_forward.27} parent=1 // pred_fallthru
      _
    %315 = vsyncpa [#allocation3], 1
    %316 = vsyncpa [#allocation6], 1
    %317 = vsyncpa [#allocation9], 1
    %318 = vsyncpa [#allocation4], 1

// kernel: aeformer_forward.29
$region0: #{aeformer_forward.29}
  #allocation0 [shape = 'u32[]', space=smem, size = 0x4, offset = 0x4, fixed_abs, tag = 'smem constant byte address 0x4 - core index']
  #allocation1 [shape = 'u32[144,128]{1,0:T(1,128)}', space=vmem, size = 0x12000, scoped, tag = 'internal scratch']
  %s0 = inlined_call_operand.hbm [shape: bf16[34,32], index: 0, kind: input, shape index: {}]
  %s1 = inlined_call_operand.hbm [shape: bf16[32,32], index: 1, kind: input, shape index: {}]
  %s2 = inlined_call_operand.hbm [shape: f32[1,32], index: 2, kind: input, shape index: {}]
  %s3 = inlined_call_operand.hbm [shape: f32[34,32], index: 3, kind: input, shape index: {}]
  %s4 = inlined_call_operand.hbm [shape: f32[34,32], index: 4, kind: output, shape index: {}]
  %s5 = sld [smem:[#allocation0]]
  $region42: #{aeformer_forward.29} parent=0
    _
  %s7 = ssub.s32 1, %s5
  %s8 = scalar_select 0, %s7, %s5
  $region1: #{aeformer_forward.29} parent=0
    #allocation2 [shape = 'u8[10240]{0}', space=vmem, size = 0x2800, scoped, tag = 'input window, operand 0, single buffered']
    #allocation3 [shape = 's32[1]{0}', space=sflag, size = 0x4, scoped, tag = 'scoped memory for aeformer_forward.29']
    #allocation4 [shape = 's32[1]{0}', space=sflag, size = 0x4, scoped, tag = 'scoped memory for aeformer_forward.29']
    #allocation5 [shape = 'u8[8192]{0}', space=vmem, size = 0x2000, scoped, tag = 'input window, operand 1, single buffered']
    #allocation6 [shape = 's32[1]{0}', space=sflag, size = 0x4, scoped, tag = 'scoped memory for aeformer_forward.29']
    #allocation7 [shape = 'u8[512]{0}', space=vmem, size = 0x400, scoped, tag = 'input window, operand 2, single buffered']
    #allocation8 [shape = 'u8[20480]{0}', space=vmem, size = 0x5000, scoped, tag = 'input window, operand 3, single buffered']
    #allocation9 [shape = 's32[1]{0}', space=sflag, size = 0x4, scoped, tag = 'scoped memory for aeformer_forward.29']
    #allocation10 [shape = 'u8[20480]{0}', space=vmem, size = 0x5000, scoped, tag = 'output window, operand 0, single buffered']
    %9 = vsyncpa [#allocation3], 0
    %10 = vsyncpa [#allocation6], 0
    %11 = vsyncpa [#allocation9], 0
    %12 = vsyncpa [#allocation4], 0
    // Predicated region
    $region2: #{aeformer_forward.29} parent=1 // pred_check
      _
    $region3: #{aeformer_forward.29} parent=1 // pred_check_branch
      %14 = sbr.rel (0) target = $region5
    $region4: #{aeformer_forward.29} parent=1 // pred_region
      %s16 = ssub.s32 320, 320
      %17 = vsyncadd [#allocation3], %s16
      %s18 = sshll.u32 [#allocation2], 4
      %s19 = int_to_ptr.vmem [resolvable:$true] %s18
      %24 = dma.hbm_to_vmem [thread:$0]  %s0, 320, %s19, [#allocation3], 64, 64, 4
    $region5: #{aeformer_forward.29} parent=1 // pred_fallthru
      _
    // Predicated region
    $region6: #{aeformer_forward.29} parent=1 // pred_check
      _
    $region7: #{aeformer_forward.29} parent=1 // pred_check_branch
      %26 = sbr.rel (0) target = $region9
    $region8: #{aeformer_forward.29} parent=1 // pred_region
      %s28 = ssub.s32 256, 256
      %29 = vsyncadd [#allocation6], %s28
      %s30 = sshll.u32 [#allocation5], 4
      %s31 = int_to_ptr.vmem [resolvable:$true] %s30
      %36 = dma.hbm_to_vmem [thread:$0]  %s1, 256, %s31, [#allocation6], 64, 64, 4
    $region9: #{aeformer_forward.29} parent=1 // pred_fallthru
      _
    // Predicated region
    $region10: #{aeformer_forward.29} parent=1 // pred_check
      _
    $region11: #{aeformer_forward.29} parent=1 // pred_check_branch
      %38 = sbr.rel (0) target = $region13
    $region12: #{aeformer_forward.29} parent=1 // pred_region
      %s40 = ssub.s32 16, 16
      %41 = vsyncadd [#allocation6], %s40
      %s43 = sshll.u32 [#allocation7], 4
      %s44 = int_to_ptr.vmem [resolvable:$true] %s43
      %46 = dma.hbm_to_vmem [thread:$0]  %s2, 16, %s44, [#allocation6]
    $region13: #{aeformer_forward.29} parent=1 // pred_fallthru
      _
    // Predicated region
    $region14: #{aeformer_forward.29} parent=1 // pred_check
      _
    $region15: #{aeformer_forward.29} parent=1 // pred_check_branch
      %48 = sbr.rel (0) target = $region17
    $region16: #{aeformer_forward.29} parent=1 // pred_region
      %s50 = ssub.s32 640, 640
      %51 = vsyncadd [#allocation9], %s50
      %s52 = sshll.u32 [#allocation8], 4
      %s53 = int_to_ptr.vmem [resolvable:$true] %s52
      %58 = dma.hbm_to_vmem [thread:$0]  %s3, 640, %s53, [#allocation9], 128, 128, 8
    $region17: #{aeformer_forward.29} parent=1 // pred_fallthru
      _
    // Predicated region
    $region18: #{aeformer_forward.29} parent=1 // pred_check
      _
    $region19: #{aeformer_forward.29} parent=1 // pred_check_branch
      %60 = sbr.rel (0) target = $region21
    $region20: #{aeformer_forward.29} parent=1 // pred_region
      %61 = dma.done [#allocation3], 320
    $region21: #{aeformer_forward.29} parent=1 // pred_fallthru
      _
    // Predicated region
    $region22: #{aeformer_forward.29} parent=1 // pred_check
      _
    $region23: #{aeformer_forward.29} parent=1 // pred_check_branch
      %63 = sbr.rel (0) target = $region25
    $region24: #{aeformer_forward.29} parent=1 // pred_region
      %64 = dma.done [#allocation6], 256
    $region25: #{aeformer_forward.29} parent=1 // pred_fallthru
      _
    // Predicated region
    $region26: #{aeformer_forward.29} parent=1 // pred_check
      _
    $region27: #{aeformer_forward.29} parent=1 // pred_check_branch
      %66 = sbr.rel (0) target = $region29
    $region28: #{aeformer_forward.29} parent=1 // pred_region
      %67 = dma.done [#allocation6], 16
    $region29: #{aeformer_forward.29} parent=1 // pred_fallthru
      _
    // Predicated region
    $region30: #{aeformer_forward.29} parent=1 // pred_check
      _
    $region31: #{aeformer_forward.29} parent=1 // pred_check_branch
      %69 = sbr.rel (0) target = $region33
    $region32: #{aeformer_forward.29} parent=1 // pred_region
      %70 = dma.done [#allocation9], 640
    $region33: #{aeformer_forward.29} parent=1 // pred_fallthru
      _
    %v72 = vld [vmem:[#allocation2] sm:$0xf]
    %v73 = vld [vmem:[#allocation2 + $0x4] sm:$0xf]
    %v74 = vld [vmem:[#allocation2 + $0x8] sm:$0xf]
    %v75 = vld [vmem:[#allocation2 + $0xc] sm:$0xf]
    %v76 = vld [vmem:[#allocation2 + $0x10] sm:$0x1]
    %v77 = vld [vmem:[#allocation5] sm:$0xf]
    %v78 = vld [vmem:[#allocation5 + $0x4] sm:$0xf]
    %v79 = vld [vmem:[#allocation5 + $0x8] sm:$0xf]
    %v80 = vld [vmem:[#allocation5 + $0xc] sm:$0xf]
    %v81 = vld [vmem:[#allocation7] sm:$0x1]
    %v83 = vlaneseq
    %v84 = vshrl.u32 %v83, 7
    %v85 = vsub.s32 0, %v84
    %v86 = vrot.slane %v81, %v85
    %v93 = vunpack.c.l.b16 %v72
    %v94 = vunpack.c.l.b16 %v73
    %v95 = vunpack.c.l.b16 %v74
    %v96 = vunpack.c.l.b16 %v75
    %v97 = vunpack.c.l.b16 %v76
    %v98 = vpack.c.b16 %v94, %v93
    %v99 = vpack.c.b16 %v96, %v95
    %v100 = vpack.c.b16 %v97, %v97
    %v105 = vunpack.c.l.b16 %v77
    %v106 = vunpack.c.l.b16 %v78
    %v107 = vunpack.c.l.b16 %v79
    %v108 = vunpack.c.l.b16 %v80
    %v109 = vpack.c.b16 %v106, %v105
    %v110 = vpack.c.b16 %v108, %v107
    %vm113 = vcmask 261120
    %v115 = vsel %vm113, %v98, 0
    %v118 = vsel %vm113, %v99, 0
    %v121 = vsel %vm113, %v100, 0
    %123 = vmatprep.subr.bf16.mxu0 0
    %124 = vmatpush1.bf16.msra.mxu0 %v109
    %125 = vmatprep.subr.bf16.mxu0 0
    %126 = vmatpush1.bf16.msra.mxu0 %v110
    %127 = vmatprep.subr.bf16.mxu0 0
    %128 = vmatpush1.bf16.msra.mxu0 0
    %129 = vmatprep.subr.bf16.mxu0 0
    %130 = vmatpush1.bf16.msra.mxu0 0
    %131 = vmatprep.subr.bf16.mxu0 0
    %132 = vmatpush1.bf16.msra.mxu0 0
    %133 = vmatprep.subr.bf16.mxu0 0
    %134 = vmatpush1.bf16.msra.mxu0 0
    %135 = vmatprep.subr.bf16.mxu0 0
    %136 = vmatpush1.bf16.msra.mxu0 0
    %137 = vmatprep.subr.bf16.mxu0 0
    %138 = vmatpush1.bf16.msra.mxu0 0
    %139 = vmatprep.subr.bf16.mxu0 0
    %140 = vmatpush1.bf16.msra.mxu0 0
    %141 = vmatprep.subr.bf16.mxu0 0
    %142 = vmatpush1.bf16.msra.mxu0 0
    %143 = vmatprep.subr.bf16.mxu0 0
    %144 = vmatpush1.bf16.msra.mxu0 0
    %145 = vmatprep.subr.bf16.mxu0 0
    %146 = vmatpush1.bf16.msra.mxu0 0
    %147 = vmatprep.subr.bf16.mxu0 0
    %148 = vmatpush1.bf16.msra.mxu0 0
    %149 = vmatprep.subr.bf16.mxu0 0
    %150 = vmatpush1.bf16.msra.mxu0 0
    %151 = vmatprep.subr.bf16.mxu0 0
    %152 = vmatpush1.bf16.msra.mxu0 0
    %153 = vmatprep.subr.bf16.mxu0 0
    %154 = vmatpush1.bf16.msra.mxu0 0
    %155 = vmatprep.mubr.bf16.mxu0 0
    %156 = vmatmul.mubr.bf16.gmra.mrb[0].mxu0 %v115
    %v157 = vpop.f32.mrb[0].mxu0
    %v158 = vadd.f32 %v86, %v157
    %v159 = vpop.f32.mrb[0].mxu0
    %v160 = vpop.f32.mrb[0].mxu0
    %v161 = vadd.f32 %v86, %v160
    %v162 = vpop.f32.mrb[0].mxu0
    %163 = vmatprep.mubr.bf16.mxu0 0
    %164 = vmatmul.mubr.bf16.gmra.mrb[0].mxu0 %v118
    %v165 = vpop.f32.mrb[0].mxu0
    %v166 = vadd.f32 %v86, %v165
    %v167 = vpop.f32.mrb[0].mxu0
    %v168 = vpop.f32.mrb[0].mxu0
    %v169 = vadd.f32 %v86, %v168
    %v170 = vpop.f32.mrb[0].mxu0
    %171 = vmatprep.mubr.bf16.mxu0 0
    %172 = vmatmul.mubr.bf16.gmra.mrb[0].mxu0 %v121
    %v173 = vpop.f32.mrb[0].mxu0
    %v174 = vadd.f32 %v86, %v173
    %v175 = vpop.f32.mrb[0].mxu0
    %v176 = vpop.f32.mrb[0].mxu0
    %v177 = vpop.f32.mrb[0].mxu0
    %178 = vdwg.mxu0
    %v179 = vld [vmem:[#allocation8] sm:$0xff]
    %v180 = vld [vmem:[#allocation8 + $0x8] sm:$0xff]
    %v181 = vld [vmem:[#allocation8 + $0x10] sm:$0xff]
    %v182 = vld [vmem:[#allocation8 + $0x18] sm:$0xff]
    %v183 = vld [vmem:[#allocation8 + $0x20] sm:$0x3]
    %v184 = vadd.f32 %v158, %v179
    %v185 = vadd.f32 %v161, %v180
    %v186 = vadd.f32 %v166, %v181
    %v187 = vadd.f32 %v169, %v182
    %v188 = vadd.f32 %v174, %v183
    %189 = vst.msk [vmem:[#allocation10] sm:$0xff] %vm113, %v184
    %190 = vst.msk [vmem:[#allocation10 + $0x8] sm:$0xff] %vm113, %v185
    %191 = vst.msk [vmem:[#allocation10 + $0x10] sm:$0xff] %vm113, %v186
    %192 = vst.msk [vmem:[#allocation10 + $0x18] sm:$0xff] %vm113, %v187
    %vm193 = vcmask 254976
    %194 = vst.msk [vmem:[#allocation10 + $0x20] sm:$0x3] %vm193, %v188
    // Predicated region
    $region34: #{aeformer_forward.29} parent=1 // pred_check
      _
    $region35: #{aeformer_forward.29} parent=1 // pred_check_branch
      %196 = sbr.rel (0) target = $region37
    $region36: #{aeformer_forward.29} parent=1 // pred_region
      %s198 = ssub.s32 640, 640
      %199 = vsyncadd [#allocation4], %s198
      %s200 = sshll.u32 [#allocation10], 4
      %s201 = int_to_ptr.vmem [resolvable:$true] %s200
      %206 = dma.vmem_to_hbm [thread:$0]  %s201, 640, %s4, [#allocation4], 128, 128, 8
    $region37: #{aeformer_forward.29} parent=1 // pred_fallthru
      _
    // Predicated region
    $region38: #{aeformer_forward.29} parent=1 // pred_check
      _
    $region39: #{aeformer_forward.29} parent=1 // pred_check_branch
      %208 = sbr.rel (0) target = $region41
    $region40: #{aeformer_forward.29} parent=1 // pred_region
      %209 = dma.done [#allocation4], 640
    $region41: #{aeformer_forward.29} parent=1 // pred_fallthru
      _
    %210 = vsyncpa [#allocation3], 1
    %211 = vsyncpa [#allocation6], 1
    %212 = vsyncpa [#allocation9], 1
    %213 = vsyncpa [#allocation4], 1

// kernel: aeformer_forward.28
$region0: #{aeformer_forward.28}
  #allocation0 [shape = 'u32[]', space=smem, size = 0x4, offset = 0x4, fixed_abs, tag = 'smem constant byte address 0x4 - core index']
  #allocation1 [shape = 'u32[144,128]{1,0:T(1,128)}', space=vmem, size = 0x12000, scoped, tag = 'internal scratch']
  %s0 = inlined_call_operand.hbm [shape: bf16[2,17,96], index: 0, kind: input, shape index: {}]
  %s1 = inlined_call_operand.hbm [shape: bf16[2,17,32], index: 1, kind: output, shape index: {}]
  %s2 = sld [smem:[#allocation0]]
  $region41: #{aeformer_forward.28} parent=0
    _
  %s4 = ssub.s32 1, %s2
  %s5 = scalar_select 0, %s4, %s2
  $region1: #{aeformer_forward.28} parent=0
    #allocation2 [shape = 'u8[12288]{0}', space=vmem, size = 0x3000, scoped, tag = 'input window, operand 0']
    #allocation3 [shape = 's32[2]{0}', space=sflag, size = 0x8, scoped, tag = 'scoped memory for aeformer_forward.28']
    #allocation4 [shape = 's32[2]{0}', space=sflag, size = 0x8, scoped, tag = 'scoped memory for aeformer_forward.28']
    #allocation5 [shape = 'u8[12288]{0}', space=vmem, size = 0x3000, scoped, tag = 'output window, operand 0']
    %6 = vsyncpa [#allocation3], 0
    %s7 = scalar_lea.sflag [#allocation3], 1
    %8 = vsyncpa %s7, 0
    %9 = vsyncpa [#allocation4], 0
    %s10 = scalar_lea.sflag [#allocation4], 1
    %11 = vsyncpa %s10, 0
    loop: start=0, step=1, limit=4
    $region2: #{aeformer_forward.28} parent=1 // loop_pre_header
      _
    $region3: #{aeformer_forward.28} parent=1 // loop_header
      %s13 = sphi 0, %s17
      %p14 = scmp.ge.s32.totalorder %s13, 4
      %s23 = sphi 0, %s25
      %s26 = sphi 0, %s23
      %s27 = sphi 0, %s26
      %s43 = sphi 0, %s27
      %s49 = sphi 0, %s51
      %s52 = sphi 0, %s49
      %s53 = sphi 0, %s52
      %s69 = sphi 0, %s53
    $region4: #{aeformer_forward.28} parent=1 // loop_header_branch
      %16 = sbr.rel (%p14) target = $region8
    $region5: #{aeformer_forward.28} parent=1 // loop_body
      %s18 = ssub.s32 %s13, 1
      %s19 = ssub.s32 %s13, 2
      %s20 = sadd.s32 %s13, 1
      %s21 = ssub.s32 %s13, %s20
      %p22 = scmp.eq.s32.totalorder %s21, 0
      %s24 = sadd.s32 %s23, 1
      %s25 = scalar_select %p22, %s23, %s24
      %p28 = pneg %p22
      %p29 = scmp.eq.s32.totalorder %s13, 1
      %p30 = por %p28, %p29
      %p31 = scmp.ne.s32.totalorder %s23, %s26
      %p32 = scmp.eq.s32.totalorder %s13, 0
      %p33 = por %p31, %p32
      %p34 = scmp.ne.s32.totalorder %s23, %s26
      %p35 = scmp.eq.s32.totalorder %s18, 1
      %p36 = por %p34, %p35
      %p37 = scmp.ne.s32.totalorder %s26, %s27
      %p38 = scmp.eq.s32.totalorder %s18, 0
      %p39 = por %p37, %p38
      %p40 = scmp.ne.s32.totalorder %s26, %s27
      %p41 = scmp.eq.s32.totalorder %s19, 1
      %p42 = por %p40, %p41
      %p44 = scmp.ne.s32.totalorder %s27, %s43
      %p45 = scmp.eq.s32.totalorder %s19, 0
      %p46 = por %p44, %p45
      %s47 = ssub.s32 %s13, %s20
      %p48 = scmp.eq.s32.totalorder %s47, 0
      %s50 = sadd.s32 %s49, 1
      %s51 = scalar_select %p48, %s49, %s50
      %p54 = pneg %p48
      %p55 = scmp.eq.s32.totalorder %s13, 1
      %p56 = por %p54, %p55
      %p57 = scmp.ne.s32.totalorder %s49, %s52
      %p58 = scmp.eq.s32.totalorder %s13, 0
      %p59 = por %p57, %p58
      %p60 = scmp.ne.s32.totalorder %s49, %s52
      %p61 = scmp.eq.s32.totalorder %s18, 1
      %p62 = por %p60, %p61
      %p63 = scmp.ne.s32.totalorder %s52, %s53
      %p64 = scmp.eq.s32.totalorder %s18, 0
      %p65 = por %p63, %p64
      %p66 = scmp.ne.s32.totalorder %s52, %s53
      %p67 = scmp.eq.s32.totalorder %s19, 1
      %p68 = por %p66, %p67
      %p70 = scmp.ne.s32.totalorder %s53, %s69
      %p71 = scmp.eq.s32.totalorder %s19, 0
      %p72 = por %p70, %p71
      %p73 = scmp.le.s32.totalorder 1, %s13
      %p74 = scmp.lt.s32.totalorder %s13, 3
      %p75 = pnand %p73, %p74
      %p76 = pneg %p75
      // Predicated region
      $region9: #{aeformer_forward.28} parent=5 // pred_check
        _
      $region10: #{aeformer_forward.28} parent=5 // pred_check_branch
        %78 = sbr.rel (%p75) target = $region12
      $region11: #{aeformer_forward.28} parent=5 // pred_region
        %s79 = ssub.s32 %s13, 1
      $region12: #{aeformer_forward.28} parent=5 // pred_fallthru
        _
      %p80 = scmp.lt.s32.totalorder %s13, 2
      // Predicated region
      $region13: #{aeformer_forward.28} parent=5 // pred_check
        %p81 = pneg %p80
      $region14: #{aeformer_forward.28} parent=5 // pred_check_branch
        %83 = sbr.rel (%p81) target = $region16
      $region15: #{aeformer_forward.28} parent=5 // pred_region
        // Predicated region
        $region17: #{aeformer_forward.28} parent=15 // pred_check
          %p84 = pneg %p33
        $region18: #{aeformer_forward.28} parent=15 // pred_check_branch
          %86 = sbr.rel (%p84) target = $region20
        $region19: #{aeformer_forward.28} parent=15 // pred_region
          %s87 = sand.u32 %s23, 1
          %s88 = scalar_lea.sflag [#allocation3], %s87
          %s89 = sand.u32 %s23, 1
          %s90 = smul.addr %s89, 12
          %s91 = scalar_lea.vmem [#allocation2], %s90
          %s93 = ssub.s32 192, 192
          %94 = vsyncadd %s88, %s93
          %s95 = smul.addr %s13, 3
          %s96 = smul.addr %s95, 64
          %s97 = scalar_lea.hbm %s0, %s96
          %s98 = sshll.u32 %s91, 4
          %s99 = int_to_ptr.vmem [resolvable:$true] %s98
          %104 = dma.hbm_to_vmem [thread:$0]  %s97, 192, %s99, %s88, 64, 64, 4
        $region20: #{aeformer_forward.28} parent=15 // pred_fallthru
          _
      $region16: #{aeformer_forward.28} parent=5 // pred_fallthru
        _
      %p105 = scmp.le.s32.totalorder 1, %s13
      %p106 = scmp.lt.s32.totalorder %s13, 3
      %p107 = pnand %p105, %p106
      %p108 = pneg %p107
      // Predicated region
      $region21: #{aeformer_forward.28} parent=5 // pred_check
        _
      $region22: #{aeformer_forward.28} parent=5 // pred_check_branch
        %110 = sbr.rel (%p107) target = $region24
      $region23: #{aeformer_forward.28} parent=5 // pred_region
        %s111 = ssub.s32 %s13, 1
        %s112 = sand.u32 %s26, 1
        %s113 = scalar_lea.sflag [#allocation3], %s112
        %s114 = sand.u32 %s26, 1
        %s115 = smul.addr %s114, 12
        %s116 = scalar_lea.vmem [#allocation2], %s115
        // Predicated region
        $region25: #{aeformer_forward.28} parent=23 // pred_check
          %p117 = pneg %p39
        $region26: #{aeformer_forward.28} parent=23 // pred_check_branch
          %119 = sbr.rel (%p117) target = $region28
        $region27: #{aeformer_forward.28} parent=23 // pred_region
          %120 = dma.done %s113, 192
        $region28: #{aeformer_forward.28} parent=23 // pred_fallthru
          _
        %s121 = sand.u32 %s26, 1
        %s122 = scalar_lea.sflag [#allocation3], %s121
        %s123 = sand.u32 %s26, 1
        %s124 = smul.addr %s123, 12
        %s125 = scalar_lea.vmem [#allocation2], %s124
        %p126 = pneg %p39
        %p127 = pneg %p36
        %p128 = pneg %p65
        %p129 = pneg %p62
        %s130 = sand.u32 %s52, 1
        %s131 = scalar_lea.sflag [#allocation4], %s130
        %s132 = sand.u32 %s52, 1
        %s133 = smul.addr %s132, 12
        %s134 = scalar_lea.vmem [#allocation5], %s133
        %v136 = vld [vmem:[%s116] sm:$0xf]
        %v137 = vld [vmem:[%s116 + $0x4] sm:$0xf]
        %v138 = vld [vmem:[%s116 + $0x8] sm:$0x1]
        %142 = vrot.lane.b32.xlu0 %v136, 120
        %v143 = vpop.permute.xlu0 %142
        %144 = vrot.lane.b32.xlu0 %v137, 120
        %v145 = vpop.permute.xlu0 %144
        %146 = vrot.lane.b32.xlu0 %v138, 120
        %v147 = vpop.permute.xlu0 %146
        %148 = vrot.lane.b32.xlu0 %v136, 112
        %v149 = vpop.permute.xlu0 %148
        %150 = vrot.lane.b32.xlu0 %v137, 112
        %v151 = vpop.permute.xlu0 %150
        %152 = vrot.lane.b32.xlu0 %v138, 112
        %v153 = vpop.permute.xlu0 %152
        %154 = vrot.lane.b32.xlu0 %v136, 104
        %v155 = vpop.permute.xlu0 %154
        %156 = vrot.lane.b32.xlu0 %v137, 104
        %v157 = vpop.permute.xlu0 %156
        %158 = vrot.lane.b32.xlu0 %v138, 104
        %v159 = vpop.permute.xlu0 %158
        %v161 = vunpack.c.l.s4 1983009808
        %v162 = vunpack.c.0.s8 %v161
        %v163 = vlaneseq
        %v164 = vshrl.u32 %v163, 7
        %v165 = vsub.s32 %v162, %v164
        %v166 = vrot.slane %v136, %v165
        %v169 = vunpack.c.l.s4 1983009808
        %v170 = vunpack.c.0.s8 %v169
        %v171 = vlaneseq
        %v172 = vshrl.u32 %v171, 7
        %v173 = vsub.s32 %v170, %v172
        %v174 = vrot.slane %v149, %v173
        %v175 = vcombine.low %v166, %v174
        %v176 = vcombine.high %v166, %v174
        %v178 = vunpack.c.l.s4 1934713408
        %v179 = vunpack.c.0.s8 %v178
        %v180 = vlaneseq
        %v181 = vshrl.u32 %v180, 7
        %v182 = vsub.s32 %v179, %v181
        %v183 = vrot.slane %v175, %v182
        %v185 = vunpack.c.l.s4 1934713408
        %v186 = vunpack.c.0.s8 %v185
        %v187 = vlaneseq
        %v188 = vshrl.u32 %v187, 7
        %v189 = vsub.s32 %v186, %v188
        %v190 = vrot.slane %v176, %v189
        %v191 = vcombine.high %v183, 0
        %v192 = vcombine.high %v190, 0
        %v195 = vunpack.c.l.s4 1983009808
        %v196 = vunpack.c.0.s8 %v195
        %v197 = vlaneseq
        %v198 = vshrl.u32 %v197, 7
        %v199 = vsub.s32 %v196, %v198
        %v200 = vrot.slane %v143, %v199
        %v203 = vunpack.c.l.s4 1983009808
        %v204 = vunpack.c.0.s8 %v203
        %v205 = vlaneseq
        %v206 = vshrl.u32 %v205, 7
        %v207 = vsub.s32 %v204, %v206
        %v208 = vrot.slane %v155, %v207
        %v209 = vcombine.low %v200, %v208
        %v210 = vcombine.high %v200, %v208
        %v212 = vunpack.c.l.s4 1934713408
        %v213 = vunpack.c.0.s8 %v212
        %v214 = vlaneseq
        %v215 = vshrl.u32 %v214, 7
        %v216 = vsub.s32 %v213, %v215
        %v217 = vrot.slane %v209, %v216
        %v219 = vunpack.c.l.s4 1934713408
        %v220 = vunpack.c.0.s8 %v219
        %v221 = vlaneseq
        %v222 = vshrl.u32 %v221, 7
        %v223 = vsub.s32 %v220, %v222
        %v224 = vrot.slane %v210, %v223
        %v225 = vcombine.high %v217, 0
        %v226 = vcombine.high %v224, 0
        %v228 = vunpack.c.l.s4 1983009808
        %v229 = vunpack.c.0.s8 %v228
        %v230 = vlaneseq
        %v231 = vshrl.u32 %v230, 7
        %v232 = vsub.s32 %v229, %v231
        %v233 = vrot.slane %v137, %v232
        %v236 = vunpack.c.l.s4 1983009808
        %v237 = vunpack.c.0.s8 %v236
        %v238 = vlaneseq
        %v239 = vshrl.u32 %v238, 7
        %v240 = vsub.s32 %v237, %v239
        %v241 = vrot.slane %v151, %v240
        %v242 = vcombine.low %v233, %v241
        %v243 = vcombine.high %v233, %v241
        %v245 = vunpack.c.l.s4 1934713408
        %v246 = vunpack.c.0.s8 %v245
        %v247 = vlaneseq
        %v248 = vshrl.u32 %v247, 7
        %v249 = vsub.s32 %v246, %v248
        %v250 = vrot.slane %v242, %v249
        %v252 = vunpack.c.l.s4 1934713408
        %v253 = vunpack.c.0.s8 %v252
        %v254 = vlaneseq
        %v255 = vshrl.u32 %v254, 7
        %v256 = vsub.s32 %v253, %v255
        %v257 = vrot.slane %v243, %v256
        %v258 = vcombine.high %v250, 0
        %v259 = vcombine.high %v257, 0
        %v262 = vunpack.c.l.s4 1983009808
        %v263 = vunpack.c.0.s8 %v262
        %v264 = vlaneseq
        %v265 = vshrl.u32 %v264, 7
        %v266 = vsub.s32 %v263, %v265
        %v267 = vrot.slane %v145, %v266
        %v270 = vunpack.c.l.s4 1983009808
        %v271 = vunpack.c.0.s8 %v270
        %v272 = vlaneseq
        %v273 = vshrl.u32 %v272, 7
        %v274 = vsub.s32 %v271, %v273
        %v275 = vrot.slane %v157, %v274
        %v276 = vcombine.low %v267, %v275
        %v277 = vcombine.high %v267, %v275
        %v279 = vunpack.c.l.s4 1934713408
        %v280 = vunpack.c.0.s8 %v279
        %v281 = vlaneseq
        %v282 = vshrl.u32 %v281, 7
        %v283 = vsub.s32 %v280, %v282
        %v284 = vrot.slane %v276, %v283
        %v286 = vunpack.c.l.s4 1934713408
        %v287 = vunpack.c.0.s8 %v286
        %v288 = vlaneseq
        %v289 = vshrl.u32 %v288, 7
        %v290 = vsub.s32 %v287, %v289
        %v291 = vrot.slane %v277, %v290
        %v292 = vcombine.high %v284, 0
        %v293 = vcombine.high %v291, 0
        %v295 = vcombine.low %v138, %v153
        %v297 = vunpack.c.l.s4 1934713408
        %v298 = vunpack.c.0.s8 %v297
        %v299 = vlaneseq
        %v300 = vshrl.u32 %v299, 7
        %v301 = vsub.s32 %v298, %v300
        %v302 = vrot.slane %v295, %v301
        %v305 = vcombine.low %v147, %v159
        %v307 = vunpack.c.l.s4 1934713408
        %v308 = vunpack.c.0.s8 %v307
        %v309 = vlaneseq
        %v310 = vshrl.u32 %v309, 7
        %v311 = vsub.s32 %v308, %v310
        %v312 = vrot.slane %v305, %v311
        %v315 = vpack.i.b16 %v217, %v183
        %v317 = vshrl.u32 %v183, 16
        %v318 = vshrl.u32 %v217, 16
        %v319 = vpack.i.b16 %v318, %v317
        %v323 = vpack.i.b16 %v225, %v191
        %v325 = vshrl.u32 %v191, 16
        %v326 = vshrl.u32 %v225, 16
        %v327 = vpack.i.b16 %v326, %v325
        %v331 = vpack.i.b16 %v224, %v190
        %v333 = vshrl.u32 %v190, 16
        %v334 = vshrl.u32 %v224, 16
        %v335 = vpack.i.b16 %v334, %v333
        %v339 = vpack.i.b16 %v226, %v192
        %v341 = vshrl.u32 %v192, 16
        %v342 = vshrl.u32 %v226, 16
        %v343 = vpack.i.b16 %v342, %v341
        %v347 = vpack.i.b16 %v284, %v250
        %v349 = vshrl.u32 %v250, 16
        %v350 = vshrl.u32 %v284, 16
        %v351 = vpack.i.b16 %v350, %v349
        %v355 = vpack.i.b16 %v292, %v258
        %v357 = vshrl.u32 %v258, 16
        %v358 = vshrl.u32 %v292, 16
        %v359 = vpack.i.b16 %v358, %v357
        %v363 = vpack.i.b16 %v291, %v257
        %v365 = vshrl.u32 %v257, 16
        %v366 = vshrl.u32 %v291, 16
        %v367 = vpack.i.b16 %v366, %v365
        %v371 = vpack.i.b16 %v293, %v259
        %v373 = vshrl.u32 %v259, 16
        %v374 = vshrl.u32 %v293, 16
        %v375 = vpack.i.b16 %v374, %v373
        %v379 = vpack.i.b16 %v312, %v302
        %v380 = vcombine.low %v315, %v331
        %v382 = vunpack.c.l.s4 1983009808
        %v383 = vunpack.c.0.s8 %v382
        %v384 = vlaneseq
        %v385 = vshrl.u32 %v384, 7
        %v386 = vsub.s32 %v383, %v385
        %v387 = vrot.slane %v380, %v386
        %v388 = vcombine.low %v323, %v339
        %v390 = vunpack.c.l.s4 1983009808
        %v391 = vunpack.c.0.s8 %v390
        %v392 = vlaneseq
        %v393 = vshrl.u32 %v392, 7
        %v394 = vsub.s32 %v391, %v393
        %v395 = vrot.slane %v388, %v394
        %v396 = vcombine.low %v387, %v395
        %v398 = vunpack.c.l.s4 1934713408
        %v399 = vunpack.c.0.s8 %v398
        %v400 = vlaneseq
        %v401 = vshrl.u32 %v400, 7
        %v402 = vsub.s32 %v399, %v401
        %v403 = vrot.slane %v396, %v402
        %v404 = vcombine.high %v403, 0
        %v405 = vcombine.low %v319, %v335
        %v407 = vunpack.c.l.s4 1983009808
        %v408 = vunpack.c.0.s8 %v407
        %v409 = vlaneseq
        %v410 = vshrl.u32 %v409, 7
        %v411 = vsub.s32 %v408, %v410
        %v412 = vrot.slane %v405, %v411
        %v413 = vcombine.low %v327, %v343
        %v415 = vunpack.c.l.s4 1983009808
        %v416 = vunpack.c.0.s8 %v415
        %v417 = vlaneseq
        %v418 = vshrl.u32 %v417, 7
        %v419 = vsub.s32 %v416, %v418
        %v420 = vrot.slane %v413, %v419
        %v421 = vcombine.low %v412, %v420
        %v423 = vunpack.c.l.s4 1934713408
        %v424 = vunpack.c.0.s8 %v423
        %v425 = vlaneseq
        %v426 = vshrl.u32 %v425, 7
        %v427 = vsub.s32 %v424, %v426
        %v428 = vrot.slane %v421, %v427
        %v429 = vcombine.high %v428, 0
        %v430 = vcombine.low %v347, %v363
        %v432 = vunpack.c.l.s4 1983009808
        %v433 = vunpack.c.0.s8 %v432
        %v434 = vlaneseq
        %v435 = vshrl.u32 %v434, 7
        %v436 = vsub.s32 %v433, %v435
        %v437 = vrot.slane %v430, %v436
        %v438 = vcombine.low %v355, %v371
        %v440 = vunpack.c.l.s4 1983009808
        %v441 = vunpack.c.0.s8 %v440
        %v442 = vlaneseq
        %v443 = vshrl.u32 %v442, 7
        %v444 = vsub.s32 %v441, %v443
        %v445 = vrot.slane %v438, %v444
        %v446 = vcombine.low %v437, %v445
        %v448 = vunpack.c.l.s4 1934713408
        %v449 = vunpack.c.0.s8 %v448
        %v450 = vlaneseq
        %v451 = vshrl.u32 %v450, 7
        %v452 = vsub.s32 %v449, %v451
        %v453 = vrot.slane %v446, %v452
        %v454 = vcombine.high %v453, 0
        %v455 = vcombine.low %v351, %v367
        %v457 = vunpack.c.l.s4 1983009808
        %v458 = vunpack.c.0.s8 %v457
        %v459 = vlaneseq
        %v460 = vshrl.u32 %v459, 7
        %v461 = vsub.s32 %v458, %v460
        %v462 = vrot.slane %v455, %v461
        %v463 = vcombine.low %v359, %v375
        %v465 = vunpack.c.l.s4 1983009808
        %v466 = vunpack.c.0.s8 %v465
        %v467 = vlaneseq
        %v468 = vshrl.u32 %v467, 7
        %v469 = vsub.s32 %v466, %v468
        %v470 = vrot.slane %v463, %v469
        %v471 = vcombine.low %v462, %v470
        %v473 = vunpack.c.l.s4 1934713408
        %v474 = vunpack.c.0.s8 %v473
        %v475 = vlaneseq
        %v476 = vshrl.u32 %v475, 7
        %v477 = vsub.s32 %v474, %v476
        %v478 = vrot.slane %v471, %v477
        %v479 = vcombine.high %v478, 0
        %v482 = vunpack.c.l.s4 1934713408
        %v483 = vunpack.c.0.s8 %v482
        %v484 = vlaneseq
        %v485 = vshrl.u32 %v484, 7
        %v486 = vsub.s32 %v483, %v485
        %v487 = vrot.slane %v379, %v486
        %v488 = vcombine.high %v487, 0
        %v491 = vpack.i.b16 %v428, %v403
        %v493 = vshrl.u32 %v403, 16
        %v494 = vshrl.u32 %v428, 16
        %v495 = vpack.i.b16 %v494, %v493
        %v499 = vpack.i.b16 %v429, %v404
        %v501 = vshrl.u32 %v404, 16
        %v502 = vshrl.u32 %v429, 16
        %v503 = vpack.i.b16 %v502, %v501
        %v507 = vpack.i.b16 %v478, %v453
        %v509 = vshrl.u32 %v453, 16
        %v510 = vshrl.u32 %v478, 16
        %v511 = vpack.i.b16 %v510, %v509
        %v515 = vpack.i.b16 %v479, %v454
        %v517 = vshrl.u32 %v454, 16
        %v518 = vshrl.u32 %v479, 16
        %v519 = vpack.i.b16 %v518, %v517
        %v523 = vpack.i.b16 0, %v487
        %v525 = vshrl.u32 %v487, 16
        %v526 = vshrl.u32 0, 16
        %v527 = vpack.i.b16 %v526, %v525
        %v530 = vpack.i.b16 0, %v488
        %v532 = vshrl.u32 %v488, 16
        %v533 = vpack.i.b16 %v526, %v532
        %535 = vrot.lane.b32.xlu0 %v136, 96
        %v536 = vpop.permute.xlu0 %535
        %537 = vrot.lane.b32.xlu0 %v137, 96
        %v538 = vpop.permute.xlu0 %537
        %539 = vrot.lane.b32.xlu0 %v138, 96
        %v540 = vpop.permute.xlu0 %539
        %541 = vrot.lane.b32.xlu0 %v143, 96
        %v542 = vpop.permute.xlu0 %541
        %543 = vrot.lane.b32.xlu0 %v145, 96
        %v544 = vpop.permute.xlu0 %543
        %545 = vrot.lane.b32.xlu0 %v147, 96
        %v546 = vpop.permute.xlu0 %545
        %547 = vrot.lane.b32.xlu0 %v149, 96
        %v548 = vpop.permute.xlu0 %547
        %549 = vrot.lane.b32.xlu0 %v151, 96
        %v550 = vpop.permute.xlu0 %549
        %551 = vrot.lane.b32.xlu0 %v153, 96
        %v552 = vpop.permute.xlu0 %551
        %553 = vrot.lane.b32.xlu0 %v155, 96
        %v554 = vpop.permute.xlu0 %553
        %555 = vrot.lane.b32.xlu0 %v157, 96
        %v556 = vpop.permute.xlu0 %555
        %557 = vrot.lane.b32.xlu0 %v159, 96
        %v558 = vpop.permute.xlu0 %557
        %v561 = vunpack.c.l.s4 1983009808
        %v562 = vunpack.c.0.s8 %v561
        %v563 = vlaneseq
        %v564 = vshrl.u32 %v563, 7
        %v565 = vsub.s32 %v562, %v564
        %v566 = vrot.slane %v536, %v565
        %v569 = vunpack.c.l.s4 1983009808
        %v570 = vunpack.c.0.s8 %v569
        %v571 = vlaneseq
        %v572 = vshrl.u32 %v571, 7
        %v573 = vsub.s32 %v570, %v572
        %v574 = vrot.slane %v548, %v573
        %v575 = vcombine.low %v566, %v574
        %v576 = vcombine.high %v566, %v574
        %v578 = vunpack.c.l.s4 1934713408
        %v579 = vunpack.c.0.s8 %v578
        %v580 = vlaneseq
        %v581 = vshrl.u32 %v580, 7
        %v582 = vsub.s32 %v579, %v581
        %v583 = vrot.slane %v575, %v582
        %v585 = vunpack.c.l.s4 1934713408
        %v586 = vunpack.c.0.s8 %v585
        %v587 = vlaneseq
        %v588 = vshrl.u32 %v587, 7
        %v589 = vsub.s32 %v586, %v588
        %v590 = vrot.slane %v576, %v589
        %v591 = vcombine.high %v583, 0
        %v592 = vcombine.high %v590, 0
        %v595 = vunpack.c.l.s4 1983009808
        %v596 = vunpack.c.0.s8 %v595
        %v597 = vlaneseq
        %v598 = vshrl.u32 %v597, 7
        %v599 = vsub.s32 %v596, %v598
        %v600 = vrot.slane %v542, %v599
        %v603 = vunpack.c.l.s4 1983009808
        %v604 = vunpack.c.0.s8 %v603
        %v605 = vlaneseq
        %v606 = vshrl.u32 %v605, 7
        %v607 = vsub.s32 %v604, %v606
        %v608 = vrot.slane %v554, %v607
        %v609 = vcombine.low %v600, %v608
        %v610 = vcombine.high %v600, %v608
        %v612 = vunpack.c.l.s4 1934713408
        %v613 = vunpack.c.0.s8 %v612
        %v614 = vlaneseq
        %v615 = vshrl.u32 %v614, 7
        %v616 = vsub.s32 %v613, %v615
        %v617 = vrot.slane %v609, %v616
        %v619 = vunpack.c.l.s4 1934713408
        %v620 = vunpack.c.0.s8 %v619
        %v621 = vlaneseq
        %v622 = vshrl.u32 %v621, 7
        %v623 = vsub.s32 %v620, %v622
        %v624 = vrot.slane %v610, %v623
        %v625 = vcombine.high %v617, 0
        %v626 = vcombine.high %v624, 0
        %v629 = vunpack.c.l.s4 1983009808
        %v630 = vunpack.c.0.s8 %v629
        %v631 = vlaneseq
        %v632 = vshrl.u32 %v631, 7
        %v633 = vsub.s32 %v630, %v632
        %v634 = vrot.slane %v538, %v633
        %v637 = vunpack.c.l.s4 1983009808
        %v638 = vunpack.c.0.s8 %v637
        %v639 = vlaneseq
        %v640 = vshrl.u32 %v639, 7
        %v641 = vsub.s32 %v638, %v640
        %v642 = vrot.slane %v550, %v641
        %v643 = vcombine.low %v634, %v642
        %v644 = vcombine.high %v634, %v642
        %v646 = vunpack.c.l.s4 1934713408
        %v647 = vunpack.c.0.s8 %v646
        %v648 = vlaneseq
        %v649 = vshrl.u32 %v648, 7
        %v650 = vsub.s32 %v647, %v649
        %v651 = vrot.slane %v643, %v650
        %v653 = vunpack.c.l.s4 1934713408
        %v654 = vunpack.c.0.s8 %v653
        %v655 = vlaneseq
        %v656 = vshrl.u32 %v655, 7
        %v657 = vsub.s32 %v654, %v656
        %v658 = vrot.slane %v644, %v657
        %v659 = vcombine.high %v651, 0
        %v660 = vcombine.high %v658, 0
        %v663 = vunpack.c.l.s4 1983009808
        %v664 = vunpack.c.0.s8 %v663
        %v665 = vlaneseq
        %v666 = vshrl.u32 %v665, 7
        %v667 = vsub.s32 %v664, %v666
        %v668 = vrot.slane %v544, %v667
        %v671 = vunpack.c.l.s4 1983009808
        %v672 = vunpack.c.0.s8 %v671
        %v673 = vlaneseq
        %v674 = vshrl.u32 %v673, 7
        %v675 = vsub.s32 %v672, %v674
        %v676 = vrot.slane %v556, %v675
        %v677 = vcombine.low %v668, %v676
        %v678 = vcombine.high %v668, %v676
        %v680 = vunpack.c.l.s4 1934713408
        %v681 = vunpack.c.0.s8 %v680
        %v682 = vlaneseq
        %v683 = vshrl.u32 %v682, 7
        %v684 = vsub.s32 %v681, %v683
        %v685 = vrot.slane %v677, %v684
        %v687 = vunpack.c.l.s4 1934713408
        %v688 = vunpack.c.0.s8 %v687
        %v689 = vlaneseq
        %v690 = vshrl.u32 %v689, 7
        %v691 = vsub.s32 %v688, %v690
        %v692 = vrot.slane %v678, %v691
        %v693 = vcombine.high %v685, 0
        %v694 = vcombine.high %v692, 0
        %v697 = vcombine.low %v540, %v552
        %v699 = vunpack.c.l.s4 1934713408
        %v700 = vunpack.c.0.s8 %v699
        %v701 = vlaneseq
        %v702 = vshrl.u32 %v701, 7
        %v703 = vsub.s32 %v700, %v702
        %v704 = vrot.slane %v697, %v703
        %v707 = vcombine.low %v546, %v558
        %v709 = vunpack.c.l.s4 1934713408
        %v710 = vunpack.c.0.s8 %v709
        %v711 = vlaneseq
        %v712 = vshrl.u32 %v711, 7
        %v713 = vsub.s32 %v710, %v712
        %v714 = vrot.slane %v707, %v713
        %v717 = vpack.i.b16 %v617, %v583
        %v719 = vshrl.u32 %v583, 16
        %v720 = vshrl.u32 %v617, 16
        %v721 = vpack.i.b16 %v720, %v719
        %v725 = vpack.i.b16 %v625, %v591
        %v727 = vshrl.u32 %v591, 16
        %v728 = vshrl.u32 %v625, 16
        %v729 = vpack.i.b16 %v728, %v727
        %v733 = vpack.i.b16 %v624, %v590
        %v735 = vshrl.u32 %v590, 16
        %v736 = vshrl.u32 %v624, 16
        %v737 = vpack.i.b16 %v736, %v735
        %v741 = vpack.i.b16 %v626, %v592
        %v743 = vshrl.u32 %v592, 16
        %v744 = vshrl.u32 %v626, 16
        %v745 = vpack.i.b16 %v744, %v743
        %v749 = vpack.i.b16 %v685, %v651
        %v751 = vshrl.u32 %v651, 16
        %v752 = vshrl.u32 %v685, 16
        %v753 = vpack.i.b16 %v752, %v751
        %v757 = vpack.i.b16 %v693, %v659
        %v759 = vshrl.u32 %v659, 16
        %v760 = vshrl.u32 %v693, 16
        %v761 = vpack.i.b16 %v760, %v759
        %v765 = vpack.i.b16 %v692, %v658
        %v767 = vshrl.u32 %v658, 16
        %v768 = vshrl.u32 %v692, 16
        %v769 = vpack.i.b16 %v768, %v767
        %v773 = vpack.i.b16 %v694, %v660
        %v775 = vshrl.u32 %v660, 16
        %v776 = vshrl.u32 %v694, 16
        %v777 = vpack.i.b16 %v776, %v775
        %v781 = vpack.i.b16 %v714, %v704
        %v782 = vcombine.low %v717, %v733
        %v784 = vunpack.c.l.s4 1983009808
        %v785 = vunpack.c.0.s8 %v784
        %v786 = vlaneseq
        %v787 = vshrl.u32 %v786, 7
        %v788 = vsub.s32 %v785, %v787
        %v789 = vrot.slane %v782, %v788
        %v790 = vcombine.low %v725, %v741
        %v792 = vunpack.c.l.s4 1983009808
        %v793 = vunpack.c.0.s8 %v792
        %v794 = vlaneseq
        %v795 = vshrl.u32 %v794, 7
        %v796 = vsub.s32 %v793, %v795
        %v797 = vrot.slane %v790, %v796
        %v798 = vcombine.low %v789, %v797
        %v800 = vunpack.c.l.s4 1934713408
        %v801 = vunpack.c.0.s8 %v800
        %v802 = vlaneseq
        %v803 = vshrl.u32 %v802, 7
        %v804 = vsub.s32 %v801, %v803
        %v805 = vrot.slane %v798, %v804
        %v806 = vcombine.high %v805, 0
        %v807 = vcombine.low %v721, %v737
        %v809 = vunpack.c.l.s4 1983009808
        %v810 = vunpack.c.0.s8 %v809
        %v811 = vlaneseq
        %v812 = vshrl.u32 %v811, 7
        %v813 = vsub.s32 %v810, %v812
        %v814 = vrot.slane %v807, %v813
        %v815 = vcombine.low %v729, %v745
        %v817 = vunpack.c.l.s4 1983009808
        %v818 = vunpack.c.0.s8 %v817
        %v819 = vlaneseq
        %v820 = vshrl.u32 %v819, 7
        %v821 = vsub.s32 %v818, %v820
        %v822 = vrot.slane %v815, %v821
        %v823 = vcombine.low %v814, %v822
        %v825 = vunpack.c.l.s4 1934713408
        %v826 = vunpack.c.0.s8 %v825
        %v827 = vlaneseq
        %v828 = vshrl.u32 %v827, 7
        %v829 = vsub.s32 %v826, %v828
        %v830 = vrot.slane %v823, %v829
        %v831 = vcombine.high %v830, 0
        %v832 = vcombine.low %v749, %v765
        %v834 = vunpack.c.l.s4 1983009808
        %v835 = vunpack.c.0.s8 %v834
        %v836 = vlaneseq
        %v837 = vshrl.u32 %v836, 7
        %v838 = vsub.s32 %v835, %v837
        %v839 = vrot.slane %v832, %v838
        %v840 = vcombine.low %v757, %v773
        %v842 = vunpack.c.l.s4 1983009808
        %v843 = vunpack.c.0.s8 %v842
        %v844 = vlaneseq
        %v845 = vshrl.u32 %v844, 7
        %v846 = vsub.s32 %v843, %v845
        %v847 = vrot.slane %v840, %v846
        %v848 = vcombine.low %v839, %v847
        %v850 = vunpack.c.l.s4 1934713408
        %v851 = vunpack.c.0.s8 %v850
        %v852 = vlaneseq
        %v853 = vshrl.u32 %v852, 7
        %v854 = vsub.s32 %v851, %v853
        %v855 = vrot.slane %v848, %v854
        %v856 = vcombine.high %v855, 0
        %v857 = vcombine.low %v753, %v769
        %v859 = vunpack.c.l.s4 1983009808
        %v860 = vunpack.c.0.s8 %v859
        %v861 = vlaneseq
        %v862 = vshrl.u32 %v861, 7
        %v863 = vsub.s32 %v860, %v862
        %v864 = vrot.slane %v857, %v863
        %v865 = vcombine.low %v761, %v777
        %v867 = vunpack.c.l.s4 1983009808
        %v868 = vunpack.c.0.s8 %v867
        %v869 = vlaneseq
        %v870 = vshrl.u32 %v869, 7
        %v871 = vsub.s32 %v868, %v870
        %v872 = vrot.slane %v865, %v871
        %v873 = vcombine.low %v864, %v872
        %v875 = vunpack.c.l.s4 1934713408
        %v876 = vunpack.c.0.s8 %v875
        %v877 = vlaneseq
        %v878 = vshrl.u32 %v877, 7
        %v879 = vsub.s32 %v876, %v878
        %v880 = vrot.slane %v873, %v879
        %v881 = vcombine.high %v880, 0
        %v884 = vunpack.c.l.s4 1934713408
        %v885 = vunpack.c.0.s8 %v884
        %v886 = vlaneseq
        %v887 = vshrl.u32 %v886, 7
        %v888 = vsub.s32 %v885, %v887
        %v889 = vrot.slane %v781, %v888
        %v890 = vcombine.high %v889, 0
        %v893 = vpack.i.b16 %v830, %v805
        %v894 = vshrl.u32 %v805, 16
        %v895 = vshrl.u32 %v830, 16
        %v896 = vpack.i.b16 %v895, %v894
        %v899 = vpack.i.b16 %v831, %v806
        %v900 = vshrl.u32 %v806, 16
        %v901 = vshrl.u32 %v831, 16
        %v902 = vpack.i.b16 %v901, %v900
        %v905 = vpack.i.b16 %v880, %v855
        %v906 = vshrl.u32 %v855, 16
        %v907 = vshrl.u32 %v880, 16
        %v908 = vpack.i.b16 %v907, %v906
        %v911 = vpack.i.b16 %v881, %v856
        %v912 = vshrl.u32 %v856, 16
        %v913 = vshrl.u32 %v881, 16
        %v914 = vpack.i.b16 %v913, %v912
        %v916 = vpack.i.b16 0, %v889
        %v917 = vshrl.u32 %v889, 16
        %v918 = vpack.i.b16 %v526, %v917
        %v920 = vpack.i.b16 0, %v890
        %v921 = vshrl.u32 %v890, 16
        %v922 = vpack.i.b16 %v526, %v921
        %923 = vrot.lane.b32.xlu0 %v136, 64
        %v924 = vpop.permute.xlu0 %923
        %925 = vrot.lane.b32.xlu0 %v137, 64
        %v926 = vpop.permute.xlu0 %925
        %927 = vrot.lane.b32.xlu0 %v138, 64
        %v928 = vpop.permute.xlu0 %927
        %929 = vrot.lane.b32.xlu0 %v143, 64
        %v930 = vpop.permute.xlu0 %929
        %931 = vrot.lane.b32.xlu0 %v145, 64
        %v932 = vpop.permute.xlu0 %931
        %933 = vrot.lane.b32.xlu0 %v147, 64
        %v934 = vpop.permute.xlu0 %933
        %935 = vrot.lane.b32.xlu0 %v149, 64
        %v936 = vpop.permute.xlu0 %935
        %937 = vrot.lane.b32.xlu0 %v151, 64
        %v938 = vpop.permute.xlu0 %937
        %939 = vrot.lane.b32.xlu0 %v153, 64
        %v940 = vpop.permute.xlu0 %939
        %941 = vrot.lane.b32.xlu0 %v155, 64
        %v942 = vpop.permute.xlu0 %941
        %943 = vrot.lane.b32.xlu0 %v157, 64
        %v944 = vpop.permute.xlu0 %943
        %945 = vrot.lane.b32.xlu0 %v159, 64
        %v946 = vpop.permute.xlu0 %945
        %v949 = vunpack.c.l.s4 1983009808
        %v950 = vunpack.c.0.s8 %v949
        %v951 = vlaneseq
        %v952 = vshrl.u32 %v951, 7
        %v953 = vsub.s32 %v950, %v952
        %v954 = vrot.slane %v924, %v953
        %v957 = vunpack.c.l.s4 1983009808
        %v958 = vunpack.c.0.s8 %v957
        %v959 = vlaneseq
        %v960 = vshrl.u32 %v959, 7
        %v961 = vsub.s32 %v958, %v960
        %v962 = vrot.slane %v936, %v961
        %v963 = vcombine.low %v954, %v962
        %v964 = vcombine.high %v954, %v962
        %v966 = vunpack.c.l.s4 1934713408
        %v967 = vunpack.c.0.s8 %v966
        %v968 = vlaneseq
        %v969 = vshrl.u32 %v968, 7
        %v970 = vsub.s32 %v967, %v969
        %v971 = vrot.slane %v963, %v970
        %v973 = vunpack.c.l.s4 1934713408
        %v974 = vunpack.c.0.s8 %v973
        %v975 = vlaneseq
        %v976 = vshrl.u32 %v975, 7
        %v977 = vsub.s32 %v974, %v976
        %v978 = vrot.slane %v964, %v977
        %v979 = vcombine.high %v971, 0
        %v980 = vcombine.high %v978, 0
        %v983 = vunpack.c.l.s4 1983009808
        %v984 = vunpack.c.0.s8 %v983
        %v985 = vlaneseq
        %v986 = vshrl.u32 %v985, 7
        %v987 = vsub.s32 %v984, %v986
        %v988 = vrot.slane %v930, %v987
        %v991 = vunpack.c.l.s4 1983009808
        %v992 = vunpack.c.0.s8 %v991
        %v993 = vlaneseq
        %v994 = vshrl.u32 %v993, 7
        %v995 = vsub.s32 %v992, %v994
        %v996 = vrot.slane %v942, %v995
        %v997 = vcombine.low %v988, %v996
        %v998 = vcombine.high %v988, %v996
        %v1000 = vunpack.c.l.s4 1934713408
        %v1001 = vunpack.c.0.s8 %v1000
        %v1002 = vlaneseq
        %v1003 = vshrl.u32 %v1002, 7
        %v1004 = vsub.s32 %v1001, %v1003
        %v1005 = vrot.slane %v997, %v1004
        %v1007 = vunpack.c.l.s4 1934713408
        %v1008 = vunpack.c.0.s8 %v1007
        %v1009 = vlaneseq
        %v1010 = vshrl.u32 %v1009, 7
        %v1011 = vsub.s32 %v1008, %v1010
        %v1012 = vrot.slane %v998, %v1011
        %v1013 = vcombine.high %v1005, 0
        %v1014 = vcombine.high %v1012, 0
        %v1017 = vunpack.c.l.s4 1983009808
        %v1018 = vunpack.c.0.s8 %v1017
        %v1019 = vlaneseq
        %v1020 = vshrl.u32 %v1019, 7
        %v1021 = vsub.s32 %v1018, %v1020
        %v1022 = vrot.slane %v926, %v1021
        %v1025 = vunpack.c.l.s4 1983009808
        %v1026 = vunpack.c.0.s8 %v1025
        %v1027 = vlaneseq
        %v1028 = vshrl.u32 %v1027, 7
        %v1029 = vsub.s32 %v1026, %v1028
        %v1030 = vrot.slane %v938, %v1029
        %v1031 = vcombine.low %v1022, %v1030
        %v1032 = vcombine.high %v1022, %v1030
        %v1034 = vunpack.c.l.s4 1934713408
        %v1035 = vunpack.c.0.s8 %v1034
        %v1036 = vlaneseq
        %v1037 = vshrl.u32 %v1036, 7
        %v1038 = vsub.s32 %v1035, %v1037
        %v1039 = vrot.slane %v1031, %v1038
        %v1041 = vunpack.c.l.s4 1934713408
        %v1042 = vunpack.c.0.s8 %v1041
        %v1043 = vlaneseq
        %v1044 = vshrl.u32 %v1043, 7
        %v1045 = vsub.s32 %v1042, %v1044
        %v1046 = vrot.slane %v1032, %v1045
        %v1047 = vcombine.high %v1039, 0
        %v1048 = vcombine.high %v1046, 0
        %v1051 = vunpack.c.l.s4 1983009808
        %v1052 = vunpack.c.0.s8 %v1051
        %v1053 = vlaneseq
        %v1054 = vshrl.u32 %v1053, 7
        %v1055 = vsub.s32 %v1052, %v1054
        %v1056 = vrot.slane %v932, %v1055
        %v1059 = vunpack.c.l.s4 1983009808
        %v1060 = vunpack.c.0.s8 %v1059
        %v1061 = vlaneseq
        %v1062 = vshrl.u32 %v1061, 7
        %v1063 = vsub.s32 %v1060, %v1062
        %v1064 = vrot.slane %v944, %v1063
        %v1065 = vcombine.low %v1056, %v1064
        %v1066 = vcombine.high %v1056, %v1064
        %v1068 = vunpack.c.l.s4 1934713408
        %v1069 = vunpack.c.0.s8 %v1068
        %v1070 = vlaneseq
        %v1071 = vshrl.u32 %v1070, 7
        %v1072 = vsub.s32 %v1069, %v1071
        %v1073 = vrot.slane %v1065, %v1072
        %v1075 = vunpack.c.l.s4 1934713408
        %v1076 = vunpack.c.0.s8 %v1075
        %v1077 = vlaneseq
        %v1078 = vshrl.u32 %v1077, 7
        %v1079 = vsub.s32 %v1076, %v1078
        %v1080 = vrot.slane %v1066, %v1079
        %v1081 = vcombine.high %v1073, 0
        %v1082 = vcombine.high %v1080, 0
        %v1085 = vcombine.low %v928, %v940
        %v1087 = vunpack.c.l.s4 1934713408
        %v1088 = vunpack.c.0.s8 %v1087
        %v1089 = vlaneseq
        %v1090 = vshrl.u32 %v1089, 7
        %v1091 = vsub.s32 %v1088, %v1090
        %v1092 = vrot.slane %v1085, %v1091
        %v1095 = vcombine.low %v934, %v946
        %v1097 = vunpack.c.l.s4 1934713408
        %v1098 = vunpack.c.0.s8 %v1097
        %v1099 = vlaneseq
        %v1100 = vshrl.u32 %v1099, 7
        %v1101 = vsub.s32 %v1098, %v1100
        %v1102 = vrot.slane %v1095, %v1101
        %v1105 = vpack.i.b16 %v1005, %v971
        %v1107 = vshrl.u32 %v971, 16
        %v1108 = vshrl.u32 %v1005, 16
        %v1109 = vpack.i.b16 %v1108, %v1107
        %v1113 = vpack.i.b16 %v1013, %v979
        %v1115 = vshrl.u32 %v979, 16
        %v1116 = vshrl.u32 %v1013, 16
        %v1117 = vpack.i.b16 %v1116, %v1115
        %v1121 = vpack.i.b16 %v1012, %v978
        %v1123 = vshrl.u32 %v978, 16
        %v1124 = vshrl.u32 %v1012, 16
        %v1125 = vpack.i.b16 %v1124, %v1123
        %v1129 = vpack.i.b16 %v1014, %v980
        %v1131 = vshrl.u32 %v980, 16
        %v1132 = vshrl.u32 %v1014, 16
        %v1133 = vpack.i.b16 %v1132, %v1131
        %v1137 = vpack.i.b16 %v1073, %v1039
        %v1139 = vshrl.u32 %v1039, 16
        %v1140 = vshrl.u32 %v1073, 16
        %v1141 = vpack.i.b16 %v1140, %v1139
        %v1145 = vpack.i.b16 %v1081, %v1047
        %v1147 = vshrl.u32 %v1047, 16
        %v1148 = vshrl.u32 %v1081, 16
        %v1149 = vpack.i.b16 %v1148, %v1147
        %v1153 = vpack.i.b16 %v1080, %v1046
        %v1155 = vshrl.u32 %v1046, 16
        %v1156 = vshrl.u32 %v1080, 16
        %v1157 = vpack.i.b16 %v1156, %v1155
        %v1161 = vpack.i.b16 %v1082, %v1048
        %v1163 = vshrl.u32 %v1048, 16
        %v1164 = vshrl.u32 %v1082, 16
        %v1165 = vpack.i.b16 %v1164, %v1163
        %v1169 = vpack.i.b16 %v1102, %v1092
        %v1170 = vcombine.low %v1105, %v1121
        %v1172 = vunpack.c.l.s4 1983009808
        %v1173 = vunpack.c.0.s8 %v1172
        %v1174 = vlaneseq
        %v1175 = vshrl.u32 %v1174, 7
        %v1176 = vsub.s32 %v1173, %v1175
        %v1177 = vrot.slane %v1170, %v1176
        %v1178 = vcombine.low %v1113, %v1129
        %v1180 = vunpack.c.l.s4 1983009808
        %v1181 = vunpack.c.0.s8 %v1180
        %v1182 = vlaneseq
        %v1183 = vshrl.u32 %v1182, 7
        %v1184 = vsub.s32 %v1181, %v1183
        %v1185 = vrot.slane %v1178, %v1184
        %v1186 = vcombine.low %v1177, %v1185
        %v1188 = vunpack.c.l.s4 1934713408
        %v1189 = vunpack.c.0.s8 %v1188
        %v1190 = vlaneseq
        %v1191 = vshrl.u32 %v1190, 7
        %v1192 = vsub.s32 %v1189, %v1191
        %v1193 = vrot.slane %v1186, %v1192
        %v1194 = vcombine.high %v1193, 0
        %v1195 = vcombine.low %v1109, %v1125
        %v1197 = vunpack.c.l.s4 1983009808
        %v1198 = vunpack.c.0.s8 %v1197
        %v1199 = vlaneseq
        %v1200 = vshrl.u32 %v1199, 7
        %v1201 = vsub.s32 %v1198, %v1200
        %v1202 = vrot.slane %v1195, %v1201
        %v1203 = vcombine.low %v1117, %v1133
        %v1205 = vunpack.c.l.s4 1983009808
        %v1206 = vunpack.c.0.s8 %v1205
        %v1207 = vlaneseq
        %v1208 = vshrl.u32 %v1207, 7
        %v1209 = vsub.s32 %v1206, %v1208
        %v1210 = vrot.slane %v1203, %v1209
        %v1211 = vcombine.low %v1202, %v1210
        %v1213 = vunpack.c.l.s4 1934713408
        %v1214 = vunpack.c.0.s8 %v1213
        %v1215 = vlaneseq
        %v1216 = vshrl.u32 %v1215, 7
        %v1217 = vsub.s32 %v1214, %v1216
        %v1218 = vrot.slane %v1211, %v1217
        %v1219 = vcombine.high %v1218, 0
        %v1220 = vcombine.low %v1137, %v1153
        %v1222 = vunpack.c.l.s4 1983009808
        %v1223 = vunpack.c.0.s8 %v1222
        %v1224 = vlaneseq
        %v1225 = vshrl.u32 %v1224, 7
        %v1226 = vsub.s32 %v1223, %v1225
        %v1227 = vrot.slane %v1220, %v1226
        %v1228 = vcombine.low %v1145, %v1161
        %v1230 = vunpack.c.l.s4 1983009808
        %v1231 = vunpack.c.0.s8 %v1230
        %v1232 = vlaneseq
        %v1233 = vshrl.u32 %v1232, 7
        %v1234 = vsub.s32 %v1231, %v1233
        %v1235 = vrot.slane %v1228, %v1234
        %v1236 = vcombine.low %v1227, %v1235
        %v1238 = vunpack.c.l.s4 1934713408
        %v1239 = vunpack.c.0.s8 %v1238
        %v1240 = vlaneseq
        %v1241 = vshrl.u32 %v1240, 7
        %v1242 = vsub.s32 %v1239, %v1241
        %v1243 = vrot.slane %v1236, %v1242
        %v1244 = vcombine.high %v1243, 0
        %v1245 = vcombine.low %v1141, %v1157
        %v1247 = vunpack.c.l.s4 1983009808
        %v1248 = vunpack.c.0.s8 %v1247
        %v1249 = vlaneseq
        %v1250 = vshrl.u32 %v1249, 7
        %v1251 = vsub.s32 %v1248, %v1250
        %v1252 = vrot.slane %v1245, %v1251
        %v1253 = vcombine.low %v1149, %v1165
        %v1255 = vunpack.c.l.s4 1983009808
        %v1256 = vunpack.c.0.s8 %v1255
        %v1257 = vlaneseq
        %v1258 = vshrl.u32 %v1257, 7
        %v1259 = vsub.s32 %v1256, %v1258
        %v1260 = vrot.slane %v1253, %v1259
        %v1261 = vcombine.low %v1252, %v1260
        %v1263 = vunpack.c.l.s4 1934713408
        %v1264 = vunpack.c.0.s8 %v1263
        %v1265 = vlaneseq
        %v1266 = vshrl.u32 %v1265, 7
        %v1267 = vsub.s32 %v1264, %v1266
        %v1268 = vrot.slane %v1261, %v1267
        %v1269 = vcombine.high %v1268, 0
        %v1272 = vunpack.c.l.s4 1934713408
        %v1273 = vunpack.c.0.s8 %v1272
        %v1274 = vlaneseq
        %v1275 = vshrl.u32 %v1274, 7
        %v1276 = vsub.s32 %v1273, %v1275
        %v1277 = vrot.slane %v1169, %v1276
        %v1278 = vcombine.high %v1277, 0
        %v1281 = vpack.i.b16 %v1218, %v1193
        %v1282 = vshrl.u32 %v1193, 16
        %v1283 = vshrl.u32 %v1218, 16
        %v1284 = vpack.i.b16 %v1283, %v1282
        %v1287 = vpack.i.b16 %v1219, %v1194
        %v1288 = vshrl.u32 %v1194, 16
        %v1289 = vshrl.u32 %v1219, 16
        %v1290 = vpack.i.b16 %v1289, %v1288
        %v1293 = vpack.i.b16 %v1268, %v1243
        %v1294 = vshrl.u32 %v1243, 16
        %v1295 = vshrl.u32 %v1268, 16
        %v1296 = vpack.i.b16 %v1295, %v1294
        %v1299 = vpack.i.b16 %v1269, %v1244
        %v1300 = vshrl.u32 %v1244, 16
        %v1301 = vshrl.u32 %v1269, 16
        %v1302 = vpack.i.b16 %v1301, %v1300
        %v1304 = vpack.i.b16 0, %v1277
        %v1305 = vshrl.u32 %v1277, 16
        %v1306 = vpack.i.b16 %v526, %v1305
        %v1308 = vpack.i.b16 0, %v1278
        %v1309 = vshrl.u32 %v1278, 16
        %v1310 = vpack.i.b16 %v526, %v1309
        %v1311 = vunpack.c.l.bf16 %v491
        %v1312 = vunpack.c.l.bf16 %v507
        %v1313 = vunpack.c.l.bf16 %v523
        %v1314 = vunpack.c.l.bf16 %v495
        %v1315 = vunpack.c.l.bf16 %v511
        %v1316 = vunpack.c.l.bf16 %v527
        %v1317 = vunpack.c.l.bf16 %v499
        %v1318 = vunpack.c.l.bf16 %v515
        %v1319 = vunpack.c.l.bf16 %v530
        %v1320 = vunpack.c.l.bf16 %v503
        %v1321 = vunpack.c.l.bf16 %v519
        %v1322 = vunpack.c.l.bf16 %v533
        %v1323 = vmul.f32 %v1311, 0.35355338
        %v1324 = vmul.f32 %v1312, 0.35355338
        %v1325 = vmul.f32 %v1313, 0.35355338
        %v1326 = vmul.f32 %v1314, 0.35355338
        %v1327 = vmul.f32 %v1315, 0.35355338
        %v1328 = vmul.f32 %v1316, 0.35355338
        %v1329 = vmul.f32 %v1317, 0.35355338
        %v1330 = vmul.f32 %v1318, 0.35355338
        %v1331 = vmul.f32 %v1319, 0.35355338
        %v1332 = vmul.f32 %v1320, 0.35355338
        %v1333 = vmul.f32 %v1321, 0.35355338
        %v1334 = vmul.f32 %v1322, 0.35355338
        %v1335 = vpack.c.bf16 %v1324, %v1323
        %v1336 = vpack.c.bf16 %v1325, %v1325
        %v1337 = vpack.c.bf16 %v1327, %v1326
        %v1338 = vpack.c.bf16 %v1328, %v1328
        %v1339 = vpack.c.bf16 %v1330, %v1329
        %v1340 = vpack.c.bf16 %v1331, %v1331
        %v1341 = vpack.c.bf16 %v1333, %v1332
        %v1342 = vpack.c.bf16 %v1334, %v1334
        %v1343 = vunpack.c.l.b16 %v893
        %v1344 = vunpack.c.l.b16 %v905
        %v1345 = vunpack.c.l.b16 %v916
        %v1346 = vpack.c.b16 %v1344, %v1343
        %v1347 = vpack.c.b16 %v1345, %v1345
        %vm1348 = vcmask 64512
        %v1350 = vsel %vm1348, %v1335, 0
        %v1353 = vsel %vm1348, %v1336, 0
        %v1356 = vsel %vm1348, %v1346, 0
        %v1359 = vsel %vm1348, %v1347, 0
        %1361 = vmatprep.subr.bf16.mxu0 0
        %1362 = vmatpush1.bf16.xpose.msra.mxu0 %v1356
        %1363 = vmatprep.subr.bf16.mxu0 0
        %1364 = vmatpush1.bf16.xpose.msra.mxu0 %v1359
        %1365 = vmatprep.subr.bf16.mxu0 0
        %1366 = vmatpush1.bf16.xpose.msra.mxu0 0
        %1367 = vmatprep.subr.bf16.mxu0 0
        %1368 = vmatpush1.bf16.xpose.msra.mxu0 0
        %1369 = vmatprep.subr.bf16.mxu0 0
        %1370 = vmatpush1.bf16.xpose.msra.mxu0 0
        %1371 = vmatprep.subr.bf16.mxu0 0
        %1372 = vmatpush1.bf16.xpose.msra.mxu0 0
        %1373 = vmatprep.subr.bf16.mxu0 0
        %1374 = vmatpush1.bf16.xpose.msra.mxu0 0
        %1375 = vmatprep.subr.bf16.mxu0 0
        %1376 = vmatpush1.bf16.xpose.msra.mxu0 0
        %1377 = vmatprep.subr.bf16.mxu0 0
        %1378 = vmatpush1.bf16.xpose.msra.mxu0 0
        %1379 = vmatprep.subr.bf16.mxu0 0
        %1380 = vmatpush1.bf16.xpose.msra.mxu0 0
        %1381 = vmatprep.subr.bf16.mxu0 0
        %1382 = vmatpush1.bf16.xpose.msra.mxu0 0
        %1383 = vmatprep.subr.bf16.mxu0 0
        %1384 = vmatpush1.bf16.xpose.msra.mxu0 0
        %1385 = vmatprep.subr.bf16.mxu0 0
        %1386 = vmatpush1.bf16.xpose.msra.mxu0 0
        %1387 = vmatprep.subr.bf16.mxu0 0
        %1388 = vmatpush1.bf16.xpose.msra.mxu0 0
        %1389 = vmatprep.subr.bf16.mxu0 0
        %1390 = vmatpush1.bf16.xpose.msra.mxu0 0
        %1391 = vmatprep.subr.bf16.mxu0 0
        %1392 = vmatpush1.bf16.xpose.msra.mxu0 0
        %1393 = vmatprep.mubr.bf16.mxu0 0
        %1394 = vmatmul.mubr.bf16.gmra.mrb[0].mxu0 %v1350
        %v1395 = vpop.f32.mrb[0].mxu0
        %v1396 = vadd.f32 0.0, %v1395
        %v1397 = vpop.f32.mrb[0].mxu0
        %v1398 = vpop.f32.mrb[0].mxu0
        %v1399 = vadd.f32 0.0, %v1398
        %v1400 = vpop.f32.mrb[0].mxu0
        %1401 = vmatprep.mubr.bf16.mxu0 0
        %1402 = vmatmul.mubr.bf16.gmra.mrb[0].mxu0 %v1353
        %v1403 = vpop.f32.mrb[0].mxu0
        %v1404 = vadd.f32 0.0, %v1403
        %v1405 = vpop.f32.mrb[0].mxu0
        %v1406 = vpop.f32.mrb[0].mxu0
        %v1407 = vpop.f32.mrb[0].mxu0
        %1408 = vdwg.mxu0
        %v1409 = vunpack.c.l.b16 %v896
        %v1410 = vunpack.c.l.b16 %v908
        %v1411 = vunpack.c.l.b16 %v918
        %v1412 = vpack.c.b16 %v1410, %v1409
        %v1413 = vpack.c.b16 %v1411, %v1411
        %v1415 = vsel %vm1348, %v1337, 0
        %v1418 = vsel %vm1348, %v1338, 0
        %v1421 = vsel %vm1348, %v1412, 0
        %v1424 = vsel %vm1348, %v1413, 0
        %1426 = vmatprep.subr.bf16.mxu0 0
        %1427 = vmatpush1.bf16.xpose.msra.mxu0 %v1421
        %1428 = vmatprep.subr.bf16.mxu0 0
        %1429 = vmatpush1.bf16.xpose.msra.mxu0 %v1424
        %1430 = vmatprep.subr.bf16.mxu0 0
        %1431 = vmatpush1.bf16.xpose.msra.mxu0 0
        %1432 = vmatprep.subr.bf16.mxu0 0
        %1433 = vmatpush1.bf16.xpose.msra.mxu0 0
        %1434 = vmatprep.subr.bf16.mxu0 0
        %1435 = vmatpush1.bf16.xpose.msra.mxu0 0
        %1436 = vmatprep.subr.bf16.mxu0 0
        %1437 = vmatpush1.bf16.xpose.msra.mxu0 0
        %1438 = vmatprep.subr.bf16.mxu0 0
        %1439 = vmatpush1.bf16.xpose.msra.mxu0 0
        %1440 = vmatprep.subr.bf16.mxu0 0
        %1441 = vmatpush1.bf16.xpose.msra.mxu0 0
        %1442 = vmatprep.subr.bf16.mxu0 0
        %1443 = vmatpush1.bf16.xpose.msra.mxu0 0
        %1444 = vmatprep.subr.bf16.mxu0 0
        %1445 = vmatpush1.bf16.xpose.msra.mxu0 0
        %1446 = vmatprep.subr.bf16.mxu0 0
        %1447 = vmatpush1.bf16.xpose.msra.mxu0 0
        %1448 = vmatprep.subr.bf16.mxu0 0
        %1449 = vmatpush1.bf16.xpose.msra.mxu0 0
        %1450 = vmatprep.subr.bf16.mxu0 0
        %1451 = vmatpush1.bf16.xpose.msra.mxu0 0
        %1452 = vmatprep.subr.bf16.mxu0 0
        %1453 = vmatpush1.bf16.xpose.msra.mxu0 0
        %1454 = vmatprep.subr.bf16.mxu0 0
        %1455 = vmatpush1.bf16.xpose.msra.mxu0 0
        %1456 = vmatprep.subr.bf16.mxu0 0
        %1457 = vmatpush1.bf16.xpose.msra.mxu0 0
        %1458 = vmatprep.mubr.bf16.mxu0 0
        %1459 = vmatmul.mubr.bf16.gmra.mrb[0].mxu0 %v1415
        %v1460 = vpop.f32.mrb[0].mxu0
        %v1461 = vadd.f32 0.0, %v1460
        %v1462 = vpop.f32.mrb[0].mxu0
        %v1463 = vpop.f32.mrb[0].mxu0
        %v1464 = vadd.f32 0.0, %v1463
        %v1465 = vpop.f32.mrb[0].mxu0
        %1466 = vmatprep.mubr.bf16.mxu0 0
        %1467 = vmatmul.mubr.bf16.gmra.mrb[0].mxu0 %v1418
        %v1468 = vpop.f32.mrb[0].mxu0
        %v1469 = vadd.f32 0.0, %v1468
        %v1470 = vpop.f32.mrb[0].mxu0
        %v1471 = vpop.f32.mrb[0].mxu0
        %v1472 = vpop.f32.mrb[0].mxu0
        %1473 = vdwg.mxu0
        %v1474 = vunpack.c.l.b16 %v899
        %v1475 = vunpack.c.l.b16 %v911
        %v1476 = vunpack.c.l.b16 %v920
        %v1477 = vpack.c.b16 %v1475, %v1474
        %v1478 = vpack.c.b16 %v1476, %v1476
        %v1480 = vsel %vm1348, %v1339, 0
        %v1483 = vsel %vm1348, %v1340, 0
        %v1486 = vsel %vm1348, %v1477, 0
        %v1489 = vsel %vm1348, %v1478, 0
        %1491 = vmatprep.subr.bf16.mxu0 0
        %1492 = vmatpush1.bf16.xpose.msra.mxu0 %v1486
        %1493 = vmatprep.subr.bf16.mxu0 0
        %1494 = vmatpush1.bf16.xpose.msra.mxu0 %v1489
        %1495 = vmatprep.subr.bf16.mxu0 0
        %1496 = vmatpush1.bf16.xpose.msra.mxu0 0
        %1497 = vmatprep.subr.bf16.mxu0 0
        %1498 = vmatpush1.bf16.xpose.msra.mxu0 0
        %1499 = vmatprep.subr.bf16.mxu0 0
        %1500 = vmatpush1.bf16.xpose.msra.mxu0 0
        %1501 = vmatprep.subr.bf16.mxu0 0
        %1502 = vmatpush1.bf16.xpose.msra.mxu0 0
        %1503 = vmatprep.subr.bf16.mxu0 0
        %1504 = vmatpush1.bf16.xpose.msra.mxu0 0
        %1505 = vmatprep.subr.bf16.mxu0 0
        %1506 = vmatpush1.bf16.xpose.msra.mxu0 0
        %1507 = vmatprep.subr.bf16.mxu0 0
        %1508 = vmatpush1.bf16.xpose.msra.mxu0 0
        %1509 = vmatprep.subr.bf16.mxu0 0
        %1510 = vmatpush1.bf16.xpose.msra.mxu0 0
        %1511 = vmatprep.subr.bf16.mxu0 0
        %1512 = vmatpush1.bf16.xpose.msra.mxu0 0
        %1513 = vmatprep.subr.bf16.mxu0 0
        %1514 = vmatpush1.bf16.xpose.msra.mxu0 0
        %1515 = vmatprep.subr.bf16.mxu0 0
        %1516 = vmatpush1.bf16.xpose.msra.mxu0 0
        %1517 = vmatprep.subr.bf16.mxu0 0
        %1518 = vmatpush1.bf16.xpose.msra.mxu0 0
        %1519 = vmatprep.subr.bf16.mxu0 0
        %1520 = vmatpush1.bf16.xpose.msra.mxu0 0
        %1521 = vmatprep.subr.bf16.mxu0 0
        %1522 = vmatpush1.bf16.xpose.msra.mxu0 0
        %1523 = vmatprep.mubr.bf16.mxu0 0
        %1524 = vmatmul.mubr.bf16.gmra.mrb[0].mxu0 %v1480
        %v1525 = vpop.f32.mrb[0].mxu0
        %v1526 = vadd.f32 0.0, %v1525
        %v1527 = vpop.f32.mrb[0].mxu0
        %v1528 = vpop.f32.mrb[0].mxu0
        %v1529 = vadd.f32 0.0, %v1528
        %v1530 = vpop.f32.mrb[0].mxu0
        %1531 = vmatprep.mubr.bf16.mxu0 0
        %1532 = vmatmul.mubr.bf16.gmra.mrb[0].mxu0 %v1483
        %v1533 = vpop.f32.mrb[0].mxu0
        %v1534 = vadd.f32 0.0, %v1533
        %v1535 = vpop.f32.mrb[0].mxu0
        %v1536 = vpop.f32.mrb[0].mxu0
        %v1537 = vpop.f32.mrb[0].mxu0
        %1538 = vdwg.mxu0
        %v1539 = vunpack.c.l.b16 %v902
        %v1540 = vunpack.c.l.b16 %v914
        %v1541 = vunpack.c.l.b16 %v922
        %v1542 = vpack.c.b16 %v1540, %v1539
        %v1543 = vpack.c.b16 %v1541, %v1541
        %v1545 = vsel %vm1348, %v1341, 0
        %v1548 = vsel %vm1348, %v1342, 0
        %v1551 = vsel %vm1348, %v1542, 0
        %v1554 = vsel %vm1348, %v1543, 0
        %1556 = vmatprep.subr.bf16.mxu0 0
        %1557 = vmatpush1.bf16.xpose.msra.mxu0 %v1551
        %1558 = vmatprep.subr.bf16.mxu0 0
        %1559 = vmatpush1.bf16.xpose.msra.mxu0 %v1554
        %1560 = vmatprep.subr.bf16.mxu0 0
        %1561 = vmatpush1.bf16.xpose.msra.mxu0 0
        %1562 = vmatprep.subr.bf16.mxu0 0
        %1563 = vmatpush1.bf16.xpose.msra.mxu0 0
        %1564 = vmatprep.subr.bf16.mxu0 0
        %1565 = vmatpush1.bf16.xpose.msra.mxu0 0
        %1566 = vmatprep.subr.bf16.mxu0 0
        %1567 = vmatpush1.bf16.xpose.msra.mxu0 0
        %1568 = vmatprep.subr.bf16.mxu0 0
        %1569 = vmatpush1.bf16.xpose.msra.mxu0 0
        %1570 = vmatprep.subr.bf16.mxu0 0
        %1571 = vmatpush1.bf16.xpose.msra.mxu0 0
        %1572 = vmatprep.subr.bf16.mxu0 0
        %1573 = vmatpush1.bf16.xpose.msra.mxu0 0
        %1574 = vmatprep.subr.bf16.mxu0 0
        %1575 = vmatpush1.bf16.xpose.msra.mxu0 0
        %1576 = vmatprep.subr.bf16.mxu0 0
        %1577 = vmatpush1.bf16.xpose.msra.mxu0 0
        %1578 = vmatprep.subr.bf16.mxu0 0
        %1579 = vmatpush1.bf16.xpose.msra.mxu0 0
        %1580 = vmatprep.subr.bf16.mxu0 0
        %1581 = vmatpush1.bf16.xpose.msra.mxu0 0
        %1582 = vmatprep.subr.bf16.mxu0 0
        %1583 = vmatpush1.bf16.xpose.msra.mxu0 0
        %1584 = vmatprep.subr.bf16.mxu0 0
        %1585 = vmatpush1.bf16.xpose.msra.mxu0 0
        %1586 = vmatprep.subr.bf16.mxu0 0
        %1587 = vmatpush1.bf16.xpose.msra.mxu0 0
        %1588 = vmatprep.mubr.bf16.mxu0 0
        %1589 = vmatmul.mubr.bf16.gmra.mrb[0].mxu0 %v1545
        %v1590 = vpop.f32.mrb[0].mxu0
        %v1591 = vadd.f32 0.0, %v1590
        %v1592 = vpop.f32.mrb[0].mxu0
        %v1593 = vpop.f32.mrb[0].mxu0
        %v1594 = vadd.f32 0.0, %v1593
        %v1595 = vpop.f32.mrb[0].mxu0
        %1596 = vmatprep.mubr.bf16.mxu0 0
        %1597 = vmatmul.mubr.bf16.gmra.mrb[0].mxu0 %v1548
        %v1598 = vpop.f32.mrb[0].mxu0
        %v1599 = vadd.f32 0.0, %v1598
        %v1600 = vpop.f32.mrb[0].mxu0
        %v1601 = vpop.f32.mrb[0].mxu0
        %v1602 = vpop.f32.mrb[0].mxu0
        %1603 = vdwg.mxu0
        %vm1604 = vcmask 138240
        %v1605 = vsel %vm1604, %v1396, -inf
        %1606 = vmax.xlane.f32.xlu0 %v1605
        %v1607 = vpop.xlane.xlu0 %1606
        %v1608 = vsel %vm1604, %v1399, -inf
        %1609 = vmax.xlane.f32.xlu0 %v1608
        %v1610 = vpop.xlane.xlu0 %1609
        %vm1611 = vcmask 131072
        %v1612 = vsel %vm1611, %v1404, -inf
        %1613 = vmax.xlane.f32.xlu0 %v1612
        %v1614 = vpop.xlane.xlu0 %1613
        %v1615 = vsel %vm1604, %v1461, -inf
        %1616 = vmax.xlane.f32.xlu0 %v1615
        %v1617 = vpop.xlane.xlu0 %1616
        %v1618 = vsel %vm1604, %v1464, -inf
        %1619 = vmax.xlane.f32.xlu0 %v1618
        %v1620 = vpop.xlane.xlu0 %1619
        %v1621 = vsel %vm1611, %v1469, -inf
        %1622 = vmax.xlane.f32.xlu0 %v1621
        %v1623 = vpop.xlane.xlu0 %1622
        %v1624 = vsel %vm1604, %v1526, -inf
        %1625 = vmax.xlane.f32.xlu0 %v1624
        %v1626 = vpop.xlane.xlu0 %1625
        %v1627 = vsel %vm1604, %v1529, -inf
        %1628 = vmax.xlane.f32.xlu0 %v1627
        %v1629 = vpop.xlane.xlu0 %1628
        %v1630 = vsel %vm1611, %v1534, -inf
        %1631 = vmax.xlane.f32.xlu0 %v1630
        %v1632 = vpop.xlane.xlu0 %1631
        %v1633 = vsel %vm1604, %v1591, -inf
        %1634 = vmax.xlane.f32.xlu0 %v1633
        %v1635 = vpop.xlane.xlu0 %1634
        %v1636 = vsel %vm1604, %v1594, -inf
        %1637 = vmax.xlane.f32.xlu0 %v1636
        %v1638 = vpop.xlane.xlu0 %1637
        %v1639 = vsel %vm1611, %v1599, -inf
        %1640 = vmax.xlane.f32.xlu0 %v1639
        %v1641 = vpop.xlane.xlu0 %1640
        %v1642 = vsub.f32 %v1396, %v1607
        %v1643 = vsub.f32 %v1399, %v1610
        %v1644 = vsub.f32 %v1404, %v1614
        %v1645 = vsub.f32 %v1461, %v1617
        %v1646 = vsub.f32 %v1464, %v1620
        %v1647 = vsub.f32 %v1469, %v1623
        %v1648 = vsub.f32 %v1526, %v1626
        %v1649 = vsub.f32 %v1529, %v1629
        %v1650 = vsub.f32 %v1534, %v1632
        %v1651 = vsub.f32 %v1591, %v1635
        %v1652 = vsub.f32 %v1594, %v1638
        %v1653 = vsub.f32 %v1599, %v1641
        %v1654 = vmul.f32 %v1642, 1.442695
        %v1655 = vpow.pop %v1654
        %v1656 = vmul.f32 %v1643, 1.442695
        %v1657 = vpow.pop %v1656
        %v1658 = vmul.f32 %v1644, 1.442695
        %v1659 = vpow.pop %v1658
        %v1660 = vmul.f32 %v1645, 1.442695
        %v1661 = vpow.pop %v1660
        %v1662 = vmul.f32 %v1646, 1.442695
        %v1663 = vpow.pop %v1662
        %v1664 = vmul.f32 %v1647, 1.442695
        %v1665 = vpow.pop %v1664
        %v1666 = vmul.f32 %v1648, 1.442695
        %v1667 = vpow.pop %v1666
        %v1668 = vmul.f32 %v1649, 1.442695
        %v1669 = vpow.pop %v1668
        %v1670 = vmul.f32 %v1650, 1.442695
        %v1671 = vpow.pop %v1670
        %v1672 = vmul.f32 %v1651, 1.442695
        %v1673 = vpow.pop %v1672
        %v1674 = vmul.f32 %v1652, 1.442695
        %v1675 = vpow.pop %v1674
        %v1676 = vmul.f32 %v1653, 1.442695
        %v1677 = vpow.pop %v1676
        %v1678 = vsel %vm1604, %v1655, 0.0
        %1679 = vadd.xlane.f32.xlu0 %v1678
        %v1680 = vpop.xlane.xlu0 %1679
        %v1681 = vsel %vm1604, %v1657, 0.0
        %1682 = vadd.xlane.f32.xlu0 %v1681
        %v1683 = vpop.xlane.xlu0 %1682
        %v1684 = vsel %vm1611, %v1659, 0.0
        %1685 = vadd.xlane.f32.xlu0 %v1684
        %v1686 = vpop.xlane.xlu0 %1685
        %v1687 = vsel %vm1604, %v1661, 0.0
        %1688 = vadd.xlane.f32.xlu0 %v1687
        %v1689 = vpop.xlane.xlu0 %1688
        %v1690 = vsel %vm1604, %v1663, 0.0
        %1691 = vadd.xlane.f32.xlu0 %v1690
        %v1692 = vpop.xlane.xlu0 %1691
        %v1693 = vsel %vm1611, %v1665, 0.0
        %1694 = vadd.xlane.f32.xlu0 %v1693
        %v1695 = vpop.xlane.xlu0 %1694
        %v1696 = vsel %vm1604, %v1667, 0.0
        %1697 = vadd.xlane.f32.xlu0 %v1696
        %v1698 = vpop.xlane.xlu0 %1697
        %v1699 = vsel %vm1604, %v1669, 0.0
        %1700 = vadd.xlane.f32.xlu0 %v1699
        %v1701 = vpop.xlane.xlu0 %1700
        %v1702 = vsel %vm1611, %v1671, 0.0
        %1703 = vadd.xlane.f32.xlu0 %v1702
        %v1704 = vpop.xlane.xlu0 %1703
        %v1705 = vsel %vm1604, %v1673, 0.0
        %1706 = vadd.xlane.f32.xlu0 %v1705
        %v1707 = vpop.xlane.xlu0 %1706
        %v1708 = vsel %vm1604, %v1675, 0.0
        %1709 = vadd.xlane.f32.xlu0 %v1708
        %v1710 = vpop.xlane.xlu0 %1709
        %v1711 = vsel %vm1611, %v1677, 0.0
        %1712 = vadd.xlane.f32.xlu0 %v1711
        %v1713 = vpop.xlane.xlu0 %1712
        %v1714 = vrcp.pop %v1680
        %v1715 = vrcp.pop %v1683
        %v1716 = vrcp.pop %v1686
        %v1717 = vrcp.pop %v1689
        %v1718 = vrcp.pop %v1692
        %v1719 = vrcp.pop %v1695
        %v1720 = vrcp.pop %v1698
        %v1721 = vrcp.pop %v1701
        %v1722 = vrcp.pop %v1704
        %v1723 = vrcp.pop %v1707
        %v1724 = vrcp.pop %v1710
        %v1725 = vrcp.pop %v1713
        %v1726 = vmul.f32 %v1655, %v1714
        %v1727 = vmul.f32 %v1657, %v1715
        %v1728 = vmul.f32 %v1659, %v1716
        %v1729 = vmul.f32 %v1661, %v1717
        %v1730 = vmul.f32 %v1663, %v1718
        %v1731 = vmul.f32 %v1665, %v1719
        %v1732 = vmul.f32 %v1667, %v1720
        %v1733 = vmul.f32 %v1669, %v1721
        %v1734 = vmul.f32 %v1671, %v1722
        %v1735 = vmul.f32 %v1673, %v1723
        %v1736 = vmul.f32 %v1675, %v1724
        %v1737 = vmul.f32 %v1677, %v1725
        %v1738 = vpack.c.bf16 %v1727, %v1726
        %v1739 = vpack.c.bf16 %v1728, %v1728
        %v1740 = vpack.c.bf16 %v1730, %v1729
        %v1741 = vpack.c.bf16 %v1731, %v1731
        %v1742 = vpack.c.bf16 %v1733, %v1732
        %v1743 = vpack.c.bf16 %v1734, %v1734
        %v1744 = vpack.c.bf16 %v1736, %v1735
        %v1745 = vpack.c.bf16 %v1737, %v1737
        %v1746 = vunpack.c.l.b16 %v1281
        %v1747 = vunpack.c.l.b16 %v1293
        %v1748 = vunpack.c.l.b16 %v1304
        %v1749 = vpack.c.b16 %v1747, %v1746
        %v1750 = vpack.c.b16 %v1748, %v1748
        %v1753 = vsel %vm1604, %v1738, 0
        %v1756 = vsel %vm1604, %v1739, 0
        %vm1758 = vcmask 1040384
        %v1759 = vsel 0, 4294967295, 65535
        %v1760 = vsel %vm1758, %v1759, 0
        %v1762 = vand.u32 %v1750, %v1760
        %1764 = vmatprep.subr.bf16.mxu0 0
        %1765 = vmatpush1.bf16.msra.mxu0 %v1749
        %1766 = vmatprep.subr.bf16.mxu0 0
        %1767 = vmatpush1.bf16.msra.mxu0 %v1762
        %1768 = vmatprep.subr.bf16.mxu0 0
        %1769 = vmatpush1.bf16.msra.mxu0 0
        %1770 = vmatprep.subr.bf16.mxu0 0
        %1771 = vmatpush1.bf16.msra.mxu0 0
        %1772 = vmatprep.subr.bf16.mxu0 0
        %1773 = vmatpush1.bf16.msra.mxu0 0
        %1774 = vmatprep.subr.bf16.mxu0 0
        %1775 = vmatpush1.bf16.msra.mxu0 0
        %1776 = vmatprep.subr.bf16.mxu0 0
        %1777 = vmatpush1.bf16.msra.mxu0 0
        %1778 = vmatprep.subr.bf16.mxu0 0
        %1779 = vmatpush1.bf16.msra.mxu0 0
        %1780 = vmatprep.subr.bf16.mxu0 0
        %1781 = vmatpush1.bf16.msra.mxu0 0
        %1782 = vmatprep.subr.bf16.mxu0 0
        %1783 = vmatpush1.bf16.msra.mxu0 0
        %1784 = vmatprep.subr.bf16.mxu0 0
        %1785 = vmatpush1.bf16.msra.mxu0 0
        %1786 = vmatprep.subr.bf16.mxu0 0
        %1787 = vmatpush1.bf16.msra.mxu0 0
        %1788 = vmatprep.subr.bf16.mxu0 0
        %1789 = vmatpush1.bf16.msra.mxu0 0
        %1790 = vmatprep.subr.bf16.mxu0 0
        %1791 = vmatpush1.bf16.msra.mxu0 0
        %1792 = vmatprep.subr.bf16.mxu0 0
        %1793 = vmatpush1.bf16.msra.mxu0 0
        %1794 = vmatprep.subr.bf16.mxu0 0
        %1795 = vmatpush1.bf16.msra.mxu0 0
        %1796 = vmatprep.mubr.bf16.mxu0 0
        %1797 = vmatmul.mubr.bf16.gmra.mrb[0].mxu0 %v1753
        %v1798 = vpop.f32.mrb[0].mxu0
        %v1799 = vadd.f32 0.0, %v1798
        %v1800 = vpop.f32.mrb[0].mxu0
        %v1801 = vpop.f32.mrb[0].mxu0
        %v1802 = vadd.f32 0.0, %v1801
        %v1803 = vpop.f32.mrb[0].mxu0
        %1804 = vmatprep.mubr.bf16.mxu0 0
        %1805 = vmatmul.mubr.bf16.gmra.mrb[0].mxu0 %v1756
        %v1806 = vpop.f32.mrb[0].mxu0
        %v1807 = vadd.f32 0.0, %v1806
        %v1808 = vpop.f32.mrb[0].mxu0
        %v1809 = vpop.f32.mrb[0].mxu0
        %v1810 = vpop.f32.mrb[0].mxu0
        %1811 = vdwg.mxu0
        %v1812 = vunpack.c.l.b16 %v1284
        %v1813 = vunpack.c.l.b16 %v1296
        %v1814 = vunpack.c.l.b16 %v1306
        %v1815 = vpack.c.b16 %v1813, %v1812
        %v1816 = vpack.c.b16 %v1814, %v1814
        %v1819 = vsel %vm1604, %v1740, 0
        %v1822 = vsel %vm1604, %v1741, 0
        %v1825 = vand.u32 %v1816, %v1760
        %1827 = vmatprep.subr.bf16.mxu0 0
        %1828 = vmatpush1.bf16.msra.mxu0 %v1815
        %1829 = vmatprep.subr.bf16.mxu0 0
        %1830 = vmatpush1.bf16.msra.mxu0 %v1825
        %1831 = vmatprep.subr.bf16.mxu0 0
        %1832 = vmatpush1.bf16.msra.mxu0 0
        %1833 = vmatprep.subr.bf16.mxu0 0
        %1834 = vmatpush1.bf16.msra.mxu0 0
        %1835 = vmatprep.subr.bf16.mxu0 0
        %1836 = vmatpush1.bf16.msra.mxu0 0
        %1837 = vmatprep.subr.bf16.mxu0 0
        %1838 = vmatpush1.bf16.msra.mxu0 0
        %1839 = vmatprep.subr.bf16.mxu0 0
        %1840 = vmatpush1.bf16.msra.mxu0 0
        %1841 = vmatprep.subr.bf16.mxu0 0
        %1842 = vmatpush1.bf16.msra.mxu0 0
        %1843 = vmatprep.subr.bf16.mxu0 0
        %1844 = vmatpush1.bf16.msra.mxu0 0
        %1845 = vmatprep.subr.bf16.mxu0 0
        %1846 = vmatpush1.bf16.msra.mxu0 0
        %1847 = vmatprep.subr.bf16.mxu0 0
        %1848 = vmatpush1.bf16.msra.mxu0 0
        %1849 = vmatprep.subr.bf16.mxu0 0
        %1850 = vmatpush1.bf16.msra.mxu0 0
        %1851 = vmatprep.subr.bf16.mxu0 0
        %1852 = vmatpush1.bf16.msra.mxu0 0
        %1853 = vmatprep.subr.bf16.mxu0 0
        %1854 = vmatpush1.bf16.msra.mxu0 0
        %1855 = vmatprep.subr.bf16.mxu0 0
        %1856 = vmatpush1.bf16.msra.mxu0 0
        %1857 = vmatprep.subr.bf16.mxu0 0
        %1858 = vmatpush1.bf16.msra.mxu0 0
        %1859 = vmatprep.mubr.bf16.mxu0 0
        %1860 = vmatmul.mubr.bf16.gmra.mrb[0].mxu0 %v1819
        %v1861 = vpop.f32.mrb[0].mxu0
        %v1862 = vadd.f32 0.0, %v1861
        %v1863 = vpop.f32.mrb[0].mxu0
        %v1864 = vpop.f32.mrb[0].mxu0
        %v1865 = vadd.f32 0.0, %v1864
        %v1866 = vpop.f32.mrb[0].mxu0
        %1867 = vmatprep.mubr.bf16.mxu0 0
        %1868 = vmatmul.mubr.bf16.gmra.mrb[0].mxu0 %v1822
        %v1869 = vpop.f32.mrb[0].mxu0
        %v1870 = vadd.f32 0.0, %v1869
        %v1871 = vpop.f32.mrb[0].mxu0
        %v1872 = vpop.f32.mrb[0].mxu0
        %v1873 = vpop.f32.mrb[0].mxu0
        %1874 = vdwg.mxu0
        %v1875 = vunpack.c.l.b16 %v1287
        %v1876 = vunpack.c.l.b16 %v1299
        %v1877 = vunpack.c.l.b16 %v1308
        %v1878 = vpack.c.b16 %v1876, %v1875
        %v1879 = vpack.c.b16 %v1877, %v1877
        %v1882 = vsel %vm1604, %v1742, 0
        %v1885 = vsel %vm1604, %v1743, 0
        %v1888 = vand.u32 %v1879, %v1760
        %1890 = vmatprep.subr.bf16.mxu0 0
        %1891 = vmatpush1.bf16.msra.mxu0 %v1878
        %1892 = vmatprep.subr.bf16.mxu0 0
        %1893 = vmatpush1.bf16.msra.mxu0 %v1888
        %1894 = vmatprep.subr.bf16.mxu0 0
        %1895 = vmatpush1.bf16.msra.mxu0 0
        %1896 = vmatprep.subr.bf16.mxu0 0
        %1897 = vmatpush1.bf16.msra.mxu0 0
        %1898 = vmatprep.subr.bf16.mxu0 0
        %1899 = vmatpush1.bf16.msra.mxu0 0
        %1900 = vmatprep.subr.bf16.mxu0 0
        %1901 = vmatpush1.bf16.msra.mxu0 0
        %1902 = vmatprep.subr.bf16.mxu0 0
        %1903 = vmatpush1.bf16.msra.mxu0 0
        %1904 = vmatprep.subr.bf16.mxu0 0
        %1905 = vmatpush1.bf16.msra.mxu0 0
        %1906 = vmatprep.subr.bf16.mxu0 0
        %1907 = vmatpush1.bf16.msra.mxu0 0
        %1908 = vmatprep.subr.bf16.mxu0 0
        %1909 = vmatpush1.bf16.msra.mxu0 0
        %1910 = vmatprep.subr.bf16.mxu0 0
        %1911 = vmatpush1.bf16.msra.mxu0 0
        %1912 = vmatprep.subr.bf16.mxu0 0
        %1913 = vmatpush1.bf16.msra.mxu0 0
        %1914 = vmatprep.subr.bf16.mxu0 0
        %1915 = vmatpush1.bf16.msra.mxu0 0
        %1916 = vmatprep.subr.bf16.mxu0 0
        %1917 = vmatpush1.bf16.msra.mxu0 0
        %1918 = vmatprep.subr.bf16.mxu0 0
        %1919 = vmatpush1.bf16.msra.mxu0 0
        %1920 = vmatprep.subr.bf16.mxu0 0
        %1921 = vmatpush1.bf16.msra.mxu0 0
        %1922 = vmatprep.mubr.bf16.mxu0 0
        %1923 = vmatmul.mubr.bf16.gmra.mrb[0].mxu0 %v1882
        %v1924 = vpop.f32.mrb[0].mxu0
        %v1925 = vadd.f32 0.0, %v1924
        %v1926 = vpop.f32.mrb[0].mxu0
        %v1927 = vpop.f32.mrb[0].mxu0
        %v1928 = vadd.f32 0.0, %v1927
        %v1929 = vpop.f32.mrb[0].mxu0
        %1930 = vmatprep.mubr.bf16.mxu0 0
        %1931 = vmatmul.mubr.bf16.gmra.mrb[0].mxu0 %v1885
        %v1932 = vpop.f32.mrb[0].mxu0
        %v1933 = vadd.f32 0.0, %v1932
        %v1934 = vpop.f32.mrb[0].mxu0
        %v1935 = vpop.f32.mrb[0].mxu0
        %v1936 = vpop.f32.mrb[0].mxu0
        %1937 = vdwg.mxu0
        %v1938 = vunpack.c.l.b16 %v1290
        %v1939 = vunpack.c.l.b16 %v1302
        %v1940 = vunpack.c.l.b16 %v1310
        %v1941 = vpack.c.b16 %v1939, %v1938
        %v1942 = vpack.c.b16 %v1940, %v1940
        %v1945 = vsel %vm1604, %v1744, 0
        %v1948 = vsel %vm1604, %v1745, 0
        %v1951 = vand.u32 %v1942, %v1760
        %1953 = vmatprep.subr.bf16.mxu0 0
        %1954 = vmatpush1.bf16.msra.mxu0 %v1941
        %1955 = vmatprep.subr.bf16.mxu0 0
        %1956 = vmatpush1.bf16.msra.mxu0 %v1951
        %1957 = vmatprep.subr.bf16.mxu0 0
        %1958 = vmatpush1.bf16.msra.mxu0 0
        %1959 = vmatprep.subr.bf16.mxu0 0
        %1960 = vmatpush1.bf16.msra.mxu0 0
        %1961 = vmatprep.subr.bf16.mxu0 0
        %1962 = vmatpush1.bf16.msra.mxu0 0
        %1963 = vmatprep.subr.bf16.mxu0 0
        %1964 = vmatpush1.bf16.msra.mxu0 0
        %1965 = vmatprep.subr.bf16.mxu0 0
        %1966 = vmatpush1.bf16.msra.mxu0 0
        %1967 = vmatprep.subr.bf16.mxu0 0
        %1968 = vmatpush1.bf16.msra.mxu0 0
        %1969 = vmatprep.subr.bf16.mxu0 0
        %1970 = vmatpush1.bf16.msra.mxu0 0
        %1971 = vmatprep.subr.bf16.mxu0 0
        %1972 = vmatpush1.bf16.msra.mxu0 0
        %1973 = vmatprep.subr.bf16.mxu0 0
        %1974 = vmatpush1.bf16.msra.mxu0 0
        %1975 = vmatprep.subr.bf16.mxu0 0
        %1976 = vmatpush1.bf16.msra.mxu0 0
        %1977 = vmatprep.subr.bf16.mxu0 0
        %1978 = vmatpush1.bf16.msra.mxu0 0
        %1979 = vmatprep.subr.bf16.mxu0 0
        %1980 = vmatpush1.bf16.msra.mxu0 0
        %1981 = vmatprep.subr.bf16.mxu0 0
        %1982 = vmatpush1.bf16.msra.mxu0 0
        %1983 = vmatprep.subr.bf16.mxu0 0
        %1984 = vmatpush1.bf16.msra.mxu0 0
        %1985 = vmatprep.mubr.bf16.mxu0 0
        %1986 = vmatmul.mubr.bf16.gmra.mrb[0].mxu0 %v1945
        %v1987 = vpop.f32.mrb[0].mxu0
        %v1988 = vadd.f32 0.0, %v1987
        %v1989 = vpop.f32.mrb[0].mxu0
        %v1990 = vpop.f32.mrb[0].mxu0
        %v1991 = vadd.f32 0.0, %v1990
        %v1992 = vpop.f32.mrb[0].mxu0
        %1993 = vmatprep.mubr.bf16.mxu0 0
        %1994 = vmatmul.mubr.bf16.gmra.mrb[0].mxu0 %v1948
        %v1995 = vpop.f32.mrb[0].mxu0
        %v1996 = vadd.f32 0.0, %v1995
        %v1997 = vpop.f32.mrb[0].mxu0
        %v1998 = vpop.f32.mrb[0].mxu0
        %v1999 = vpop.f32.mrb[0].mxu0
        %2000 = vdwg.mxu0
        %v2001 = vcombine.low %v1799, %v1925
        %v2002 = vcombine.high %v1799, %v1925
        %v2004 = vunpack.c.l.s4 1983009808
        %v2005 = vunpack.c.0.s8 %v2004
        %v2006 = vlaneseq
        %v2007 = vshrl.u32 %v2006, 7
        %v2008 = vsub.s32 %v2005, %v2007
        %v2009 = vrot.slane %v2001, %v2008
        %v2011 = vunpack.c.l.s4 1983009808
        %v2012 = vunpack.c.0.s8 %v2011
        %v2013 = vlaneseq
        %v2014 = vshrl.u32 %v2013, 7
        %v2015 = vsub.s32 %v2012, %v2014
        %v2016 = vrot.slane %v2002, %v2015
        %v2017 = vcombine.low %v1862, %v1988
        %v2018 = vcombine.high %v1862, %v1988
        %v2020 = vunpack.c.l.s4 1983009808
        %v2021 = vunpack.c.0.s8 %v2020
        %v2022 = vlaneseq
        %v2023 = vshrl.u32 %v2022, 7
        %v2024 = vsub.s32 %v2021, %v2023
        %v2025 = vrot.slane %v2017, %v2024
        %v2027 = vunpack.c.l.s4 1983009808
        %v2028 = vunpack.c.0.s8 %v2027
        %v2029 = vlaneseq
        %v2030 = vshrl.u32 %v2029, 7
        %v2031 = vsub.s32 %v2028, %v2030
        %v2032 = vrot.slane %v2018, %v2031
        %v2033 = vcombine.low %v2009, %v2025
        %v2034 = vcombine.high %v2009, %v2025
        %v2036 = vunpack.c.l.s4 1934713408
        %v2037 = vunpack.c.0.s8 %v2036
        %v2038 = vlaneseq
        %v2039 = vshrl.u32 %v2038, 7
        %v2040 = vsub.s32 %v2037, %v2039
        %v2041 = vrot.slane %v2033, %v2040
        %v2043 = vunpack.c.l.s4 1934713408
        %v2044 = vunpack.c.0.s8 %v2043
        %v2045 = vlaneseq
        %v2046 = vshrl.u32 %v2045, 7
        %v2047 = vsub.s32 %v2044, %v2046
        %v2048 = vrot.slane %v2034, %v2047
        %v2049 = vcombine.low %v2016, %v2032
        %v2050 = vcombine.high %v2016, %v2032
        %v2052 = vunpack.c.l.s4 1934713408
        %v2053 = vunpack.c.0.s8 %v2052
        %v2054 = vlaneseq
        %v2055 = vshrl.u32 %v2054, 7
        %v2056 = vsub.s32 %v2053, %v2055
        %v2057 = vrot.slane %v2049, %v2056
        %v2059 = vunpack.c.l.s4 1934713408
        %v2060 = vunpack.c.0.s8 %v2059
        %v2061 = vlaneseq
        %v2062 = vshrl.u32 %v2061, 7
        %v2063 = vsub.s32 %v2060, %v2062
        %v2064 = vrot.slane %v2050, %v2063
        %v2065 = vcombine.high %v2041, 0.0
        %v2066 = vcombine.high %v2048, 0.0
        %v2067 = vcombine.high %v2057, 0.0
        %v2068 = vcombine.high %v2064, 0.0
        %v2069 = vcombine.low %v1802, %v1928
        %v2070 = vcombine.high %v1802, %v1928
        %v2072 = vunpack.c.l.s4 1983009808
        %v2073 = vunpack.c.0.s8 %v2072
        %v2074 = vlaneseq
        %v2075 = vshrl.u32 %v2074, 7
        %v2076 = vsub.s32 %v2073, %v2075
        %v2077 = vrot.slane %v2069, %v2076
        %v2079 = vunpack.c.l.s4 1983009808
        %v2080 = vunpack.c.0.s8 %v2079
        %v2081 = vlaneseq
        %v2082 = vshrl.u32 %v2081, 7
        %v2083 = vsub.s32 %v2080, %v2082
        %v2084 = vrot.slane %v2070, %v2083
        %v2085 = vcombine.low %v1865, %v1991
        %v2086 = vcombine.high %v1865, %v1991
        %v2088 = vunpack.c.l.s4 1983009808
        %v2089 = vunpack.c.0.s8 %v2088
        %v2090 = vlaneseq
        %v2091 = vshrl.u32 %v2090, 7
        %v2092 = vsub.s32 %v2089, %v2091
        %v2093 = vrot.slane %v2085, %v2092
        %v2095 = vunpack.c.l.s4 1983009808
        %v2096 = vunpack.c.0.s8 %v2095
        %v2097 = vlaneseq
        %v2098 = vshrl.u32 %v2097, 7
        %v2099 = vsub.s32 %v2096, %v2098
        %v2100 = vrot.slane %v2086, %v2099
        %v2101 = vcombine.low %v2077, %v2093
        %v2102 = vcombine.high %v2077, %v2093
        %v2104 = vunpack.c.l.s4 1934713408
        %v2105 = vunpack.c.0.s8 %v2104
        %v2106 = vlaneseq
        %v2107 = vshrl.u32 %v2106, 7
        %v2108 = vsub.s32 %v2105, %v2107
        %v2109 = vrot.slane %v2101, %v2108
        %v2111 = vunpack.c.l.s4 1934713408
        %v2112 = vunpack.c.0.s8 %v2111
        %v2113 = vlaneseq
        %v2114 = vshrl.u32 %v2113, 7
        %v2115 = vsub.s32 %v2112, %v2114
        %v2116 = vrot.slane %v2102, %v2115
        %v2117 = vcombine.low %v2084, %v2100
        %v2118 = vcombine.high %v2084, %v2100
        %v2120 = vunpack.c.l.s4 1934713408
        %v2121 = vunpack.c.0.s8 %v2120
        %v2122 = vlaneseq
        %v2123 = vshrl.u32 %v2122, 7
        %v2124 = vsub.s32 %v2121, %v2123
        %v2125 = vrot.slane %v2117, %v2124
        %v2127 = vunpack.c.l.s4 1934713408
        %v2128 = vunpack.c.0.s8 %v2127
        %v2129 = vlaneseq
        %v2130 = vshrl.u32 %v2129, 7
        %v2131 = vsub.s32 %v2128, %v2130
        %v2132 = vrot.slane %v2118, %v2131
        %v2133 = vcombine.high %v2109, 0.0
        %v2134 = vcombine.high %v2116, 0.0
        %v2135 = vcombine.high %v2125, 0.0
        %v2136 = vcombine.high %v2132, 0.0
        %v2137 = vcombine.low %v1807, %v1933
        %v2139 = vunpack.c.l.s4 1983009808
        %v2140 = vunpack.c.0.s8 %v2139
        %v2141 = vlaneseq
        %v2142 = vshrl.u32 %v2141, 7
        %v2143 = vsub.s32 %v2140, %v2142
        %v2144 = vrot.slane %v2137, %v2143
        %v2145 = vcombine.low %v1870, %v1996
        %v2147 = vunpack.c.l.s4 1983009808
        %v2148 = vunpack.c.0.s8 %v2147
        %v2149 = vlaneseq
        %v2150 = vshrl.u32 %v2149, 7
        %v2151 = vsub.s32 %v2148, %v2150
        %v2152 = vrot.slane %v2145, %v2151
        %v2153 = vcombine.low %v2144, %v2152
        %v2154 = vcombine.low %v2041, %v2048
        %v2156 = vunpack.c.l.s4 1983009808
        %v2157 = vunpack.c.0.s8 %v2156
        %v2158 = vlaneseq
        %v2159 = vshrl.u32 %v2158, 7
        %v2160 = vsub.s32 %v2157, %v2159
        %v2161 = vrot.slane %v2154, %v2160
        %v2162 = vcombine.low %v2065, %v2066
        %v2164 = vunpack.c.l.s4 1983009808
        %v2165 = vunpack.c.0.s8 %v2164
        %v2166 = vlaneseq
        %v2167 = vshrl.u32 %v2166, 7
        %v2168 = vsub.s32 %v2165, %v2167
        %v2169 = vrot.slane %v2162, %v2168
        %v2170 = vcombine.low %v2057, %v2064
        %v2172 = vunpack.c.l.s4 1983009808
        %v2173 = vunpack.c.0.s8 %v2172
        %v2174 = vlaneseq
        %v2175 = vshrl.u32 %v2174, 7
        %v2176 = vsub.s32 %v2173, %v2175
        %v2177 = vrot.slane %v2170, %v2176
        %v2178 = vcombine.low %v2067, %v2068
        %v2180 = vunpack.c.l.s4 1983009808
        %v2181 = vunpack.c.0.s8 %v2180
        %v2182 = vlaneseq
        %v2183 = vshrl.u32 %v2182, 7
        %v2184 = vsub.s32 %v2181, %v2183
        %v2185 = vrot.slane %v2178, %v2184
        %v2186 = vcombine.low %v2161, %v2169
        %v2187 = vcombine.high %v2161, %v2169
        %v2189 = vunpack.c.l.s4 1934713408
        %v2190 = vunpack.c.0.s8 %v2189
        %v2191 = vlaneseq
        %v2192 = vshrl.u32 %v2191, 7
        %v2193 = vsub.s32 %v2190, %v2192
        %v2194 = vrot.slane %v2186, %v2193
        %v2196 = vunpack.c.l.s4 1934713408
        %v2197 = vunpack.c.0.s8 %v2196
        %v2198 = vlaneseq
        %v2199 = vshrl.u32 %v2198, 7
        %v2200 = vsub.s32 %v2197, %v2199
        %v2201 = vrot.slane %v2187, %v2200
        %v2202 = vcombine.low %v2177, %v2185
        %v2203 = vcombine.high %v2177, %v2185
        %v2205 = vunpack.c.l.s4 1934713408
        %v2206 = vunpack.c.0.s8 %v2205
        %v2207 = vlaneseq
        %v2208 = vshrl.u32 %v2207, 7
        %v2209 = vsub.s32 %v2206, %v2208
        %v2210 = vrot.slane %v2202, %v2209
        %v2212 = vunpack.c.l.s4 1934713408
        %v2213 = vunpack.c.0.s8 %v2212
        %v2214 = vlaneseq
        %v2215 = vshrl.u32 %v2214, 7
        %v2216 = vsub.s32 %v2213, %v2215
        %v2217 = vrot.slane %v2203, %v2216
        %v2218 = vcombine.low %v2194, %v2210
        %v2219 = vcombine.high %v2194, %v2210
        %v2220 = vcombine.low %v2201, %v2217
        %v2221 = vcombine.high %v2201, %v2217
        %v2222 = vcombine.low %v2109, %v2116
        %v2224 = vunpack.c.l.s4 1983009808
        %v2225 = vunpack.c.0.s8 %v2224
        %v2226 = vlaneseq
        %v2227 = vshrl.u32 %v2226, 7
        %v2228 = vsub.s32 %v2225, %v2227
        %v2229 = vrot.slane %v2222, %v2228
        %v2230 = vcombine.low %v2133, %v2134
        %v2232 = vunpack.c.l.s4 1983009808
        %v2233 = vunpack.c.0.s8 %v2232
        %v2234 = vlaneseq
        %v2235 = vshrl.u32 %v2234, 7
        %v2236 = vsub.s32 %v2233, %v2235
        %v2237 = vrot.slane %v2230, %v2236
        %v2238 = vcombine.low %v2125, %v2132
        %v2240 = vunpack.c.l.s4 1983009808
        %v2241 = vunpack.c.0.s8 %v2240
        %v2242 = vlaneseq
        %v2243 = vshrl.u32 %v2242, 7
        %v2244 = vsub.s32 %v2241, %v2243
        %v2245 = vrot.slane %v2238, %v2244
        %v2246 = vcombine.low %v2135, %v2136
        %v2248 = vunpack.c.l.s4 1983009808
        %v2249 = vunpack.c.0.s8 %v2248
        %v2250 = vlaneseq
        %v2251 = vshrl.u32 %v2250, 7
        %v2252 = vsub.s32 %v2249, %v2251
        %v2253 = vrot.slane %v2246, %v2252
        %v2254 = vcombine.low %v2229, %v2237
        %v2255 = vcombine.high %v2229, %v2237
        %v2257 = vunpack.c.l.s4 1934713408
        %v2258 = vunpack.c.0.s8 %v2257
        %v2259 = vlaneseq
        %v2260 = vshrl.u32 %v2259, 7
        %v2261 = vsub.s32 %v2258, %v2260
        %v2262 = vrot.slane %v2254, %v2261
        %v2264 = vunpack.c.l.s4 1934713408
        %v2265 = vunpack.c.0.s8 %v2264
        %v2266 = vlaneseq
        %v2267 = vshrl.u32 %v2266, 7
        %v2268 = vsub.s32 %v2265, %v2267
        %v2269 = vrot.slane %v2255, %v2268
        %v2270 = vcombine.low %v2245, %v2253
        %v2271 = vcombine.high %v2245, %v2253
        %v2273 = vunpack.c.l.s4 1934713408
        %v2274 = vunpack.c.0.s8 %v2273
        %v2275 = vlaneseq
        %v2276 = vshrl.u32 %v2275, 7
        %v2277 = vsub.s32 %v2274, %v2276
        %v2278 = vrot.slane %v2270, %v2277
        %v2280 = vunpack.c.l.s4 1934713408
        %v2281 = vunpack.c.0.s8 %v2280
        %v2282 = vlaneseq
        %v2283 = vshrl.u32 %v2282, 7
        %v2284 = vsub.s32 %v2281, %v2283
        %v2285 = vrot.slane %v2271, %v2284
        %v2286 = vcombine.low %v2262, %v2278
        %v2287 = vcombine.high %v2262, %v2278
        %v2288 = vcombine.low %v2269, %v2285
        %v2289 = vcombine.high %v2269, %v2285
        %v2291 = vunpack.c.l.s4 1934713408
        %v2292 = vunpack.c.0.s8 %v2291
        %v2293 = vlaneseq
        %v2294 = vshrl.u32 %v2293, 7
        %v2295 = vsub.s32 %v2292, %v2294
        %v2296 = vrot.slane %v2153, %v2295
        %v2298 = vunpack.c.l.s4 1983009808
        %v2299 = vunpack.c.0.s8 %v2298
        %v2300 = vlaneseq
        %v2301 = vshrl.u32 %v2300, 7
        %v2302 = vsub.s32 %v2299, %v2301
        %v2303 = vrot.slane %v2296, %v2302
        %v2304 = vcombine.high %v2303, 0.0
        %v2306 = vunpack.c.l.s4 1934713408
        %v2307 = vunpack.c.0.s8 %v2306
        %v2308 = vlaneseq
        %v2309 = vshrl.u32 %v2308, 7
        %v2310 = vsub.s32 %v2307, %v2309
        %v2311 = vrot.slane %v2303, %v2310
        %v2313 = vunpack.c.l.s4 1934713408
        %v2314 = vunpack.c.0.s8 %v2313
        %v2315 = vlaneseq
        %v2316 = vshrl.u32 %v2315, 7
        %v2317 = vsub.s32 %v2314, %v2316
        %v2318 = vrot.slane %v2304, %v2317
        %v2319 = vcombine.high %v2311, 0.0
        %v2320 = vcombine.high %v2318, 0.0
        %2324 = vrot.lane.b32.xlu0 %v2219, 8
        %v2325 = vpop.permute.xlu0 %2324
        %2326 = vrot.lane.b32.xlu0 %v2287, 8
        %v2327 = vpop.permute.xlu0 %2326
        %2328 = vrot.lane.b32.xlu0 %v2319, 8
        %v2329 = vpop.permute.xlu0 %2328
        %2336 = vrot.lane.b32.xlu0 %v2220, 16
        %v2337 = vpop.permute.xlu0 %2336
        %2338 = vrot.lane.b32.xlu0 %v2288, 16
        %v2339 = vpop.permute.xlu0 %2338
        %2340 = vrot.lane.b32.xlu0 %v2318, 16
        %v2341 = vpop.permute.xlu0 %2340
        %2348 = vrot.lane.b32.xlu0 %v2221, 24
        %v2349 = vpop.permute.xlu0 %2348
        %2350 = vrot.lane.b32.xlu0 %v2289, 24
        %v2351 = vpop.permute.xlu0 %2350
        %2352 = vrot.lane.b32.xlu0 %v2320, 24
        %v2353 = vpop.permute.xlu0 %2352
        %v2357 = vsel %vm1348, %v2218, %v2325
        %v2358 = vsel %vm1348, %v2286, %v2327
        %v2359 = vsel %vm1348, %v2311, %v2329
        %vm2360 = vcmask 130048
        %v2361 = vsel %vm2360, %v2357, %v2337
        %v2362 = vsel %vm2360, %v2358, %v2339
        %v2363 = vsel %vm2360, %v2359, %v2341
        %vm2364 = vcmask 195584
        %v2365 = vsel %vm2364, %v2361, %v2349
        %v2366 = vsel %vm2364, %v2362, %v2351
        %v2367 = vsel %vm2364, %v2363, %v2353
        %v2368 = vpack.c.bf16 %v2366, %v2365
        %v2369 = vpack.c.bf16 %v2367, %v2367
        %v2372 = vunpack.c.l.b16 %v2368
        %v2373 = vunpack.c.h.b16 %v2368
        %v2374 = vunpack.c.l.b16 %v2369
        %v2375 = vpack.c.b16 %v2372, %v2372
        %v2376 = vpack.c.b16 %v2373, %v2373
        %v2377 = vpack.c.b16 %v2374, %v2374
        %vm2381 = vcmask 257024
        %2382 = vst.msk [vmem:[%s134] sm:$0xf] %vm2381, %v2375
        %2383 = vst.msk [vmem:[%s134 + $0x4] sm:$0xf] %vm2381, %v2376
        %vm2384 = vcmask 253952
        %vm2385 = vsmask.f32 256
        %vm2386 = vmand %vm2384, %vm2385
        %v2387 = vld [vmem:[%s134 + $0x8] sm:$0x1]
        %v2388 = vsel %vm2386, %v2377, %v2387
        %2389 = vst [vmem:[%s134 + $0x8] sm:$0x1] %v2388
        %s2390 = sand.u32 %s52, 1
        %s2391 = scalar_lea.sflag [#allocation4], %s2390
        %s2392 = sand.u32 %s52, 1
        %s2393 = smul.addr %s2392, 12
        %s2394 = scalar_lea.vmem [#allocation5], %s2393
        // Predicated region
        $region29: #{aeformer_forward.28} parent=23 // pred_check
          %p2395 = pneg %p62
        $region30: #{aeformer_forward.28} parent=23 // pred_check_branch
          %2397 = sbr.rel (%p2395) target = $region32
        $region31: #{aeformer_forward.28} parent=23 // pred_region
          %s2399 = ssub.s32 192, 192
          %2400 = vsyncadd %s2391, %s2399
          %s2401 = smul.addr %s18, 3
          %s2402 = smul.addr %s2401, 64
          %s2403 = scalar_lea.hbm %s1, %s2402
          %s2404 = sshll.u32 %s2394, 4
          %s2405 = int_to_ptr.vmem [resolvable:$true] %s2404
          %2410 = dma.vmem_to_hbm [thread:$0]  %s2405, 192, %s2403, %s2391, 64, 64, 4
        $region32: #{aeformer_forward.28} parent=23 // pred_fallthru
          _
      $region24: #{aeformer_forward.28} parent=5 // pred_fallthru
        _
      %p2411 = scmp.le.s32.totalorder 2, %s13
      // Predicated region
      $region33: #{aeformer_forward.28} parent=5 // pred_check
        %p2412 = pneg %p2411
      $region34: #{aeformer_forward.28} parent=5 // pred_check_branch
        %2414 = sbr.rel (%p2412) target = $region36
      $region35: #{aeformer_forward.28} parent=5 // pred_region
        %s2415 = ssub.s32 %s13, 2
        // Predicated region
        $region37: #{aeformer_forward.28} parent=35 // pred_check
          %p2416 = pneg %p68
        $region38: #{aeformer_forward.28} parent=35 // pred_check_branch
          %2418 = sbr.rel (%p2416) target = $region40
        $region39: #{aeformer_forward.28} parent=35 // pred_region
          %s2419 = sand.u32 %s53, 1
          %s2420 = scalar_lea.sflag [#allocation4], %s2419
          %s2421 = sand.u32 %s53, 1
          %s2422 = smul.addr %s2421, 12
          %s2423 = scalar_lea.vmem [#allocation5], %s2422
          %2424 = dma.done %s2420, 192
        $region40: #{aeformer_forward.28} parent=35 // pred_fallthru
          _
      $region36: #{aeformer_forward.28} parent=5 // pred_fallthru
        _
    $region6: #{aeformer_forward.28} parent=1 // loop_footer
      %s17 = sadd.s32 1, %s13
    $region7: #{aeformer_forward.28} parent=1 // loop_footer_branch
      %12 = sbr.rel target = $region3
    $region8: #{aeformer_forward.28} parent=1 // loop_exit
      _
    %2425 = vsyncpa [#allocation3], 1
    %s2426 = scalar_lea.sflag [#allocation3], 1
    %2427 = vsyncpa %s2426, 1
    %2428 = vsyncpa [#allocation4], 1
    %s2429 = scalar_lea.sflag [#allocation4], 1
    %2430 = vsyncpa %s2429, 1

// kernel: aeformer_forward.30
$region0: #{aeformer_forward.30}
  #allocation0 [shape = 'u32[]', space=smem, size = 0x4, offset = 0x4, fixed_abs, tag = 'smem constant byte address 0x4 - core index']
  #allocation1 [shape = 'u32[144,128]{1,0:T(1,128)}', space=vmem, size = 0x12000, scoped, tag = 'internal scratch']
  %s0 = inlined_call_operand.hbm [shape: f32[34,32], index: 0, kind: input, shape index: {}]
  %s1 = inlined_call_operand.hbm [shape: bf16[32,128], index: 1, kind: input, shape index: {}]
  %s2 = inlined_call_operand.hbm [shape: f32[1,128], index: 2, kind: input, shape index: {}]
  %s3 = inlined_call_operand.hbm [shape: f32[1,32], index: 3, kind: input, shape index: {}]
  %s4 = inlined_call_operand.hbm [shape: f32[1,32], index: 4, kind: input, shape index: {}]
  %s5 = inlined_call_operand.hbm [shape: bf16[34,128], index: 5, kind: output, shape index: {}]
  %s6 = sld [smem:[#allocation0]]
  $region50: #{aeformer_forward.30} parent=0
    _
  %s8 = ssub.s32 1, %s6
  %s9 = scalar_select 0, %s8, %s6
  $region1: #{aeformer_forward.30} parent=0
    #allocation2 [shape = 'u8[20480]{0}', space=vmem, size = 0x5000, scoped, tag = 'input window, operand 0, single buffered']
    #allocation3 [shape = 's32[1]{0}', space=sflag, size = 0x4, scoped, tag = 'scoped memory for aeformer_forward.30']
    #allocation4 [shape = 's32[1]{0}', space=sflag, size = 0x4, scoped, tag = 'scoped memory for aeformer_forward.30']
    #allocation5 [shape = 'u8[8192]{0}', space=vmem, size = 0x2000, scoped, tag = 'input window, operand 1, single buffered']
    #allocation6 [shape = 's32[1]{0}', space=sflag, size = 0x4, scoped, tag = 'scoped memory for aeformer_forward.30']
    #allocation7 [shape = 'u8[512]{0}', space=vmem, size = 0x400, scoped, tag = 'input window, operand 2, single buffered']
    #allocation8 [shape = 'u8[512]{0}', space=vmem, size = 0x400, scoped, tag = 'input window, operand 3, single buffered']
    #allocation9 [shape = 's32[1]{0}', space=sflag, size = 0x4, scoped, tag = 'scoped memory for aeformer_forward.30']
    #allocation10 [shape = 'u8[512]{0}', space=vmem, size = 0x400, scoped, tag = 'input window, operand 4, single buffered']
    #allocation11 [shape = 'u8[10240]{0}', space=vmem, size = 0x2800, scoped, tag = 'output window, operand 0, single buffered']
    %10 = vsyncpa [#allocation3], 0
    %11 = vsyncpa [#allocation6], 0
    %12 = vsyncpa [#allocation9], 0
    %13 = vsyncpa [#allocation4], 0
    // Predicated region
    $region2: #{aeformer_forward.30} parent=1 // pred_check
      _
    $region3: #{aeformer_forward.30} parent=1 // pred_check_branch
      %15 = sbr.rel (0) target = $region5
    $region4: #{aeformer_forward.30} parent=1 // pred_region
      %s17 = ssub.s32 640, 640
      %18 = vsyncadd [#allocation3], %s17
      %s19 = sshll.u32 [#allocation2], 4
      %s20 = int_to_ptr.vmem [resolvable:$true] %s19
      %25 = dma.hbm_to_vmem [thread:$0]  %s0, 640, %s20, [#allocation3], 128, 128, 8
    $region5: #{aeformer_forward.30} parent=1 // pred_fallthru
      _
    // Predicated region
    $region6: #{aeformer_forward.30} parent=1 // pred_check
      _
    $region7: #{aeformer_forward.30} parent=1 // pred_check_branch
      %27 = sbr.rel (0) target = $region9
    $region8: #{aeformer_forward.30} parent=1 // pred_region
      %s29 = ssub.s32 256, 256
      %30 = vsyncadd [#allocation6], %s29
      %s31 = sshll.u32 [#allocation5], 4
      %s32 = int_to_ptr.vmem [resolvable:$true] %s31
      %37 = dma.hbm_to_vmem [thread:$0]  %s1, 256, %s32, [#allocation6], 64, 64, 4
    $region9: #{aeformer_forward.30} parent=1 // pred_fallthru
      _
    // Predicated region
    $region10: #{aeformer_forward.30} parent=1 // pred_check
      _
    $region11: #{aeformer_forward.30} parent=1 // pred_check_branch
      %39 = sbr.rel (0) target = $region13
    $region12: #{aeformer_forward.30} parent=1 // pred_region
      %s41 = ssub.s32 16, 16
      %42 = vsyncadd [#allocation6], %s41
      %s44 = sshll.u32 [#allocation7], 4
      %s45 = int_to_ptr.vmem [resolvable:$true] %s44
      %47 = dma.hbm_to_vmem [thread:$0]  %s2, 16, %s45, [#allocation6]
    $region13: #{aeformer_forward.30} parent=1 // pred_fallthru
      _
    // Predicated region
    $region14: #{aeformer_forward.30} parent=1 // pred_check
      _
    $region15: #{aeformer_forward.30} parent=1 // pred_check_branch
      %49 = sbr.rel (0) target = $region17
    $region16: #{aeformer_forward.30} parent=1 // pred_region
      %s51 = ssub.s32 16, 16
      %52 = vsyncadd [#allocation9], %s51
      %s54 = sshll.u32 [#allocation8], 4
      %s55 = int_to_ptr.vmem [resolvable:$true] %s54
      %57 = dma.hbm_to_vmem [thread:$0]  %s3, 16, %s55, [#allocation9]
    $region17: #{aeformer_forward.30} parent=1 // pred_fallthru
      _
    // Predicated region
    $region18: #{aeformer_forward.30} parent=1 // pred_check
      _
    $region19: #{aeformer_forward.30} parent=1 // pred_check_branch
      %59 = sbr.rel (0) target = $region21
    $region20: #{aeformer_forward.30} parent=1 // pred_region
      %s61 = ssub.s32 16, 16
      %62 = vsyncadd [#allocation9], %s61
      %s64 = sshll.u32 [#allocation10], 4
      %s65 = int_to_ptr.vmem [resolvable:$true] %s64
      %67 = dma.hbm_to_vmem [thread:$0]  %s4, 16, %s65, [#allocation9]
    $region21: #{aeformer_forward.30} parent=1 // pred_fallthru
      _
    // Predicated region
    $region22: #{aeformer_forward.30} parent=1 // pred_check
      _
    $region23: #{aeformer_forward.30} parent=1 // pred_check_branch
      %69 = sbr.rel (0) target = $region25
    $region24: #{aeformer_forward.30} parent=1 // pred_region
      %70 = dma.done [#allocation3], 640
    $region25: #{aeformer_forward.30} parent=1 // pred_fallthru
      _
    // Predicated region
    $region26: #{aeformer_forward.30} parent=1 // pred_check
      _
    $region27: #{aeformer_forward.30} parent=1 // pred_check_branch
      %72 = sbr.rel (0) target = $region29
    $region28: #{aeformer_forward.30} parent=1 // pred_region
      %73 = dma.done [#allocation6], 256
    $region29: #{aeformer_forward.30} parent=1 // pred_fallthru
      _
    // Predicated region
    $region30: #{aeformer_forward.30} parent=1 // pred_check
      _
    $region31: #{aeformer_forward.30} parent=1 // pred_check_branch
      %75 = sbr.rel (0) target = $region33
    $region32: #{aeformer_forward.30} parent=1 // pred_region
      %76 = dma.done [#allocation6], 16
    $region33: #{aeformer_forward.30} parent=1 // pred_fallthru
      _
    // Predicated region
    $region34: #{aeformer_forward.30} parent=1 // pred_check
      _
    $region35: #{aeformer_forward.30} parent=1 // pred_check_branch
      %78 = sbr.rel (0) target = $region37
    $region36: #{aeformer_forward.30} parent=1 // pred_region
      %79 = dma.done [#allocation9], 16
    $region37: #{aeformer_forward.30} parent=1 // pred_fallthru
      _
    // Predicated region
    $region38: #{aeformer_forward.30} parent=1 // pred_check
      _
    $region39: #{aeformer_forward.30} parent=1 // pred_check_branch
      %81 = sbr.rel (0) target = $region41
    $region40: #{aeformer_forward.30} parent=1 // pred_region
      %82 = dma.done [#allocation9], 16
    $region41: #{aeformer_forward.30} parent=1 // pred_fallthru
      _
    %v84 = vld [vmem:[#allocation2] sm:$0xff]
    %v85 = vld [vmem:[#allocation2 + $0x8] sm:$0xff]
    %v86 = vld [vmem:[#allocation2 + $0x10] sm:$0xff]
    %v87 = vld [vmem:[#allocation2 + $0x18] sm:$0xff]
    %v88 = vld [vmem:[#allocation2 + $0x20] sm:$0x3]
    %v89 = vld [vmem:[#allocation8] sm:$0x1]
    %v90 = vld [vmem:[#allocation10] sm:$0x1]
    %vm91 = vcmask 261120
    %v92 = vsel %vm91, %v84, 0.0
    %93 = vadd.xlane.f32.xlu0 %v92
    %v94 = vpop.xlane.xlu0 %93
    %v95 = vsel %vm91, %v85, 0.0
    %96 = vadd.xlane.f32.xlu0 %v95
    %v97 = vpop.xlane.xlu0 %96
    %v98 = vsel %vm91, %v86, 0.0
    %99 = vadd.xlane.f32.xlu0 %v98
    %v100 = vpop.xlane.xlu0 %99
    %v101 = vsel %vm91, %v87, 0.0
    %102 = vadd.xlane.f32.xlu0 %v101
    %v103 = vpop.xlane.xlu0 %102
    %vm104 = vcmask 254976
    %v105 = vsel %vm104, %v88, 0.0
    %106 = vadd.xlane.f32.xlu0 %v105
    %v107 = vpop.xlane.xlu0 %106
    %v108 = vrcp.pop 32.0
    %v109 = vmul.f32 %v94, %v108
    %v110 = vmul.f32 %v97, %v108
    %v111 = vmul.f32 %v100, %v108
    %v112 = vmul.f32 %v103, %v108
    %v113 = vmul.f32 %v107, %v108
    %v114 = vsub.f32 %v84, %v109
    %v115 = vsub.f32 %v85, %v110
    %v116 = vsub.f32 %v86, %v111
    %v117 = vsub.f32 %v87, %v112
    %v118 = vsub.f32 %v88, %v113
    %v119 = vmul.f32 %v114, %v114
    %v120 = vmul.f32 %v115, %v115
    %v121 = vmul.f32 %v116, %v116
    %v122 = vmul.f32 %v117, %v117
    %v123 = vmul.f32 %v118, %v118
    %v124 = vsel %vm91, %v119, 0.0
    %125 = vadd.xlane.f32.xlu0 %v124
    %v126 = vpop.xlane.xlu0 %125
    %v127 = vsel %vm91, %v120, 0.0
    %128 = vadd.xlane.f32.xlu0 %v127
    %v129 = vpop.xlane.xlu0 %128
    %v130 = vsel %vm91, %v121, 0.0
    %131 = vadd.xlane.f32.xlu0 %v130
    %v132 = vpop.xlane.xlu0 %131
    %v133 = vsel %vm91, %v122, 0.0
    %134 = vadd.xlane.f32.xlu0 %v133
    %v135 = vpop.xlane.xlu0 %134
    %v136 = vsel %vm104, %v123, 0.0
    %137 = vadd.xlane.f32.xlu0 %v136
    %v138 = vpop.xlane.xlu0 %137
    %v139 = vmul.f32 %v126, %v108
    %v140 = vmul.f32 %v129, %v108
    %v141 = vmul.f32 %v132, %v108
    %v142 = vmul.f32 %v135, %v108
    %v143 = vmul.f32 %v138, %v108
    %v144 = vadd.f32 %v139, 1e-05
    %v145 = vadd.f32 %v140, 1e-05
    %v146 = vadd.f32 %v141, 1e-05
    %v147 = vadd.f32 %v142, 1e-05
    %v148 = vadd.f32 %v143, 1e-05
    %v149 = vrsqrt.pop %v144
    %v150 = vrsqrt.pop %v145
    %v151 = vrsqrt.pop %v146
    %v152 = vrsqrt.pop %v147
    %v153 = vrsqrt.pop %v148
    %v154 = vmul.f32 %v114, %v149
    %v155 = vmul.f32 %v115, %v150
    %v156 = vmul.f32 %v116, %v151
    %v157 = vmul.f32 %v117, %v152
    %v158 = vmul.f32 %v118, %v153
    %v160 = vlaneseq
    %v161 = vshrl.u32 %v160, 7
    %v162 = vsub.s32 0, %v161
    %v163 = vrot.slane %v89, %v162
    %v165 = vmul.f32 %v154, %v163
    %v166 = vmul.f32 %v155, %v163
    %v167 = vmul.f32 %v156, %v163
    %v168 = vmul.f32 %v157, %v163
    %v169 = vmul.f32 %v158, %v163
    %v171 = vlaneseq
    %v172 = vshrl.u32 %v171, 7
    %v173 = vsub.s32 0, %v172
    %v174 = vrot.slane %v90, %v173
    %v176 = vadd.f32 %v165, %v174
    %v177 = vadd.f32 %v166, %v174
    %v178 = vadd.f32 %v167, %v174
    %v179 = vadd.f32 %v168, %v174
    %v180 = vadd.f32 %v169, %v174
    %v181 = vpack.c.bf16 %v177, %v176
    %v182 = vpack.c.bf16 %v179, %v178
    %v183 = vpack.c.bf16 %v180, %v180
    %v184 = vld [vmem:[#allocation5] sm:$0xf]
    %v185 = vld [vmem:[#allocation5 + $0x4] sm:$0xf]
    %v186 = vld [vmem:[#allocation5 + $0x8] sm:$0xf]
    %v187 = vld [vmem:[#allocation5 + $0xc] sm:$0xf]
    %v188 = vld [vmem:[#allocation7] sm:$0x1]
    %v190 = vlaneseq
    %v191 = vshrl.u32 %v190, 7
    %v192 = vsub.s32 0, %v191
    %v193 = vrot.slane %v188, %v192
    %v199 = vunpack.c.l.b16 %v184
    %v200 = vunpack.c.l.b16 %v185
    %v201 = vunpack.c.l.b16 %v186
    %v202 = vunpack.c.l.b16 %v187
    %v203 = vpack.c.b16 %v200, %v199
    %v204 = vpack.c.b16 %v202, %v201
    %v208 = vsel %vm91, %v181, 0
    %v211 = vsel %vm91, %v182, 0
    %v214 = vsel %vm91, %v183, 0
    %216 = vmatprep.subr.bf16.mxu0 0
    %217 = vmatpush1.bf16.msra.mxu0 %v203
    %218 = vmatprep.subr.bf16.mxu0 0
    %219 = vmatpush1.bf16.msra.mxu0 %v204
    %220 = vmatprep.subr.bf16.mxu0 0
    %221 = vmatpush1.bf16.msra.mxu0 0
    %222 = vmatprep.subr.bf16.mxu0 0
    %223 = vmatpush1.bf16.msra.mxu0 0
    %224 = vmatprep.subr.bf16.mxu0 0
    %225 = vmatpush1.bf16.msra.mxu0 0
    %226 = vmatprep.subr.bf16.mxu0 0
    %227 = vmatpush1.bf16.msra.mxu0 0
    %228 = vmatprep.subr.bf16.mxu0 0
    %229 = vmatpush1.bf16.msra.mxu0 0
    %230 = vmatprep.subr.bf16.mxu0 0
    %231 = vmatpush1.bf16.msra.mxu0 0
    %232 = vmatprep.subr.bf16.mxu0 0
    %233 = vmatpush1.bf16.msra.mxu0 0
    %234 = vmatprep.subr.bf16.mxu0 0
    %235 = vmatpush1.bf16.msra.mxu0 0
    %236 = vmatprep.subr.bf16.mxu0 0
    %237 = vmatpush1.bf16.msra.mxu0 0
    %238 = vmatprep.subr.bf16.mxu0 0
    %239 = vmatpush1.bf16.msra.mxu0 0
    %240 = vmatprep.subr.bf16.mxu0 0
    %241 = vmatpush1.bf16.msra.mxu0 0
    %242 = vmatprep.subr.bf16.mxu0 0
    %243 = vmatpush1.bf16.msra.mxu0 0
    %244 = vmatprep.subr.bf16.mxu0 0
    %245 = vmatpush1.bf16.msra.mxu0 0
    %246 = vmatprep.subr.bf16.mxu0 0
    %247 = vmatpush1.bf16.msra.mxu0 0
    %248 = vmatprep.mubr.bf16.mxu0 0
    %249 = vmatmul.mubr.bf16.gmra.mrb[0].mxu0 %v208
    %v250 = vpop.f32.mrb[0].mxu0
    %v251 = vadd.f32 %v193, %v250
    %v252 = vpop.f32.mrb[0].mxu0
    %v253 = vpop.f32.mrb[0].mxu0
    %v254 = vadd.f32 %v193, %v253
    %v255 = vpop.f32.mrb[0].mxu0
    %256 = vmatprep.mubr.bf16.mxu0 0
    %257 = vmatmul.mubr.bf16.gmra.mrb[0].mxu0 %v211
    %v258 = vpop.f32.mrb[0].mxu0
    %v259 = vadd.f32 %v193, %v258
    %v260 = vpop.f32.mrb[0].mxu0
    %v261 = vpop.f32.mrb[0].mxu0
    %v262 = vadd.f32 %v193, %v261
    %v263 = vpop.f32.mrb[0].mxu0
    %264 = vmatprep.mubr.bf16.mxu0 0
    %265 = vmatmul.mubr.bf16.gmra.mrb[0].mxu0 %v214
    %v266 = vpop.f32.mrb[0].mxu0
    %v267 = vadd.f32 %v193, %v266
    %v268 = vpop.f32.mrb[0].mxu0
    %v269 = vpop.f32.mrb[0].mxu0
    %v270 = vpop.f32.mrb[0].mxu0
    %271 = vdwg.mxu0
    %v272 = vmul.f32 %v251, 0.5
    %v273 = vmul.f32 %v254, 0.5
    %v274 = vmul.f32 %v259, 0.5
    %v275 = vmul.f32 %v262, 0.5
    %v276 = vmul.f32 %v267, 0.5
    %v277 = vmul.f32 %v251, 0.70710677
    %v278 = vmul.f32 %v254, 0.70710677
    %v279 = vmul.f32 %v259, 0.70710677
    %v280 = vmul.f32 %v262, 0.70710677
    %v281 = vmul.f32 %v267, 0.70710677
    %v282 = verf.f32.pop %v277
    %v283 = verf.f32.pop %v278
    %v284 = verf.f32.pop %v279
    %v285 = verf.f32.pop %v280
    %v286 = verf.f32.pop %v281
    %v287 = vadd.f32 %v282, 1.0
    %v288 = vadd.f32 %v283, 1.0
    %v289 = vadd.f32 %v284, 1.0
    %v290 = vadd.f32 %v285, 1.0
    %v291 = vadd.f32 %v286, 1.0
    %v292 = vmul.f32 %v272, %v287
    %v293 = vmul.f32 %v273, %v288
    %v294 = vmul.f32 %v274, %v289
    %v295 = vmul.f32 %v275, %v290
    %v296 = vmul.f32 %v276, %v291
    %v297 = vpack.c.bf16 %v293, %v292
    %v298 = vpack.c.bf16 %v295, %v294
    %v299 = vpack.c.bf16 %v296, %v296
    %v303 = vunpack.c.l.b16 %v297
    %v304 = vunpack.c.h.b16 %v297
    %v305 = vunpack.c.l.b16 %v298
    %v306 = vunpack.c.h.b16 %v298
    %v307 = vunpack.c.l.b16 %v299
    %v308 = vpack.c.b16 %v303, %v303
    %v309 = vpack.c.b16 %v304, %v304
    %v310 = vpack.c.b16 %v305, %v305
    %v311 = vpack.c.b16 %v306, %v306
    %v312 = vpack.c.b16 %v307, %v307
    %318 = vst [vmem:[#allocation11] sm:$0xf] %v308
    %319 = vst [vmem:[#allocation11 + $0x4] sm:$0xf] %v309
    %320 = vst [vmem:[#allocation11 + $0x8] sm:$0xf] %v310
    %321 = vst [vmem:[#allocation11 + $0xc] sm:$0xf] %v311
    %322 = vst [vmem:[#allocation11 + $0x10] sm:$0x1] %v312
    // Predicated region
    $region42: #{aeformer_forward.30} parent=1 // pred_check
      _
    $region43: #{aeformer_forward.30} parent=1 // pred_check_branch
      %324 = sbr.rel (0) target = $region45
    $region44: #{aeformer_forward.30} parent=1 // pred_region
      %s326 = ssub.s32 320, 320
      %327 = vsyncadd [#allocation4], %s326
      %s328 = sshll.u32 [#allocation11], 4
      %s329 = int_to_ptr.vmem [resolvable:$true] %s328
      %334 = dma.vmem_to_hbm [thread:$0]  %s329, 320, %s5, [#allocation4], 64, 64, 4
    $region45: #{aeformer_forward.30} parent=1 // pred_fallthru
      _
    // Predicated region
    $region46: #{aeformer_forward.30} parent=1 // pred_check
      _
    $region47: #{aeformer_forward.30} parent=1 // pred_check_branch
      %336 = sbr.rel (0) target = $region49
    $region48: #{aeformer_forward.30} parent=1 // pred_region
      %337 = dma.done [#allocation4], 320
    $region49: #{aeformer_forward.30} parent=1 // pred_fallthru
      _
    %338 = vsyncpa [#allocation3], 1
    %339 = vsyncpa [#allocation6], 1
    %340 = vsyncpa [#allocation9], 1
    %341 = vsyncpa [#allocation4], 1

// kernel: aeformer_forward.37
$region0: #{aeformer_forward.37}
  #allocation0 [shape = 'u32[]', space=smem, size = 0x4, offset = 0x4, fixed_abs, tag = 'smem constant byte address 0x4 - core index']
  #allocation1 [shape = 'u32[144,128]{1,0:T(1,128)}', space=vmem, size = 0x12000, scoped, tag = 'internal scratch']
  %s0 = inlined_call_operand.hbm [shape: f32[34,32], index: 0, kind: input, shape index: {}]
  %s1 = inlined_call_operand.hbm [shape: f32[1,32], index: 1, kind: input, shape index: {}]
  %s2 = inlined_call_operand.hbm [shape: f32[1,32], index: 2, kind: input, shape index: {}]
  %s3 = inlined_call_operand.hbm [shape: f32[34,32], index: 3, kind: output, shape index: {}]
  %s4 = sld [smem:[#allocation0]]
  $region34: #{aeformer_forward.37} parent=0
    _
  %s6 = ssub.s32 1, %s4
  %s7 = scalar_select 0, %s6, %s4
  $region1: #{aeformer_forward.37} parent=0
    #allocation2 [shape = 'u8[20480]{0}', space=vmem, size = 0x5000, scoped, tag = 'input window, operand 0, single buffered']
    #allocation3 [shape = 's32[1]{0}', space=sflag, size = 0x4, scoped, tag = 'scoped memory for aeformer_forward.37']
    #allocation4 [shape = 's32[1]{0}', space=sflag, size = 0x4, scoped, tag = 'scoped memory for aeformer_forward.37']
    #allocation5 [shape = 'u8[512]{0}', space=vmem, size = 0x400, scoped, tag = 'input window, operand 1, single buffered']
    #allocation6 [shape = 's32[1]{0}', space=sflag, size = 0x4, scoped, tag = 'scoped memory for aeformer_forward.37']
    #allocation7 [shape = 'u8[512]{0}', space=vmem, size = 0x400, scoped, tag = 'input window, operand 2, single buffered']
    #allocation8 [shape = 'u8[20480]{0}', space=vmem, size = 0x5000, scoped, tag = 'output window, operand 0, single buffered']
    %8 = vsyncpa [#allocation3], 0
    %9 = vsyncpa [#allocation6], 0
    %10 = vsyncpa [#allocation4], 0
    // Predicated region
    $region2: #{aeformer_forward.37} parent=1 // pred_check
      _
    $region3: #{aeformer_forward.37} parent=1 // pred_check_branch
      %12 = sbr.rel (0) target = $region5
    $region4: #{aeformer_forward.37} parent=1 // pred_region
      %s14 = ssub.s32 640, 640
      %15 = vsyncadd [#allocation3], %s14
      %s16 = sshll.u32 [#allocation2], 4
      %s17 = int_to_ptr.vmem [resolvable:$true] %s16
      %22 = dma.hbm_to_vmem [thread:$0]  %s0, 640, %s17, [#allocation3], 128, 128, 8
    $region5: #{aeformer_forward.37} parent=1 // pred_fallthru
      _
    // Predicated region
    $region6: #{aeformer_forward.37} parent=1 // pred_check
      _
    $region7: #{aeformer_forward.37} parent=1 // pred_check_branch
      %24 = sbr.rel (0) target = $region9
    $region8: #{aeformer_forward.37} parent=1 // pred_region
      %s26 = ssub.s32 16, 16
      %27 = vsyncadd [#allocation6], %s26
      %s29 = sshll.u32 [#allocation5], 4
      %s30 = int_to_ptr.vmem [resolvable:$true] %s29
      %32 = dma.hbm_to_vmem [thread:$0]  %s1, 16, %s30, [#allocation6]
    $region9: #{aeformer_forward.37} parent=1 // pred_fallthru
      _
    // Predicated region
    $region10: #{aeformer_forward.37} parent=1 // pred_check
      _
    $region11: #{aeformer_forward.37} parent=1 // pred_check_branch
      %34 = sbr.rel (0) target = $region13
    $region12: #{aeformer_forward.37} parent=1 // pred_region
      %s36 = ssub.s32 16, 16
      %37 = vsyncadd [#allocation6], %s36
      %s39 = sshll.u32 [#allocation7], 4
      %s40 = int_to_ptr.vmem [resolvable:$true] %s39
      %42 = dma.hbm_to_vmem [thread:$0]  %s2, 16, %s40, [#allocation6]
    $region13: #{aeformer_forward.37} parent=1 // pred_fallthru
      _
    // Predicated region
    $region14: #{aeformer_forward.37} parent=1 // pred_check
      _
    $region15: #{aeformer_forward.37} parent=1 // pred_check_branch
      %44 = sbr.rel (0) target = $region17
    $region16: #{aeformer_forward.37} parent=1 // pred_region
      %45 = dma.done [#allocation3], 640
    $region17: #{aeformer_forward.37} parent=1 // pred_fallthru
      _
    // Predicated region
    $region18: #{aeformer_forward.37} parent=1 // pred_check
      _
    $region19: #{aeformer_forward.37} parent=1 // pred_check_branch
      %47 = sbr.rel (0) target = $region21
    $region20: #{aeformer_forward.37} parent=1 // pred_region
      %48 = dma.done [#allocation6], 16
    $region21: #{aeformer_forward.37} parent=1 // pred_fallthru
      _
    // Predicated region
    $region22: #{aeformer_forward.37} parent=1 // pred_check
      _
    $region23: #{aeformer_forward.37} parent=1 // pred_check_branch
      %50 = sbr.rel (0) target = $region25
    $region24: #{aeformer_forward.37} parent=1 // pred_region
      %51 = dma.done [#allocation6], 16
    $region25: #{aeformer_forward.37} parent=1 // pred_fallthru
      _
    %v52 = vld [vmem:[#allocation2] sm:$0xff]
    %v53 = vld [vmem:[#allocation2 + $0x8] sm:$0xff]
    %v54 = vld [vmem:[#allocation2 + $0x10] sm:$0xff]
    %v55 = vld [vmem:[#allocation2 + $0x18] sm:$0xff]
    %v56 = vld [vmem:[#allocation2 + $0x20] sm:$0x3]
    %v57 = vld [vmem:[#allocation5] sm:$0x1]
    %v58 = vld [vmem:[#allocation7] sm:$0x1]
    %vm59 = vcmask 261120
    %v60 = vsel %vm59, %v52, 0.0
    %61 = vadd.xlane.f32.xlu0 %v60
    %v62 = vpop.xlane.xlu0 %61
    %v63 = vsel %vm59, %v53, 0.0
    %64 = vadd.xlane.f32.xlu0 %v63
    %v65 = vpop.xlane.xlu0 %64
    %v66 = vsel %vm59, %v54, 0.0
    %67 = vadd.xlane.f32.xlu0 %v66
    %v68 = vpop.xlane.xlu0 %67
    %v69 = vsel %vm59, %v55, 0.0
    %70 = vadd.xlane.f32.xlu0 %v69
    %v71 = vpop.xlane.xlu0 %70
    %vm72 = vcmask 254976
    %v73 = vsel %vm72, %v56, 0.0
    %74 = vadd.xlane.f32.xlu0 %v73
    %v75 = vpop.xlane.xlu0 %74
    %v76 = vrcp.pop 32.0
    %v77 = vmul.f32 %v62, %v76
    %v78 = vmul.f32 %v65, %v76
    %v79 = vmul.f32 %v68, %v76
    %v80 = vmul.f32 %v71, %v76
    %v81 = vmul.f32 %v75, %v76
    %v82 = vsub.f32 %v52, %v77
    %v83 = vsub.f32 %v53, %v78
    %v84 = vsub.f32 %v54, %v79
    %v85 = vsub.f32 %v55, %v80
    %v86 = vsub.f32 %v56, %v81
    %v87 = vmul.f32 %v82, %v82
    %v88 = vmul.f32 %v83, %v83
    %v89 = vmul.f32 %v84, %v84
    %v90 = vmul.f32 %v85, %v85
    %v91 = vmul.f32 %v86, %v86
    %v92 = vsel %vm59, %v87, 0.0
    %93 = vadd.xlane.f32.xlu0 %v92
    %v94 = vpop.xlane.xlu0 %93
    %v95 = vsel %vm59, %v88, 0.0
    %96 = vadd.xlane.f32.xlu0 %v95
    %v97 = vpop.xlane.xlu0 %96
    %v98 = vsel %vm59, %v89, 0.0
    %99 = vadd.xlane.f32.xlu0 %v98
    %v100 = vpop.xlane.xlu0 %99
    %v101 = vsel %vm59, %v90, 0.0
    %102 = vadd.xlane.f32.xlu0 %v101
    %v103 = vpop.xlane.xlu0 %102
    %v104 = vsel %vm72, %v91, 0.0
    %105 = vadd.xlane.f32.xlu0 %v104
    %v106 = vpop.xlane.xlu0 %105
    %v107 = vmul.f32 %v94, %v76
    %v108 = vmul.f32 %v97, %v76
    %v109 = vmul.f32 %v100, %v76
    %v110 = vmul.f32 %v103, %v76
    %v111 = vmul.f32 %v106, %v76
    %v112 = vadd.f32 %v107, 1e-05
    %v113 = vadd.f32 %v108, 1e-05
    %v114 = vadd.f32 %v109, 1e-05
    %v115 = vadd.f32 %v110, 1e-05
    %v116 = vadd.f32 %v111, 1e-05
    %v117 = vrsqrt.pop %v112
    %v118 = vrsqrt.pop %v113
    %v119 = vrsqrt.pop %v114
    %v120 = vrsqrt.pop %v115
    %v121 = vrsqrt.pop %v116
    %v122 = vmul.f32 %v82, %v117
    %v123 = vmul.f32 %v83, %v118
    %v124 = vmul.f32 %v84, %v119
    %v125 = vmul.f32 %v85, %v120
    %v126 = vmul.f32 %v86, %v121
    %v128 = vlaneseq
    %v129 = vshrl.u32 %v128, 7
    %v130 = vsub.s32 0, %v129
    %v131 = vrot.slane %v57, %v130
    %v133 = vmul.f32 %v122, %v131
    %v134 = vmul.f32 %v123, %v131
    %v135 = vmul.f32 %v124, %v131
    %v136 = vmul.f32 %v125, %v131
    %v137 = vmul.f32 %v126, %v131
    %v139 = vlaneseq
    %v140 = vshrl.u32 %v139, 7
    %v141 = vsub.s32 0, %v140
    %v142 = vrot.slane %v58, %v141
    %v144 = vadd.f32 %v133, %v142
    %v145 = vadd.f32 %v134, %v142
    %v146 = vadd.f32 %v135, %v142
    %v147 = vadd.f32 %v136, %v142
    %v148 = vadd.f32 %v137, %v142
    %149 = vst.msk [vmem:[#allocation8] sm:$0xff] %vm59, %v144
    %150 = vst.msk [vmem:[#allocation8 + $0x8] sm:$0xff] %vm59, %v145
    %151 = vst.msk [vmem:[#allocation8 + $0x10] sm:$0xff] %vm59, %v146
    %152 = vst.msk [vmem:[#allocation8 + $0x18] sm:$0xff] %vm59, %v147
    %153 = vst.msk [vmem:[#allocation8 + $0x20] sm:$0x3] %vm72, %v148
    // Predicated region
    $region26: #{aeformer_forward.37} parent=1 // pred_check
      _
    $region27: #{aeformer_forward.37} parent=1 // pred_check_branch
      %155 = sbr.rel (0) target = $region29
    $region28: #{aeformer_forward.37} parent=1 // pred_region
      %s157 = ssub.s32 640, 640
      %158 = vsyncadd [#allocation4], %s157
      %s159 = sshll.u32 [#allocation8], 4
      %s160 = int_to_ptr.vmem [resolvable:$true] %s159
      %165 = dma.vmem_to_hbm [thread:$0]  %s160, 640, %s3, [#allocation4], 128, 128, 8
    $region29: #{aeformer_forward.37} parent=1 // pred_fallthru
      _
    // Predicated region
    $region30: #{aeformer_forward.37} parent=1 // pred_check
      _
    $region31: #{aeformer_forward.37} parent=1 // pred_check_branch
      %167 = sbr.rel (0) target = $region33
    $region32: #{aeformer_forward.37} parent=1 // pred_region
      %168 = dma.done [#allocation4], 640
    $region33: #{aeformer_forward.37} parent=1 // pred_fallthru
      _
    %169 = vsyncpa [#allocation3], 1
    %170 = vsyncpa [#allocation6], 1
    %171 = vsyncpa [#allocation4], 1

// kernel: aeformer_forward.31
$region0: #{aeformer_forward.31}
  #allocation0 [shape = 'u32[]', space=smem, size = 0x4, offset = 0x4, fixed_abs, tag = 'smem constant byte address 0x4 - core index']
  #allocation1 [shape = 'u32[144,128]{1,0:T(1,128)}', space=vmem, size = 0x12000, scoped, tag = 'internal scratch']
  %s0 = inlined_call_operand.hbm [shape: bf16[34,128], index: 0, kind: input, shape index: {}]
  %s1 = inlined_call_operand.hbm [shape: bf16[128,32], index: 1, kind: input, shape index: {}]
  %s2 = inlined_call_operand.hbm [shape: f32[1,32], index: 2, kind: input, shape index: {}]
  %s3 = inlined_call_operand.hbm [shape: f32[34,32], index: 3, kind: input, shape index: {}]
  %s4 = inlined_call_operand.hbm [shape: f32[34,32], index: 4, kind: output, shape index: {}]
  %s5 = sld [smem:[#allocation0]]
  $region42: #{aeformer_forward.31} parent=0
    _
  %s7 = ssub.s32 1, %s5
  %s8 = scalar_select 0, %s7, %s5
  $region1: #{aeformer_forward.31} parent=0
    #allocation2 [shape = 'u8[10240]{0}', space=vmem, size = 0x2800, scoped, tag = 'input window, operand 0, single buffered']
    #allocation3 [shape = 's32[1]{0}', space=sflag, size = 0x4, scoped, tag = 'scoped memory for aeformer_forward.31']
    #allocation4 [shape = 's32[1]{0}', space=sflag, size = 0x4, scoped, tag = 'scoped memory for aeformer_forward.31']
    #allocation5 [shape = 'u8[32768]{0}', space=vmem, size = 0x8000, scoped, tag = 'input window, operand 1, single buffered']
    #allocation6 [shape = 's32[1]{0}', space=sflag, size = 0x4, scoped, tag = 'scoped memory for aeformer_forward.31']
    #allocation7 [shape = 'u8[512]{0}', space=vmem, size = 0x400, scoped, tag = 'input window, operand 2, single buffered']
    #allocation8 [shape = 'u8[20480]{0}', space=vmem, size = 0x5000, scoped, tag = 'input window, operand 3, single buffered']
    #allocation9 [shape = 's32[1]{0}', space=sflag, size = 0x4, scoped, tag = 'scoped memory for aeformer_forward.31']
    #allocation10 [shape = 'u8[20480]{0}', space=vmem, size = 0x5000, scoped, tag = 'output window, operand 0, single buffered']
    %9 = vsyncpa [#allocation3], 0
    %10 = vsyncpa [#allocation6], 0
    %11 = vsyncpa [#allocation9], 0
    %12 = vsyncpa [#allocation4], 0
    // Predicated region
    $region2: #{aeformer_forward.31} parent=1 // pred_check
      _
    $region3: #{aeformer_forward.31} parent=1 // pred_check_branch
      %14 = sbr.rel (0) target = $region5
    $region4: #{aeformer_forward.31} parent=1 // pred_region
      %s16 = ssub.s32 320, 320
      %17 = vsyncadd [#allocation3], %s16
      %s18 = sshll.u32 [#allocation2], 4
      %s19 = int_to_ptr.vmem [resolvable:$true] %s18
      %24 = dma.hbm_to_vmem [thread:$0]  %s0, 320, %s19, [#allocation3], 64, 64, 4
    $region5: #{aeformer_forward.31} parent=1 // pred_fallthru
      _
    // Predicated region
    $region6: #{aeformer_forward.31} parent=1 // pred_check
      _
    $region7: #{aeformer_forward.31} parent=1 // pred_check_branch
      %26 = sbr.rel (0) target = $region9
    $region8: #{aeformer_forward.31} parent=1 // pred_region
      %s28 = ssub.s32 1024, 1024
      %29 = vsyncadd [#allocation6], %s28
      %s30 = sshll.u32 [#allocation5], 4
      %s31 = int_to_ptr.vmem [resolvable:$true] %s30
      %36 = dma.hbm_to_vmem [thread:$0]  %s1, 1024, %s31, [#allocation6], 64, 64, 4
    $region9: #{aeformer_forward.31} parent=1 // pred_fallthru
      _
    // Predicated region
    $region10: #{aeformer_forward.31} parent=1 // pred_check
      _
    $region11: #{aeformer_forward.31} parent=1 // pred_check_branch
      %38 = sbr.rel (0) target = $region13
    $region12: #{aeformer_forward.31} parent=1 // pred_region
      %s40 = ssub.s32 16, 16
      %41 = vsyncadd [#allocation6], %s40
      %s43 = sshll.u32 [#allocation7], 4
      %s44 = int_to_ptr.vmem [resolvable:$true] %s43
      %46 = dma.hbm_to_vmem [thread:$0]  %s2, 16, %s44, [#allocation6]
    $region13: #{aeformer_forward.31} parent=1 // pred_fallthru
      _
    // Predicated region
    $region14: #{aeformer_forward.31} parent=1 // pred_check
      _
    $region15: #{aeformer_forward.31} parent=1 // pred_check_branch
      %48 = sbr.rel (0) target = $region17
    $region16: #{aeformer_forward.31} parent=1 // pred_region
      %s50 = ssub.s32 640, 640
      %51 = vsyncadd [#allocation9], %s50
      %s52 = sshll.u32 [#allocation8], 4
      %s53 = int_to_ptr.vmem [resolvable:$true] %s52
      %58 = dma.hbm_to_vmem [thread:$0]  %s3, 640, %s53, [#allocation9], 128, 128, 8
    $region17: #{aeformer_forward.31} parent=1 // pred_fallthru
      _
    // Predicated region
    $region18: #{aeformer_forward.31} parent=1 // pred_check
      _
    $region19: #{aeformer_forward.31} parent=1 // pred_check_branch
      %60 = sbr.rel (0) target = $region21
    $region20: #{aeformer_forward.31} parent=1 // pred_region
      %61 = dma.done [#allocation3], 320
    $region21: #{aeformer_forward.31} parent=1 // pred_fallthru
      _
    // Predicated region
    $region22: #{aeformer_forward.31} parent=1 // pred_check
      _
    $region23: #{aeformer_forward.31} parent=1 // pred_check_branch
      %63 = sbr.rel (0) target = $region25
    $region24: #{aeformer_forward.31} parent=1 // pred_region
      %64 = dma.done [#allocation6], 1024
    $region25: #{aeformer_forward.31} parent=1 // pred_fallthru
      _
    // Predicated region
    $region26: #{aeformer_forward.31} parent=1 // pred_check
      _
    $region27: #{aeformer_forward.31} parent=1 // pred_check_branch
      %66 = sbr.rel (0) target = $region29
    $region28: #{aeformer_forward.31} parent=1 // pred_region
      %67 = dma.done [#allocation6], 16
    $region29: #{aeformer_forward.31} parent=1 // pred_fallthru
      _
    // Predicated region
    $region30: #{aeformer_forward.31} parent=1 // pred_check
      _
    $region31: #{aeformer_forward.31} parent=1 // pred_check_branch
      %69 = sbr.rel (0) target = $region33
    $region32: #{aeformer_forward.31} parent=1 // pred_region
      %70 = dma.done [#allocation9], 640
    $region33: #{aeformer_forward.31} parent=1 // pred_fallthru
      _
    %v72 = vld [vmem:[#allocation2] sm:$0xf]
    %v73 = vld [vmem:[#allocation2 + $0x4] sm:$0xf]
    %v74 = vld [vmem:[#allocation2 + $0x8] sm:$0xf]
    %v75 = vld [vmem:[#allocation2 + $0xc] sm:$0xf]
    %v76 = vld [vmem:[#allocation2 + $0x10] sm:$0x1]
    %v77 = vld [vmem:[#allocation5] sm:$0xf]
    %v78 = vld [vmem:[#allocation5 + $0x4] sm:$0xf]
    %v79 = vld [vmem:[#allocation5 + $0x8] sm:$0xf]
    %v80 = vld [vmem:[#allocation5 + $0xc] sm:$0xf]
    %v81 = vld [vmem:[#allocation5 + $0x10] sm:$0xf]
    %v82 = vld [vmem:[#allocation5 + $0x14] sm:$0xf]
    %v83 = vld [vmem:[#allocation5 + $0x18] sm:$0xf]
    %v84 = vld [vmem:[#allocation5 + $0x1c] sm:$0xf]
    %v85 = vld [vmem:[#allocation5 + $0x20] sm:$0xf]
    %v86 = vld [vmem:[#allocation5 + $0x24] sm:$0xf]
    %v87 = vld [vmem:[#allocation5 + $0x28] sm:$0xf]
    %v88 = vld [vmem:[#allocation5 + $0x2c] sm:$0xf]
    %v89 = vld [vmem:[#allocation5 + $0x30] sm:$0xf]
    %v90 = vld [vmem:[#allocation5 + $0x34] sm:$0xf]
    %v91 = vld [vmem:[#allocation5 + $0x38] sm:$0xf]
    %v92 = vld [vmem:[#allocation5 + $0x3c] sm:$0xf]
    %v93 = vld [vmem:[#allocation7] sm:$0x1]
    %v95 = vlaneseq
    %v96 = vshrl.u32 %v95, 7
    %v97 = vsub.s32 0, %v96
    %v98 = vrot.slane %v93, %v97
    %v105 = vunpack.c.l.b16 %v72
    %v106 = vunpack.c.l.b16 %v73
    %v107 = vunpack.c.l.b16 %v74
    %v108 = vunpack.c.l.b16 %v75
    %v109 = vunpack.c.l.b16 %v76
    %v110 = vpack.c.b16 %v106, %v105
    %v111 = vpack.c.b16 %v108, %v107
    %v112 = vpack.c.b16 %v109, %v109
    %v132 = vunpack.c.l.b16 %v77
    %v133 = vunpack.c.l.b16 %v78
    %v134 = vunpack.c.l.b16 %v79
    %v135 = vunpack.c.l.b16 %v80
    %v136 = vunpack.c.l.b16 %v81
    %v137 = vunpack.c.l.b16 %v82
    %v138 = vunpack.c.l.b16 %v83
    %v139 = vunpack.c.l.b16 %v84
    %v140 = vunpack.c.l.b16 %v85
    %v141 = vunpack.c.l.b16 %v86
    %v142 = vunpack.c.l.b16 %v87
    %v143 = vunpack.c.l.b16 %v88
    %v144 = vunpack.c.l.b16 %v89
    %v145 = vunpack.c.l.b16 %v90
    %v146 = vunpack.c.l.b16 %v91
    %v147 = vunpack.c.l.b16 %v92
    %v148 = vpack.c.b16 %v133, %v132
    %v149 = vpack.c.b16 %v135, %v134
    %v150 = vpack.c.b16 %v137, %v136
    %v151 = vpack.c.b16 %v139, %v138
    %v152 = vpack.c.b16 %v141, %v140
    %v153 = vpack.c.b16 %v143, %v142
    %v154 = vpack.c.b16 %v145, %v144
    %v155 = vpack.c.b16 %v147, %v146
    %164 = vmatprep.subr.bf16.mxu0 0
    %165 = vmatpush1.bf16.msra.mxu0 %v148
    %166 = vmatprep.subr.bf16.mxu0 0
    %167 = vmatpush1.bf16.msra.mxu0 %v149
    %168 = vmatprep.subr.bf16.mxu0 0
    %169 = vmatpush1.bf16.msra.mxu0 %v150
    %170 = vmatprep.subr.bf16.mxu0 0
    %171 = vmatpush1.bf16.msra.mxu0 %v151
    %172 = vmatprep.subr.bf16.mxu0 0
    %173 = vmatpush1.bf16.msra.mxu0 %v152
    %174 = vmatprep.subr.bf16.mxu0 0
    %175 = vmatpush1.bf16.msra.mxu0 %v153
    %176 = vmatprep.subr.bf16.mxu0 0
    %177 = vmatpush1.bf16.msra.mxu0 %v154
    %178 = vmatprep.subr.bf16.mxu0 0
    %179 = vmatpush1.bf16.msra.mxu0 %v155
    %180 = vmatprep.subr.bf16.mxu0 0
    %181 = vmatpush1.bf16.msra.mxu0 0
    %182 = vmatprep.subr.bf16.mxu0 0
    %183 = vmatpush1.bf16.msra.mxu0 0
    %184 = vmatprep.subr.bf16.mxu0 0
    %185 = vmatpush1.bf16.msra.mxu0 0
    %186 = vmatprep.subr.bf16.mxu0 0
    %187 = vmatpush1.bf16.msra.mxu0 0
    %188 = vmatprep.subr.bf16.mxu0 0
    %189 = vmatpush1.bf16.msra.mxu0 0
    %190 = vmatprep.subr.bf16.mxu0 0
    %191 = vmatpush1.bf16.msra.mxu0 0
    %192 = vmatprep.subr.bf16.mxu0 0
    %193 = vmatpush1.bf16.msra.mxu0 0
    %194 = vmatprep.subr.bf16.mxu0 0
    %195 = vmatpush1.bf16.msra.mxu0 0
    %196 = vmatprep.mubr.bf16.mxu0 0
    %197 = vmatmul.mubr.bf16.gmra.mrb[0].mxu0 %v110
    %v198 = vpop.f32.mrb[0].mxu0
    %v199 = vadd.f32 %v98, %v198
    %v200 = vpop.f32.mrb[0].mxu0
    %v201 = vpop.f32.mrb[0].mxu0
    %v202 = vadd.f32 %v98, %v201
    %v203 = vpop.f32.mrb[0].mxu0
    %204 = vmatprep.mubr.bf16.mxu0 0
    %205 = vmatmul.mubr.bf16.gmra.mrb[0].mxu0 %v111
    %v206 = vpop.f32.mrb[0].mxu0
    %v207 = vadd.f32 %v98, %v206
    %v208 = vpop.f32.mrb[0].mxu0
    %v209 = vpop.f32.mrb[0].mxu0
    %v210 = vadd.f32 %v98, %v209
    %v211 = vpop.f32.mrb[0].mxu0
    %212 = vmatprep.mubr.bf16.mxu0 0
    %213 = vmatmul.mubr.bf16.gmra.mrb[0].mxu0 %v112
    %v214 = vpop.f32.mrb[0].mxu0
    %v215 = vadd.f32 %v98, %v214
    %v216 = vpop.f32.mrb[0].mxu0
    %v217 = vpop.f32.mrb[0].mxu0
    %v218 = vpop.f32.mrb[0].mxu0
    %219 = vdwg.mxu0
    %v220 = vld [vmem:[#allocation8] sm:$0xff]
    %v221 = vld [vmem:[#allocation8 + $0x8] sm:$0xff]
    %v222 = vld [vmem:[#allocation8 + $0x10] sm:$0xff]
    %v223 = vld [vmem:[#allocation8 + $0x18] sm:$0xff]
    %v224 = vld [vmem:[#allocation8 + $0x20] sm:$0x3]
    %v225 = vadd.f32 %v199, %v220
    %v226 = vadd.f32 %v202, %v221
    %v227 = vadd.f32 %v207, %v222
    %v228 = vadd.f32 %v210, %v223
    %v229 = vadd.f32 %v215, %v224
    %vm230 = vcmask 261120
    %231 = vst.msk [vmem:[#allocation10] sm:$0xff] %vm230, %v225
    %232 = vst.msk [vmem:[#allocation10 + $0x8] sm:$0xff] %vm230, %v226
    %233 = vst.msk [vmem:[#allocation10 + $0x10] sm:$0xff] %vm230, %v227
    %234 = vst.msk [vmem:[#allocation10 + $0x18] sm:$0xff] %vm230, %v228
    %vm235 = vcmask 254976
    %236 = vst.msk [vmem:[#allocation10 + $0x20] sm:$0x3] %vm235, %v229
    // Predicated region
    $region34: #{aeformer_forward.31} parent=1 // pred_check
      _
    $region35: #{aeformer_forward.31} parent=1 // pred_check_branch
      %238 = sbr.rel (0) target = $region37
    $region36: #{aeformer_forward.31} parent=1 // pred_region
      %s240 = ssub.s32 640, 640
      %241 = vsyncadd [#allocation4], %s240
      %s242 = sshll.u32 [#allocation10], 4
      %s243 = int_to_ptr.vmem [resolvable:$true] %s242
      %248 = dma.vmem_to_hbm [thread:$0]  %s243, 640, %s4, [#allocation4], 128, 128, 8
    $region37: #{aeformer_forward.31} parent=1 // pred_fallthru
      _
    // Predicated region
    $region38: #{aeformer_forward.31} parent=1 // pred_check
      _
    $region39: #{aeformer_forward.31} parent=1 // pred_check_branch
      %250 = sbr.rel (0) target = $region41
    $region40: #{aeformer_forward.31} parent=1 // pred_region
      %251 = dma.done [#allocation4], 640
    $region41: #{aeformer_forward.31} parent=1 // pred_fallthru
      _
    %252 = vsyncpa [#allocation3], 1
    %253 = vsyncpa [#allocation6], 1
    %254 = vsyncpa [#allocation9], 1
    %255 = vsyncpa [#allocation4], 1

// kernel: aeformer_forward.38
$region0: #{aeformer_forward.38}
  #allocation0 [shape = 'u32[]', space=smem, size = 0x4, offset = 0x4, fixed_abs, tag = 'smem constant byte address 0x4 - core index']
  #allocation1 [shape = 'u32[144,128]{1,0:T(1,128)}', space=vmem, size = 0x12000, scoped, tag = 'internal scratch']
  %s0 = inlined_call_operand.hbm [shape: f32[34,32], index: 0, kind: input, shape index: {}]
  %s1 = inlined_call_operand.hbm [shape: bf16[32,16], index: 1, kind: input, shape index: {}]
  %s2 = inlined_call_operand.hbm [shape: f32[1,16], index: 2, kind: input, shape index: {}]
  %s3 = inlined_call_operand.hbm [shape: f32[34,16], index: 3, kind: output, shape index: {}]
  %s4 = sld [smem:[#allocation0]]
  $region34: #{aeformer_forward.38} parent=0
    _
  %s6 = ssub.s32 1, %s4
  %s7 = scalar_select 0, %s6, %s4
  $region1: #{aeformer_forward.38} parent=0
    #allocation2 [shape = 'u8[20480]{0}', space=vmem, size = 0x5000, scoped, tag = 'input window, operand 0, single buffered']
    #allocation3 [shape = 's32[1]{0}', space=sflag, size = 0x4, scoped, tag = 'scoped memory for aeformer_forward.38']
    #allocation4 [shape = 's32[1]{0}', space=sflag, size = 0x4, scoped, tag = 'scoped memory for aeformer_forward.38']
    #allocation5 [shape = 'u8[8192]{0}', space=vmem, size = 0x2000, scoped, tag = 'input window, operand 1, single buffered']
    #allocation6 [shape = 's32[1]{0}', space=sflag, size = 0x4, scoped, tag = 'scoped memory for aeformer_forward.38']
    #allocation7 [shape = 'u8[512]{0}', space=vmem, size = 0x400, scoped, tag = 'input window, operand 2, single buffered']
    #allocation8 [shape = 'u8[20480]{0}', space=vmem, size = 0x5000, scoped, tag = 'output window, operand 0, single buffered']
    %8 = vsyncpa [#allocation3], 0
    %9 = vsyncpa [#allocation6], 0
    %10 = vsyncpa [#allocation4], 0
    // Predicated region
    $region2: #{aeformer_forward.38} parent=1 // pred_check
      _
    $region3: #{aeformer_forward.38} parent=1 // pred_check_branch
      %12 = sbr.rel (0) target = $region5
    $region4: #{aeformer_forward.38} parent=1 // pred_region
      %s14 = ssub.s32 640, 640
      %15 = vsyncadd [#allocation3], %s14
      %s16 = sshll.u32 [#allocation2], 4
      %s17 = int_to_ptr.vmem [resolvable:$true] %s16
      %22 = dma.hbm_to_vmem [thread:$0]  %s0, 640, %s17, [#allocation3], 128, 128, 8
    $region5: #{aeformer_forward.38} parent=1 // pred_fallthru
      _
    // Predicated region
    $region6: #{aeformer_forward.38} parent=1 // pred_check
      _
    $region7: #{aeformer_forward.38} parent=1 // pred_check_branch
      %24 = sbr.rel (0) target = $region9
    $region8: #{aeformer_forward.38} parent=1 // pred_region
      %s26 = ssub.s32 256, 256
      %27 = vsyncadd [#allocation6], %s26
      %s28 = sshll.u32 [#allocation5], 4
      %s29 = int_to_ptr.vmem [resolvable:$true] %s28
      %34 = dma.hbm_to_vmem [thread:$0]  %s1, 256, %s29, [#allocation6], 64, 64, 4
    $region9: #{aeformer_forward.38} parent=1 // pred_fallthru
      _
    // Predicated region
    $region10: #{aeformer_forward.38} parent=1 // pred_check
      _
    $region11: #{aeformer_forward.38} parent=1 // pred_check_branch
      %36 = sbr.rel (0) target = $region13
    $region12: #{aeformer_forward.38} parent=1 // pred_region
      %s38 = ssub.s32 16, 16
      %39 = vsyncadd [#allocation6], %s38
      %s41 = sshll.u32 [#allocation7], 4
      %s42 = int_to_ptr.vmem [resolvable:$true] %s41
      %44 = dma.hbm_to_vmem [thread:$0]  %s2, 16, %s42, [#allocation6]
    $region13: #{aeformer_forward.38} parent=1 // pred_fallthru
      _
    // Predicated region
    $region14: #{aeformer_forward.38} parent=1 // pred_check
      _
    $region15: #{aeformer_forward.38} parent=1 // pred_check_branch
      %46 = sbr.rel (0) target = $region17
    $region16: #{aeformer_forward.38} parent=1 // pred_region
      %47 = dma.done [#allocation3], 640
    $region17: #{aeformer_forward.38} parent=1 // pred_fallthru
      _
    // Predicated region
    $region18: #{aeformer_forward.38} parent=1 // pred_check
      _
    $region19: #{aeformer_forward.38} parent=1 // pred_check_branch
      %49 = sbr.rel (0) target = $region21
    $region20: #{aeformer_forward.38} parent=1 // pred_region
      %50 = dma.done [#allocation6], 256
    $region21: #{aeformer_forward.38} parent=1 // pred_fallthru
      _
    // Predicated region
    $region22: #{aeformer_forward.38} parent=1 // pred_check
      _
    $region23: #{aeformer_forward.38} parent=1 // pred_check_branch
      %52 = sbr.rel (0) target = $region25
    $region24: #{aeformer_forward.38} parent=1 // pred_region
      %53 = dma.done [#allocation6], 16
    $region25: #{aeformer_forward.38} parent=1 // pred_fallthru
      _
    %v55 = vld [vmem:[#allocation2] sm:$0xff]
    %v56 = vld [vmem:[#allocation2 + $0x8] sm:$0xff]
    %v57 = vld [vmem:[#allocation2 + $0x10] sm:$0xff]
    %v58 = vld [vmem:[#allocation2 + $0x18] sm:$0xff]
    %v59 = vld [vmem:[#allocation2 + $0x20] sm:$0x3]
    %v60 = vpack.c.bf16 %v56, %v55
    %v61 = vpack.c.bf16 %v58, %v57
    %v62 = vpack.c.bf16 %v59, %v59
    %v63 = vld [vmem:[#allocation5] sm:$0xf]
    %v64 = vld [vmem:[#allocation5 + $0x4] sm:$0xf]
    %v65 = vld [vmem:[#allocation5 + $0x8] sm:$0xf]
    %v66 = vld [vmem:[#allocation5 + $0xc] sm:$0xf]
    %v67 = vld [vmem:[#allocation7] sm:$0x1]
    %v69 = vlaneseq
    %v70 = vshrl.u32 %v69, 7
    %v71 = vsub.s32 0, %v70
    %v72 = vrot.slane %v67, %v71
    %v78 = vunpack.c.l.b16 %v63
    %v79 = vunpack.c.l.b16 %v64
    %v80 = vunpack.c.l.b16 %v65
    %v81 = vunpack.c.l.b16 %v66
    %v82 = vpack.c.b16 %v79, %v78
    %v83 = vpack.c.b16 %v81, %v80
    %vm86 = vcmask 261120
    %v88 = vsel %vm86, %v60, 0
    %v91 = vsel %vm86, %v61, 0
    %v94 = vsel %vm86, %v62, 0
    %96 = vmatprep.subr.bf16.mxu0 0
    %97 = vmatpush1.bf16.msra.mxu0 %v82
    %98 = vmatprep.subr.bf16.mxu0 0
    %99 = vmatpush1.bf16.msra.mxu0 %v83
    %100 = vmatprep.subr.bf16.mxu0 0
    %101 = vmatpush1.bf16.msra.mxu0 0
    %102 = vmatprep.subr.bf16.mxu0 0
    %103 = vmatpush1.bf16.msra.mxu0 0
    %104 = vmatprep.subr.bf16.mxu0 0
    %105 = vmatpush1.bf16.msra.mxu0 0
    %106 = vmatprep.subr.bf16.mxu0 0
    %107 = vmatpush1.bf16.msra.mxu0 0
    %108 = vmatprep.subr.bf16.mxu0 0
    %109 = vmatpush1.bf16.msra.mxu0 0
    %110 = vmatprep.subr.bf16.mxu0 0
    %111 = vmatpush1.bf16.msra.mxu0 0
    %112 = vmatprep.subr.bf16.mxu0 0
    %113 = vmatpush1.bf16.msra.mxu0 0
    %114 = vmatprep.subr.bf16.mxu0 0
    %115 = vmatpush1.bf16.msra.mxu0 0
    %116 = vmatprep.subr.bf16.mxu0 0
    %117 = vmatpush1.bf16.msra.mxu0 0
    %118 = vmatprep.subr.bf16.mxu0 0
    %119 = vmatpush1.bf16.msra.mxu0 0
    %120 = vmatprep.subr.bf16.mxu0 0
    %121 = vmatpush1.bf16.msra.mxu0 0
    %122 = vmatprep.subr.bf16.mxu0 0
    %123 = vmatpush1.bf16.msra.mxu0 0
    %124 = vmatprep.subr.bf16.mxu0 0
    %125 = vmatpush1.bf16.msra.mxu0 0
    %126 = vmatprep.subr.bf16.mxu0 0
    %127 = vmatpush1.bf16.msra.mxu0 0
    %128 = vmatprep.mubr.bf16.mxu0 0
    %129 = vmatmul.mubr.bf16.gmra.mrb[0].mxu0 %v88
    %v130 = vpop.f32.mrb[0].mxu0
    %v131 = vadd.f32 %v72, %v130
    %v132 = vpop.f32.mrb[0].mxu0
    %v133 = vpop.f32.mrb[0].mxu0
    %v134 = vadd.f32 %v72, %v133
    %v135 = vpop.f32.mrb[0].mxu0
    %136 = vmatprep.mubr.bf16.mxu0 0
    %137 = vmatmul.mubr.bf16.gmra.mrb[0].mxu0 %v91
    %v138 = vpop.f32.mrb[0].mxu0
    %v139 = vadd.f32 %v72, %v138
    %v140 = vpop.f32.mrb[0].mxu0
    %v141 = vpop.f32.mrb[0].mxu0
    %v142 = vadd.f32 %v72, %v141
    %v143 = vpop.f32.mrb[0].mxu0
    %144 = vmatprep.mubr.bf16.mxu0 0
    %145 = vmatmul.mubr.bf16.gmra.mrb[0].mxu0 %v94
    %v146 = vpop.f32.mrb[0].mxu0
    %v147 = vadd.f32 %v72, %v146
    %v148 = vpop.f32.mrb[0].mxu0
    %v149 = vpop.f32.mrb[0].mxu0
    %v150 = vpop.f32.mrb[0].mxu0
    %151 = vdwg.mxu0
    %vm152 = vcmask 130048
    %153 = vst.msk [vmem:[#allocation8] sm:$0xff] %vm152, %v131
    %154 = vst.msk [vmem:[#allocation8 + $0x8] sm:$0xff] %vm152, %v134
    %155 = vst.msk [vmem:[#allocation8 + $0x10] sm:$0xff] %vm152, %v139
    %156 = vst.msk [vmem:[#allocation8 + $0x18] sm:$0xff] %vm152, %v142
    %vm157 = vcmask 123904
    %158 = vst.msk [vmem:[#allocation8 + $0x20] sm:$0x3] %vm157, %v147
    // Predicated region
    $region26: #{aeformer_forward.38} parent=1 // pred_check
      _
    $region27: #{aeformer_forward.38} parent=1 // pred_check_branch
      %160 = sbr.rel (0) target = $region29
    $region28: #{aeformer_forward.38} parent=1 // pred_region
      %s162 = ssub.s32 640, 640
      %163 = vsyncadd [#allocation4], %s162
      %s164 = sshll.u32 [#allocation8], 4
      %s165 = int_to_ptr.vmem [resolvable:$true] %s164
      %170 = dma.vmem_to_hbm [thread:$0]  %s165, 640, %s3, [#allocation4], 128, 128, 8
    $region29: #{aeformer_forward.38} parent=1 // pred_fallthru
      _
    // Predicated region
    $region30: #{aeformer_forward.38} parent=1 // pred_check
      _
    $region31: #{aeformer_forward.38} parent=1 // pred_check_branch
      %172 = sbr.rel (0) target = $region33
    $region32: #{aeformer_forward.38} parent=1 // pred_region
      %173 = dma.done [#allocation4], 640
    $region33: #{aeformer_forward.38} parent=1 // pred_fallthru
      _
    %174 = vsyncpa [#allocation3], 1
    %175 = vsyncpa [#allocation6], 1
    %176 = vsyncpa [#allocation4], 1

// kernel: aeformer_forward.39
$region0: #{aeformer_forward.39}
  #allocation0 [shape = 'u32[]', space=smem, size = 0x4, offset = 0x4, fixed_abs, tag = 'smem constant byte address 0x4 - core index']
  #allocation1 [shape = 'u32[144,128]{1,0:T(1,128)}', space=vmem, size = 0x12000, scoped, tag = 'internal scratch']
  %s0 = inlined_call_operand.hbm [shape: f32[34,16], index: 0, kind: input, shape index: {}]
  %s1 = inlined_call_operand.hbm [shape: bf16[16,48], index: 1, kind: input, shape index: {}]
  %s2 = inlined_call_operand.hbm [shape: f32[1,48], index: 2, kind: input, shape index: {}]
  %s3 = inlined_call_operand.hbm [shape: f32[1,16], index: 3, kind: input, shape index: {}]
  %s4 = inlined_call_operand.hbm [shape: f32[1,16], index: 4, kind: input, shape index: {}]
  %s5 = inlined_call_operand.hbm [shape: bf16[34,48], index: 5, kind: output, shape index: {}]
  %s6 = sld [smem:[#allocation0]]
  $region50: #{aeformer_forward.39} parent=0
    _
  %s8 = ssub.s32 1, %s6
  %s9 = scalar_select 0, %s8, %s6
  $region1: #{aeformer_forward.39} parent=0
    #allocation2 [shape = 'u8[20480]{0}', space=vmem, size = 0x5000, scoped, tag = 'input window, operand 0, single buffered']
    #allocation3 [shape = 's32[1]{0}', space=sflag, size = 0x4, scoped, tag = 'scoped memory for aeformer_forward.39']
    #allocation4 [shape = 's32[1]{0}', space=sflag, size = 0x4, scoped, tag = 'scoped memory for aeformer_forward.39']
    #allocation5 [shape = 'u8[4096]{0}', space=vmem, size = 0x1000, scoped, tag = 'input window, operand 1, single buffered']
    #allocation6 [shape = 's32[1]{0}', space=sflag, size = 0x4, scoped, tag = 'scoped memory for aeformer_forward.39']
    #allocation7 [shape = 'u8[512]{0}', space=vmem, size = 0x400, scoped, tag = 'input window, operand 2, single buffered']
    #allocation8 [shape = 'u8[512]{0}', space=vmem, size = 0x400, scoped, tag = 'input window, operand 3, single buffered']
    #allocation9 [shape = 's32[1]{0}', space=sflag, size = 0x4, scoped, tag = 'scoped memory for aeformer_forward.39']
    #allocation10 [shape = 'u8[512]{0}', space=vmem, size = 0x400, scoped, tag = 'input window, operand 4, single buffered']
    #allocation11 [shape = 'u8[10240]{0}', space=vmem, size = 0x2800, scoped, tag = 'output window, operand 0, single buffered']
    %10 = vsyncpa [#allocation3], 0
    %11 = vsyncpa [#allocation6], 0
    %12 = vsyncpa [#allocation9], 0
    %13 = vsyncpa [#allocation4], 0
    // Predicated region
    $region2: #{aeformer_forward.39} parent=1 // pred_check
      _
    $region3: #{aeformer_forward.39} parent=1 // pred_check_branch
      %15 = sbr.rel (0) target = $region5
    $region4: #{aeformer_forward.39} parent=1 // pred_region
      %s17 = ssub.s32 640, 640
      %18 = vsyncadd [#allocation3], %s17
      %s19 = sshll.u32 [#allocation2], 4
      %s20 = int_to_ptr.vmem [resolvable:$true] %s19
      %25 = dma.hbm_to_vmem [thread:$0]  %s0, 640, %s20, [#allocation3], 128, 128, 8
    $region5: #{aeformer_forward.39} parent=1 // pred_fallthru
      _
    // Predicated region
    $region6: #{aeformer_forward.39} parent=1 // pred_check
      _
    $region7: #{aeformer_forward.39} parent=1 // pred_check_branch
      %27 = sbr.rel (0) target = $region9
    $region8: #{aeformer_forward.39} parent=1 // pred_region
      %s29 = ssub.s32 128, 128
      %30 = vsyncadd [#allocation6], %s29
      %s31 = sshll.u32 [#allocation5], 4
      %s32 = int_to_ptr.vmem [resolvable:$true] %s31
      %37 = dma.hbm_to_vmem [thread:$0]  %s1, 128, %s32, [#allocation6], 64, 64, 4
    $region9: #{aeformer_forward.39} parent=1 // pred_fallthru
      _
    // Predicated region
    $region10: #{aeformer_forward.39} parent=1 // pred_check
      _
    $region11: #{aeformer_forward.39} parent=1 // pred_check_branch
      %39 = sbr.rel (0) target = $region13
    $region12: #{aeformer_forward.39} parent=1 // pred_region
      %s41 = ssub.s32 16, 16
      %42 = vsyncadd [#allocation6], %s41
      %s44 = sshll.u32 [#allocation7], 4
      %s45 = int_to_ptr.vmem [resolvable:$true] %s44
      %47 = dma.hbm_to_vmem [thread:$0]  %s2, 16, %s45, [#allocation6]
    $region13: #{aeformer_forward.39} parent=1 // pred_fallthru
      _
    // Predicated region
    $region14: #{aeformer_forward.39} parent=1 // pred_check
      _
    $region15: #{aeformer_forward.39} parent=1 // pred_check_branch
      %49 = sbr.rel (0) target = $region17
    $region16: #{aeformer_forward.39} parent=1 // pred_region
      %s51 = ssub.s32 16, 16
      %52 = vsyncadd [#allocation9], %s51
      %s54 = sshll.u32 [#allocation8], 4
      %s55 = int_to_ptr.vmem [resolvable:$true] %s54
      %57 = dma.hbm_to_vmem [thread:$0]  %s3, 16, %s55, [#allocation9]
    $region17: #{aeformer_forward.39} parent=1 // pred_fallthru
      _
    // Predicated region
    $region18: #{aeformer_forward.39} parent=1 // pred_check
      _
    $region19: #{aeformer_forward.39} parent=1 // pred_check_branch
      %59 = sbr.rel (0) target = $region21
    $region20: #{aeformer_forward.39} parent=1 // pred_region
      %s61 = ssub.s32 16, 16
      %62 = vsyncadd [#allocation9], %s61
      %s64 = sshll.u32 [#allocation10], 4
      %s65 = int_to_ptr.vmem [resolvable:$true] %s64
      %67 = dma.hbm_to_vmem [thread:$0]  %s4, 16, %s65, [#allocation9]
    $region21: #{aeformer_forward.39} parent=1 // pred_fallthru
      _
    // Predicated region
    $region22: #{aeformer_forward.39} parent=1 // pred_check
      _
    $region23: #{aeformer_forward.39} parent=1 // pred_check_branch
      %69 = sbr.rel (0) target = $region25
    $region24: #{aeformer_forward.39} parent=1 // pred_region
      %70 = dma.done [#allocation3], 640
    $region25: #{aeformer_forward.39} parent=1 // pred_fallthru
      _
    // Predicated region
    $region26: #{aeformer_forward.39} parent=1 // pred_check
      _
    $region27: #{aeformer_forward.39} parent=1 // pred_check_branch
      %72 = sbr.rel (0) target = $region29
    $region28: #{aeformer_forward.39} parent=1 // pred_region
      %73 = dma.done [#allocation6], 128
    $region29: #{aeformer_forward.39} parent=1 // pred_fallthru
      _
    // Predicated region
    $region30: #{aeformer_forward.39} parent=1 // pred_check
      _
    $region31: #{aeformer_forward.39} parent=1 // pred_check_branch
      %75 = sbr.rel (0) target = $region33
    $region32: #{aeformer_forward.39} parent=1 // pred_region
      %76 = dma.done [#allocation6], 16
    $region33: #{aeformer_forward.39} parent=1 // pred_fallthru
      _
    // Predicated region
    $region34: #{aeformer_forward.39} parent=1 // pred_check
      _
    $region35: #{aeformer_forward.39} parent=1 // pred_check_branch
      %78 = sbr.rel (0) target = $region37
    $region36: #{aeformer_forward.39} parent=1 // pred_region
      %79 = dma.done [#allocation9], 16
    $region37: #{aeformer_forward.39} parent=1 // pred_fallthru
      _
    // Predicated region
    $region38: #{aeformer_forward.39} parent=1 // pred_check
      _
    $region39: #{aeformer_forward.39} parent=1 // pred_check_branch
      %81 = sbr.rel (0) target = $region41
    $region40: #{aeformer_forward.39} parent=1 // pred_region
      %82 = dma.done [#allocation9], 16
    $region41: #{aeformer_forward.39} parent=1 // pred_fallthru
      _
    %v84 = vld [vmem:[#allocation2] sm:$0xff]
    %v85 = vld [vmem:[#allocation2 + $0x8] sm:$0xff]
    %v86 = vld [vmem:[#allocation2 + $0x10] sm:$0xff]
    %v87 = vld [vmem:[#allocation2 + $0x18] sm:$0xff]
    %v88 = vld [vmem:[#allocation2 + $0x20] sm:$0x3]
    %v89 = vld [vmem:[#allocation8] sm:$0x1]
    %v90 = vld [vmem:[#allocation10] sm:$0x1]
    %vm91 = vcmask 130048
    %v92 = vsel %vm91, %v84, 0.0
    %93 = vadd.xlane.f32.xlu0 %v92
    %v94 = vpop.xlane.xlu0 %93
    %v95 = vsel %vm91, %v85, 0.0
    %96 = vadd.xlane.f32.xlu0 %v95
    %v97 = vpop.xlane.xlu0 %96
    %v98 = vsel %vm91, %v86, 0.0
    %99 = vadd.xlane.f32.xlu0 %v98
    %v100 = vpop.xlane.xlu0 %99
    %v101 = vsel %vm91, %v87, 0.0
    %102 = vadd.xlane.f32.xlu0 %v101
    %v103 = vpop.xlane.xlu0 %102
    %vm104 = vcmask 123904
    %v105 = vsel %vm104, %v88, 0.0
    %106 = vadd.xlane.f32.xlu0 %v105
    %v107 = vpop.xlane.xlu0 %106
    %v108 = vrcp.pop 16.0
    %v109 = vmul.f32 %v94, %v108
    %v110 = vmul.f32 %v97, %v108
    %v111 = vmul.f32 %v100, %v108
    %v112 = vmul.f32 %v103, %v108
    %v113 = vmul.f32 %v107, %v108
    %v114 = vsub.f32 %v84, %v109
    %v115 = vsub.f32 %v85, %v110
    %v116 = vsub.f32 %v86, %v111
    %v117 = vsub.f32 %v87, %v112
    %v118 = vsub.f32 %v88, %v113
    %v119 = vmul.f32 %v114, %v114
    %v120 = vmul.f32 %v115, %v115
    %v121 = vmul.f32 %v116, %v116
    %v122 = vmul.f32 %v117, %v117
    %v123 = vmul.f32 %v118, %v118
    %v124 = vsel %vm91, %v119, 0.0
    %125 = vadd.xlane.f32.xlu0 %v124
    %v126 = vpop.xlane.xlu0 %125
    %v127 = vsel %vm91, %v120, 0.0
    %128 = vadd.xlane.f32.xlu0 %v127
    %v129 = vpop.xlane.xlu0 %128
    %v130 = vsel %vm91, %v121, 0.0
    %131 = vadd.xlane.f32.xlu0 %v130
    %v132 = vpop.xlane.xlu0 %131
    %v133 = vsel %vm91, %v122, 0.0
    %134 = vadd.xlane.f32.xlu0 %v133
    %v135 = vpop.xlane.xlu0 %134
    %v136 = vsel %vm104, %v123, 0.0
    %137 = vadd.xlane.f32.xlu0 %v136
    %v138 = vpop.xlane.xlu0 %137
    %v139 = vmul.f32 %v126, %v108
    %v140 = vmul.f32 %v129, %v108
    %v141 = vmul.f32 %v132, %v108
    %v142 = vmul.f32 %v135, %v108
    %v143 = vmul.f32 %v138, %v108
    %v144 = vadd.f32 %v139, 1e-05
    %v145 = vadd.f32 %v140, 1e-05
    %v146 = vadd.f32 %v141, 1e-05
    %v147 = vadd.f32 %v142, 1e-05
    %v148 = vadd.f32 %v143, 1e-05
    %v149 = vrsqrt.pop %v144
    %v150 = vrsqrt.pop %v145
    %v151 = vrsqrt.pop %v146
    %v152 = vrsqrt.pop %v147
    %v153 = vrsqrt.pop %v148
    %v154 = vmul.f32 %v114, %v149
    %v155 = vmul.f32 %v115, %v150
    %v156 = vmul.f32 %v116, %v151
    %v157 = vmul.f32 %v117, %v152
    %v158 = vmul.f32 %v118, %v153
    %v160 = vlaneseq
    %v161 = vshrl.u32 %v160, 7
    %v162 = vsub.s32 0, %v161
    %v163 = vrot.slane %v89, %v162
    %v165 = vmul.f32 %v154, %v163
    %v166 = vmul.f32 %v155, %v163
    %v167 = vmul.f32 %v156, %v163
    %v168 = vmul.f32 %v157, %v163
    %v169 = vmul.f32 %v158, %v163
    %v171 = vlaneseq
    %v172 = vshrl.u32 %v171, 7
    %v173 = vsub.s32 0, %v172
    %v174 = vrot.slane %v90, %v173
    %v176 = vadd.f32 %v165, %v174
    %v177 = vadd.f32 %v166, %v174
    %v178 = vadd.f32 %v167, %v174
    %v179 = vadd.f32 %v168, %v174
    %v180 = vadd.f32 %v169, %v174
    %v181 = vpack.c.bf16 %v177, %v176
    %v182 = vpack.c.bf16 %v179, %v178
    %v183 = vpack.c.bf16 %v180, %v180
    %v184 = vld [vmem:[#allocation5] sm:$0xf]
    %v185 = vld [vmem:[#allocation5 + $0x4] sm:$0xf]
    %v186 = vld [vmem:[#allocation7] sm:$0x1]
    %v188 = vlaneseq
    %v189 = vshrl.u32 %v188, 7
    %v190 = vsub.s32 0, %v189
    %v191 = vrot.slane %v186, %v190
    %v195 = vunpack.c.l.b16 %v184
    %v196 = vunpack.c.l.b16 %v185
    %v197 = vpack.c.b16 %v196, %v195
    %v200 = vsel %vm91, %v181, 0
    %v203 = vsel %vm91, %v182, 0
    %v206 = vsel %vm91, %v183, 0
    %208 = vmatprep.subr.bf16.mxu0 0
    %209 = vmatpush1.bf16.msra.mxu0 %v197
    %210 = vmatprep.subr.bf16.mxu0 0
    %211 = vmatpush1.bf16.msra.mxu0 0
    %212 = vmatprep.subr.bf16.mxu0 0
    %213 = vmatpush1.bf16.msra.mxu0 0
    %214 = vmatprep.subr.bf16.mxu0 0
    %215 = vmatpush1.bf16.msra.mxu0 0
    %216 = vmatprep.subr.bf16.mxu0 0
    %217 = vmatpush1.bf16.msra.mxu0 0
    %218 = vmatprep.subr.bf16.mxu0 0
    %219 = vmatpush1.bf16.msra.mxu0 0
    %220 = vmatprep.subr.bf16.mxu0 0
    %221 = vmatpush1.bf16.msra.mxu0 0
    %222 = vmatprep.subr.bf16.mxu0 0
    %223 = vmatpush1.bf16.msra.mxu0 0
    %224 = vmatprep.subr.bf16.mxu0 0
    %225 = vmatpush1.bf16.msra.mxu0 0
    %226 = vmatprep.subr.bf16.mxu0 0
    %227 = vmatpush1.bf16.msra.mxu0 0
    %228 = vmatprep.subr.bf16.mxu0 0
    %229 = vmatpush1.bf16.msra.mxu0 0
    %230 = vmatprep.subr.bf16.mxu0 0
    %231 = vmatpush1.bf16.msra.mxu0 0
    %232 = vmatprep.subr.bf16.mxu0 0
    %233 = vmatpush1.bf16.msra.mxu0 0
    %234 = vmatprep.subr.bf16.mxu0 0
    %235 = vmatpush1.bf16.msra.mxu0 0
    %236 = vmatprep.subr.bf16.mxu0 0
    %237 = vmatpush1.bf16.msra.mxu0 0
    %238 = vmatprep.subr.bf16.mxu0 0
    %239 = vmatpush1.bf16.msra.mxu0 0
    %240 = vmatprep.mubr.bf16.mxu0 0
    %241 = vmatmul.mubr.bf16.gmra.mrb[0].mxu0 %v200
    %v242 = vpop.f32.mrb[0].mxu0
    %v243 = vadd.f32 %v191, %v242
    %v244 = vpop.f32.mrb[0].mxu0
    %v245 = vpop.f32.mrb[0].mxu0
    %v246 = vadd.f32 %v191, %v245
    %v247 = vpop.f32.mrb[0].mxu0
    %248 = vmatprep.mubr.bf16.mxu0 0
    %249 = vmatmul.mubr.bf16.gmra.mrb[0].mxu0 %v203
    %v250 = vpop.f32.mrb[0].mxu0
    %v251 = vadd.f32 %v191, %v250
    %v252 = vpop.f32.mrb[0].mxu0
    %v253 = vpop.f32.mrb[0].mxu0
    %v254 = vadd.f32 %v191, %v253
    %v255 = vpop.f32.mrb[0].mxu0
    %256 = vmatprep.mubr.bf16.mxu0 0
    %257 = vmatmul.mubr.bf16.gmra.mrb[0].mxu0 %v206
    %v258 = vpop.f32.mrb[0].mxu0
    %v259 = vadd.f32 %v191, %v258
    %v260 = vpop.f32.mrb[0].mxu0
    %v261 = vpop.f32.mrb[0].mxu0
    %v262 = vpop.f32.mrb[0].mxu0
    %263 = vdwg.mxu0
    %v264 = vpack.c.bf16 %v246, %v243
    %v265 = vpack.c.bf16 %v254, %v251
    %v266 = vpack.c.bf16 %v259, %v259
    %v270 = vunpack.c.l.b16 %v264
    %v271 = vunpack.c.h.b16 %v264
    %v272 = vunpack.c.l.b16 %v265
    %v273 = vunpack.c.h.b16 %v265
    %v274 = vunpack.c.l.b16 %v266
    %v275 = vpack.c.b16 %v270, %v270
    %v276 = vpack.c.b16 %v271, %v271
    %v277 = vpack.c.b16 %v272, %v272
    %v278 = vpack.c.b16 %v273, %v273
    %v279 = vpack.c.b16 %v274, %v274
    %vm285 = vcmask 388096
    %286 = vst.msk [vmem:[#allocation11] sm:$0xf] %vm285, %v275
    %287 = vst.msk [vmem:[#allocation11 + $0x4] sm:$0xf] %vm285, %v276
    %288 = vst.msk [vmem:[#allocation11 + $0x8] sm:$0xf] %vm285, %v277
    %289 = vst.msk [vmem:[#allocation11 + $0xc] sm:$0xf] %vm285, %v278
    %vm290 = vcmask 385024
    %291 = vst.msk [vmem:[#allocation11 + $0x10] sm:$0x1] %vm290, %v279
    // Predicated region
    $region42: #{aeformer_forward.39} parent=1 // pred_check
      _
    $region43: #{aeformer_forward.39} parent=1 // pred_check_branch
      %293 = sbr.rel (0) target = $region45
    $region44: #{aeformer_forward.39} parent=1 // pred_region
      %s295 = ssub.s32 320, 320
      %296 = vsyncadd [#allocation4], %s295
      %s297 = sshll.u32 [#allocation11], 4
      %s298 = int_to_ptr.vmem [resolvable:$true] %s297
      %303 = dma.vmem_to_hbm [thread:$0]  %s298, 320, %s5, [#allocation4], 64, 64, 4
    $region45: #{aeformer_forward.39} parent=1 // pred_fallthru
      _
    // Predicated region
    $region46: #{aeformer_forward.39} parent=1 // pred_check
      _
    $region47: #{aeformer_forward.39} parent=1 // pred_check_branch
      %305 = sbr.rel (0) target = $region49
    $region48: #{aeformer_forward.39} parent=1 // pred_region
      %306 = dma.done [#allocation4], 320
    $region49: #{aeformer_forward.39} parent=1 // pred_fallthru
      _
    %307 = vsyncpa [#allocation3], 1
    %308 = vsyncpa [#allocation6], 1
    %309 = vsyncpa [#allocation9], 1
    %310 = vsyncpa [#allocation4], 1

// kernel: aeformer_forward.42
$region0: #{aeformer_forward.42}
  #allocation0 [shape = 'u32[]', space=smem, size = 0x4, offset = 0x4, fixed_abs, tag = 'smem constant byte address 0x4 - core index']
  #allocation1 [shape = 'u32[144,128]{1,0:T(1,128)}', space=vmem, size = 0x12000, scoped, tag = 'internal scratch']
  %s0 = inlined_call_operand.hbm [shape: f32[34,16], index: 0, kind: input, shape index: {}]
  %s1 = inlined_call_operand.hbm [shape: bf16[16,64], index: 1, kind: input, shape index: {}]
  %s2 = inlined_call_operand.hbm [shape: f32[1,64], index: 2, kind: input, shape index: {}]
  %s3 = inlined_call_operand.hbm [shape: f32[1,16], index: 3, kind: input, shape index: {}]
  %s4 = inlined_call_operand.hbm [shape: f32[1,16], index: 4, kind: input, shape index: {}]
  %s5 = inlined_call_operand.hbm [shape: bf16[34,64], index: 5, kind: output, shape index: {}]
  %s6 = sld [smem:[#allocation0]]
  $region50: #{aeformer_forward.42} parent=0
    _
  %s8 = ssub.s32 1, %s6
  %s9 = scalar_select 0, %s8, %s6
  $region1: #{aeformer_forward.42} parent=0
    #allocation2 [shape = 'u8[20480]{0}', space=vmem, size = 0x5000, scoped, tag = 'input window, operand 0, single buffered']
    #allocation3 [shape = 's32[1]{0}', space=sflag, size = 0x4, scoped, tag = 'scoped memory for aeformer_forward.42']
    #allocation4 [shape = 's32[1]{0}', space=sflag, size = 0x4, scoped, tag = 'scoped memory for aeformer_forward.42']
    #allocation5 [shape = 'u8[4096]{0}', space=vmem, size = 0x1000, scoped, tag = 'input window, operand 1, single buffered']
    #allocation6 [shape = 's32[1]{0}', space=sflag, size = 0x4, scoped, tag = 'scoped memory for aeformer_forward.42']
    #allocation7 [shape = 'u8[512]{0}', space=vmem, size = 0x400, scoped, tag = 'input window, operand 2, single buffered']
    #allocation8 [shape = 'u8[512]{0}', space=vmem, size = 0x400, scoped, tag = 'input window, operand 3, single buffered']
    #allocation9 [shape = 's32[1]{0}', space=sflag, size = 0x4, scoped, tag = 'scoped memory for aeformer_forward.42']
    #allocation10 [shape = 'u8[512]{0}', space=vmem, size = 0x400, scoped, tag = 'input window, operand 4, single buffered']
    #allocation11 [shape = 'u8[10240]{0}', space=vmem, size = 0x2800, scoped, tag = 'output window, operand 0, single buffered']
    %10 = vsyncpa [#allocation3], 0
    %11 = vsyncpa [#allocation6], 0
    %12 = vsyncpa [#allocation9], 0
    %13 = vsyncpa [#allocation4], 0
    // Predicated region
    $region2: #{aeformer_forward.42} parent=1 // pred_check
      _
    $region3: #{aeformer_forward.42} parent=1 // pred_check_branch
      %15 = sbr.rel (0) target = $region5
    $region4: #{aeformer_forward.42} parent=1 // pred_region
      %s17 = ssub.s32 640, 640
      %18 = vsyncadd [#allocation3], %s17
      %s19 = sshll.u32 [#allocation2], 4
      %s20 = int_to_ptr.vmem [resolvable:$true] %s19
      %25 = dma.hbm_to_vmem [thread:$0]  %s0, 640, %s20, [#allocation3], 128, 128, 8
    $region5: #{aeformer_forward.42} parent=1 // pred_fallthru
      _
    // Predicated region
    $region6: #{aeformer_forward.42} parent=1 // pred_check
      _
    $region7: #{aeformer_forward.42} parent=1 // pred_check_branch
      %27 = sbr.rel (0) target = $region9
    $region8: #{aeformer_forward.42} parent=1 // pred_region
      %s29 = ssub.s32 128, 128
      %30 = vsyncadd [#allocation6], %s29
      %s31 = sshll.u32 [#allocation5], 4
      %s32 = int_to_ptr.vmem [resolvable:$true] %s31
      %37 = dma.hbm_to_vmem [thread:$0]  %s1, 128, %s32, [#allocation6], 64, 64, 4
    $region9: #{aeformer_forward.42} parent=1 // pred_fallthru
      _
    // Predicated region
    $region10: #{aeformer_forward.42} parent=1 // pred_check
      _
    $region11: #{aeformer_forward.42} parent=1 // pred_check_branch
      %39 = sbr.rel (0) target = $region13
    $region12: #{aeformer_forward.42} parent=1 // pred_region
      %s41 = ssub.s32 16, 16
      %42 = vsyncadd [#allocation6], %s41
      %s44 = sshll.u32 [#allocation7], 4
      %s45 = int_to_ptr.vmem [resolvable:$true] %s44
      %47 = dma.hbm_to_vmem [thread:$0]  %s2, 16, %s45, [#allocation6]
    $region13: #{aeformer_forward.42} parent=1 // pred_fallthru
      _
    // Predicated region
    $region14: #{aeformer_forward.42} parent=1 // pred_check
      _
    $region15: #{aeformer_forward.42} parent=1 // pred_check_branch
      %49 = sbr.rel (0) target = $region17
    $region16: #{aeformer_forward.42} parent=1 // pred_region
      %s51 = ssub.s32 16, 16
      %52 = vsyncadd [#allocation9], %s51
      %s54 = sshll.u32 [#allocation8], 4
      %s55 = int_to_ptr.vmem [resolvable:$true] %s54
      %57 = dma.hbm_to_vmem [thread:$0]  %s3, 16, %s55, [#allocation9]
    $region17: #{aeformer_forward.42} parent=1 // pred_fallthru
      _
    // Predicated region
    $region18: #{aeformer_forward.42} parent=1 // pred_check
      _
    $region19: #{aeformer_forward.42} parent=1 // pred_check_branch
      %59 = sbr.rel (0) target = $region21
    $region20: #{aeformer_forward.42} parent=1 // pred_region
      %s61 = ssub.s32 16, 16
      %62 = vsyncadd [#allocation9], %s61
      %s64 = sshll.u32 [#allocation10], 4
      %s65 = int_to_ptr.vmem [resolvable:$true] %s64
      %67 = dma.hbm_to_vmem [thread:$0]  %s4, 16, %s65, [#allocation9]
    $region21: #{aeformer_forward.42} parent=1 // pred_fallthru
      _
    // Predicated region
    $region22: #{aeformer_forward.42} parent=1 // pred_check
      _
    $region23: #{aeformer_forward.42} parent=1 // pred_check_branch
      %69 = sbr.rel (0) target = $region25
    $region24: #{aeformer_forward.42} parent=1 // pred_region
      %70 = dma.done [#allocation3], 640
    $region25: #{aeformer_forward.42} parent=1 // pred_fallthru
      _
    // Predicated region
    $region26: #{aeformer_forward.42} parent=1 // pred_check
      _
    $region27: #{aeformer_forward.42} parent=1 // pred_check_branch
      %72 = sbr.rel (0) target = $region29
    $region28: #{aeformer_forward.42} parent=1 // pred_region
      %73 = dma.done [#allocation6], 128
    $region29: #{aeformer_forward.42} parent=1 // pred_fallthru
      _
    // Predicated region
    $region30: #{aeformer_forward.42} parent=1 // pred_check
      _
    $region31: #{aeformer_forward.42} parent=1 // pred_check_branch
      %75 = sbr.rel (0) target = $region33
    $region32: #{aeformer_forward.42} parent=1 // pred_region
      %76 = dma.done [#allocation6], 16
    $region33: #{aeformer_forward.42} parent=1 // pred_fallthru
      _
    // Predicated region
    $region34: #{aeformer_forward.42} parent=1 // pred_check
      _
    $region35: #{aeformer_forward.42} parent=1 // pred_check_branch
      %78 = sbr.rel (0) target = $region37
    $region36: #{aeformer_forward.42} parent=1 // pred_region
      %79 = dma.done [#allocation9], 16
    $region37: #{aeformer_forward.42} parent=1 // pred_fallthru
      _
    // Predicated region
    $region38: #{aeformer_forward.42} parent=1 // pred_check
      _
    $region39: #{aeformer_forward.42} parent=1 // pred_check_branch
      %81 = sbr.rel (0) target = $region41
    $region40: #{aeformer_forward.42} parent=1 // pred_region
      %82 = dma.done [#allocation9], 16
    $region41: #{aeformer_forward.42} parent=1 // pred_fallthru
      _
    %v84 = vld [vmem:[#allocation2] sm:$0xff]
    %v85 = vld [vmem:[#allocation2 + $0x8] sm:$0xff]
    %v86 = vld [vmem:[#allocation2 + $0x10] sm:$0xff]
    %v87 = vld [vmem:[#allocation2 + $0x18] sm:$0xff]
    %v88 = vld [vmem:[#allocation2 + $0x20] sm:$0x3]
    %v89 = vld [vmem:[#allocation8] sm:$0x1]
    %v90 = vld [vmem:[#allocation10] sm:$0x1]
    %vm91 = vcmask 130048
    %v92 = vsel %vm91, %v84, 0.0
    %93 = vadd.xlane.f32.xlu0 %v92
    %v94 = vpop.xlane.xlu0 %93
    %v95 = vsel %vm91, %v85, 0.0
    %96 = vadd.xlane.f32.xlu0 %v95
    %v97 = vpop.xlane.xlu0 %96
    %v98 = vsel %vm91, %v86, 0.0
    %99 = vadd.xlane.f32.xlu0 %v98
    %v100 = vpop.xlane.xlu0 %99
    %v101 = vsel %vm91, %v87, 0.0
    %102 = vadd.xlane.f32.xlu0 %v101
    %v103 = vpop.xlane.xlu0 %102
    %vm104 = vcmask 123904
    %v105 = vsel %vm104, %v88, 0.0
    %106 = vadd.xlane.f32.xlu0 %v105
    %v107 = vpop.xlane.xlu0 %106
    %v108 = vrcp.pop 16.0
    %v109 = vmul.f32 %v94, %v108
    %v110 = vmul.f32 %v97, %v108
    %v111 = vmul.f32 %v100, %v108
    %v112 = vmul.f32 %v103, %v108
    %v113 = vmul.f32 %v107, %v108
    %v114 = vsub.f32 %v84, %v109
    %v115 = vsub.f32 %v85, %v110
    %v116 = vsub.f32 %v86, %v111
    %v117 = vsub.f32 %v87, %v112
    %v118 = vsub.f32 %v88, %v113
    %v119 = vmul.f32 %v114, %v114
    %v120 = vmul.f32 %v115, %v115
    %v121 = vmul.f32 %v116, %v116
    %v122 = vmul.f32 %v117, %v117
    %v123 = vmul.f32 %v118, %v118
    %v124 = vsel %vm91, %v119, 0.0
    %125 = vadd.xlane.f32.xlu0 %v124
    %v126 = vpop.xlane.xlu0 %125
    %v127 = vsel %vm91, %v120, 0.0
    %128 = vadd.xlane.f32.xlu0 %v127
    %v129 = vpop.xlane.xlu0 %128
    %v130 = vsel %vm91, %v121, 0.0
    %131 = vadd.xlane.f32.xlu0 %v130
    %v132 = vpop.xlane.xlu0 %131
    %v133 = vsel %vm91, %v122, 0.0
    %134 = vadd.xlane.f32.xlu0 %v133
    %v135 = vpop.xlane.xlu0 %134
    %v136 = vsel %vm104, %v123, 0.0
    %137 = vadd.xlane.f32.xlu0 %v136
    %v138 = vpop.xlane.xlu0 %137
    %v139 = vmul.f32 %v126, %v108
    %v140 = vmul.f32 %v129, %v108
    %v141 = vmul.f32 %v132, %v108
    %v142 = vmul.f32 %v135, %v108
    %v143 = vmul.f32 %v138, %v108
    %v144 = vadd.f32 %v139, 1e-05
    %v145 = vadd.f32 %v140, 1e-05
    %v146 = vadd.f32 %v141, 1e-05
    %v147 = vadd.f32 %v142, 1e-05
    %v148 = vadd.f32 %v143, 1e-05
    %v149 = vrsqrt.pop %v144
    %v150 = vrsqrt.pop %v145
    %v151 = vrsqrt.pop %v146
    %v152 = vrsqrt.pop %v147
    %v153 = vrsqrt.pop %v148
    %v154 = vmul.f32 %v114, %v149
    %v155 = vmul.f32 %v115, %v150
    %v156 = vmul.f32 %v116, %v151
    %v157 = vmul.f32 %v117, %v152
    %v158 = vmul.f32 %v118, %v153
    %v160 = vlaneseq
    %v161 = vshrl.u32 %v160, 7
    %v162 = vsub.s32 0, %v161
    %v163 = vrot.slane %v89, %v162
    %v165 = vmul.f32 %v154, %v163
    %v166 = vmul.f32 %v155, %v163
    %v167 = vmul.f32 %v156, %v163
    %v168 = vmul.f32 %v157, %v163
    %v169 = vmul.f32 %v158, %v163
    %v171 = vlaneseq
    %v172 = vshrl.u32 %v171, 7
    %v173 = vsub.s32 0, %v172
    %v174 = vrot.slane %v90, %v173
    %v176 = vadd.f32 %v165, %v174
    %v177 = vadd.f32 %v166, %v174
    %v178 = vadd.f32 %v167, %v174
    %v179 = vadd.f32 %v168, %v174
    %v180 = vadd.f32 %v169, %v174
    %v181 = vpack.c.bf16 %v177, %v176
    %v182 = vpack.c.bf16 %v179, %v178
    %v183 = vpack.c.bf16 %v180, %v180
    %v184 = vld [vmem:[#allocation5] sm:$0xf]
    %v185 = vld [vmem:[#allocation5 + $0x4] sm:$0xf]
    %v186 = vld [vmem:[#allocation7] sm:$0x1]
    %v188 = vlaneseq
    %v189 = vshrl.u32 %v188, 7
    %v190 = vsub.s32 0, %v189
    %v191 = vrot.slane %v186, %v190
    %v195 = vunpack.c.l.b16 %v184
    %v196 = vunpack.c.l.b16 %v185
    %v197 = vpack.c.b16 %v196, %v195
    %v200 = vsel %vm91, %v181, 0
    %v203 = vsel %vm91, %v182, 0
    %v206 = vsel %vm91, %v183, 0
    %208 = vmatprep.subr.bf16.mxu0 0
    %209 = vmatpush1.bf16.msra.mxu0 %v197
    %210 = vmatprep.subr.bf16.mxu0 0
    %211 = vmatpush1.bf16.msra.mxu0 0
    %212 = vmatprep.subr.bf16.mxu0 0
    %213 = vmatpush1.bf16.msra.mxu0 0
    %214 = vmatprep.subr.bf16.mxu0 0
    %215 = vmatpush1.bf16.msra.mxu0 0
    %216 = vmatprep.subr.bf16.mxu0 0
    %217 = vmatpush1.bf16.msra.mxu0 0
    %218 = vmatprep.subr.bf16.mxu0 0
    %219 = vmatpush1.bf16.msra.mxu0 0
    %220 = vmatprep.subr.bf16.mxu0 0
    %221 = vmatpush1.bf16.msra.mxu0 0
    %222 = vmatprep.subr.bf16.mxu0 0
    %223 = vmatpush1.bf16.msra.mxu0 0
    %224 = vmatprep.subr.bf16.mxu0 0
    %225 = vmatpush1.bf16.msra.mxu0 0
    %226 = vmatprep.subr.bf16.mxu0 0
    %227 = vmatpush1.bf16.msra.mxu0 0
    %228 = vmatprep.subr.bf16.mxu0 0
    %229 = vmatpush1.bf16.msra.mxu0 0
    %230 = vmatprep.subr.bf16.mxu0 0
    %231 = vmatpush1.bf16.msra.mxu0 0
    %232 = vmatprep.subr.bf16.mxu0 0
    %233 = vmatpush1.bf16.msra.mxu0 0
    %234 = vmatprep.subr.bf16.mxu0 0
    %235 = vmatpush1.bf16.msra.mxu0 0
    %236 = vmatprep.subr.bf16.mxu0 0
    %237 = vmatpush1.bf16.msra.mxu0 0
    %238 = vmatprep.subr.bf16.mxu0 0
    %239 = vmatpush1.bf16.msra.mxu0 0
    %240 = vmatprep.mubr.bf16.mxu0 0
    %241 = vmatmul.mubr.bf16.gmra.mrb[0].mxu0 %v200
    %v242 = vpop.f32.mrb[0].mxu0
    %v243 = vadd.f32 %v191, %v242
    %v244 = vpop.f32.mrb[0].mxu0
    %v245 = vpop.f32.mrb[0].mxu0
    %v246 = vadd.f32 %v191, %v245
    %v247 = vpop.f32.mrb[0].mxu0
    %248 = vmatprep.mubr.bf16.mxu0 0
    %249 = vmatmul.mubr.bf16.gmra.mrb[0].mxu0 %v203
    %v250 = vpop.f32.mrb[0].mxu0
    %v251 = vadd.f32 %v191, %v250
    %v252 = vpop.f32.mrb[0].mxu0
    %v253 = vpop.f32.mrb[0].mxu0
    %v254 = vadd.f32 %v191, %v253
    %v255 = vpop.f32.mrb[0].mxu0
    %256 = vmatprep.mubr.bf16.mxu0 0
    %257 = vmatmul.mubr.bf16.gmra.mrb[0].mxu0 %v206
    %v258 = vpop.f32.mrb[0].mxu0
    %v259 = vadd.f32 %v191, %v258
    %v260 = vpop.f32.mrb[0].mxu0
    %v261 = vpop.f32.mrb[0].mxu0
    %v262 = vpop.f32.mrb[0].mxu0
    %263 = vdwg.mxu0
    %v264 = vmul.f32 %v243, 0.5
    %v265 = vmul.f32 %v246, 0.5
    %v266 = vmul.f32 %v251, 0.5
    %v267 = vmul.f32 %v254, 0.5
    %v268 = vmul.f32 %v259, 0.5
    %v269 = vmul.f32 %v243, 0.70710677
    %v270 = vmul.f32 %v246, 0.70710677
    %v271 = vmul.f32 %v251, 0.70710677
    %v272 = vmul.f32 %v254, 0.70710677
    %v273 = vmul.f32 %v259, 0.70710677
    %v274 = verf.f32.pop %v269
    %v275 = verf.f32.pop %v270
    %v276 = verf.f32.pop %v271
    %v277 = verf.f32.pop %v272
    %v278 = verf.f32.pop %v273
    %v279 = vadd.f32 %v274, 1.0
    %v280 = vadd.f32 %v275, 1.0
    %v281 = vadd.f32 %v276, 1.0
    %v282 = vadd.f32 %v277, 1.0
    %v283 = vadd.f32 %v278, 1.0
    %v284 = vmul.f32 %v264, %v279
    %v285 = vmul.f32 %v265, %v280
    %v286 = vmul.f32 %v266, %v281
    %v287 = vmul.f32 %v267, %v282
    %v288 = vmul.f32 %v268, %v283
    %v289 = vpack.c.bf16 %v285, %v284
    %v290 = vpack.c.bf16 %v287, %v286
    %v291 = vpack.c.bf16 %v288, %v288
    %v295 = vunpack.c.l.b16 %v289
    %v296 = vunpack.c.h.b16 %v289
    %v297 = vunpack.c.l.b16 %v290
    %v298 = vunpack.c.h.b16 %v290
    %v299 = vunpack.c.l.b16 %v291
    %v300 = vpack.c.b16 %v295, %v295
    %v301 = vpack.c.b16 %v296, %v296
    %v302 = vpack.c.b16 %v297, %v297
    %v303 = vpack.c.b16 %v298, %v298
    %v304 = vpack.c.b16 %v299, %v299
    %vm310 = vcmask 519168
    %311 = vst.msk [vmem:[#allocation11] sm:$0xf] %vm310, %v300
    %312 = vst.msk [vmem:[#allocation11 + $0x4] sm:$0xf] %vm310, %v301
    %313 = vst.msk [vmem:[#allocation11 + $0x8] sm:$0xf] %vm310, %v302
    %314 = vst.msk [vmem:[#allocation11 + $0xc] sm:$0xf] %vm310, %v303
    %vm315 = vcmask 516096
    %316 = vst.msk [vmem:[#allocation11 + $0x10] sm:$0x1] %vm315, %v304
    // Predicated region
    $region42: #{aeformer_forward.42} parent=1 // pred_check
      _
    $region43: #{aeformer_forward.42} parent=1 // pred_check_branch
      %318 = sbr.rel (0) target = $region45
    $region44: #{aeformer_forward.42} parent=1 // pred_region
      %s320 = ssub.s32 320, 320
      %321 = vsyncadd [#allocation4], %s320
      %s322 = sshll.u32 [#allocation11], 4
      %s323 = int_to_ptr.vmem [resolvable:$true] %s322
      %328 = dma.vmem_to_hbm [thread:$0]  %s323, 320, %s5, [#allocation4], 64, 64, 4
    $region45: #{aeformer_forward.42} parent=1 // pred_fallthru
      _
    // Predicated region
    $region46: #{aeformer_forward.42} parent=1 // pred_check
      _
    $region47: #{aeformer_forward.42} parent=1 // pred_check_branch
      %330 = sbr.rel (0) target = $region49
    $region48: #{aeformer_forward.42} parent=1 // pred_region
      %331 = dma.done [#allocation4], 320
    $region49: #{aeformer_forward.42} parent=1 // pred_fallthru
      _
    %332 = vsyncpa [#allocation3], 1
    %333 = vsyncpa [#allocation6], 1
    %334 = vsyncpa [#allocation9], 1
    %335 = vsyncpa [#allocation4], 1

// kernel: aeformer_forward.41
$region0: #{aeformer_forward.41}
  #allocation0 [shape = 'u32[]', space=smem, size = 0x4, offset = 0x4, fixed_abs, tag = 'smem constant byte address 0x4 - core index']
  #allocation1 [shape = 'u32[144,128]{1,0:T(1,128)}', space=vmem, size = 0x12000, scoped, tag = 'internal scratch']
  %s0 = inlined_call_operand.hbm [shape: bf16[34,16], index: 0, kind: input, shape index: {}]
  %s1 = inlined_call_operand.hbm [shape: bf16[16,16], index: 1, kind: input, shape index: {}]
  %s2 = inlined_call_operand.hbm [shape: f32[1,16], index: 2, kind: input, shape index: {}]
  %s3 = inlined_call_operand.hbm [shape: f32[34,16], index: 3, kind: input, shape index: {}]
  %s4 = inlined_call_operand.hbm [shape: f32[34,16], index: 4, kind: output, shape index: {}]
  %s5 = sld [smem:[#allocation0]]
  $region42: #{aeformer_forward.41} parent=0
    _
  %s7 = ssub.s32 1, %s5
  %s8 = scalar_select 0, %s7, %s5
  $region1: #{aeformer_forward.41} parent=0
    #allocation2 [shape = 'u8[10240]{0}', space=vmem, size = 0x2800, scoped, tag = 'input window, operand 0, single buffered']
    #allocation3 [shape = 's32[1]{0}', space=sflag, size = 0x4, scoped, tag = 'scoped memory for aeformer_forward.41']
    #allocation4 [shape = 's32[1]{0}', space=sflag, size = 0x4, scoped, tag = 'scoped memory for aeformer_forward.41']
    #allocation5 [shape = 'u8[4096]{0}', space=vmem, size = 0x1000, scoped, tag = 'input window, operand 1, single buffered']
    #allocation6 [shape = 's32[1]{0}', space=sflag, size = 0x4, scoped, tag = 'scoped memory for aeformer_forward.41']
    #allocation7 [shape = 'u8[512]{0}', space=vmem, size = 0x400, scoped, tag = 'input window, operand 2, single buffered']
    #allocation8 [shape = 'u8[20480]{0}', space=vmem, size = 0x5000, scoped, tag = 'input window, operand 3, single buffered']
    #allocation9 [shape = 's32[1]{0}', space=sflag, size = 0x4, scoped, tag = 'scoped memory for aeformer_forward.41']
    #allocation10 [shape = 'u8[20480]{0}', space=vmem, size = 0x5000, scoped, tag = 'output window, operand 0, single buffered']
    %9 = vsyncpa [#allocation3], 0
    %10 = vsyncpa [#allocation6], 0
    %11 = vsyncpa [#allocation9], 0
    %12 = vsyncpa [#allocation4], 0
    // Predicated region
    $region2: #{aeformer_forward.41} parent=1 // pred_check
      _
    $region3: #{aeformer_forward.41} parent=1 // pred_check_branch
      %14 = sbr.rel (0) target = $region5
    $region4: #{aeformer_forward.41} parent=1 // pred_region
      %s16 = ssub.s32 320, 320
      %17 = vsyncadd [#allocation3], %s16
      %s18 = sshll.u32 [#allocation2], 4
      %s19 = int_to_ptr.vmem [resolvable:$true] %s18
      %24 = dma.hbm_to_vmem [thread:$0]  %s0, 320, %s19, [#allocation3], 64, 64, 4
    $region5: #{aeformer_forward.41} parent=1 // pred_fallthru
      _
    // Predicated region
    $region6: #{aeformer_forward.41} parent=1 // pred_check
      _
    $region7: #{aeformer_forward.41} parent=1 // pred_check_branch
      %26 = sbr.rel (0) target = $region9
    $region8: #{aeformer_forward.41} parent=1 // pred_region
      %s28 = ssub.s32 128, 128
      %29 = vsyncadd [#allocation6], %s28
      %s30 = sshll.u32 [#allocation5], 4
      %s31 = int_to_ptr.vmem [resolvable:$true] %s30
      %36 = dma.hbm_to_vmem [thread:$0]  %s1, 128, %s31, [#allocation6], 64, 64, 4
    $region9: #{aeformer_forward.41} parent=1 // pred_fallthru
      _
    // Predicated region
    $region10: #{aeformer_forward.41} parent=1 // pred_check
      _
    $region11: #{aeformer_forward.41} parent=1 // pred_check_branch
      %38 = sbr.rel (0) target = $region13
    $region12: #{aeformer_forward.41} parent=1 // pred_region
      %s40 = ssub.s32 16, 16
      %41 = vsyncadd [#allocation6], %s40
      %s43 = sshll.u32 [#allocation7], 4
      %s44 = int_to_ptr.vmem [resolvable:$true] %s43
      %46 = dma.hbm_to_vmem [thread:$0]  %s2, 16, %s44, [#allocation6]
    $region13: #{aeformer_forward.41} parent=1 // pred_fallthru
      _
    // Predicated region
    $region14: #{aeformer_forward.41} parent=1 // pred_check
      _
    $region15: #{aeformer_forward.41} parent=1 // pred_check_branch
      %48 = sbr.rel (0) target = $region17
    $region16: #{aeformer_forward.41} parent=1 // pred_region
      %s50 = ssub.s32 640, 640
      %51 = vsyncadd [#allocation9], %s50
      %s52 = sshll.u32 [#allocation8], 4
      %s53 = int_to_ptr.vmem [resolvable:$true] %s52
      %58 = dma.hbm_to_vmem [thread:$0]  %s3, 640, %s53, [#allocation9], 128, 128, 8
    $region17: #{aeformer_forward.41} parent=1 // pred_fallthru
      _
    // Predicated region
    $region18: #{aeformer_forward.41} parent=1 // pred_check
      _
    $region19: #{aeformer_forward.41} parent=1 // pred_check_branch
      %60 = sbr.rel (0) target = $region21
    $region20: #{aeformer_forward.41} parent=1 // pred_region
      %61 = dma.done [#allocation3], 320
    $region21: #{aeformer_forward.41} parent=1 // pred_fallthru
      _
    // Predicated region
    $region22: #{aeformer_forward.41} parent=1 // pred_check
      _
    $region23: #{aeformer_forward.41} parent=1 // pred_check_branch
      %63 = sbr.rel (0) target = $region25
    $region24: #{aeformer_forward.41} parent=1 // pred_region
      %64 = dma.done [#allocation6], 128
    $region25: #{aeformer_forward.41} parent=1 // pred_fallthru
      _
    // Predicated region
    $region26: #{aeformer_forward.41} parent=1 // pred_check
      _
    $region27: #{aeformer_forward.41} parent=1 // pred_check_branch
      %66 = sbr.rel (0) target = $region29
    $region28: #{aeformer_forward.41} parent=1 // pred_region
      %67 = dma.done [#allocation6], 16
    $region29: #{aeformer_forward.41} parent=1 // pred_fallthru
      _
    // Predicated region
    $region30: #{aeformer_forward.41} parent=1 // pred_check
      _
    $region31: #{aeformer_forward.41} parent=1 // pred_check_branch
      %69 = sbr.rel (0) target = $region33
    $region32: #{aeformer_forward.41} parent=1 // pred_region
      %70 = dma.done [#allocation9], 640
    $region33: #{aeformer_forward.41} parent=1 // pred_fallthru
      _
    %v72 = vld [vmem:[#allocation2] sm:$0xf]
    %v73 = vld [vmem:[#allocation2 + $0x4] sm:$0xf]
    %v74 = vld [vmem:[#allocation2 + $0x8] sm:$0xf]
    %v75 = vld [vmem:[#allocation2 + $0xc] sm:$0xf]
    %v76 = vld [vmem:[#allocation2 + $0x10] sm:$0x1]
    %v77 = vld [vmem:[#allocation5] sm:$0xf]
    %v78 = vld [vmem:[#allocation5 + $0x4] sm:$0xf]
    %v79 = vld [vmem:[#allocation7] sm:$0x1]
    %v81 = vlaneseq
    %v82 = vshrl.u32 %v81, 7
    %v83 = vsub.s32 0, %v82
    %v84 = vrot.slane %v79, %v83
    %v91 = vunpack.c.l.b16 %v72
    %v92 = vunpack.c.l.b16 %v73
    %v93 = vunpack.c.l.b16 %v74
    %v94 = vunpack.c.l.b16 %v75
    %v95 = vunpack.c.l.b16 %v76
    %v96 = vpack.c.b16 %v92, %v91
    %v97 = vpack.c.b16 %v94, %v93
    %v98 = vpack.c.b16 %v95, %v95
    %v101 = vunpack.c.l.b16 %v77
    %v102 = vunpack.c.l.b16 %v78
    %v103 = vpack.c.b16 %v102, %v101
    %vm105 = vcmask 130048
    %v107 = vsel %vm105, %v96, 0
    %v110 = vsel %vm105, %v97, 0
    %v113 = vsel %vm105, %v98, 0
    %115 = vmatprep.subr.bf16.mxu0 0
    %116 = vmatpush1.bf16.msra.mxu0 %v103
    %117 = vmatprep.subr.bf16.mxu0 0
    %118 = vmatpush1.bf16.msra.mxu0 0
    %119 = vmatprep.subr.bf16.mxu0 0
    %120 = vmatpush1.bf16.msra.mxu0 0
    %121 = vmatprep.subr.bf16.mxu0 0
    %122 = vmatpush1.bf16.msra.mxu0 0
    %123 = vmatprep.subr.bf16.mxu0 0
    %124 = vmatpush1.bf16.msra.mxu0 0
    %125 = vmatprep.subr.bf16.mxu0 0
    %126 = vmatpush1.bf16.msra.mxu0 0
    %127 = vmatprep.subr.bf16.mxu0 0
    %128 = vmatpush1.bf16.msra.mxu0 0
    %129 = vmatprep.subr.bf16.mxu0 0
    %130 = vmatpush1.bf16.msra.mxu0 0
    %131 = vmatprep.subr.bf16.mxu0 0
    %132 = vmatpush1.bf16.msra.mxu0 0
    %133 = vmatprep.subr.bf16.mxu0 0
    %134 = vmatpush1.bf16.msra.mxu0 0
    %135 = vmatprep.subr.bf16.mxu0 0
    %136 = vmatpush1.bf16.msra.mxu0 0
    %137 = vmatprep.subr.bf16.mxu0 0
    %138 = vmatpush1.bf16.msra.mxu0 0
    %139 = vmatprep.subr.bf16.mxu0 0
    %140 = vmatpush1.bf16.msra.mxu0 0
    %141 = vmatprep.subr.bf16.mxu0 0
    %142 = vmatpush1.bf16.msra.mxu0 0
    %143 = vmatprep.subr.bf16.mxu0 0
    %144 = vmatpush1.bf16.msra.mxu0 0
    %145 = vmatprep.subr.bf16.mxu0 0
    %146 = vmatpush1.bf16.msra.mxu0 0
    %147 = vmatprep.mubr.bf16.mxu0 0
    %148 = vmatmul.mubr.bf16.gmra.mrb[0].mxu0 %v107
    %v149 = vpop.f32.mrb[0].mxu0
    %v150 = vadd.f32 %v84, %v149
    %v151 = vpop.f32.mrb[0].mxu0
    %v152 = vpop.f32.mrb[0].mxu0
    %v153 = vadd.f32 %v84, %v152
    %v154 = vpop.f32.mrb[0].mxu0
    %155 = vmatprep.mubr.bf16.mxu0 0
    %156 = vmatmul.mubr.bf16.gmra.mrb[0].mxu0 %v110
    %v157 = vpop.f32.mrb[0].mxu0
    %v158 = vadd.f32 %v84, %v157
    %v159 = vpop.f32.mrb[0].mxu0
    %v160 = vpop.f32.mrb[0].mxu0
    %v161 = vadd.f32 %v84, %v160
    %v162 = vpop.f32.mrb[0].mxu0
    %163 = vmatprep.mubr.bf16.mxu0 0
    %164 = vmatmul.mubr.bf16.gmra.mrb[0].mxu0 %v113
    %v165 = vpop.f32.mrb[0].mxu0
    %v166 = vadd.f32 %v84, %v165
    %v167 = vpop.f32.mrb[0].mxu0
    %v168 = vpop.f32.mrb[0].mxu0
    %v169 = vpop.f32.mrb[0].mxu0
    %170 = vdwg.mxu0
    %v171 = vld [vmem:[#allocation8] sm:$0xff]
    %v172 = vld [vmem:[#allocation8 + $0x8] sm:$0xff]
    %v173 = vld [vmem:[#allocation8 + $0x10] sm:$0xff]
    %v174 = vld [vmem:[#allocation8 + $0x18] sm:$0xff]
    %v175 = vld [vmem:[#allocation8 + $0x20] sm:$0x3]
    %v176 = vadd.f32 %v150, %v171
    %v177 = vadd.f32 %v153, %v172
    %v178 = vadd.f32 %v158, %v173
    %v179 = vadd.f32 %v161, %v174
    %v180 = vadd.f32 %v166, %v175
    %181 = vst.msk [vmem:[#allocation10] sm:$0xff] %vm105, %v176
    %182 = vst.msk [vmem:[#allocation10 + $0x8] sm:$0xff] %vm105, %v177
    %183 = vst.msk [vmem:[#allocation10 + $0x10] sm:$0xff] %vm105, %v178
    %184 = vst.msk [vmem:[#allocation10 + $0x18] sm:$0xff] %vm105, %v179
    %vm185 = vcmask 123904
    %186 = vst.msk [vmem:[#allocation10 + $0x20] sm:$0x3] %vm185, %v180
    // Predicated region
    $region34: #{aeformer_forward.41} parent=1 // pred_check
      _
    $region35: #{aeformer_forward.41} parent=1 // pred_check_branch
      %188 = sbr.rel (0) target = $region37
    $region36: #{aeformer_forward.41} parent=1 // pred_region
      %s190 = ssub.s32 640, 640
      %191 = vsyncadd [#allocation4], %s190
      %s192 = sshll.u32 [#allocation10], 4
      %s193 = int_to_ptr.vmem [resolvable:$true] %s192
      %198 = dma.vmem_to_hbm [thread:$0]  %s193, 640, %s4, [#allocation4], 128, 128, 8
    $region37: #{aeformer_forward.41} parent=1 // pred_fallthru
      _
    // Predicated region
    $region38: #{aeformer_forward.41} parent=1 // pred_check
      _
    $region39: #{aeformer_forward.41} parent=1 // pred_check_branch
      %200 = sbr.rel (0) target = $region41
    $region40: #{aeformer_forward.41} parent=1 // pred_region
      %201 = dma.done [#allocation4], 640
    $region41: #{aeformer_forward.41} parent=1 // pred_fallthru
      _
    %202 = vsyncpa [#allocation3], 1
    %203 = vsyncpa [#allocation6], 1
    %204 = vsyncpa [#allocation9], 1
    %205 = vsyncpa [#allocation4], 1

// kernel: aeformer_forward.40
$region0: #{aeformer_forward.40}
  #allocation0 [shape = 'u32[]', space=smem, size = 0x4, offset = 0x4, fixed_abs, tag = 'smem constant byte address 0x4 - core index']
  #allocation1 [shape = 'u32[144,128]{1,0:T(1,128)}', space=vmem, size = 0x12000, scoped, tag = 'internal scratch']
  %s0 = inlined_call_operand.hbm [shape: bf16[2,17,48], index: 0, kind: input, shape index: {}]
  %s1 = inlined_call_operand.hbm [shape: bf16[2,17,16], index: 1, kind: output, shape index: {}]
  %s2 = sld [smem:[#allocation0]]
  $region41: #{aeformer_forward.40} parent=0
    _
  %s4 = ssub.s32 1, %s2
  %s5 = scalar_select 0, %s4, %s2
  $region1: #{aeformer_forward.40} parent=0
    #allocation2 [shape = 'u8[12288]{0}', space=vmem, size = 0x3000, scoped, tag = 'input window, operand 0']
    #allocation3 [shape = 's32[2]{0}', space=sflag, size = 0x8, scoped, tag = 'scoped memory for aeformer_forward.40']
    #allocation4 [shape = 's32[2]{0}', space=sflag, size = 0x8, scoped, tag = 'scoped memory for aeformer_forward.40']
    #allocation5 [shape = 'u8[12288]{0}', space=vmem, size = 0x3000, scoped, tag = 'output window, operand 0']
    %6 = vsyncpa [#allocation3], 0
    %s7 = scalar_lea.sflag [#allocation3], 1
    %8 = vsyncpa %s7, 0
    %9 = vsyncpa [#allocation4], 0
    %s10 = scalar_lea.sflag [#allocation4], 1
    %11 = vsyncpa %s10, 0
    loop: start=0, step=1, limit=4
    $region2: #{aeformer_forward.40} parent=1 // loop_pre_header
      _
    $region3: #{aeformer_forward.40} parent=1 // loop_header
      %s13 = sphi 0, %s17
      %p14 = scmp.ge.s32.totalorder %s13, 4
      %s23 = sphi 0, %s25
      %s26 = sphi 0, %s23
      %s27 = sphi 0, %s26
      %s43 = sphi 0, %s27
      %s49 = sphi 0, %s51
      %s52 = sphi 0, %s49
      %s53 = sphi 0, %s52
      %s69 = sphi 0, %s53
    $region4: #{aeformer_forward.40} parent=1 // loop_header_branch
      %16 = sbr.rel (%p14) target = $region8
    $region5: #{aeformer_forward.40} parent=1 // loop_body
      %s18 = ssub.s32 %s13, 1
      %s19 = ssub.s32 %s13, 2
      %s20 = sadd.s32 %s13, 1
      %s21 = ssub.s32 %s13, %s20
      %p22 = scmp.eq.s32.totalorder %s21, 0
      %s24 = sadd.s32 %s23, 1
      %s25 = scalar_select %p22, %s23, %s24
      %p28 = pneg %p22
      %p29 = scmp.eq.s32.totalorder %s13, 1
      %p30 = por %p28, %p29
      %p31 = scmp.ne.s32.totalorder %s23, %s26
      %p32 = scmp.eq.s32.totalorder %s13, 0
      %p33 = por %p31, %p32
      %p34 = scmp.ne.s32.totalorder %s23, %s26
      %p35 = scmp.eq.s32.totalorder %s18, 1
      %p36 = por %p34, %p35
      %p37 = scmp.ne.s32.totalorder %s26, %s27
      %p38 = scmp.eq.s32.totalorder %s18, 0
      %p39 = por %p37, %p38
      %p40 = scmp.ne.s32.totalorder %s26, %s27
      %p41 = scmp.eq.s32.totalorder %s19, 1
      %p42 = por %p40, %p41
      %p44 = scmp.ne.s32.totalorder %s27, %s43
      %p45 = scmp.eq.s32.totalorder %s19, 0
      %p46 = por %p44, %p45
      %s47 = ssub.s32 %s13, %s20
      %p48 = scmp.eq.s32.totalorder %s47, 0
      %s50 = sadd.s32 %s49, 1
      %s51 = scalar_select %p48, %s49, %s50
      %p54 = pneg %p48
      %p55 = scmp.eq.s32.totalorder %s13, 1
      %p56 = por %p54, %p55
      %p57 = scmp.ne.s32.totalorder %s49, %s52
      %p58 = scmp.eq.s32.totalorder %s13, 0
      %p59 = por %p57, %p58
      %p60 = scmp.ne.s32.totalorder %s49, %s52
      %p61 = scmp.eq.s32.totalorder %s18, 1
      %p62 = por %p60, %p61
      %p63 = scmp.ne.s32.totalorder %s52, %s53
      %p64 = scmp.eq.s32.totalorder %s18, 0
      %p65 = por %p63, %p64
      %p66 = scmp.ne.s32.totalorder %s52, %s53
      %p67 = scmp.eq.s32.totalorder %s19, 1
      %p68 = por %p66, %p67
      %p70 = scmp.ne.s32.totalorder %s53, %s69
      %p71 = scmp.eq.s32.totalorder %s19, 0
      %p72 = por %p70, %p71
      %p73 = scmp.le.s32.totalorder 1, %s13
      %p74 = scmp.lt.s32.totalorder %s13, 3
      %p75 = pnand %p73, %p74
      %p76 = pneg %p75
      // Predicated region
      $region9: #{aeformer_forward.40} parent=5 // pred_check
        _
      $region10: #{aeformer_forward.40} parent=5 // pred_check_branch
        %78 = sbr.rel (%p75) target = $region12
      $region11: #{aeformer_forward.40} parent=5 // pred_region
        %s79 = ssub.s32 %s13, 1
      $region12: #{aeformer_forward.40} parent=5 // pred_fallthru
        _
      %p80 = scmp.lt.s32.totalorder %s13, 2
      // Predicated region
      $region13: #{aeformer_forward.40} parent=5 // pred_check
        %p81 = pneg %p80
      $region14: #{aeformer_forward.40} parent=5 // pred_check_branch
        %83 = sbr.rel (%p81) target = $region16
      $region15: #{aeformer_forward.40} parent=5 // pred_region
        // Predicated region
        $region17: #{aeformer_forward.40} parent=15 // pred_check
          %p84 = pneg %p33
        $region18: #{aeformer_forward.40} parent=15 // pred_check_branch
          %86 = sbr.rel (%p84) target = $region20
        $region19: #{aeformer_forward.40} parent=15 // pred_region
          %s87 = sand.u32 %s23, 1
          %s88 = scalar_lea.sflag [#allocation3], %s87
          %s89 = sand.u32 %s23, 1
          %s90 = smul.addr %s89, 12
          %s91 = scalar_lea.vmem [#allocation2], %s90
          %s93 = ssub.s32 192, 192
          %94 = vsyncadd %s88, %s93
          %s95 = smul.addr %s13, 3
          %s96 = smul.addr %s95, 64
          %s97 = scalar_lea.hbm %s0, %s96
          %s98 = sshll.u32 %s91, 4
          %s99 = int_to_ptr.vmem [resolvable:$true] %s98
          %104 = dma.hbm_to_vmem [thread:$0]  %s97, 192, %s99, %s88, 64, 64, 4
        $region20: #{aeformer_forward.40} parent=15 // pred_fallthru
          _
      $region16: #{aeformer_forward.40} parent=5 // pred_fallthru
        _
      %p105 = scmp.le.s32.totalorder 1, %s13
      %p106 = scmp.lt.s32.totalorder %s13, 3
      %p107 = pnand %p105, %p106
      %p108 = pneg %p107
      // Predicated region
      $region21: #{aeformer_forward.40} parent=5 // pred_check
        _
      $region22: #{aeformer_forward.40} parent=5 // pred_check_branch
        %110 = sbr.rel (%p107) target = $region24
      $region23: #{aeformer_forward.40} parent=5 // pred_region
        %s111 = ssub.s32 %s13, 1
        %s112 = sand.u32 %s26, 1
        %s113 = scalar_lea.sflag [#allocation3], %s112
        %s114 = sand.u32 %s26, 1
        %s115 = smul.addr %s114, 12
        %s116 = scalar_lea.vmem [#allocation2], %s115
        // Predicated region
        $region25: #{aeformer_forward.40} parent=23 // pred_check
          %p117 = pneg %p39
        $region26: #{aeformer_forward.40} parent=23 // pred_check_branch
          %119 = sbr.rel (%p117) target = $region28
        $region27: #{aeformer_forward.40} parent=23 // pred_region
          %120 = dma.done %s113, 192
        $region28: #{aeformer_forward.40} parent=23 // pred_fallthru
          _
        %s121 = sand.u32 %s26, 1
        %s122 = scalar_lea.sflag [#allocation3], %s121
        %s123 = sand.u32 %s26, 1
        %s124 = smul.addr %s123, 12
        %s125 = scalar_lea.vmem [#allocation2], %s124
        %p126 = pneg %p39
        %p127 = pneg %p36
        %p128 = pneg %p65
        %p129 = pneg %p62
        %s130 = sand.u32 %s52, 1
        %s131 = scalar_lea.sflag [#allocation4], %s130
        %s132 = sand.u32 %s52, 1
        %s133 = smul.addr %s132, 12
        %s134 = scalar_lea.vmem [#allocation5], %s133
        %v136 = vld [vmem:[%s116] sm:$0xf]
        %v137 = vld [vmem:[%s116 + $0x4] sm:$0xf]
        %v138 = vld [vmem:[%s116 + $0x8] sm:$0x1]
        %142 = vrot.lane.b32.xlu0 %v136, 124
        %v143 = vpop.permute.xlu0 %142
        %144 = vrot.lane.b32.xlu0 %v137, 124
        %v145 = vpop.permute.xlu0 %144
        %146 = vrot.lane.b32.xlu0 %v138, 124
        %v147 = vpop.permute.xlu0 %146
        %148 = vrot.lane.b32.xlu0 %v136, 120
        %v149 = vpop.permute.xlu0 %148
        %150 = vrot.lane.b32.xlu0 %v137, 120
        %v151 = vpop.permute.xlu0 %150
        %152 = vrot.lane.b32.xlu0 %v138, 120
        %v153 = vpop.permute.xlu0 %152
        %154 = vrot.lane.b32.xlu0 %v136, 116
        %v155 = vpop.permute.xlu0 %154
        %156 = vrot.lane.b32.xlu0 %v137, 116
        %v157 = vpop.permute.xlu0 %156
        %158 = vrot.lane.b32.xlu0 %v138, 116
        %v159 = vpop.permute.xlu0 %158
        %v161 = vunpack.c.l.s4 1983009808
        %v162 = vunpack.c.0.s8 %v161
        %v163 = vlaneseq
        %v164 = vshrl.u32 %v163, 7
        %v165 = vsub.s32 %v162, %v164
        %v166 = vrot.slane %v136, %v165
        %v169 = vunpack.c.l.s4 1983009808
        %v170 = vunpack.c.0.s8 %v169
        %v171 = vlaneseq
        %v172 = vshrl.u32 %v171, 7
        %v173 = vsub.s32 %v170, %v172
        %v174 = vrot.slane %v149, %v173
        %v175 = vcombine.low %v166, %v174
        %v176 = vcombine.high %v166, %v174
        %v178 = vunpack.c.l.s4 1934713408
        %v179 = vunpack.c.0.s8 %v178
        %v180 = vlaneseq
        %v181 = vshrl.u32 %v180, 7
        %v182 = vsub.s32 %v179, %v181
        %v183 = vrot.slane %v175, %v182
        %v185 = vunpack.c.l.s4 1934713408
        %v186 = vunpack.c.0.s8 %v185
        %v187 = vlaneseq
        %v188 = vshrl.u32 %v187, 7
        %v189 = vsub.s32 %v186, %v188
        %v190 = vrot.slane %v176, %v189
        %v191 = vcombine.high %v183, 0
        %v192 = vcombine.high %v190, 0
        %v195 = vunpack.c.l.s4 1983009808
        %v196 = vunpack.c.0.s8 %v195
        %v197 = vlaneseq
        %v198 = vshrl.u32 %v197, 7
        %v199 = vsub.s32 %v196, %v198
        %v200 = vrot.slane %v143, %v199
        %v203 = vunpack.c.l.s4 1983009808
        %v204 = vunpack.c.0.s8 %v203
        %v205 = vlaneseq
        %v206 = vshrl.u32 %v205, 7
        %v207 = vsub.s32 %v204, %v206
        %v208 = vrot.slane %v155, %v207
        %v209 = vcombine.low %v200, %v208
        %v210 = vcombine.high %v200, %v208
        %v212 = vunpack.c.l.s4 1934713408
        %v213 = vunpack.c.0.s8 %v212
        %v214 = vlaneseq
        %v215 = vshrl.u32 %v214, 7
        %v216 = vsub.s32 %v213, %v215
        %v217 = vrot.slane %v209, %v216
        %v219 = vunpack.c.l.s4 1934713408
        %v220 = vunpack.c.0.s8 %v219
        %v221 = vlaneseq
        %v222 = vshrl.u32 %v221, 7
        %v223 = vsub.s32 %v220, %v222
        %v224 = vrot.slane %v210, %v223
        %v225 = vcombine.high %v217, 0
        %v226 = vcombine.high %v224, 0
        %v228 = vunpack.c.l.s4 1983009808
        %v229 = vunpack.c.0.s8 %v228
        %v230 = vlaneseq
        %v231 = vshrl.u32 %v230, 7
        %v232 = vsub.s32 %v229, %v231
        %v233 = vrot.slane %v137, %v232
        %v236 = vunpack.c.l.s4 1983009808
        %v237 = vunpack.c.0.s8 %v236
        %v238 = vlaneseq
        %v239 = vshrl.u32 %v238, 7
        %v240 = vsub.s32 %v237, %v239
        %v241 = vrot.slane %v151, %v240
        %v242 = vcombine.low %v233, %v241
        %v243 = vcombine.high %v233, %v241
        %v245 = vunpack.c.l.s4 1934713408
        %v246 = vunpack.c.0.s8 %v245
        %v247 = vlaneseq
        %v248 = vshrl.u32 %v247, 7
        %v249 = vsub.s32 %v246, %v248
        %v250 = vrot.slane %v242, %v249
        %v252 = vunpack.c.l.s4 1934713408
        %v253 = vunpack.c.0.s8 %v252
        %v254 = vlaneseq
        %v255 = vshrl.u32 %v254, 7
        %v256 = vsub.s32 %v253, %v255
        %v257 = vrot.slane %v243, %v256
        %v258 = vcombine.high %v250, 0
        %v259 = vcombine.high %v257, 0
        %v262 = vunpack.c.l.s4 1983009808
        %v263 = vunpack.c.0.s8 %v262
        %v264 = vlaneseq
        %v265 = vshrl.u32 %v264, 7
        %v266 = vsub.s32 %v263, %v265
        %v267 = vrot.slane %v145, %v266
        %v270 = vunpack.c.l.s4 1983009808
        %v271 = vunpack.c.0.s8 %v270
        %v272 = vlaneseq
        %v273 = vshrl.u32 %v272, 7
        %v274 = vsub.s32 %v271, %v273
        %v275 = vrot.slane %v157, %v274
        %v276 = vcombine.low %v267, %v275
        %v277 = vcombine.high %v267, %v275
        %v279 = vunpack.c.l.s4 1934713408
        %v280 = vunpack.c.0.s8 %v279
        %v281 = vlaneseq
        %v282 = vshrl.u32 %v281, 7
        %v283 = vsub.s32 %v280, %v282
        %v284 = vrot.slane %v276, %v283
        %v286 = vunpack.c.l.s4 1934713408
        %v287 = vunpack.c.0.s8 %v286
        %v288 = vlaneseq
        %v289 = vshrl.u32 %v288, 7
        %v290 = vsub.s32 %v287, %v289
        %v291 = vrot.slane %v277, %v290
        %v292 = vcombine.high %v284, 0
        %v293 = vcombine.high %v291, 0
        %v295 = vcombine.low %v138, %v153
        %v297 = vunpack.c.l.s4 1934713408
        %v298 = vunpack.c.0.s8 %v297
        %v299 = vlaneseq
        %v300 = vshrl.u32 %v299, 7
        %v301 = vsub.s32 %v298, %v300
        %v302 = vrot.slane %v295, %v301
        %v305 = vcombine.low %v147, %v159
        %v307 = vunpack.c.l.s4 1934713408
        %v308 = vunpack.c.0.s8 %v307
        %v309 = vlaneseq
        %v310 = vshrl.u32 %v309, 7
        %v311 = vsub.s32 %v308, %v310
        %v312 = vrot.slane %v305, %v311
        %v315 = vpack.i.b16 %v217, %v183
        %v317 = vshrl.u32 %v183, 16
        %v318 = vshrl.u32 %v217, 16
        %v319 = vpack.i.b16 %v318, %v317
        %v323 = vpack.i.b16 %v225, %v191
        %v325 = vshrl.u32 %v191, 16
        %v326 = vshrl.u32 %v225, 16
        %v327 = vpack.i.b16 %v326, %v325
        %v331 = vpack.i.b16 %v224, %v190
        %v333 = vshrl.u32 %v190, 16
        %v334 = vshrl.u32 %v224, 16
        %v335 = vpack.i.b16 %v334, %v333
        %v339 = vpack.i.b16 %v226, %v192
        %v341 = vshrl.u32 %v192, 16
        %v342 = vshrl.u32 %v226, 16
        %v343 = vpack.i.b16 %v342, %v341
        %v347 = vpack.i.b16 %v284, %v250
        %v349 = vshrl.u32 %v250, 16
        %v350 = vshrl.u32 %v284, 16
        %v351 = vpack.i.b16 %v350, %v349
        %v355 = vpack.i.b16 %v292, %v258
        %v357 = vshrl.u32 %v258, 16
        %v358 = vshrl.u32 %v292, 16
        %v359 = vpack.i.b16 %v358, %v357
        %v363 = vpack.i.b16 %v291, %v257
        %v365 = vshrl.u32 %v257, 16
        %v366 = vshrl.u32 %v291, 16
        %v367 = vpack.i.b16 %v366, %v365
        %v371 = vpack.i.b16 %v293, %v259
        %v373 = vshrl.u32 %v259, 16
        %v374 = vshrl.u32 %v293, 16
        %v375 = vpack.i.b16 %v374, %v373
        %v379 = vpack.i.b16 %v312, %v302
        %v380 = vcombine.low %v315, %v331
        %v382 = vunpack.c.l.s4 1983009808
        %v383 = vunpack.c.0.s8 %v382
        %v384 = vlaneseq
        %v385 = vshrl.u32 %v384, 7
        %v386 = vsub.s32 %v383, %v385
        %v387 = vrot.slane %v380, %v386
        %v388 = vcombine.low %v323, %v339
        %v390 = vunpack.c.l.s4 1983009808
        %v391 = vunpack.c.0.s8 %v390
        %v392 = vlaneseq
        %v393 = vshrl.u32 %v392, 7
        %v394 = vsub.s32 %v391, %v393
        %v395 = vrot.slane %v388, %v394
        %v396 = vcombine.low %v387, %v395
        %v398 = vunpack.c.l.s4 1934713408
        %v399 = vunpack.c.0.s8 %v398
        %v400 = vlaneseq
        %v401 = vshrl.u32 %v400, 7
        %v402 = vsub.s32 %v399, %v401
        %v403 = vrot.slane %v396, %v402
        %v404 = vcombine.high %v403, 0
        %v405 = vcombine.low %v319, %v335
        %v407 = vunpack.c.l.s4 1983009808
        %v408 = vunpack.c.0.s8 %v407
        %v409 = vlaneseq
        %v410 = vshrl.u32 %v409, 7
        %v411 = vsub.s32 %v408, %v410
        %v412 = vrot.slane %v405, %v411
        %v413 = vcombine.low %v327, %v343
        %v415 = vunpack.c.l.s4 1983009808
        %v416 = vunpack.c.0.s8 %v415
        %v417 = vlaneseq
        %v418 = vshrl.u32 %v417, 7
        %v419 = vsub.s32 %v416, %v418
        %v420 = vrot.slane %v413, %v419
        %v421 = vcombine.low %v412, %v420
        %v423 = vunpack.c.l.s4 1934713408
        %v424 = vunpack.c.0.s8 %v423
        %v425 = vlaneseq
        %v426 = vshrl.u32 %v425, 7
        %v427 = vsub.s32 %v424, %v426
        %v428 = vrot.slane %v421, %v427
        %v429 = vcombine.high %v428, 0
        %v430 = vcombine.low %v347, %v363
        %v432 = vunpack.c.l.s4 1983009808
        %v433 = vunpack.c.0.s8 %v432
        %v434 = vlaneseq
        %v435 = vshrl.u32 %v434, 7
        %v436 = vsub.s32 %v433, %v435
        %v437 = vrot.slane %v430, %v436
        %v438 = vcombine.low %v355, %v371
        %v440 = vunpack.c.l.s4 1983009808
        %v441 = vunpack.c.0.s8 %v440
        %v442 = vlaneseq
        %v443 = vshrl.u32 %v442, 7
        %v444 = vsub.s32 %v441, %v443
        %v445 = vrot.slane %v438, %v444
        %v446 = vcombine.low %v437, %v445
        %v448 = vunpack.c.l.s4 1934713408
        %v449 = vunpack.c.0.s8 %v448
        %v450 = vlaneseq
        %v451 = vshrl.u32 %v450, 7
        %v452 = vsub.s32 %v449, %v451
        %v453 = vrot.slane %v446, %v452
        %v454 = vcombine.high %v453, 0
        %v455 = vcombine.low %v351, %v367
        %v457 = vunpack.c.l.s4 1983009808
        %v458 = vunpack.c.0.s8 %v457
        %v459 = vlaneseq
        %v460 = vshrl.u32 %v459, 7
        %v461 = vsub.s32 %v458, %v460
        %v462 = vrot.slane %v455, %v461
        %v463 = vcombine.low %v359, %v375
        %v465 = vunpack.c.l.s4 1983009808
        %v466 = vunpack.c.0.s8 %v465
        %v467 = vlaneseq
        %v468 = vshrl.u32 %v467, 7
        %v469 = vsub.s32 %v466, %v468
        %v470 = vrot.slane %v463, %v469
        %v471 = vcombine.low %v462, %v470
        %v473 = vunpack.c.l.s4 1934713408
        %v474 = vunpack.c.0.s8 %v473
        %v475 = vlaneseq
        %v476 = vshrl.u32 %v475, 7
        %v477 = vsub.s32 %v474, %v476
        %v478 = vrot.slane %v471, %v477
        %v479 = vcombine.high %v478, 0
        %v482 = vunpack.c.l.s4 1934713408
        %v483 = vunpack.c.0.s8 %v482
        %v484 = vlaneseq
        %v485 = vshrl.u32 %v484, 7
        %v486 = vsub.s32 %v483, %v485
        %v487 = vrot.slane %v379, %v486
        %v488 = vcombine.high %v487, 0
        %v491 = vpack.i.b16 %v428, %v403
        %v493 = vshrl.u32 %v403, 16
        %v494 = vshrl.u32 %v428, 16
        %v495 = vpack.i.b16 %v494, %v493
        %v499 = vpack.i.b16 %v429, %v404
        %v501 = vshrl.u32 %v404, 16
        %v502 = vshrl.u32 %v429, 16
        %v503 = vpack.i.b16 %v502, %v501
        %v507 = vpack.i.b16 %v478, %v453
        %v509 = vshrl.u32 %v453, 16
        %v510 = vshrl.u32 %v478, 16
        %v511 = vpack.i.b16 %v510, %v509
        %v515 = vpack.i.b16 %v479, %v454
        %v517 = vshrl.u32 %v454, 16
        %v518 = vshrl.u32 %v479, 16
        %v519 = vpack.i.b16 %v518, %v517
        %v523 = vpack.i.b16 0, %v487
        %v525 = vshrl.u32 %v487, 16
        %v526 = vshrl.u32 0, 16
        %v527 = vpack.i.b16 %v526, %v525
        %v530 = vpack.i.b16 0, %v488
        %v532 = vshrl.u32 %v488, 16
        %v533 = vpack.i.b16 %v526, %v532
        %535 = vrot.lane.b32.xlu0 %v136, 112
        %v536 = vpop.permute.xlu0 %535
        %537 = vrot.lane.b32.xlu0 %v137, 112
        %v538 = vpop.permute.xlu0 %537
        %539 = vrot.lane.b32.xlu0 %v138, 112
        %v540 = vpop.permute.xlu0 %539
        %541 = vrot.lane.b32.xlu0 %v143, 112
        %v542 = vpop.permute.xlu0 %541
        %543 = vrot.lane.b32.xlu0 %v145, 112
        %v544 = vpop.permute.xlu0 %543
        %545 = vrot.lane.b32.xlu0 %v147, 112
        %v546 = vpop.permute.xlu0 %545
        %547 = vrot.lane.b32.xlu0 %v149, 112
        %v548 = vpop.permute.xlu0 %547
        %549 = vrot.lane.b32.xlu0 %v151, 112
        %v550 = vpop.permute.xlu0 %549
        %551 = vrot.lane.b32.xlu0 %v153, 112
        %v552 = vpop.permute.xlu0 %551
        %553 = vrot.lane.b32.xlu0 %v155, 112
        %v554 = vpop.permute.xlu0 %553
        %555 = vrot.lane.b32.xlu0 %v157, 112
        %v556 = vpop.permute.xlu0 %555
        %557 = vrot.lane.b32.xlu0 %v159, 112
        %v558 = vpop.permute.xlu0 %557
        %v561 = vunpack.c.l.s4 1983009808
        %v562 = vunpack.c.0.s8 %v561
        %v563 = vlaneseq
        %v564 = vshrl.u32 %v563, 7
        %v565 = vsub.s32 %v562, %v564
        %v566 = vrot.slane %v536, %v565
        %v569 = vunpack.c.l.s4 1983009808
        %v570 = vunpack.c.0.s8 %v569
        %v571 = vlaneseq
        %v572 = vshrl.u32 %v571, 7
        %v573 = vsub.s32 %v570, %v572
        %v574 = vrot.slane %v548, %v573
        %v575 = vcombine.low %v566, %v574
        %v576 = vcombine.high %v566, %v574
        %v578 = vunpack.c.l.s4 1934713408
        %v579 = vunpack.c.0.s8 %v578
        %v580 = vlaneseq
        %v581 = vshrl.u32 %v580, 7
        %v582 = vsub.s32 %v579, %v581
        %v583 = vrot.slane %v575, %v582
        %v585 = vunpack.c.l.s4 1934713408
        %v586 = vunpack.c.0.s8 %v585
        %v587 = vlaneseq
        %v588 = vshrl.u32 %v587, 7
        %v589 = vsub.s32 %v586, %v588
        %v590 = vrot.slane %v576, %v589
        %v591 = vcombine.high %v583, 0
        %v592 = vcombine.high %v590, 0
        %v595 = vunpack.c.l.s4 1983009808
        %v596 = vunpack.c.0.s8 %v595
        %v597 = vlaneseq
        %v598 = vshrl.u32 %v597, 7
        %v599 = vsub.s32 %v596, %v598
        %v600 = vrot.slane %v542, %v599
        %v603 = vunpack.c.l.s4 1983009808
        %v604 = vunpack.c.0.s8 %v603
        %v605 = vlaneseq
        %v606 = vshrl.u32 %v605, 7
        %v607 = vsub.s32 %v604, %v606
        %v608 = vrot.slane %v554, %v607
        %v609 = vcombine.low %v600, %v608
        %v610 = vcombine.high %v600, %v608
        %v612 = vunpack.c.l.s4 1934713408
        %v613 = vunpack.c.0.s8 %v612
        %v614 = vlaneseq
        %v615 = vshrl.u32 %v614, 7
        %v616 = vsub.s32 %v613, %v615
        %v617 = vrot.slane %v609, %v616
        %v619 = vunpack.c.l.s4 1934713408
        %v620 = vunpack.c.0.s8 %v619
        %v621 = vlaneseq
        %v622 = vshrl.u32 %v621, 7
        %v623 = vsub.s32 %v620, %v622
        %v624 = vrot.slane %v610, %v623
        %v625 = vcombine.high %v617, 0
        %v626 = vcombine.high %v624, 0
        %v629 = vunpack.c.l.s4 1983009808
        %v630 = vunpack.c.0.s8 %v629
        %v631 = vlaneseq
        %v632 = vshrl.u32 %v631, 7
        %v633 = vsub.s32 %v630, %v632
        %v634 = vrot.slane %v538, %v633
        %v637 = vunpack.c.l.s4 1983009808
        %v638 = vunpack.c.0.s8 %v637
        %v639 = vlaneseq
        %v640 = vshrl.u32 %v639, 7
        %v641 = vsub.s32 %v638, %v640
        %v642 = vrot.slane %v550, %v641
        %v643 = vcombine.low %v634, %v642
        %v644 = vcombine.high %v634, %v642
        %v646 = vunpack.c.l.s4 1934713408
        %v647 = vunpack.c.0.s8 %v646
        %v648 = vlaneseq
        %v649 = vshrl.u32 %v648, 7
        %v650 = vsub.s32 %v647, %v649
        %v651 = vrot.slane %v643, %v650
        %v653 = vunpack.c.l.s4 1934713408
        %v654 = vunpack.c.0.s8 %v653
        %v655 = vlaneseq
        %v656 = vshrl.u32 %v655, 7
        %v657 = vsub.s32 %v654, %v656
        %v658 = vrot.slane %v644, %v657
        %v659 = vcombine.high %v651, 0
        %v660 = vcombine.high %v658, 0
        %v663 = vunpack.c.l.s4 1983009808
        %v664 = vunpack.c.0.s8 %v663
        %v665 = vlaneseq
        %v666 = vshrl.u32 %v665, 7
        %v667 = vsub.s32 %v664, %v666
        %v668 = vrot.slane %v544, %v667
        %v671 = vunpack.c.l.s4 1983009808
        %v672 = vunpack.c.0.s8 %v671
        %v673 = vlaneseq
        %v674 = vshrl.u32 %v673, 7
        %v675 = vsub.s32 %v672, %v674
        %v676 = vrot.slane %v556, %v675
        %v677 = vcombine.low %v668, %v676
        %v678 = vcombine.high %v668, %v676
        %v680 = vunpack.c.l.s4 1934713408
        %v681 = vunpack.c.0.s8 %v680
        %v682 = vlaneseq
        %v683 = vshrl.u32 %v682, 7
        %v684 = vsub.s32 %v681, %v683
        %v685 = vrot.slane %v677, %v684
        %v687 = vunpack.c.l.s4 1934713408
        %v688 = vunpack.c.0.s8 %v687
        %v689 = vlaneseq
        %v690 = vshrl.u32 %v689, 7
        %v691 = vsub.s32 %v688, %v690
        %v692 = vrot.slane %v678, %v691
        %v693 = vcombine.high %v685, 0
        %v694 = vcombine.high %v692, 0
        %v697 = vcombine.low %v540, %v552
        %v699 = vunpack.c.l.s4 1934713408
        %v700 = vunpack.c.0.s8 %v699
        %v701 = vlaneseq
        %v702 = vshrl.u32 %v701, 7
        %v703 = vsub.s32 %v700, %v702
        %v704 = vrot.slane %v697, %v703
        %v707 = vcombine.low %v546, %v558
        %v709 = vunpack.c.l.s4 1934713408
        %v710 = vunpack.c.0.s8 %v709
        %v711 = vlaneseq
        %v712 = vshrl.u32 %v711, 7
        %v713 = vsub.s32 %v710, %v712
        %v714 = vrot.slane %v707, %v713
        %v717 = vpack.i.b16 %v617, %v583
        %v719 = vshrl.u32 %v583, 16
        %v720 = vshrl.u32 %v617, 16
        %v721 = vpack.i.b16 %v720, %v719
        %v725 = vpack.i.b16 %v625, %v591
        %v727 = vshrl.u32 %v591, 16
        %v728 = vshrl.u32 %v625, 16
        %v729 = vpack.i.b16 %v728, %v727
        %v733 = vpack.i.b16 %v624, %v590
        %v735 = vshrl.u32 %v590, 16
        %v736 = vshrl.u32 %v624, 16
        %v737 = vpack.i.b16 %v736, %v735
        %v741 = vpack.i.b16 %v626, %v592
        %v743 = vshrl.u32 %v592, 16
        %v744 = vshrl.u32 %v626, 16
        %v745 = vpack.i.b16 %v744, %v743
        %v749 = vpack.i.b16 %v685, %v651
        %v751 = vshrl.u32 %v651, 16
        %v752 = vshrl.u32 %v685, 16
        %v753 = vpack.i.b16 %v752, %v751
        %v757 = vpack.i.b16 %v693, %v659
        %v759 = vshrl.u32 %v659, 16
        %v760 = vshrl.u32 %v693, 16
        %v761 = vpack.i.b16 %v760, %v759
        %v765 = vpack.i.b16 %v692, %v658
        %v767 = vshrl.u32 %v658, 16
        %v768 = vshrl.u32 %v692, 16
        %v769 = vpack.i.b16 %v768, %v767
        %v773 = vpack.i.b16 %v694, %v660
        %v775 = vshrl.u32 %v660, 16
        %v776 = vshrl.u32 %v694, 16
        %v777 = vpack.i.b16 %v776, %v775
        %v781 = vpack.i.b16 %v714, %v704
        %v782 = vcombine.low %v717, %v733
        %v784 = vunpack.c.l.s4 1983009808
        %v785 = vunpack.c.0.s8 %v784
        %v786 = vlaneseq
        %v787 = vshrl.u32 %v786, 7
        %v788 = vsub.s32 %v785, %v787
        %v789 = vrot.slane %v782, %v788
        %v790 = vcombine.low %v725, %v741
        %v792 = vunpack.c.l.s4 1983009808
        %v793 = vunpack.c.0.s8 %v792
        %v794 = vlaneseq
        %v795 = vshrl.u32 %v794, 7
        %v796 = vsub.s32 %v793, %v795
        %v797 = vrot.slane %v790, %v796
        %v798 = vcombine.low %v789, %v797
        %v800 = vunpack.c.l.s4 1934713408
        %v801 = vunpack.c.0.s8 %v800
        %v802 = vlaneseq
        %v803 = vshrl.u32 %v802, 7
        %v804 = vsub.s32 %v801, %v803
        %v805 = vrot.slane %v798, %v804
        %v806 = vcombine.high %v805, 0
        %v807 = vcombine.low %v721, %v737
        %v809 = vunpack.c.l.s4 1983009808
        %v810 = vunpack.c.0.s8 %v809
        %v811 = vlaneseq
        %v812 = vshrl.u32 %v811, 7
        %v813 = vsub.s32 %v810, %v812
        %v814 = vrot.slane %v807, %v813
        %v815 = vcombine.low %v729, %v745
        %v817 = vunpack.c.l.s4 1983009808
        %v818 = vunpack.c.0.s8 %v817
        %v819 = vlaneseq
        %v820 = vshrl.u32 %v819, 7
        %v821 = vsub.s32 %v818, %v820
        %v822 = vrot.slane %v815, %v821
        %v823 = vcombine.low %v814, %v822
        %v825 = vunpack.c.l.s4 1934713408
        %v826 = vunpack.c.0.s8 %v825
        %v827 = vlaneseq
        %v828 = vshrl.u32 %v827, 7
        %v829 = vsub.s32 %v826, %v828
        %v830 = vrot.slane %v823, %v829
        %v831 = vcombine.high %v830, 0
        %v832 = vcombine.low %v749, %v765
        %v834 = vunpack.c.l.s4 1983009808
        %v835 = vunpack.c.0.s8 %v834
        %v836 = vlaneseq
        %v837 = vshrl.u32 %v836, 7
        %v838 = vsub.s32 %v835, %v837
        %v839 = vrot.slane %v832, %v838
        %v840 = vcombine.low %v757, %v773
        %v842 = vunpack.c.l.s4 1983009808
        %v843 = vunpack.c.0.s8 %v842
        %v844 = vlaneseq
        %v845 = vshrl.u32 %v844, 7
        %v846 = vsub.s32 %v843, %v845
        %v847 = vrot.slane %v840, %v846
        %v848 = vcombine.low %v839, %v847
        %v850 = vunpack.c.l.s4 1934713408
        %v851 = vunpack.c.0.s8 %v850
        %v852 = vlaneseq
        %v853 = vshrl.u32 %v852, 7
        %v854 = vsub.s32 %v851, %v853
        %v855 = vrot.slane %v848, %v854
        %v856 = vcombine.high %v855, 0
        %v857 = vcombine.low %v753, %v769
        %v859 = vunpack.c.l.s4 1983009808
        %v860 = vunpack.c.0.s8 %v859
        %v861 = vlaneseq
        %v862 = vshrl.u32 %v861, 7
        %v863 = vsub.s32 %v860, %v862
        %v864 = vrot.slane %v857, %v863
        %v865 = vcombine.low %v761, %v777
        %v867 = vunpack.c.l.s4 1983009808
        %v868 = vunpack.c.0.s8 %v867
        %v869 = vlaneseq
        %v870 = vshrl.u32 %v869, 7
        %v871 = vsub.s32 %v868, %v870
        %v872 = vrot.slane %v865, %v871
        %v873 = vcombine.low %v864, %v872
        %v875 = vunpack.c.l.s4 1934713408
        %v876 = vunpack.c.0.s8 %v875
        %v877 = vlaneseq
        %v878 = vshrl.u32 %v877, 7
        %v879 = vsub.s32 %v876, %v878
        %v880 = vrot.slane %v873, %v879
        %v881 = vcombine.high %v880, 0
        %v884 = vunpack.c.l.s4 1934713408
        %v885 = vunpack.c.0.s8 %v884
        %v886 = vlaneseq
        %v887 = vshrl.u32 %v886, 7
        %v888 = vsub.s32 %v885, %v887
        %v889 = vrot.slane %v781, %v888
        %v890 = vcombine.high %v889, 0
        %v893 = vpack.i.b16 %v830, %v805
        %v894 = vshrl.u32 %v805, 16
        %v895 = vshrl.u32 %v830, 16
        %v896 = vpack.i.b16 %v895, %v894
        %v899 = vpack.i.b16 %v831, %v806
        %v900 = vshrl.u32 %v806, 16
        %v901 = vshrl.u32 %v831, 16
        %v902 = vpack.i.b16 %v901, %v900
        %v905 = vpack.i.b16 %v880, %v855
        %v906 = vshrl.u32 %v855, 16
        %v907 = vshrl.u32 %v880, 16
        %v908 = vpack.i.b16 %v907, %v906
        %v911 = vpack.i.b16 %v881, %v856
        %v912 = vshrl.u32 %v856, 16
        %v913 = vshrl.u32 %v881, 16
        %v914 = vpack.i.b16 %v913, %v912
        %v916 = vpack.i.b16 0, %v889
        %v917 = vshrl.u32 %v889, 16
        %v918 = vpack.i.b16 %v526, %v917
        %v920 = vpack.i.b16 0, %v890
        %v921 = vshrl.u32 %v890, 16
        %v922 = vpack.i.b16 %v526, %v921
        %923 = vrot.lane.b32.xlu0 %v136, 96
        %v924 = vpop.permute.xlu0 %923
        %925 = vrot.lane.b32.xlu0 %v137, 96
        %v926 = vpop.permute.xlu0 %925
        %927 = vrot.lane.b32.xlu0 %v138, 96
        %v928 = vpop.permute.xlu0 %927
        %929 = vrot.lane.b32.xlu0 %v143, 96
        %v930 = vpop.permute.xlu0 %929
        %931 = vrot.lane.b32.xlu0 %v145, 96
        %v932 = vpop.permute.xlu0 %931
        %933 = vrot.lane.b32.xlu0 %v147, 96
        %v934 = vpop.permute.xlu0 %933
        %935 = vrot.lane.b32.xlu0 %v149, 96
        %v936 = vpop.permute.xlu0 %935
        %937 = vrot.lane.b32.xlu0 %v151, 96
        %v938 = vpop.permute.xlu0 %937
        %939 = vrot.lane.b32.xlu0 %v153, 96
        %v940 = vpop.permute.xlu0 %939
        %941 = vrot.lane.b32.xlu0 %v155, 96
        %v942 = vpop.permute.xlu0 %941
        %943 = vrot.lane.b32.xlu0 %v157, 96
        %v944 = vpop.permute.xlu0 %943
        %945 = vrot.lane.b32.xlu0 %v159, 96
        %v946 = vpop.permute.xlu0 %945
        %v949 = vunpack.c.l.s4 1983009808
        %v950 = vunpack.c.0.s8 %v949
        %v951 = vlaneseq
        %v952 = vshrl.u32 %v951, 7
        %v953 = vsub.s32 %v950, %v952
        %v954 = vrot.slane %v924, %v953
        %v957 = vunpack.c.l.s4 1983009808
        %v958 = vunpack.c.0.s8 %v957
        %v959 = vlaneseq
        %v960 = vshrl.u32 %v959, 7
        %v961 = vsub.s32 %v958, %v960
        %v962 = vrot.slane %v936, %v961
        %v963 = vcombine.low %v954, %v962
        %v964 = vcombine.high %v954, %v962
        %v966 = vunpack.c.l.s4 1934713408
        %v967 = vunpack.c.0.s8 %v966
        %v968 = vlaneseq
        %v969 = vshrl.u32 %v968, 7
        %v970 = vsub.s32 %v967, %v969
        %v971 = vrot.slane %v963, %v970
        %v973 = vunpack.c.l.s4 1934713408
        %v974 = vunpack.c.0.s8 %v973
        %v975 = vlaneseq
        %v976 = vshrl.u32 %v975, 7
        %v977 = vsub.s32 %v974, %v976
        %v978 = vrot.slane %v964, %v977
        %v979 = vcombine.high %v971, 0
        %v980 = vcombine.high %v978, 0
        %v983 = vunpack.c.l.s4 1983009808
        %v984 = vunpack.c.0.s8 %v983
        %v985 = vlaneseq
        %v986 = vshrl.u32 %v985, 7
        %v987 = vsub.s32 %v984, %v986
        %v988 = vrot.slane %v930, %v987
        %v991 = vunpack.c.l.s4 1983009808
        %v992 = vunpack.c.0.s8 %v991
        %v993 = vlaneseq
        %v994 = vshrl.u32 %v993, 7
        %v995 = vsub.s32 %v992, %v994
        %v996 = vrot.slane %v942, %v995
        %v997 = vcombine.low %v988, %v996
        %v998 = vcombine.high %v988, %v996
        %v1000 = vunpack.c.l.s4 1934713408
        %v1001 = vunpack.c.0.s8 %v1000
        %v1002 = vlaneseq
        %v1003 = vshrl.u32 %v1002, 7
        %v1004 = vsub.s32 %v1001, %v1003
        %v1005 = vrot.slane %v997, %v1004
        %v1007 = vunpack.c.l.s4 1934713408
        %v1008 = vunpack.c.0.s8 %v1007
        %v1009 = vlaneseq
        %v1010 = vshrl.u32 %v1009, 7
        %v1011 = vsub.s32 %v1008, %v1010
        %v1012 = vrot.slane %v998, %v1011
        %v1013 = vcombine.high %v1005, 0
        %v1014 = vcombine.high %v1012, 0
        %v1017 = vunpack.c.l.s4 1983009808
        %v1018 = vunpack.c.0.s8 %v1017
        %v1019 = vlaneseq
        %v1020 = vshrl.u32 %v1019, 7
        %v1021 = vsub.s32 %v1018, %v1020
        %v1022 = vrot.slane %v926, %v1021
        %v1025 = vunpack.c.l.s4 1983009808
        %v1026 = vunpack.c.0.s8 %v1025
        %v1027 = vlaneseq
        %v1028 = vshrl.u32 %v1027, 7
        %v1029 = vsub.s32 %v1026, %v1028
        %v1030 = vrot.slane %v938, %v1029
        %v1031 = vcombine.low %v1022, %v1030
        %v1032 = vcombine.high %v1022, %v1030
        %v1034 = vunpack.c.l.s4 1934713408
        %v1035 = vunpack.c.0.s8 %v1034
        %v1036 = vlaneseq
        %v1037 = vshrl.u32 %v1036, 7
        %v1038 = vsub.s32 %v1035, %v1037
        %v1039 = vrot.slane %v1031, %v1038
        %v1041 = vunpack.c.l.s4 1934713408
        %v1042 = vunpack.c.0.s8 %v1041
        %v1043 = vlaneseq
        %v1044 = vshrl.u32 %v1043, 7
        %v1045 = vsub.s32 %v1042, %v1044
        %v1046 = vrot.slane %v1032, %v1045
        %v1047 = vcombine.high %v1039, 0
        %v1048 = vcombine.high %v1046, 0
        %v1051 = vunpack.c.l.s4 1983009808
        %v1052 = vunpack.c.0.s8 %v1051
        %v1053 = vlaneseq
        %v1054 = vshrl.u32 %v1053, 7
        %v1055 = vsub.s32 %v1052, %v1054
        %v1056 = vrot.slane %v932, %v1055
        %v1059 = vunpack.c.l.s4 1983009808
        %v1060 = vunpack.c.0.s8 %v1059
        %v1061 = vlaneseq
        %v1062 = vshrl.u32 %v1061, 7
        %v1063 = vsub.s32 %v1060, %v1062
        %v1064 = vrot.slane %v944, %v1063
        %v1065 = vcombine.low %v1056, %v1064
        %v1066 = vcombine.high %v1056, %v1064
        %v1068 = vunpack.c.l.s4 1934713408
        %v1069 = vunpack.c.0.s8 %v1068
        %v1070 = vlaneseq
        %v1071 = vshrl.u32 %v1070, 7
        %v1072 = vsub.s32 %v1069, %v1071
        %v1073 = vrot.slane %v1065, %v1072
        %v1075 = vunpack.c.l.s4 1934713408
        %v1076 = vunpack.c.0.s8 %v1075
        %v1077 = vlaneseq
        %v1078 = vshrl.u32 %v1077, 7
        %v1079 = vsub.s32 %v1076, %v1078
        %v1080 = vrot.slane %v1066, %v1079
        %v1081 = vcombine.high %v1073, 0
        %v1082 = vcombine.high %v1080, 0
        %v1085 = vcombine.low %v928, %v940
        %v1087 = vunpack.c.l.s4 1934713408
        %v1088 = vunpack.c.0.s8 %v1087
        %v1089 = vlaneseq
        %v1090 = vshrl.u32 %v1089, 7
        %v1091 = vsub.s32 %v1088, %v1090
        %v1092 = vrot.slane %v1085, %v1091
        %v1095 = vcombine.low %v934, %v946
        %v1097 = vunpack.c.l.s4 1934713408
        %v1098 = vunpack.c.0.s8 %v1097
        %v1099 = vlaneseq
        %v1100 = vshrl.u32 %v1099, 7
        %v1101 = vsub.s32 %v1098, %v1100
        %v1102 = vrot.slane %v1095, %v1101
        %v1105 = vpack.i.b16 %v1005, %v971
        %v1107 = vshrl.u32 %v971, 16
        %v1108 = vshrl.u32 %v1005, 16
        %v1109 = vpack.i.b16 %v1108, %v1107
        %v1113 = vpack.i.b16 %v1013, %v979
        %v1115 = vshrl.u32 %v979, 16
        %v1116 = vshrl.u32 %v1013, 16
        %v1117 = vpack.i.b16 %v1116, %v1115
        %v1121 = vpack.i.b16 %v1012, %v978
        %v1123 = vshrl.u32 %v978, 16
        %v1124 = vshrl.u32 %v1012, 16
        %v1125 = vpack.i.b16 %v1124, %v1123
        %v1129 = vpack.i.b16 %v1014, %v980
        %v1131 = vshrl.u32 %v980, 16
        %v1132 = vshrl.u32 %v1014, 16
        %v1133 = vpack.i.b16 %v1132, %v1131
        %v1137 = vpack.i.b16 %v1073, %v1039
        %v1139 = vshrl.u32 %v1039, 16
        %v1140 = vshrl.u32 %v1073, 16
        %v1141 = vpack.i.b16 %v1140, %v1139
        %v1145 = vpack.i.b16 %v1081, %v1047
        %v1147 = vshrl.u32 %v1047, 16
        %v1148 = vshrl.u32 %v1081, 16
        %v1149 = vpack.i.b16 %v1148, %v1147
        %v1153 = vpack.i.b16 %v1080, %v1046
        %v1155 = vshrl.u32 %v1046, 16
        %v1156 = vshrl.u32 %v1080, 16
        %v1157 = vpack.i.b16 %v1156, %v1155
        %v1161 = vpack.i.b16 %v1082, %v1048
        %v1163 = vshrl.u32 %v1048, 16
        %v1164 = vshrl.u32 %v1082, 16
        %v1165 = vpack.i.b16 %v1164, %v1163
        %v1169 = vpack.i.b16 %v1102, %v1092
        %v1170 = vcombine.low %v1105, %v1121
        %v1172 = vunpack.c.l.s4 1983009808
        %v1173 = vunpack.c.0.s8 %v1172
        %v1174 = vlaneseq
        %v1175 = vshrl.u32 %v1174, 7
        %v1176 = vsub.s32 %v1173, %v1175
        %v1177 = vrot.slane %v1170, %v1176
        %v1178 = vcombine.low %v1113, %v1129
        %v1180 = vunpack.c.l.s4 1983009808
        %v1181 = vunpack.c.0.s8 %v1180
        %v1182 = vlaneseq
        %v1183 = vshrl.u32 %v1182, 7
        %v1184 = vsub.s32 %v1181, %v1183
        %v1185 = vrot.slane %v1178, %v1184
        %v1186 = vcombine.low %v1177, %v1185
        %v1188 = vunpack.c.l.s4 1934713408
        %v1189 = vunpack.c.0.s8 %v1188
        %v1190 = vlaneseq
        %v1191 = vshrl.u32 %v1190, 7
        %v1192 = vsub.s32 %v1189, %v1191
        %v1193 = vrot.slane %v1186, %v1192
        %v1194 = vcombine.high %v1193, 0
        %v1195 = vcombine.low %v1109, %v1125
        %v1197 = vunpack.c.l.s4 1983009808
        %v1198 = vunpack.c.0.s8 %v1197
        %v1199 = vlaneseq
        %v1200 = vshrl.u32 %v1199, 7
        %v1201 = vsub.s32 %v1198, %v1200
        %v1202 = vrot.slane %v1195, %v1201
        %v1203 = vcombine.low %v1117, %v1133
        %v1205 = vunpack.c.l.s4 1983009808
        %v1206 = vunpack.c.0.s8 %v1205
        %v1207 = vlaneseq
        %v1208 = vshrl.u32 %v1207, 7
        %v1209 = vsub.s32 %v1206, %v1208
        %v1210 = vrot.slane %v1203, %v1209
        %v1211 = vcombine.low %v1202, %v1210
        %v1213 = vunpack.c.l.s4 1934713408
        %v1214 = vunpack.c.0.s8 %v1213
        %v1215 = vlaneseq
        %v1216 = vshrl.u32 %v1215, 7
        %v1217 = vsub.s32 %v1214, %v1216
        %v1218 = vrot.slane %v1211, %v1217
        %v1219 = vcombine.high %v1218, 0
        %v1220 = vcombine.low %v1137, %v1153
        %v1222 = vunpack.c.l.s4 1983009808
        %v1223 = vunpack.c.0.s8 %v1222
        %v1224 = vlaneseq
        %v1225 = vshrl.u32 %v1224, 7
        %v1226 = vsub.s32 %v1223, %v1225
        %v1227 = vrot.slane %v1220, %v1226
        %v1228 = vcombine.low %v1145, %v1161
        %v1230 = vunpack.c.l.s4 1983009808
        %v1231 = vunpack.c.0.s8 %v1230
        %v1232 = vlaneseq
        %v1233 = vshrl.u32 %v1232, 7
        %v1234 = vsub.s32 %v1231, %v1233
        %v1235 = vrot.slane %v1228, %v1234
        %v1236 = vcombine.low %v1227, %v1235
        %v1238 = vunpack.c.l.s4 1934713408
        %v1239 = vunpack.c.0.s8 %v1238
        %v1240 = vlaneseq
        %v1241 = vshrl.u32 %v1240, 7
        %v1242 = vsub.s32 %v1239, %v1241
        %v1243 = vrot.slane %v1236, %v1242
        %v1244 = vcombine.high %v1243, 0
        %v1245 = vcombine.low %v1141, %v1157
        %v1247 = vunpack.c.l.s4 1983009808
        %v1248 = vunpack.c.0.s8 %v1247
        %v1249 = vlaneseq
        %v1250 = vshrl.u32 %v1249, 7
        %v1251 = vsub.s32 %v1248, %v1250
        %v1252 = vrot.slane %v1245, %v1251
        %v1253 = vcombine.low %v1149, %v1165
        %v1255 = vunpack.c.l.s4 1983009808
        %v1256 = vunpack.c.0.s8 %v1255
        %v1257 = vlaneseq
        %v1258 = vshrl.u32 %v1257, 7
        %v1259 = vsub.s32 %v1256, %v1258
        %v1260 = vrot.slane %v1253, %v1259
        %v1261 = vcombine.low %v1252, %v1260
        %v1263 = vunpack.c.l.s4 1934713408
        %v1264 = vunpack.c.0.s8 %v1263
        %v1265 = vlaneseq
        %v1266 = vshrl.u32 %v1265, 7
        %v1267 = vsub.s32 %v1264, %v1266
        %v1268 = vrot.slane %v1261, %v1267
        %v1269 = vcombine.high %v1268, 0
        %v1272 = vunpack.c.l.s4 1934713408
        %v1273 = vunpack.c.0.s8 %v1272
        %v1274 = vlaneseq
        %v1275 = vshrl.u32 %v1274, 7
        %v1276 = vsub.s32 %v1273, %v1275
        %v1277 = vrot.slane %v1169, %v1276
        %v1278 = vcombine.high %v1277, 0
        %v1281 = vpack.i.b16 %v1218, %v1193
        %v1282 = vshrl.u32 %v1193, 16
        %v1283 = vshrl.u32 %v1218, 16
        %v1284 = vpack.i.b16 %v1283, %v1282
        %v1287 = vpack.i.b16 %v1219, %v1194
        %v1288 = vshrl.u32 %v1194, 16
        %v1289 = vshrl.u32 %v1219, 16
        %v1290 = vpack.i.b16 %v1289, %v1288
        %v1293 = vpack.i.b16 %v1268, %v1243
        %v1294 = vshrl.u32 %v1243, 16
        %v1295 = vshrl.u32 %v1268, 16
        %v1296 = vpack.i.b16 %v1295, %v1294
        %v1299 = vpack.i.b16 %v1269, %v1244
        %v1300 = vshrl.u32 %v1244, 16
        %v1301 = vshrl.u32 %v1269, 16
        %v1302 = vpack.i.b16 %v1301, %v1300
        %v1304 = vpack.i.b16 0, %v1277
        %v1305 = vshrl.u32 %v1277, 16
        %v1306 = vpack.i.b16 %v526, %v1305
        %v1308 = vpack.i.b16 0, %v1278
        %v1309 = vshrl.u32 %v1278, 16
        %v1310 = vpack.i.b16 %v526, %v1309
        %v1311 = vunpack.c.l.bf16 %v491
        %v1312 = vunpack.c.l.bf16 %v507
        %v1313 = vunpack.c.l.bf16 %v523
        %v1314 = vunpack.c.l.bf16 %v495
        %v1315 = vunpack.c.l.bf16 %v511
        %v1316 = vunpack.c.l.bf16 %v527
        %v1317 = vunpack.c.l.bf16 %v499
        %v1318 = vunpack.c.l.bf16 %v515
        %v1319 = vunpack.c.l.bf16 %v530
        %v1320 = vunpack.c.l.bf16 %v503
        %v1321 = vunpack.c.l.bf16 %v519
        %v1322 = vunpack.c.l.bf16 %v533
        %v1323 = vmul.f32 %v1311, 0.5
        %v1324 = vmul.f32 %v1312, 0.5
        %v1325 = vmul.f32 %v1313, 0.5
        %v1326 = vmul.f32 %v1314, 0.5
        %v1327 = vmul.f32 %v1315, 0.5
        %v1328 = vmul.f32 %v1316, 0.5
        %v1329 = vmul.f32 %v1317, 0.5
        %v1330 = vmul.f32 %v1318, 0.5
        %v1331 = vmul.f32 %v1319, 0.5
        %v1332 = vmul.f32 %v1320, 0.5
        %v1333 = vmul.f32 %v1321, 0.5
        %v1334 = vmul.f32 %v1322, 0.5
        %v1335 = vpack.c.bf16 %v1324, %v1323
        %v1336 = vpack.c.bf16 %v1325, %v1325
        %v1337 = vpack.c.bf16 %v1327, %v1326
        %v1338 = vpack.c.bf16 %v1328, %v1328
        %v1339 = vpack.c.bf16 %v1330, %v1329
        %v1340 = vpack.c.bf16 %v1331, %v1331
        %v1341 = vpack.c.bf16 %v1333, %v1332
        %v1342 = vpack.c.bf16 %v1334, %v1334
        %v1343 = vunpack.c.l.b16 %v893
        %v1344 = vunpack.c.l.b16 %v905
        %v1345 = vunpack.c.l.b16 %v916
        %v1346 = vpack.c.b16 %v1344, %v1343
        %v1347 = vpack.c.b16 %v1345, %v1345
        %vm1348 = vcmask 31744
        %v1350 = vsel %vm1348, %v1335, 0
        %v1353 = vsel %vm1348, %v1336, 0
        %v1356 = vsel %vm1348, %v1346, 0
        %v1359 = vsel %vm1348, %v1347, 0
        %1361 = vmatprep.subr.bf16.mxu0 0
        %1362 = vmatpush1.bf16.xpose.msra.mxu0 %v1356
        %1363 = vmatprep.subr.bf16.mxu0 0
        %1364 = vmatpush1.bf16.xpose.msra.mxu0 %v1359
        %1365 = vmatprep.subr.bf16.mxu0 0
        %1366 = vmatpush1.bf16.xpose.msra.mxu0 0
        %1367 = vmatprep.subr.bf16.mxu0 0
        %1368 = vmatpush1.bf16.xpose.msra.mxu0 0
        %1369 = vmatprep.subr.bf16.mxu0 0
        %1370 = vmatpush1.bf16.xpose.msra.mxu0 0
        %1371 = vmatprep.subr.bf16.mxu0 0
        %1372 = vmatpush1.bf16.xpose.msra.mxu0 0
        %1373 = vmatprep.subr.bf16.mxu0 0
        %1374 = vmatpush1.bf16.xpose.msra.mxu0 0
        %1375 = vmatprep.subr.bf16.mxu0 0
        %1376 = vmatpush1.bf16.xpose.msra.mxu0 0
        %1377 = vmatprep.subr.bf16.mxu0 0
        %1378 = vmatpush1.bf16.xpose.msra.mxu0 0
        %1379 = vmatprep.subr.bf16.mxu0 0
        %1380 = vmatpush1.bf16.xpose.msra.mxu0 0
        %1381 = vmatprep.subr.bf16.mxu0 0
        %1382 = vmatpush1.bf16.xpose.msra.mxu0 0
        %1383 = vmatprep.subr.bf16.mxu0 0
        %1384 = vmatpush1.bf16.xpose.msra.mxu0 0
        %1385 = vmatprep.subr.bf16.mxu0 0
        %1386 = vmatpush1.bf16.xpose.msra.mxu0 0
        %1387 = vmatprep.subr.bf16.mxu0 0
        %1388 = vmatpush1.bf16.xpose.msra.mxu0 0
        %1389 = vmatprep.subr.bf16.mxu0 0
        %1390 = vmatpush1.bf16.xpose.msra.mxu0 0
        %1391 = vmatprep.subr.bf16.mxu0 0
        %1392 = vmatpush1.bf16.xpose.msra.mxu0 0
        %1393 = vmatprep.mubr.bf16.mxu0 0
        %1394 = vmatmul.mubr.bf16.gmra.mrb[0].mxu0 %v1350
        %v1395 = vpop.f32.mrb[0].mxu0
        %v1396 = vadd.f32 0.0, %v1395
        %v1397 = vpop.f32.mrb[0].mxu0
        %v1398 = vpop.f32.mrb[0].mxu0
        %v1399 = vadd.f32 0.0, %v1398
        %v1400 = vpop.f32.mrb[0].mxu0
        %1401 = vmatprep.mubr.bf16.mxu0 0
        %1402 = vmatmul.mubr.bf16.gmra.mrb[0].mxu0 %v1353
        %v1403 = vpop.f32.mrb[0].mxu0
        %v1404 = vadd.f32 0.0, %v1403
        %v1405 = vpop.f32.mrb[0].mxu0
        %v1406 = vpop.f32.mrb[0].mxu0
        %v1407 = vpop.f32.mrb[0].mxu0
        %1408 = vdwg.mxu0
        %v1409 = vunpack.c.l.b16 %v896
        %v1410 = vunpack.c.l.b16 %v908
        %v1411 = vunpack.c.l.b16 %v918
        %v1412 = vpack.c.b16 %v1410, %v1409
        %v1413 = vpack.c.b16 %v1411, %v1411
        %v1415 = vsel %vm1348, %v1337, 0
        %v1418 = vsel %vm1348, %v1338, 0
        %v1421 = vsel %vm1348, %v1412, 0
        %v1424 = vsel %vm1348, %v1413, 0
        %1426 = vmatprep.subr.bf16.mxu0 0
        %1427 = vmatpush1.bf16.xpose.msra.mxu0 %v1421
        %1428 = vmatprep.subr.bf16.mxu0 0
        %1429 = vmatpush1.bf16.xpose.msra.mxu0 %v1424
        %1430 = vmatprep.subr.bf16.mxu0 0
        %1431 = vmatpush1.bf16.xpose.msra.mxu0 0
        %1432 = vmatprep.subr.bf16.mxu0 0
        %1433 = vmatpush1.bf16.xpose.msra.mxu0 0
        %1434 = vmatprep.subr.bf16.mxu0 0
        %1435 = vmatpush1.bf16.xpose.msra.mxu0 0
        %1436 = vmatprep.subr.bf16.mxu0 0
        %1437 = vmatpush1.bf16.xpose.msra.mxu0 0
        %1438 = vmatprep.subr.bf16.mxu0 0
        %1439 = vmatpush1.bf16.xpose.msra.mxu0 0
        %1440 = vmatprep.subr.bf16.mxu0 0
        %1441 = vmatpush1.bf16.xpose.msra.mxu0 0
        %1442 = vmatprep.subr.bf16.mxu0 0
        %1443 = vmatpush1.bf16.xpose.msra.mxu0 0
        %1444 = vmatprep.subr.bf16.mxu0 0
        %1445 = vmatpush1.bf16.xpose.msra.mxu0 0
        %1446 = vmatprep.subr.bf16.mxu0 0
        %1447 = vmatpush1.bf16.xpose.msra.mxu0 0
        %1448 = vmatprep.subr.bf16.mxu0 0
        %1449 = vmatpush1.bf16.xpose.msra.mxu0 0
        %1450 = vmatprep.subr.bf16.mxu0 0
        %1451 = vmatpush1.bf16.xpose.msra.mxu0 0
        %1452 = vmatprep.subr.bf16.mxu0 0
        %1453 = vmatpush1.bf16.xpose.msra.mxu0 0
        %1454 = vmatprep.subr.bf16.mxu0 0
        %1455 = vmatpush1.bf16.xpose.msra.mxu0 0
        %1456 = vmatprep.subr.bf16.mxu0 0
        %1457 = vmatpush1.bf16.xpose.msra.mxu0 0
        %1458 = vmatprep.mubr.bf16.mxu0 0
        %1459 = vmatmul.mubr.bf16.gmra.mrb[0].mxu0 %v1415
        %v1460 = vpop.f32.mrb[0].mxu0
        %v1461 = vadd.f32 0.0, %v1460
        %v1462 = vpop.f32.mrb[0].mxu0
        %v1463 = vpop.f32.mrb[0].mxu0
        %v1464 = vadd.f32 0.0, %v1463
        %v1465 = vpop.f32.mrb[0].mxu0
        %1466 = vmatprep.mubr.bf16.mxu0 0
        %1467 = vmatmul.mubr.bf16.gmra.mrb[0].mxu0 %v1418
        %v1468 = vpop.f32.mrb[0].mxu0
        %v1469 = vadd.f32 0.0, %v1468
        %v1470 = vpop.f32.mrb[0].mxu0
        %v1471 = vpop.f32.mrb[0].mxu0
        %v1472 = vpop.f32.mrb[0].mxu0
        %1473 = vdwg.mxu0
        %v1474 = vunpack.c.l.b16 %v899
        %v1475 = vunpack.c.l.b16 %v911
        %v1476 = vunpack.c.l.b16 %v920
        %v1477 = vpack.c.b16 %v1475, %v1474
        %v1478 = vpack.c.b16 %v1476, %v1476
        %v1480 = vsel %vm1348, %v1339, 0
        %v1483 = vsel %vm1348, %v1340, 0
        %v1486 = vsel %vm1348, %v1477, 0
        %v1489 = vsel %vm1348, %v1478, 0
        %1491 = vmatprep.subr.bf16.mxu0 0
        %1492 = vmatpush1.bf16.xpose.msra.mxu0 %v1486
        %1493 = vmatprep.subr.bf16.mxu0 0
        %1494 = vmatpush1.bf16.xpose.msra.mxu0 %v1489
        %1495 = vmatprep.subr.bf16.mxu0 0
        %1496 = vmatpush1.bf16.xpose.msra.mxu0 0
        %1497 = vmatprep.subr.bf16.mxu0 0
        %1498 = vmatpush1.bf16.xpose.msra.mxu0 0
        %1499 = vmatprep.subr.bf16.mxu0 0
        %1500 = vmatpush1.bf16.xpose.msra.mxu0 0
        %1501 = vmatprep.subr.bf16.mxu0 0
        %1502 = vmatpush1.bf16.xpose.msra.mxu0 0
        %1503 = vmatprep.subr.bf16.mxu0 0
        %1504 = vmatpush1.bf16.xpose.msra.mxu0 0
        %1505 = vmatprep.subr.bf16.mxu0 0
        %1506 = vmatpush1.bf16.xpose.msra.mxu0 0
        %1507 = vmatprep.subr.bf16.mxu0 0
        %1508 = vmatpush1.bf16.xpose.msra.mxu0 0
        %1509 = vmatprep.subr.bf16.mxu0 0
        %1510 = vmatpush1.bf16.xpose.msra.mxu0 0
        %1511 = vmatprep.subr.bf16.mxu0 0
        %1512 = vmatpush1.bf16.xpose.msra.mxu0 0
        %1513 = vmatprep.subr.bf16.mxu0 0
        %1514 = vmatpush1.bf16.xpose.msra.mxu0 0
        %1515 = vmatprep.subr.bf16.mxu0 0
        %1516 = vmatpush1.bf16.xpose.msra.mxu0 0
        %1517 = vmatprep.subr.bf16.mxu0 0
        %1518 = vmatpush1.bf16.xpose.msra.mxu0 0
        %1519 = vmatprep.subr.bf16.mxu0 0
        %1520 = vmatpush1.bf16.xpose.msra.mxu0 0
        %1521 = vmatprep.subr.bf16.mxu0 0
        %1522 = vmatpush1.bf16.xpose.msra.mxu0 0
        %1523 = vmatprep.mubr.bf16.mxu0 0
        %1524 = vmatmul.mubr.bf16.gmra.mrb[0].mxu0 %v1480
        %v1525 = vpop.f32.mrb[0].mxu0
        %v1526 = vadd.f32 0.0, %v1525
        %v1527 = vpop.f32.mrb[0].mxu0
        %v1528 = vpop.f32.mrb[0].mxu0
        %v1529 = vadd.f32 0.0, %v1528
        %v1530 = vpop.f32.mrb[0].mxu0
        %1531 = vmatprep.mubr.bf16.mxu0 0
        %1532 = vmatmul.mubr.bf16.gmra.mrb[0].mxu0 %v1483
        %v1533 = vpop.f32.mrb[0].mxu0
        %v1534 = vadd.f32 0.0, %v1533
        %v1535 = vpop.f32.mrb[0].mxu0
        %v1536 = vpop.f32.mrb[0].mxu0
        %v1537 = vpop.f32.mrb[0].mxu0
        %1538 = vdwg.mxu0
        %v1539 = vunpack.c.l.b16 %v902
        %v1540 = vunpack.c.l.b16 %v914
        %v1541 = vunpack.c.l.b16 %v922
        %v1542 = vpack.c.b16 %v1540, %v1539
        %v1543 = vpack.c.b16 %v1541, %v1541
        %v1545 = vsel %vm1348, %v1341, 0
        %v1548 = vsel %vm1348, %v1342, 0
        %v1551 = vsel %vm1348, %v1542, 0
        %v1554 = vsel %vm1348, %v1543, 0
        %1556 = vmatprep.subr.bf16.mxu0 0
        %1557 = vmatpush1.bf16.xpose.msra.mxu0 %v1551
        %1558 = vmatprep.subr.bf16.mxu0 0
        %1559 = vmatpush1.bf16.xpose.msra.mxu0 %v1554
        %1560 = vmatprep.subr.bf16.mxu0 0
        %1561 = vmatpush1.bf16.xpose.msra.mxu0 0
        %1562 = vmatprep.subr.bf16.mxu0 0
        %1563 = vmatpush1.bf16.xpose.msra.mxu0 0
        %1564 = vmatprep.subr.bf16.mxu0 0
        %1565 = vmatpush1.bf16.xpose.msra.mxu0 0
        %1566 = vmatprep.subr.bf16.mxu0 0
        %1567 = vmatpush1.bf16.xpose.msra.mxu0 0
        %1568 = vmatprep.subr.bf16.mxu0 0
        %1569 = vmatpush1.bf16.xpose.msra.mxu0 0
        %1570 = vmatprep.subr.bf16.mxu0 0
        %1571 = vmatpush1.bf16.xpose.msra.mxu0 0
        %1572 = vmatprep.subr.bf16.mxu0 0
        %1573 = vmatpush1.bf16.xpose.msra.mxu0 0
        %1574 = vmatprep.subr.bf16.mxu0 0
        %1575 = vmatpush1.bf16.xpose.msra.mxu0 0
        %1576 = vmatprep.subr.bf16.mxu0 0
        %1577 = vmatpush1.bf16.xpose.msra.mxu0 0
        %1578 = vmatprep.subr.bf16.mxu0 0
        %1579 = vmatpush1.bf16.xpose.msra.mxu0 0
        %1580 = vmatprep.subr.bf16.mxu0 0
        %1581 = vmatpush1.bf16.xpose.msra.mxu0 0
        %1582 = vmatprep.subr.bf16.mxu0 0
        %1583 = vmatpush1.bf16.xpose.msra.mxu0 0
        %1584 = vmatprep.subr.bf16.mxu0 0
        %1585 = vmatpush1.bf16.xpose.msra.mxu0 0
        %1586 = vmatprep.subr.bf16.mxu0 0
        %1587 = vmatpush1.bf16.xpose.msra.mxu0 0
        %1588 = vmatprep.mubr.bf16.mxu0 0
        %1589 = vmatmul.mubr.bf16.gmra.mrb[0].mxu0 %v1545
        %v1590 = vpop.f32.mrb[0].mxu0
        %v1591 = vadd.f32 0.0, %v1590
        %v1592 = vpop.f32.mrb[0].mxu0
        %v1593 = vpop.f32.mrb[0].mxu0
        %v1594 = vadd.f32 0.0, %v1593
        %v1595 = vpop.f32.mrb[0].mxu0
        %1596 = vmatprep.mubr.bf16.mxu0 0
        %1597 = vmatmul.mubr.bf16.gmra.mrb[0].mxu0 %v1548
        %v1598 = vpop.f32.mrb[0].mxu0
        %v1599 = vadd.f32 0.0, %v1598
        %v1600 = vpop.f32.mrb[0].mxu0
        %v1601 = vpop.f32.mrb[0].mxu0
        %v1602 = vpop.f32.mrb[0].mxu0
        %1603 = vdwg.mxu0
        %vm1604 = vcmask 138240
        %v1605 = vsel %vm1604, %v1396, -inf
        %1606 = vmax.xlane.f32.xlu0 %v1605
        %v1607 = vpop.xlane.xlu0 %1606
        %v1608 = vsel %vm1604, %v1399, -inf
        %1609 = vmax.xlane.f32.xlu0 %v1608
        %v1610 = vpop.xlane.xlu0 %1609
        %vm1611 = vcmask 131072
        %v1612 = vsel %vm1611, %v1404, -inf
        %1613 = vmax.xlane.f32.xlu0 %v1612
        %v1614 = vpop.xlane.xlu0 %1613
        %v1615 = vsel %vm1604, %v1461, -inf
        %1616 = vmax.xlane.f32.xlu0 %v1615
        %v1617 = vpop.xlane.xlu0 %1616
        %v1618 = vsel %vm1604, %v1464, -inf
        %1619 = vmax.xlane.f32.xlu0 %v1618
        %v1620 = vpop.xlane.xlu0 %1619
        %v1621 = vsel %vm1611, %v1469, -inf
        %1622 = vmax.xlane.f32.xlu0 %v1621
        %v1623 = vpop.xlane.xlu0 %1622
        %v1624 = vsel %vm1604, %v1526, -inf
        %1625 = vmax.xlane.f32.xlu0 %v1624
        %v1626 = vpop.xlane.xlu0 %1625
        %v1627 = vsel %vm1604, %v1529, -inf
        %1628 = vmax.xlane.f32.xlu0 %v1627
        %v1629 = vpop.xlane.xlu0 %1628
        %v1630 = vsel %vm1611, %v1534, -inf
        %1631 = vmax.xlane.f32.xlu0 %v1630
        %v1632 = vpop.xlane.xlu0 %1631
        %v1633 = vsel %vm1604, %v1591, -inf
        %1634 = vmax.xlane.f32.xlu0 %v1633
        %v1635 = vpop.xlane.xlu0 %1634
        %v1636 = vsel %vm1604, %v1594, -inf
        %1637 = vmax.xlane.f32.xlu0 %v1636
        %v1638 = vpop.xlane.xlu0 %1637
        %v1639 = vsel %vm1611, %v1599, -inf
        %1640 = vmax.xlane.f32.xlu0 %v1639
        %v1641 = vpop.xlane.xlu0 %1640
        %v1642 = vsub.f32 %v1396, %v1607
        %v1643 = vsub.f32 %v1399, %v1610
        %v1644 = vsub.f32 %v1404, %v1614
        %v1645 = vsub.f32 %v1461, %v1617
        %v1646 = vsub.f32 %v1464, %v1620
        %v1647 = vsub.f32 %v1469, %v1623
        %v1648 = vsub.f32 %v1526, %v1626
        %v1649 = vsub.f32 %v1529, %v1629
        %v1650 = vsub.f32 %v1534, %v1632
        %v1651 = vsub.f32 %v1591, %v1635
        %v1652 = vsub.f32 %v1594, %v1638
        %v1653 = vsub.f32 %v1599, %v1641
        %v1654 = vmul.f32 %v1642, 1.442695
        %v1655 = vpow.pop %v1654
        %v1656 = vmul.f32 %v1643, 1.442695
        %v1657 = vpow.pop %v1656
        %v1658 = vmul.f32 %v1644, 1.442695
        %v1659 = vpow.pop %v1658
        %v1660 = vmul.f32 %v1645, 1.442695
        %v1661 = vpow.pop %v1660
        %v1662 = vmul.f32 %v1646, 1.442695
        %v1663 = vpow.pop %v1662
        %v1664 = vmul.f32 %v1647, 1.442695
        %v1665 = vpow.pop %v1664
        %v1666 = vmul.f32 %v1648, 1.442695
        %v1667 = vpow.pop %v1666
        %v1668 = vmul.f32 %v1649, 1.442695
        %v1669 = vpow.pop %v1668
        %v1670 = vmul.f32 %v1650, 1.442695
        %v1671 = vpow.pop %v1670
        %v1672 = vmul.f32 %v1651, 1.442695
        %v1673 = vpow.pop %v1672
        %v1674 = vmul.f32 %v1652, 1.442695
        %v1675 = vpow.pop %v1674
        %v1676 = vmul.f32 %v1653, 1.442695
        %v1677 = vpow.pop %v1676
        %v1678 = vsel %vm1604, %v1655, 0.0
        %1679 = vadd.xlane.f32.xlu0 %v1678
        %v1680 = vpop.xlane.xlu0 %1679
        %v1681 = vsel %vm1604, %v1657, 0.0
        %1682 = vadd.xlane.f32.xlu0 %v1681
        %v1683 = vpop.xlane.xlu0 %1682
        %v1684 = vsel %vm1611, %v1659, 0.0
        %1685 = vadd.xlane.f32.xlu0 %v1684
        %v1686 = vpop.xlane.xlu0 %1685
        %v1687 = vsel %vm1604, %v1661, 0.0
        %1688 = vadd.xlane.f32.xlu0 %v1687
        %v1689 = vpop.xlane.xlu0 %1688
        %v1690 = vsel %vm1604, %v1663, 0.0
        %1691 = vadd.xlane.f32.xlu0 %v1690
        %v1692 = vpop.xlane.xlu0 %1691
        %v1693 = vsel %vm1611, %v1665, 0.0
        %1694 = vadd.xlane.f32.xlu0 %v1693
        %v1695 = vpop.xlane.xlu0 %1694
        %v1696 = vsel %vm1604, %v1667, 0.0
        %1697 = vadd.xlane.f32.xlu0 %v1696
        %v1698 = vpop.xlane.xlu0 %1697
        %v1699 = vsel %vm1604, %v1669, 0.0
        %1700 = vadd.xlane.f32.xlu0 %v1699
        %v1701 = vpop.xlane.xlu0 %1700
        %v1702 = vsel %vm1611, %v1671, 0.0
        %1703 = vadd.xlane.f32.xlu0 %v1702
        %v1704 = vpop.xlane.xlu0 %1703
        %v1705 = vsel %vm1604, %v1673, 0.0
        %1706 = vadd.xlane.f32.xlu0 %v1705
        %v1707 = vpop.xlane.xlu0 %1706
        %v1708 = vsel %vm1604, %v1675, 0.0
        %1709 = vadd.xlane.f32.xlu0 %v1708
        %v1710 = vpop.xlane.xlu0 %1709
        %v1711 = vsel %vm1611, %v1677, 0.0
        %1712 = vadd.xlane.f32.xlu0 %v1711
        %v1713 = vpop.xlane.xlu0 %1712
        %v1714 = vrcp.pop %v1680
        %v1715 = vrcp.pop %v1683
        %v1716 = vrcp.pop %v1686
        %v1717 = vrcp.pop %v1689
        %v1718 = vrcp.pop %v1692
        %v1719 = vrcp.pop %v1695
        %v1720 = vrcp.pop %v1698
        %v1721 = vrcp.pop %v1701
        %v1722 = vrcp.pop %v1704
        %v1723 = vrcp.pop %v1707
        %v1724 = vrcp.pop %v1710
        %v1725 = vrcp.pop %v1713
        %v1726 = vmul.f32 %v1655, %v1714
        %v1727 = vmul.f32 %v1657, %v1715
        %v1728 = vmul.f32 %v1659, %v1716
        %v1729 = vmul.f32 %v1661, %v1717
        %v1730 = vmul.f32 %v1663, %v1718
        %v1731 = vmul.f32 %v1665, %v1719
        %v1732 = vmul.f32 %v1667, %v1720
        %v1733 = vmul.f32 %v1669, %v1721
        %v1734 = vmul.f32 %v1671, %v1722
        %v1735 = vmul.f32 %v1673, %v1723
        %v1736 = vmul.f32 %v1675, %v1724
        %v1737 = vmul.f32 %v1677, %v1725
        %v1738 = vpack.c.bf16 %v1727, %v1726
        %v1739 = vpack.c.bf16 %v1728, %v1728
        %v1740 = vpack.c.bf16 %v1730, %v1729
        %v1741 = vpack.c.bf16 %v1731, %v1731
        %v1742 = vpack.c.bf16 %v1733, %v1732
        %v1743 = vpack.c.bf16 %v1734, %v1734
        %v1744 = vpack.c.bf16 %v1736, %v1735
        %v1745 = vpack.c.bf16 %v1737, %v1737
        %v1746 = vunpack.c.l.b16 %v1281
        %v1747 = vunpack.c.l.b16 %v1293
        %v1748 = vunpack.c.l.b16 %v1304
        %v1749 = vpack.c.b16 %v1747, %v1746
        %v1750 = vpack.c.b16 %v1748, %v1748
        %v1753 = vsel %vm1604, %v1738, 0
        %v1756 = vsel %vm1604, %v1739, 0
        %vm1758 = vcmask 1040384
        %v1759 = vsel 0, 4294967295, 65535
        %v1760 = vsel %vm1758, %v1759, 0
        %v1762 = vand.u32 %v1750, %v1760
        %1764 = vmatprep.subr.bf16.mxu0 0
        %1765 = vmatpush1.bf16.msra.mxu0 %v1749
        %1766 = vmatprep.subr.bf16.mxu0 0
        %1767 = vmatpush1.bf16.msra.mxu0 %v1762
        %1768 = vmatprep.subr.bf16.mxu0 0
        %1769 = vmatpush1.bf16.msra.mxu0 0
        %1770 = vmatprep.subr.bf16.mxu0 0
        %1771 = vmatpush1.bf16.msra.mxu0 0
        %1772 = vmatprep.subr.bf16.mxu0 0
        %1773 = vmatpush1.bf16.msra.mxu0 0
        %1774 = vmatprep.subr.bf16.mxu0 0
        %1775 = vmatpush1.bf16.msra.mxu0 0
        %1776 = vmatprep.subr.bf16.mxu0 0
        %1777 = vmatpush1.bf16.msra.mxu0 0
        %1778 = vmatprep.subr.bf16.mxu0 0
        %1779 = vmatpush1.bf16.msra.mxu0 0
        %1780 = vmatprep.subr.bf16.mxu0 0
        %1781 = vmatpush1.bf16.msra.mxu0 0
        %1782 = vmatprep.subr.bf16.mxu0 0
        %1783 = vmatpush1.bf16.msra.mxu0 0
        %1784 = vmatprep.subr.bf16.mxu0 0
        %1785 = vmatpush1.bf16.msra.mxu0 0
        %1786 = vmatprep.subr.bf16.mxu0 0
        %1787 = vmatpush1.bf16.msra.mxu0 0
        %1788 = vmatprep.subr.bf16.mxu0 0
        %1789 = vmatpush1.bf16.msra.mxu0 0
        %1790 = vmatprep.subr.bf16.mxu0 0
        %1791 = vmatpush1.bf16.msra.mxu0 0
        %1792 = vmatprep.subr.bf16.mxu0 0
        %1793 = vmatpush1.bf16.msra.mxu0 0
        %1794 = vmatprep.subr.bf16.mxu0 0
        %1795 = vmatpush1.bf16.msra.mxu0 0
        %1796 = vmatprep.mubr.bf16.mxu0 0
        %1797 = vmatmul.mubr.bf16.gmra.mrb[0].mxu0 %v1753
        %v1798 = vpop.f32.mrb[0].mxu0
        %v1799 = vadd.f32 0.0, %v1798
        %v1800 = vpop.f32.mrb[0].mxu0
        %v1801 = vpop.f32.mrb[0].mxu0
        %v1802 = vadd.f32 0.0, %v1801
        %v1803 = vpop.f32.mrb[0].mxu0
        %1804 = vmatprep.mubr.bf16.mxu0 0
        %1805 = vmatmul.mubr.bf16.gmra.mrb[0].mxu0 %v1756
        %v1806 = vpop.f32.mrb[0].mxu0
        %v1807 = vadd.f32 0.0, %v1806
        %v1808 = vpop.f32.mrb[0].mxu0
        %v1809 = vpop.f32.mrb[0].mxu0
        %v1810 = vpop.f32.mrb[0].mxu0
        %1811 = vdwg.mxu0
        %v1812 = vunpack.c.l.b16 %v1284
        %v1813 = vunpack.c.l.b16 %v1296
        %v1814 = vunpack.c.l.b16 %v1306
        %v1815 = vpack.c.b16 %v1813, %v1812
        %v1816 = vpack.c.b16 %v1814, %v1814
        %v1819 = vsel %vm1604, %v1740, 0
        %v1822 = vsel %vm1604, %v1741, 0
        %v1825 = vand.u32 %v1816, %v1760
        %1827 = vmatprep.subr.bf16.mxu0 0
        %1828 = vmatpush1.bf16.msra.mxu0 %v1815
        %1829 = vmatprep.subr.bf16.mxu0 0
        %1830 = vmatpush1.bf16.msra.mxu0 %v1825
        %1831 = vmatprep.subr.bf16.mxu0 0
        %1832 = vmatpush1.bf16.msra.mxu0 0
        %1833 = vmatprep.subr.bf16.mxu0 0
        %1834 = vmatpush1.bf16.msra.mxu0 0
        %1835 = vmatprep.subr.bf16.mxu0 0
        %1836 = vmatpush1.bf16.msra.mxu0 0
        %1837 = vmatprep.subr.bf16.mxu0 0
        %1838 = vmatpush1.bf16.msra.mxu0 0
        %1839 = vmatprep.subr.bf16.mxu0 0
        %1840 = vmatpush1.bf16.msra.mxu0 0
        %1841 = vmatprep.subr.bf16.mxu0 0
        %1842 = vmatpush1.bf16.msra.mxu0 0
        %1843 = vmatprep.subr.bf16.mxu0 0
        %1844 = vmatpush1.bf16.msra.mxu0 0
        %1845 = vmatprep.subr.bf16.mxu0 0
        %1846 = vmatpush1.bf16.msra.mxu0 0
        %1847 = vmatprep.subr.bf16.mxu0 0
        %1848 = vmatpush1.bf16.msra.mxu0 0
        %1849 = vmatprep.subr.bf16.mxu0 0
        %1850 = vmatpush1.bf16.msra.mxu0 0
        %1851 = vmatprep.subr.bf16.mxu0 0
        %1852 = vmatpush1.bf16.msra.mxu0 0
        %1853 = vmatprep.subr.bf16.mxu0 0
        %1854 = vmatpush1.bf16.msra.mxu0 0
        %1855 = vmatprep.subr.bf16.mxu0 0
        %1856 = vmatpush1.bf16.msra.mxu0 0
        %1857 = vmatprep.subr.bf16.mxu0 0
        %1858 = vmatpush1.bf16.msra.mxu0 0
        %1859 = vmatprep.mubr.bf16.mxu0 0
        %1860 = vmatmul.mubr.bf16.gmra.mrb[0].mxu0 %v1819
        %v1861 = vpop.f32.mrb[0].mxu0
        %v1862 = vadd.f32 0.0, %v1861
        %v1863 = vpop.f32.mrb[0].mxu0
        %v1864 = vpop.f32.mrb[0].mxu0
        %v1865 = vadd.f32 0.0, %v1864
        %v1866 = vpop.f32.mrb[0].mxu0
        %1867 = vmatprep.mubr.bf16.mxu0 0
        %1868 = vmatmul.mubr.bf16.gmra.mrb[0].mxu0 %v1822
        %v1869 = vpop.f32.mrb[0].mxu0
        %v1870 = vadd.f32 0.0, %v1869
        %v1871 = vpop.f32.mrb[0].mxu0
        %v1872 = vpop.f32.mrb[0].mxu0
        %v1873 = vpop.f32.mrb[0].mxu0
        %1874 = vdwg.mxu0
        %v1875 = vunpack.c.l.b16 %v1287
        %v1876 = vunpack.c.l.b16 %v1299
        %v1877 = vunpack.c.l.b16 %v1308
        %v1878 = vpack.c.b16 %v1876, %v1875
        %v1879 = vpack.c.b16 %v1877, %v1877
        %v1882 = vsel %vm1604, %v1742, 0
        %v1885 = vsel %vm1604, %v1743, 0
        %v1888 = vand.u32 %v1879, %v1760
        %1890 = vmatprep.subr.bf16.mxu0 0
        %1891 = vmatpush1.bf16.msra.mxu0 %v1878
        %1892 = vmatprep.subr.bf16.mxu0 0
        %1893 = vmatpush1.bf16.msra.mxu0 %v1888
        %1894 = vmatprep.subr.bf16.mxu0 0
        %1895 = vmatpush1.bf16.msra.mxu0 0
        %1896 = vmatprep.subr.bf16.mxu0 0
        %1897 = vmatpush1.bf16.msra.mxu0 0
        %1898 = vmatprep.subr.bf16.mxu0 0
        %1899 = vmatpush1.bf16.msra.mxu0 0
        %1900 = vmatprep.subr.bf16.mxu0 0
        %1901 = vmatpush1.bf16.msra.mxu0 0
        %1902 = vmatprep.subr.bf16.mxu0 0
        %1903 = vmatpush1.bf16.msra.mxu0 0
        %1904 = vmatprep.subr.bf16.mxu0 0
        %1905 = vmatpush1.bf16.msra.mxu0 0
        %1906 = vmatprep.subr.bf16.mxu0 0
        %1907 = vmatpush1.bf16.msra.mxu0 0
        %1908 = vmatprep.subr.bf16.mxu0 0
        %1909 = vmatpush1.bf16.msra.mxu0 0
        %1910 = vmatprep.subr.bf16.mxu0 0
        %1911 = vmatpush1.bf16.msra.mxu0 0
        %1912 = vmatprep.subr.bf16.mxu0 0
        %1913 = vmatpush1.bf16.msra.mxu0 0
        %1914 = vmatprep.subr.bf16.mxu0 0
        %1915 = vmatpush1.bf16.msra.mxu0 0
        %1916 = vmatprep.subr.bf16.mxu0 0
        %1917 = vmatpush1.bf16.msra.mxu0 0
        %1918 = vmatprep.subr.bf16.mxu0 0
        %1919 = vmatpush1.bf16.msra.mxu0 0
        %1920 = vmatprep.subr.bf16.mxu0 0
        %1921 = vmatpush1.bf16.msra.mxu0 0
        %1922 = vmatprep.mubr.bf16.mxu0 0
        %1923 = vmatmul.mubr.bf16.gmra.mrb[0].mxu0 %v1882
        %v1924 = vpop.f32.mrb[0].mxu0
        %v1925 = vadd.f32 0.0, %v1924
        %v1926 = vpop.f32.mrb[0].mxu0
        %v1927 = vpop.f32.mrb[0].mxu0
        %v1928 = vadd.f32 0.0, %v1927
        %v1929 = vpop.f32.mrb[0].mxu0
        %1930 = vmatprep.mubr.bf16.mxu0 0
        %1931 = vmatmul.mubr.bf16.gmra.mrb[0].mxu0 %v1885
        %v1932 = vpop.f32.mrb[0].mxu0
        %v1933 = vadd.f32 0.0, %v1932
        %v1934 = vpop.f32.mrb[0].mxu0
        %v1935 = vpop.f32.mrb[0].mxu0
        %v1936 = vpop.f32.mrb[0].mxu0
        %1937 = vdwg.mxu0
        %v1938 = vunpack.c.l.b16 %v1290
        %v1939 = vunpack.c.l.b16 %v1302
        %v1940 = vunpack.c.l.b16 %v1310
        %v1941 = vpack.c.b16 %v1939, %v1938
        %v1942 = vpack.c.b16 %v1940, %v1940
        %v1945 = vsel %vm1604, %v1744, 0
        %v1948 = vsel %vm1604, %v1745, 0
        %v1951 = vand.u32 %v1942, %v1760
        %1953 = vmatprep.subr.bf16.mxu0 0
        %1954 = vmatpush1.bf16.msra.mxu0 %v1941
        %1955 = vmatprep.subr.bf16.mxu0 0
        %1956 = vmatpush1.bf16.msra.mxu0 %v1951
        %1957 = vmatprep.subr.bf16.mxu0 0
        %1958 = vmatpush1.bf16.msra.mxu0 0
        %1959 = vmatprep.subr.bf16.mxu0 0
        %1960 = vmatpush1.bf16.msra.mxu0 0
        %1961 = vmatprep.subr.bf16.mxu0 0
        %1962 = vmatpush1.bf16.msra.mxu0 0
        %1963 = vmatprep.subr.bf16.mxu0 0
        %1964 = vmatpush1.bf16.msra.mxu0 0
        %1965 = vmatprep.subr.bf16.mxu0 0
        %1966 = vmatpush1.bf16.msra.mxu0 0
        %1967 = vmatprep.subr.bf16.mxu0 0
        %1968 = vmatpush1.bf16.msra.mxu0 0
        %1969 = vmatprep.subr.bf16.mxu0 0
        %1970 = vmatpush1.bf16.msra.mxu0 0
        %1971 = vmatprep.subr.bf16.mxu0 0
        %1972 = vmatpush1.bf16.msra.mxu0 0
        %1973 = vmatprep.subr.bf16.mxu0 0
        %1974 = vmatpush1.bf16.msra.mxu0 0
        %1975 = vmatprep.subr.bf16.mxu0 0
        %1976 = vmatpush1.bf16.msra.mxu0 0
        %1977 = vmatprep.subr.bf16.mxu0 0
        %1978 = vmatpush1.bf16.msra.mxu0 0
        %1979 = vmatprep.subr.bf16.mxu0 0
        %1980 = vmatpush1.bf16.msra.mxu0 0
        %1981 = vmatprep.subr.bf16.mxu0 0
        %1982 = vmatpush1.bf16.msra.mxu0 0
        %1983 = vmatprep.subr.bf16.mxu0 0
        %1984 = vmatpush1.bf16.msra.mxu0 0
        %1985 = vmatprep.mubr.bf16.mxu0 0
        %1986 = vmatmul.mubr.bf16.gmra.mrb[0].mxu0 %v1945
        %v1987 = vpop.f32.mrb[0].mxu0
        %v1988 = vadd.f32 0.0, %v1987
        %v1989 = vpop.f32.mrb[0].mxu0
        %v1990 = vpop.f32.mrb[0].mxu0
        %v1991 = vadd.f32 0.0, %v1990
        %v1992 = vpop.f32.mrb[0].mxu0
        %1993 = vmatprep.mubr.bf16.mxu0 0
        %1994 = vmatmul.mubr.bf16.gmra.mrb[0].mxu0 %v1948
        %v1995 = vpop.f32.mrb[0].mxu0
        %v1996 = vadd.f32 0.0, %v1995
        %v1997 = vpop.f32.mrb[0].mxu0
        %v1998 = vpop.f32.mrb[0].mxu0
        %v1999 = vpop.f32.mrb[0].mxu0
        %2000 = vdwg.mxu0
        %v2001 = vcombine.low %v1799, %v1925
        %v2002 = vcombine.high %v1799, %v1925
        %v2004 = vunpack.c.l.s4 1983009808
        %v2005 = vunpack.c.0.s8 %v2004
        %v2006 = vlaneseq
        %v2007 = vshrl.u32 %v2006, 7
        %v2008 = vsub.s32 %v2005, %v2007
        %v2009 = vrot.slane %v2001, %v2008
        %v2011 = vunpack.c.l.s4 1983009808
        %v2012 = vunpack.c.0.s8 %v2011
        %v2013 = vlaneseq
        %v2014 = vshrl.u32 %v2013, 7
        %v2015 = vsub.s32 %v2012, %v2014
        %v2016 = vrot.slane %v2002, %v2015
        %v2017 = vcombine.low %v1862, %v1988
        %v2018 = vcombine.high %v1862, %v1988
        %v2020 = vunpack.c.l.s4 1983009808
        %v2021 = vunpack.c.0.s8 %v2020
        %v2022 = vlaneseq
        %v2023 = vshrl.u32 %v2022, 7
        %v2024 = vsub.s32 %v2021, %v2023
        %v2025 = vrot.slane %v2017, %v2024
        %v2027 = vunpack.c.l.s4 1983009808
        %v2028 = vunpack.c.0.s8 %v2027
        %v2029 = vlaneseq
        %v2030 = vshrl.u32 %v2029, 7
        %v2031 = vsub.s32 %v2028, %v2030
        %v2032 = vrot.slane %v2018, %v2031
        %v2033 = vcombine.low %v2009, %v2025
        %v2034 = vcombine.high %v2009, %v2025
        %v2036 = vunpack.c.l.s4 1934713408
        %v2037 = vunpack.c.0.s8 %v2036
        %v2038 = vlaneseq
        %v2039 = vshrl.u32 %v2038, 7
        %v2040 = vsub.s32 %v2037, %v2039
        %v2041 = vrot.slane %v2033, %v2040
        %v2043 = vunpack.c.l.s4 1934713408
        %v2044 = vunpack.c.0.s8 %v2043
        %v2045 = vlaneseq
        %v2046 = vshrl.u32 %v2045, 7
        %v2047 = vsub.s32 %v2044, %v2046
        %v2048 = vrot.slane %v2034, %v2047
        %v2049 = vcombine.low %v2016, %v2032
        %v2050 = vcombine.high %v2016, %v2032
        %v2052 = vunpack.c.l.s4 1934713408
        %v2053 = vunpack.c.0.s8 %v2052
        %v2054 = vlaneseq
        %v2055 = vshrl.u32 %v2054, 7
        %v2056 = vsub.s32 %v2053, %v2055
        %v2057 = vrot.slane %v2049, %v2056
        %v2059 = vunpack.c.l.s4 1934713408
        %v2060 = vunpack.c.0.s8 %v2059
        %v2061 = vlaneseq
        %v2062 = vshrl.u32 %v2061, 7
        %v2063 = vsub.s32 %v2060, %v2062
        %v2064 = vrot.slane %v2050, %v2063
        %v2065 = vcombine.high %v2041, 0.0
        %v2066 = vcombine.high %v2048, 0.0
        %v2067 = vcombine.high %v2057, 0.0
        %v2068 = vcombine.high %v2064, 0.0
        %v2069 = vcombine.low %v1802, %v1928
        %v2070 = vcombine.high %v1802, %v1928
        %v2072 = vunpack.c.l.s4 1983009808
        %v2073 = vunpack.c.0.s8 %v2072
        %v2074 = vlaneseq
        %v2075 = vshrl.u32 %v2074, 7
        %v2076 = vsub.s32 %v2073, %v2075
        %v2077 = vrot.slane %v2069, %v2076
        %v2079 = vunpack.c.l.s4 1983009808
        %v2080 = vunpack.c.0.s8 %v2079
        %v2081 = vlaneseq
        %v2082 = vshrl.u32 %v2081, 7
        %v2083 = vsub.s32 %v2080, %v2082
        %v2084 = vrot.slane %v2070, %v2083
        %v2085 = vcombine.low %v1865, %v1991
        %v2086 = vcombine.high %v1865, %v1991
        %v2088 = vunpack.c.l.s4 1983009808
        %v2089 = vunpack.c.0.s8 %v2088
        %v2090 = vlaneseq
        %v2091 = vshrl.u32 %v2090, 7
        %v2092 = vsub.s32 %v2089, %v2091
        %v2093 = vrot.slane %v2085, %v2092
        %v2095 = vunpack.c.l.s4 1983009808
        %v2096 = vunpack.c.0.s8 %v2095
        %v2097 = vlaneseq
        %v2098 = vshrl.u32 %v2097, 7
        %v2099 = vsub.s32 %v2096, %v2098
        %v2100 = vrot.slane %v2086, %v2099
        %v2101 = vcombine.low %v2077, %v2093
        %v2102 = vcombine.high %v2077, %v2093
        %v2104 = vunpack.c.l.s4 1934713408
        %v2105 = vunpack.c.0.s8 %v2104
        %v2106 = vlaneseq
        %v2107 = vshrl.u32 %v2106, 7
        %v2108 = vsub.s32 %v2105, %v2107
        %v2109 = vrot.slane %v2101, %v2108
        %v2111 = vunpack.c.l.s4 1934713408
        %v2112 = vunpack.c.0.s8 %v2111
        %v2113 = vlaneseq
        %v2114 = vshrl.u32 %v2113, 7
        %v2115 = vsub.s32 %v2112, %v2114
        %v2116 = vrot.slane %v2102, %v2115
        %v2117 = vcombine.low %v2084, %v2100
        %v2118 = vcombine.high %v2084, %v2100
        %v2120 = vunpack.c.l.s4 1934713408
        %v2121 = vunpack.c.0.s8 %v2120
        %v2122 = vlaneseq
        %v2123 = vshrl.u32 %v2122, 7
        %v2124 = vsub.s32 %v2121, %v2123
        %v2125 = vrot.slane %v2117, %v2124
        %v2127 = vunpack.c.l.s4 1934713408
        %v2128 = vunpack.c.0.s8 %v2127
        %v2129 = vlaneseq
        %v2130 = vshrl.u32 %v2129, 7
        %v2131 = vsub.s32 %v2128, %v2130
        %v2132 = vrot.slane %v2118, %v2131
        %v2133 = vcombine.high %v2109, 0.0
        %v2134 = vcombine.high %v2116, 0.0
        %v2135 = vcombine.high %v2125, 0.0
        %v2136 = vcombine.high %v2132, 0.0
        %v2137 = vcombine.low %v1807, %v1933
        %v2139 = vunpack.c.l.s4 1983009808
        %v2140 = vunpack.c.0.s8 %v2139
        %v2141 = vlaneseq
        %v2142 = vshrl.u32 %v2141, 7
        %v2143 = vsub.s32 %v2140, %v2142
        %v2144 = vrot.slane %v2137, %v2143
        %v2145 = vcombine.low %v1870, %v1996
        %v2147 = vunpack.c.l.s4 1983009808
        %v2148 = vunpack.c.0.s8 %v2147
        %v2149 = vlaneseq
        %v2150 = vshrl.u32 %v2149, 7
        %v2151 = vsub.s32 %v2148, %v2150
        %v2152 = vrot.slane %v2145, %v2151
        %v2153 = vcombine.low %v2144, %v2152
        %v2154 = vcombine.low %v2041, %v2048
        %v2156 = vunpack.c.l.s4 1983009808
        %v2157 = vunpack.c.0.s8 %v2156
        %v2158 = vlaneseq
        %v2159 = vshrl.u32 %v2158, 7
        %v2160 = vsub.s32 %v2157, %v2159
        %v2161 = vrot.slane %v2154, %v2160
        %v2162 = vcombine.low %v2065, %v2066
        %v2164 = vunpack.c.l.s4 1983009808
        %v2165 = vunpack.c.0.s8 %v2164
        %v2166 = vlaneseq
        %v2167 = vshrl.u32 %v2166, 7
        %v2168 = vsub.s32 %v2165, %v2167
        %v2169 = vrot.slane %v2162, %v2168
        %v2170 = vcombine.low %v2057, %v2064
        %v2172 = vunpack.c.l.s4 1983009808
        %v2173 = vunpack.c.0.s8 %v2172
        %v2174 = vlaneseq
        %v2175 = vshrl.u32 %v2174, 7
        %v2176 = vsub.s32 %v2173, %v2175
        %v2177 = vrot.slane %v2170, %v2176
        %v2178 = vcombine.low %v2067, %v2068
        %v2180 = vunpack.c.l.s4 1983009808
        %v2181 = vunpack.c.0.s8 %v2180
        %v2182 = vlaneseq
        %v2183 = vshrl.u32 %v2182, 7
        %v2184 = vsub.s32 %v2181, %v2183
        %v2185 = vrot.slane %v2178, %v2184
        %v2186 = vcombine.low %v2161, %v2169
        %v2187 = vcombine.high %v2161, %v2169
        %v2189 = vunpack.c.l.s4 1934713408
        %v2190 = vunpack.c.0.s8 %v2189
        %v2191 = vlaneseq
        %v2192 = vshrl.u32 %v2191, 7
        %v2193 = vsub.s32 %v2190, %v2192
        %v2194 = vrot.slane %v2186, %v2193
        %v2196 = vunpack.c.l.s4 1934713408
        %v2197 = vunpack.c.0.s8 %v2196
        %v2198 = vlaneseq
        %v2199 = vshrl.u32 %v2198, 7
        %v2200 = vsub.s32 %v2197, %v2199
        %v2201 = vrot.slane %v2187, %v2200
        %v2202 = vcombine.low %v2177, %v2185
        %v2203 = vcombine.high %v2177, %v2185
        %v2205 = vunpack.c.l.s4 1934713408
        %v2206 = vunpack.c.0.s8 %v2205
        %v2207 = vlaneseq
        %v2208 = vshrl.u32 %v2207, 7
        %v2209 = vsub.s32 %v2206, %v2208
        %v2210 = vrot.slane %v2202, %v2209
        %v2212 = vunpack.c.l.s4 1934713408
        %v2213 = vunpack.c.0.s8 %v2212
        %v2214 = vlaneseq
        %v2215 = vshrl.u32 %v2214, 7
        %v2216 = vsub.s32 %v2213, %v2215
        %v2217 = vrot.slane %v2203, %v2216
        %v2218 = vcombine.low %v2194, %v2210
        %v2219 = vcombine.high %v2194, %v2210
        %v2220 = vcombine.low %v2201, %v2217
        %v2221 = vcombine.high %v2201, %v2217
        %v2222 = vcombine.low %v2109, %v2116
        %v2224 = vunpack.c.l.s4 1983009808
        %v2225 = vunpack.c.0.s8 %v2224
        %v2226 = vlaneseq
        %v2227 = vshrl.u32 %v2226, 7
        %v2228 = vsub.s32 %v2225, %v2227
        %v2229 = vrot.slane %v2222, %v2228
        %v2230 = vcombine.low %v2133, %v2134
        %v2232 = vunpack.c.l.s4 1983009808
        %v2233 = vunpack.c.0.s8 %v2232
        %v2234 = vlaneseq
        %v2235 = vshrl.u32 %v2234, 7
        %v2236 = vsub.s32 %v2233, %v2235
        %v2237 = vrot.slane %v2230, %v2236
        %v2238 = vcombine.low %v2125, %v2132
        %v2240 = vunpack.c.l.s4 1983009808
        %v2241 = vunpack.c.0.s8 %v2240
        %v2242 = vlaneseq
        %v2243 = vshrl.u32 %v2242, 7
        %v2244 = vsub.s32 %v2241, %v2243
        %v2245 = vrot.slane %v2238, %v2244
        %v2246 = vcombine.low %v2135, %v2136
        %v2248 = vunpack.c.l.s4 1983009808
        %v2249 = vunpack.c.0.s8 %v2248
        %v2250 = vlaneseq
        %v2251 = vshrl.u32 %v2250, 7
        %v2252 = vsub.s32 %v2249, %v2251
        %v2253 = vrot.slane %v2246, %v2252
        %v2254 = vcombine.low %v2229, %v2237
        %v2255 = vcombine.high %v2229, %v2237
        %v2257 = vunpack.c.l.s4 1934713408
        %v2258 = vunpack.c.0.s8 %v2257
        %v2259 = vlaneseq
        %v2260 = vshrl.u32 %v2259, 7
        %v2261 = vsub.s32 %v2258, %v2260
        %v2262 = vrot.slane %v2254, %v2261
        %v2264 = vunpack.c.l.s4 1934713408
        %v2265 = vunpack.c.0.s8 %v2264
        %v2266 = vlaneseq
        %v2267 = vshrl.u32 %v2266, 7
        %v2268 = vsub.s32 %v2265, %v2267
        %v2269 = vrot.slane %v2255, %v2268
        %v2270 = vcombine.low %v2245, %v2253
        %v2271 = vcombine.high %v2245, %v2253
        %v2273 = vunpack.c.l.s4 1934713408
        %v2274 = vunpack.c.0.s8 %v2273
        %v2275 = vlaneseq
        %v2276 = vshrl.u32 %v2275, 7
        %v2277 = vsub.s32 %v2274, %v2276
        %v2278 = vrot.slane %v2270, %v2277
        %v2280 = vunpack.c.l.s4 1934713408
        %v2281 = vunpack.c.0.s8 %v2280
        %v2282 = vlaneseq
        %v2283 = vshrl.u32 %v2282, 7
        %v2284 = vsub.s32 %v2281, %v2283
        %v2285 = vrot.slane %v2271, %v2284
        %v2286 = vcombine.low %v2262, %v2278
        %v2287 = vcombine.high %v2262, %v2278
        %v2288 = vcombine.low %v2269, %v2285
        %v2289 = vcombine.high %v2269, %v2285
        %v2291 = vunpack.c.l.s4 1934713408
        %v2292 = vunpack.c.0.s8 %v2291
        %v2293 = vlaneseq
        %v2294 = vshrl.u32 %v2293, 7
        %v2295 = vsub.s32 %v2292, %v2294
        %v2296 = vrot.slane %v2153, %v2295
        %v2298 = vunpack.c.l.s4 1983009808
        %v2299 = vunpack.c.0.s8 %v2298
        %v2300 = vlaneseq
        %v2301 = vshrl.u32 %v2300, 7
        %v2302 = vsub.s32 %v2299, %v2301
        %v2303 = vrot.slane %v2296, %v2302
        %v2304 = vcombine.high %v2303, 0.0
        %v2306 = vunpack.c.l.s4 1934713408
        %v2307 = vunpack.c.0.s8 %v2306
        %v2308 = vlaneseq
        %v2309 = vshrl.u32 %v2308, 7
        %v2310 = vsub.s32 %v2307, %v2309
        %v2311 = vrot.slane %v2303, %v2310
        %v2313 = vunpack.c.l.s4 1934713408
        %v2314 = vunpack.c.0.s8 %v2313
        %v2315 = vlaneseq
        %v2316 = vshrl.u32 %v2315, 7
        %v2317 = vsub.s32 %v2314, %v2316
        %v2318 = vrot.slane %v2304, %v2317
        %v2319 = vcombine.high %v2311, 0.0
        %v2320 = vcombine.high %v2318, 0.0
        %2324 = vrot.lane.b32.xlu0 %v2219, 4
        %v2325 = vpop.permute.xlu0 %2324
        %2326 = vrot.lane.b32.xlu0 %v2287, 4
        %v2327 = vpop.permute.xlu0 %2326
        %2328 = vrot.lane.b32.xlu0 %v2319, 4
        %v2329 = vpop.permute.xlu0 %2328
        %2336 = vrot.lane.b32.xlu0 %v2220, 8
        %v2337 = vpop.permute.xlu0 %2336
        %2338 = vrot.lane.b32.xlu0 %v2288, 8
        %v2339 = vpop.permute.xlu0 %2338
        %2340 = vrot.lane.b32.xlu0 %v2318, 8
        %v2341 = vpop.permute.xlu0 %2340
        %2348 = vrot.lane.b32.xlu0 %v2221, 12
        %v2349 = vpop.permute.xlu0 %2348
        %2350 = vrot.lane.b32.xlu0 %v2289, 12
        %v2351 = vpop.permute.xlu0 %2350
        %2352 = vrot.lane.b32.xlu0 %v2320, 12
        %v2353 = vpop.permute.xlu0 %2352
        %v2357 = vsel %vm1348, %v2218, %v2325
        %v2358 = vsel %vm1348, %v2286, %v2327
        %v2359 = vsel %vm1348, %v2311, %v2329
        %vm2360 = vcmask 64512
        %v2361 = vsel %vm2360, %v2357, %v2337
        %v2362 = vsel %vm2360, %v2358, %v2339
        %v2363 = vsel %vm2360, %v2359, %v2341
        %vm2364 = vcmask 97280
        %v2365 = vsel %vm2364, %v2361, %v2349
        %v2366 = vsel %vm2364, %v2362, %v2351
        %v2367 = vsel %vm2364, %v2363, %v2353
        %v2368 = vpack.c.bf16 %v2366, %v2365
        %v2369 = vpack.c.bf16 %v2367, %v2367
        %v2372 = vunpack.c.l.b16 %v2368
        %v2373 = vunpack.c.h.b16 %v2368
        %v2374 = vunpack.c.l.b16 %v2369
        %v2375 = vpack.c.b16 %v2372, %v2372
        %v2376 = vpack.c.b16 %v2373, %v2373
        %v2377 = vpack.c.b16 %v2374, %v2374
        %vm2381 = vcmask 125952
        %2382 = vst.msk [vmem:[%s134] sm:$0xf] %vm2381, %v2375
        %2383 = vst.msk [vmem:[%s134 + $0x4] sm:$0xf] %vm2381, %v2376
        %vm2384 = vcmask 122880
        %vm2385 = vsmask.f32 256
        %vm2386 = vmand %vm2384, %vm2385
        %v2387 = vld [vmem:[%s134 + $0x8] sm:$0x1]
        %v2388 = vsel %vm2386, %v2377, %v2387
        %2389 = vst [vmem:[%s134 + $0x8] sm:$0x1] %v2388
        %s2390 = sand.u32 %s52, 1
        %s2391 = scalar_lea.sflag [#allocation4], %s2390
        %s2392 = sand.u32 %s52, 1
        %s2393 = smul.addr %s2392, 12
        %s2394 = scalar_lea.vmem [#allocation5], %s2393
        // Predicated region
        $region29: #{aeformer_forward.40} parent=23 // pred_check
          %p2395 = pneg %p62
        $region30: #{aeformer_forward.40} parent=23 // pred_check_branch
          %2397 = sbr.rel (%p2395) target = $region32
        $region31: #{aeformer_forward.40} parent=23 // pred_region
          %s2399 = ssub.s32 192, 192
          %2400 = vsyncadd %s2391, %s2399
          %s2401 = smul.addr %s18, 3
          %s2402 = smul.addr %s2401, 64
          %s2403 = scalar_lea.hbm %s1, %s2402
          %s2404 = sshll.u32 %s2394, 4
          %s2405 = int_to_ptr.vmem [resolvable:$true] %s2404
          %2410 = dma.vmem_to_hbm [thread:$0]  %s2405, 192, %s2403, %s2391, 64, 64, 4
        $region32: #{aeformer_forward.40} parent=23 // pred_fallthru
          _
      $region24: #{aeformer_forward.40} parent=5 // pred_fallthru
        _
      %p2411 = scmp.le.s32.totalorder 2, %s13
      // Predicated region
      $region33: #{aeformer_forward.40} parent=5 // pred_check
        %p2412 = pneg %p2411
      $region34: #{aeformer_forward.40} parent=5 // pred_check_branch
        %2414 = sbr.rel (%p2412) target = $region36
      $region35: #{aeformer_forward.40} parent=5 // pred_region
        %s2415 = ssub.s32 %s13, 2
        // Predicated region
        $region37: #{aeformer_forward.40} parent=35 // pred_check
          %p2416 = pneg %p68
        $region38: #{aeformer_forward.40} parent=35 // pred_check_branch
          %2418 = sbr.rel (%p2416) target = $region40
        $region39: #{aeformer_forward.40} parent=35 // pred_region
          %s2419 = sand.u32 %s53, 1
          %s2420 = scalar_lea.sflag [#allocation4], %s2419
          %s2421 = sand.u32 %s53, 1
          %s2422 = smul.addr %s2421, 12
          %s2423 = scalar_lea.vmem [#allocation5], %s2422
          %2424 = dma.done %s2420, 192
        $region40: #{aeformer_forward.40} parent=35 // pred_fallthru
          _
      $region36: #{aeformer_forward.40} parent=5 // pred_fallthru
        _
    $region6: #{aeformer_forward.40} parent=1 // loop_footer
      %s17 = sadd.s32 1, %s13
    $region7: #{aeformer_forward.40} parent=1 // loop_footer_branch
      %12 = sbr.rel target = $region3
    $region8: #{aeformer_forward.40} parent=1 // loop_exit
      _
    %2425 = vsyncpa [#allocation3], 1
    %s2426 = scalar_lea.sflag [#allocation3], 1
    %2427 = vsyncpa %s2426, 1
    %2428 = vsyncpa [#allocation4], 1
    %s2429 = scalar_lea.sflag [#allocation4], 1
    %2430 = vsyncpa %s2429, 1

// kernel: aeformer_forward.43
$region0: #{aeformer_forward.43}
  #allocation0 [shape = 'u32[]', space=smem, size = 0x4, offset = 0x4, fixed_abs, tag = 'smem constant byte address 0x4 - core index']
  #allocation1 [shape = 'u32[144,128]{1,0:T(1,128)}', space=vmem, size = 0x12000, scoped, tag = 'internal scratch']
  %s0 = inlined_call_operand.hbm [shape: bf16[34,64], index: 0, kind: input, shape index: {}]
  %s1 = inlined_call_operand.hbm [shape: bf16[64,16], index: 1, kind: input, shape index: {}]
  %s2 = inlined_call_operand.hbm [shape: f32[1,16], index: 2, kind: input, shape index: {}]
  %s3 = inlined_call_operand.hbm [shape: f32[34,16], index: 3, kind: input, shape index: {}]
  %s4 = inlined_call_operand.hbm [shape: f32[34,16], index: 4, kind: output, shape index: {}]
  %s5 = sld [smem:[#allocation0]]
  $region42: #{aeformer_forward.43} parent=0
    _
  %s7 = ssub.s32 1, %s5
  %s8 = scalar_select 0, %s7, %s5
  $region1: #{aeformer_forward.43} parent=0
    #allocation2 [shape = 'u8[10240]{0}', space=vmem, size = 0x2800, scoped, tag = 'input window, operand 0, single buffered']
    #allocation3 [shape = 's32[1]{0}', space=sflag, size = 0x4, scoped, tag = 'scoped memory for aeformer_forward.43']
    #allocation4 [shape = 's32[1]{0}', space=sflag, size = 0x4, scoped, tag = 'scoped memory for aeformer_forward.43']
    #allocation5 [shape = 'u8[16384]{0}', space=vmem, size = 0x4000, scoped, tag = 'input window, operand 1, single buffered']
    #allocation6 [shape = 's32[1]{0}', space=sflag, size = 0x4, scoped, tag = 'scoped memory for aeformer_forward.43']
    #allocation7 [shape = 'u8[512]{0}', space=vmem, size = 0x400, scoped, tag = 'input window, operand 2, single buffered']
    #allocation8 [shape = 'u8[20480]{0}', space=vmem, size = 0x5000, scoped, tag = 'input window, operand 3, single buffered']
    #allocation9 [shape = 's32[1]{0}', space=sflag, size = 0x4, scoped, tag = 'scoped memory for aeformer_forward.43']
    #allocation10 [shape = 'u8[20480]{0}', space=vmem, size = 0x5000, scoped, tag = 'output window, operand 0, single buffered']
    %9 = vsyncpa [#allocation3], 0
    %10 = vsyncpa [#allocation6], 0
    %11 = vsyncpa [#allocation9], 0
    %12 = vsyncpa [#allocation4], 0
    // Predicated region
    $region2: #{aeformer_forward.43} parent=1 // pred_check
      _
    $region3: #{aeformer_forward.43} parent=1 // pred_check_branch
      %14 = sbr.rel (0) target = $region5
    $region4: #{aeformer_forward.43} parent=1 // pred_region
      %s16 = ssub.s32 320, 320
      %17 = vsyncadd [#allocation3], %s16
      %s18 = sshll.u32 [#allocation2], 4
      %s19 = int_to_ptr.vmem [resolvable:$true] %s18
      %24 = dma.hbm_to_vmem [thread:$0]  %s0, 320, %s19, [#allocation3], 64, 64, 4
    $region5: #{aeformer_forward.43} parent=1 // pred_fallthru
      _
    // Predicated region
    $region6: #{aeformer_forward.43} parent=1 // pred_check
      _
    $region7: #{aeformer_forward.43} parent=1 // pred_check_branch
      %26 = sbr.rel (0) target = $region9
    $region8: #{aeformer_forward.43} parent=1 // pred_region
      %s28 = ssub.s32 512, 512
      %29 = vsyncadd [#allocation6], %s28
      %s30 = sshll.u32 [#allocation5], 4
      %s31 = int_to_ptr.vmem [resolvable:$true] %s30
      %36 = dma.hbm_to_vmem [thread:$0]  %s1, 512, %s31, [#allocation6], 64, 64, 4
    $region9: #{aeformer_forward.43} parent=1 // pred_fallthru
      _
    // Predicated region
    $region10: #{aeformer_forward.43} parent=1 // pred_check
      _
    $region11: #{aeformer_forward.43} parent=1 // pred_check_branch
      %38 = sbr.rel (0) target = $region13
    $region12: #{aeformer_forward.43} parent=1 // pred_region
      %s40 = ssub.s32 16, 16
      %41 = vsyncadd [#allocation6], %s40
      %s43 = sshll.u32 [#allocation7], 4
      %s44 = int_to_ptr.vmem [resolvable:$true] %s43
      %46 = dma.hbm_to_vmem [thread:$0]  %s2, 16, %s44, [#allocation6]
    $region13: #{aeformer_forward.43} parent=1 // pred_fallthru
      _
    // Predicated region
    $region14: #{aeformer_forward.43} parent=1 // pred_check
      _
    $region15: #{aeformer_forward.43} parent=1 // pred_check_branch
      %48 = sbr.rel (0) target = $region17
    $region16: #{aeformer_forward.43} parent=1 // pred_region
      %s50 = ssub.s32 640, 640
      %51 = vsyncadd [#allocation9], %s50
      %s52 = sshll.u32 [#allocation8], 4
      %s53 = int_to_ptr.vmem [resolvable:$true] %s52
      %58 = dma.hbm_to_vmem [thread:$0]  %s3, 640, %s53, [#allocation9], 128, 128, 8
    $region17: #{aeformer_forward.43} parent=1 // pred_fallthru
      _
    // Predicated region
    $region18: #{aeformer_forward.43} parent=1 // pred_check
      _
    $region19: #{aeformer_forward.43} parent=1 // pred_check_branch
      %60 = sbr.rel (0) target = $region21
    $region20: #{aeformer_forward.43} parent=1 // pred_region
      %61 = dma.done [#allocation3], 320
    $region21: #{aeformer_forward.43} parent=1 // pred_fallthru
      _
    // Predicated region
    $region22: #{aeformer_forward.43} parent=1 // pred_check
      _
    $region23: #{aeformer_forward.43} parent=1 // pred_check_branch
      %63 = sbr.rel (0) target = $region25
    $region24: #{aeformer_forward.43} parent=1 // pred_region
      %64 = dma.done [#allocation6], 512
    $region25: #{aeformer_forward.43} parent=1 // pred_fallthru
      _
    // Predicated region
    $region26: #{aeformer_forward.43} parent=1 // pred_check
      _
    $region27: #{aeformer_forward.43} parent=1 // pred_check_branch
      %66 = sbr.rel (0) target = $region29
    $region28: #{aeformer_forward.43} parent=1 // pred_region
      %67 = dma.done [#allocation6], 16
    $region29: #{aeformer_forward.43} parent=1 // pred_fallthru
      _
    // Predicated region
    $region30: #{aeformer_forward.43} parent=1 // pred_check
      _
    $region31: #{aeformer_forward.43} parent=1 // pred_check_branch
      %69 = sbr.rel (0) target = $region33
    $region32: #{aeformer_forward.43} parent=1 // pred_region
      %70 = dma.done [#allocation9], 640
    $region33: #{aeformer_forward.43} parent=1 // pred_fallthru
      _
    %v72 = vld [vmem:[#allocation2] sm:$0xf]
    %v73 = vld [vmem:[#allocation2 + $0x4] sm:$0xf]
    %v74 = vld [vmem:[#allocation2 + $0x8] sm:$0xf]
    %v75 = vld [vmem:[#allocation2 + $0xc] sm:$0xf]
    %v76 = vld [vmem:[#allocation2 + $0x10] sm:$0x1]
    %v77 = vld [vmem:[#allocation5] sm:$0xf]
    %v78 = vld [vmem:[#allocation5 + $0x4] sm:$0xf]
    %v79 = vld [vmem:[#allocation5 + $0x8] sm:$0xf]
    %v80 = vld [vmem:[#allocation5 + $0xc] sm:$0xf]
    %v81 = vld [vmem:[#allocation5 + $0x10] sm:$0xf]
    %v82 = vld [vmem:[#allocation5 + $0x14] sm:$0xf]
    %v83 = vld [vmem:[#allocation5 + $0x18] sm:$0xf]
    %v84 = vld [vmem:[#allocation5 + $0x1c] sm:$0xf]
    %v85 = vld [vmem:[#allocation7] sm:$0x1]
    %v87 = vlaneseq
    %v88 = vshrl.u32 %v87, 7
    %v89 = vsub.s32 0, %v88
    %v90 = vrot.slane %v85, %v89
    %v97 = vunpack.c.l.b16 %v72
    %v98 = vunpack.c.l.b16 %v73
    %v99 = vunpack.c.l.b16 %v74
    %v100 = vunpack.c.l.b16 %v75
    %v101 = vunpack.c.l.b16 %v76
    %v102 = vpack.c.b16 %v98, %v97
    %v103 = vpack.c.b16 %v100, %v99
    %v104 = vpack.c.b16 %v101, %v101
    %v113 = vunpack.c.l.b16 %v77
    %v114 = vunpack.c.l.b16 %v78
    %v115 = vunpack.c.l.b16 %v79
    %v116 = vunpack.c.l.b16 %v80
    %v117 = vunpack.c.l.b16 %v81
    %v118 = vunpack.c.l.b16 %v82
    %v119 = vunpack.c.l.b16 %v83
    %v120 = vunpack.c.l.b16 %v84
    %v121 = vpack.c.b16 %v114, %v113
    %v122 = vpack.c.b16 %v116, %v115
    %v123 = vpack.c.b16 %v118, %v117
    %v124 = vpack.c.b16 %v120, %v119
    %vm129 = vcmask 523264
    %v131 = vsel %vm129, %v102, 0
    %v134 = vsel %vm129, %v103, 0
    %v137 = vsel %vm129, %v104, 0
    %139 = vmatprep.subr.bf16.mxu0 0
    %140 = vmatpush1.bf16.msra.mxu0 %v121
    %141 = vmatprep.subr.bf16.mxu0 0
    %142 = vmatpush1.bf16.msra.mxu0 %v122
    %143 = vmatprep.subr.bf16.mxu0 0
    %144 = vmatpush1.bf16.msra.mxu0 %v123
    %145 = vmatprep.subr.bf16.mxu0 0
    %146 = vmatpush1.bf16.msra.mxu0 %v124
    %147 = vmatprep.subr.bf16.mxu0 0
    %148 = vmatpush1.bf16.msra.mxu0 0
    %149 = vmatprep.subr.bf16.mxu0 0
    %150 = vmatpush1.bf16.msra.mxu0 0
    %151 = vmatprep.subr.bf16.mxu0 0
    %152 = vmatpush1.bf16.msra.mxu0 0
    %153 = vmatprep.subr.bf16.mxu0 0
    %154 = vmatpush1.bf16.msra.mxu0 0
    %155 = vmatprep.subr.bf16.mxu0 0
    %156 = vmatpush1.bf16.msra.mxu0 0
    %157 = vmatprep.subr.bf16.mxu0 0
    %158 = vmatpush1.bf16.msra.mxu0 0
    %159 = vmatprep.subr.bf16.mxu0 0
    %160 = vmatpush1.bf16.msra.mxu0 0
    %161 = vmatprep.subr.bf16.mxu0 0
    %162 = vmatpush1.bf16.msra.mxu0 0
    %163 = vmatprep.subr.bf16.mxu0 0
    %164 = vmatpush1.bf16.msra.mxu0 0
    %165 = vmatprep.subr.bf16.mxu0 0
    %166 = vmatpush1.bf16.msra.mxu0 0
    %167 = vmatprep.subr.bf16.mxu0 0
    %168 = vmatpush1.bf16.msra.mxu0 0
    %169 = vmatprep.subr.bf16.mxu0 0
    %170 = vmatpush1.bf16.msra.mxu0 0
    %171 = vmatprep.mubr.bf16.mxu0 0
    %172 = vmatmul.mubr.bf16.gmra.mrb[0].mxu0 %v131
    %v173 = vpop.f32.mrb[0].mxu0
    %v174 = vadd.f32 %v90, %v173
    %v175 = vpop.f32.mrb[0].mxu0
    %v176 = vpop.f32.mrb[0].mxu0
    %v177 = vadd.f32 %v90, %v176
    %v178 = vpop.f32.mrb[0].mxu0
    %179 = vmatprep.mubr.bf16.mxu0 0
    %180 = vmatmul.mubr.bf16.gmra.mrb[0].mxu0 %v134
    %v181 = vpop.f32.mrb[0].mxu0
    %v182 = vadd.f32 %v90, %v181
    %v183 = vpop.f32.mrb[0].mxu0
    %v184 = vpop.f32.mrb[0].mxu0
    %v185 = vadd.f32 %v90, %v184
    %v186 = vpop.f32.mrb[0].mxu0
    %187 = vmatprep.mubr.bf16.mxu0 0
    %188 = vmatmul.mubr.bf16.gmra.mrb[0].mxu0 %v137
    %v189 = vpop.f32.mrb[0].mxu0
    %v190 = vadd.f32 %v90, %v189
    %v191 = vpop.f32.mrb[0].mxu0
    %v192 = vpop.f32.mrb[0].mxu0
    %v193 = vpop.f32.mrb[0].mxu0
    %194 = vdwg.mxu0
    %v195 = vld [vmem:[#allocation8] sm:$0xff]
    %v196 = vld [vmem:[#allocation8 + $0x8] sm:$0xff]
    %v197 = vld [vmem:[#allocation8 + $0x10] sm:$0xff]
    %v198 = vld [vmem:[#allocation8 + $0x18] sm:$0xff]
    %v199 = vld [vmem:[#allocation8 + $0x20] sm:$0x3]
    %v200 = vadd.f32 %v174, %v195
    %v201 = vadd.f32 %v177, %v196
    %v202 = vadd.f32 %v182, %v197
    %v203 = vadd.f32 %v185, %v198
    %v204 = vadd.f32 %v190, %v199
    %vm205 = vcmask 130048
    %206 = vst.msk [vmem:[#allocation10] sm:$0xff] %vm205, %v200
    %207 = vst.msk [vmem:[#allocation10 + $0x8] sm:$0xff] %vm205, %v201
    %208 = vst.msk [vmem:[#allocation10 + $0x10] sm:$0xff] %vm205, %v202
    %209 = vst.msk [vmem:[#allocation10 + $0x18] sm:$0xff] %vm205, %v203
    %vm210 = vcmask 123904
    %211 = vst.msk [vmem:[#allocation10 + $0x20] sm:$0x3] %vm210, %v204
    // Predicated region
    $region34: #{aeformer_forward.43} parent=1 // pred_check
      _
    $region35: #{aeformer_forward.43} parent=1 // pred_check_branch
      %213 = sbr.rel (0) target = $region37
    $region36: #{aeformer_forward.43} parent=1 // pred_region
      %s215 = ssub.s32 640, 640
      %216 = vsyncadd [#allocation4], %s215
      %s217 = sshll.u32 [#allocation10], 4
      %s218 = int_to_ptr.vmem [resolvable:$true] %s217
      %223 = dma.vmem_to_hbm [thread:$0]  %s218, 640, %s4, [#allocation4], 128, 128, 8
    $region37: #{aeformer_forward.43} parent=1 // pred_fallthru
      _
    // Predicated region
    $region38: #{aeformer_forward.43} parent=1 // pred_check
      _
    $region39: #{aeformer_forward.43} parent=1 // pred_check_branch
      %225 = sbr.rel (0) target = $region41
    $region40: #{aeformer_forward.43} parent=1 // pred_region
      %226 = dma.done [#allocation4], 640
    $region41: #{aeformer_forward.43} parent=1 // pred_fallthru
      _
    %227 = vsyncpa [#allocation3], 1
    %228 = vsyncpa [#allocation6], 1
    %229 = vsyncpa [#allocation9], 1
    %230 = vsyncpa [#allocation4], 1

// kernel: aeformer_forward.49
$region0: #{aeformer_forward.49}
  #allocation0 [shape = 'u32[]', space=smem, size = 0x4, offset = 0x4, fixed_abs, tag = 'smem constant byte address 0x4 - core index']
  #allocation1 [shape = 'u32[144,128]{1,0:T(1,128)}', space=vmem, size = 0x12000, scoped, tag = 'internal scratch']
  %s0 = inlined_call_operand.hbm [shape: f32[34,16], index: 0, kind: input, shape index: {}]
  %s1 = inlined_call_operand.hbm [shape: bf16[16,256], index: 1, kind: input, shape index: {}]
  %s2 = inlined_call_operand.hbm [shape: f32[1,256], index: 2, kind: input, shape index: {}]
  %s3 = inlined_call_operand.hbm [shape: f32[1,16], index: 3, kind: input, shape index: {}]
  %s4 = inlined_call_operand.hbm [shape: f32[1,16], index: 4, kind: input, shape index: {}]
  %s5 = inlined_call_operand.hbm [shape: bf16[34,256], index: 5, kind: output, shape index: {}]
  %s6 = sld [smem:[#allocation0]]
  $region50: #{aeformer_forward.49} parent=0
    _
  %s8 = ssub.s32 1, %s6
  %s9 = scalar_select 0, %s8, %s6
  $region1: #{aeformer_forward.49} parent=0
    #allocation2 [shape = 'u8[20480]{0}', space=vmem, size = 0x5000, scoped, tag = 'input window, operand 0, single buffered']
    #allocation3 [shape = 's32[1]{0}', space=sflag, size = 0x4, scoped, tag = 'scoped memory for aeformer_forward.49']
    #allocation4 [shape = 's32[1]{0}', space=sflag, size = 0x4, scoped, tag = 'scoped memory for aeformer_forward.49']
    #allocation5 [shape = 'u8[8192]{0}', space=vmem, size = 0x2000, scoped, tag = 'input window, operand 1, single buffered']
    #allocation6 [shape = 's32[1]{0}', space=sflag, size = 0x4, scoped, tag = 'scoped memory for aeformer_forward.49']
    #allocation7 [shape = 'u8[1024]{0}', space=vmem, size = 0x400, scoped, tag = 'input window, operand 2, single buffered']
    #allocation8 [shape = 'u8[512]{0}', space=vmem, size = 0x400, scoped, tag = 'input window, operand 3, single buffered']
    #allocation9 [shape = 's32[1]{0}', space=sflag, size = 0x4, scoped, tag = 'scoped memory for aeformer_forward.49']
    #allocation10 [shape = 'u8[512]{0}', space=vmem, size = 0x400, scoped, tag = 'input window, operand 4, single buffered']
    #allocation11 [shape = 'u8[20480]{0}', space=vmem, size = 0x5000, scoped, tag = 'output window, operand 0, single buffered']
    %10 = vsyncpa [#allocation3], 0
    %11 = vsyncpa [#allocation6], 0
    %12 = vsyncpa [#allocation9], 0
    %13 = vsyncpa [#allocation4], 0
    // Predicated region
    $region2: #{aeformer_forward.49} parent=1 // pred_check
      _
    $region3: #{aeformer_forward.49} parent=1 // pred_check_branch
      %15 = sbr.rel (0) target = $region5
    $region4: #{aeformer_forward.49} parent=1 // pred_region
      %s17 = ssub.s32 640, 640
      %18 = vsyncadd [#allocation3], %s17
      %s19 = sshll.u32 [#allocation2], 4
      %s20 = int_to_ptr.vmem [resolvable:$true] %s19
      %25 = dma.hbm_to_vmem [thread:$0]  %s0, 640, %s20, [#allocation3], 128, 128, 8
    $region5: #{aeformer_forward.49} parent=1 // pred_fallthru
      _
    // Predicated region
    $region6: #{aeformer_forward.49} parent=1 // pred_check
      _
    $region7: #{aeformer_forward.49} parent=1 // pred_check_branch
      %27 = sbr.rel (0) target = $region9
    $region8: #{aeformer_forward.49} parent=1 // pred_region
      %s29 = ssub.s32 256, 256
      %30 = vsyncadd [#allocation6], %s29
      %s31 = sshll.u32 [#allocation5], 4
      %s32 = int_to_ptr.vmem [resolvable:$true] %s31
      %37 = dma.hbm_to_vmem [thread:$0]  %s1, 256, %s32, [#allocation6], 128, 128, 8
    $region9: #{aeformer_forward.49} parent=1 // pred_fallthru
      _
    // Predicated region
    $region10: #{aeformer_forward.49} parent=1 // pred_check
      _
    $region11: #{aeformer_forward.49} parent=1 // pred_check_branch
      %39 = sbr.rel (0) target = $region13
    $region12: #{aeformer_forward.49} parent=1 // pred_region
      %s41 = ssub.s32 32, 32
      %42 = vsyncadd [#allocation6], %s41
      %s44 = sshll.u32 [#allocation7], 4
      %s45 = int_to_ptr.vmem [resolvable:$true] %s44
      %47 = dma.hbm_to_vmem [thread:$0]  %s2, 32, %s45, [#allocation6]
    $region13: #{aeformer_forward.49} parent=1 // pred_fallthru
      _
    // Predicated region
    $region14: #{aeformer_forward.49} parent=1 // pred_check
      _
    $region15: #{aeformer_forward.49} parent=1 // pred_check_branch
      %49 = sbr.rel (0) target = $region17
    $region16: #{aeformer_forward.49} parent=1 // pred_region
      %s51 = ssub.s32 16, 16
      %52 = vsyncadd [#allocation9], %s51
      %s54 = sshll.u32 [#allocation8], 4
      %s55 = int_to_ptr.vmem [resolvable:$true] %s54
      %57 = dma.hbm_to_vmem [thread:$0]  %s3, 16, %s55, [#allocation9]
    $region17: #{aeformer_forward.49} parent=1 // pred_fallthru
      _
    // Predicated region
    $region18: #{aeformer_forward.49} parent=1 // pred_check
      _
    $region19: #{aeformer_forward.49} parent=1 // pred_check_branch
      %59 = sbr.rel (0) target = $region21
    $region20: #{aeformer_forward.49} parent=1 // pred_region
      %s61 = ssub.s32 16, 16
      %62 = vsyncadd [#allocation9], %s61
      %s64 = sshll.u32 [#allocation10], 4
      %s65 = int_to_ptr.vmem [resolvable:$true] %s64
      %67 = dma.hbm_to_vmem [thread:$0]  %s4, 16, %s65, [#allocation9]
    $region21: #{aeformer_forward.49} parent=1 // pred_fallthru
      _
    // Predicated region
    $region22: #{aeformer_forward.49} parent=1 // pred_check
      _
    $region23: #{aeformer_forward.49} parent=1 // pred_check_branch
      %69 = sbr.rel (0) target = $region25
    $region24: #{aeformer_forward.49} parent=1 // pred_region
      %70 = dma.done [#allocation3], 640
    $region25: #{aeformer_forward.49} parent=1 // pred_fallthru
      _
    // Predicated region
    $region26: #{aeformer_forward.49} parent=1 // pred_check
      _
    $region27: #{aeformer_forward.49} parent=1 // pred_check_branch
      %72 = sbr.rel (0) target = $region29
    $region28: #{aeformer_forward.49} parent=1 // pred_region
      %73 = dma.done [#allocation6], 256
    $region29: #{aeformer_forward.49} parent=1 // pred_fallthru
      _
    // Predicated region
    $region30: #{aeformer_forward.49} parent=1 // pred_check
      _
    $region31: #{aeformer_forward.49} parent=1 // pred_check_branch
      %75 = sbr.rel (0) target = $region33
    $region32: #{aeformer_forward.49} parent=1 // pred_region
      %76 = dma.done [#allocation6], 32
    $region33: #{aeformer_forward.49} parent=1 // pred_fallthru
      _
    // Predicated region
    $region34: #{aeformer_forward.49} parent=1 // pred_check
      _
    $region35: #{aeformer_forward.49} parent=1 // pred_check_branch
      %78 = sbr.rel (0) target = $region37
    $region36: #{aeformer_forward.49} parent=1 // pred_region
      %79 = dma.done [#allocation9], 16
    $region37: #{aeformer_forward.49} parent=1 // pred_fallthru
      _
    // Predicated region
    $region38: #{aeformer_forward.49} parent=1 // pred_check
      _
    $region39: #{aeformer_forward.49} parent=1 // pred_check_branch
      %81 = sbr.rel (0) target = $region41
    $region40: #{aeformer_forward.49} parent=1 // pred_region
      %82 = dma.done [#allocation9], 16
    $region41: #{aeformer_forward.49} parent=1 // pred_fallthru
      _
    %v84 = vld [vmem:[#allocation2] sm:$0xff]
    %v85 = vld [vmem:[#allocation2 + $0x8] sm:$0xff]
    %v86 = vld [vmem:[#allocation2 + $0x10] sm:$0xff]
    %v87 = vld [vmem:[#allocation2 + $0x18] sm:$0xff]
    %v88 = vld [vmem:[#allocation2 + $0x20] sm:$0x3]
    %v89 = vld [vmem:[#allocation8] sm:$0x1]
    %v90 = vld [vmem:[#allocation10] sm:$0x1]
    %vm91 = vcmask 130048
    %v92 = vsel %vm91, %v84, 0.0
    %93 = vadd.xlane.f32.xlu0 %v92
    %v94 = vpop.xlane.xlu0 %93
    %v95 = vsel %vm91, %v85, 0.0
    %96 = vadd.xlane.f32.xlu0 %v95
    %v97 = vpop.xlane.xlu0 %96
    %v98 = vsel %vm91, %v86, 0.0
    %99 = vadd.xlane.f32.xlu0 %v98
    %v100 = vpop.xlane.xlu0 %99
    %v101 = vsel %vm91, %v87, 0.0
    %102 = vadd.xlane.f32.xlu0 %v101
    %v103 = vpop.xlane.xlu0 %102
    %vm104 = vcmask 123904
    %v105 = vsel %vm104, %v88, 0.0
    %106 = vadd.xlane.f32.xlu0 %v105
    %v107 = vpop.xlane.xlu0 %106
    %v108 = vrcp.pop 16.0
    %v109 = vmul.f32 %v94, %v108
    %v110 = vmul.f32 %v97, %v108
    %v111 = vmul.f32 %v100, %v108
    %v112 = vmul.f32 %v103, %v108
    %v113 = vmul.f32 %v107, %v108
    %v114 = vsub.f32 %v84, %v109
    %v115 = vsub.f32 %v85, %v110
    %v116 = vsub.f32 %v86, %v111
    %v117 = vsub.f32 %v87, %v112
    %v118 = vsub.f32 %v88, %v113
    %v119 = vmul.f32 %v114, %v114
    %v120 = vmul.f32 %v115, %v115
    %v121 = vmul.f32 %v116, %v116
    %v122 = vmul.f32 %v117, %v117
    %v123 = vmul.f32 %v118, %v118
    %v124 = vsel %vm91, %v119, 0.0
    %125 = vadd.xlane.f32.xlu0 %v124
    %v126 = vpop.xlane.xlu0 %125
    %v127 = vsel %vm91, %v120, 0.0
    %128 = vadd.xlane.f32.xlu0 %v127
    %v129 = vpop.xlane.xlu0 %128
    %v130 = vsel %vm91, %v121, 0.0
    %131 = vadd.xlane.f32.xlu0 %v130
    %v132 = vpop.xlane.xlu0 %131
    %v133 = vsel %vm91, %v122, 0.0
    %134 = vadd.xlane.f32.xlu0 %v133
    %v135 = vpop.xlane.xlu0 %134
    %v136 = vsel %vm104, %v123, 0.0
    %137 = vadd.xlane.f32.xlu0 %v136
    %v138 = vpop.xlane.xlu0 %137
    %v139 = vmul.f32 %v126, %v108
    %v140 = vmul.f32 %v129, %v108
    %v141 = vmul.f32 %v132, %v108
    %v142 = vmul.f32 %v135, %v108
    %v143 = vmul.f32 %v138, %v108
    %v144 = vadd.f32 %v139, 1e-05
    %v145 = vadd.f32 %v140, 1e-05
    %v146 = vadd.f32 %v141, 1e-05
    %v147 = vadd.f32 %v142, 1e-05
    %v148 = vadd.f32 %v143, 1e-05
    %v149 = vrsqrt.pop %v144
    %v150 = vrsqrt.pop %v145
    %v151 = vrsqrt.pop %v146
    %v152 = vrsqrt.pop %v147
    %v153 = vrsqrt.pop %v148
    %v154 = vmul.f32 %v114, %v149
    %v155 = vmul.f32 %v115, %v150
    %v156 = vmul.f32 %v116, %v151
    %v157 = vmul.f32 %v117, %v152
    %v158 = vmul.f32 %v118, %v153
    %v160 = vlaneseq
    %v161 = vshrl.u32 %v160, 7
    %v162 = vsub.s32 0, %v161
    %v163 = vrot.slane %v89, %v162
    %v165 = vmul.f32 %v154, %v163
    %v166 = vmul.f32 %v155, %v163
    %v167 = vmul.f32 %v156, %v163
    %v168 = vmul.f32 %v157, %v163
    %v169 = vmul.f32 %v158, %v163
    %v171 = vlaneseq
    %v172 = vshrl.u32 %v171, 7
    %v173 = vsub.s32 0, %v172
    %v174 = vrot.slane %v90, %v173
    %v176 = vadd.f32 %v165, %v174
    %v177 = vadd.f32 %v166, %v174
    %v178 = vadd.f32 %v167, %v174
    %v179 = vadd.f32 %v168, %v174
    %v180 = vadd.f32 %v169, %v174
    %v181 = vpack.c.bf16 %v177, %v176
    %v182 = vpack.c.bf16 %v179, %v178
    %v183 = vpack.c.bf16 %v180, %v180
    %v184 = vld [vmem:[#allocation5] sm:$0xff]
    %v185 = vld [vmem:[#allocation5 + $0x8] sm:$0xff]
    %v186 = vld [vmem:[#allocation7] sm:$0x3]
    %v188 = vlaneseq
    %v189 = vshrl.u32 %v188, 7
    %v190 = vsub.s32 0, %v189
    %v191 = vrot.slane %v186, %v190
    %v192 = vlaneseq
    %v193 = vshrl.u32 %v192, 7
    %v194 = vsub.s32 1, %v193
    %v195 = vrot.slane %v186, %v194
    %v200 = vunpack.c.l.b16 %v184
    %v201 = vunpack.c.h.b16 %v184
    %v202 = vunpack.c.l.b16 %v185
    %v203 = vunpack.c.h.b16 %v185
    %v204 = vpack.c.b16 %v202, %v200
    %v205 = vpack.c.b16 %v203, %v201
    %v209 = vsel %vm91, %v181, 0
    %v212 = vsel %vm91, %v182, 0
    %v215 = vsel %vm91, %v183, 0
    %217 = vmatprep.subr.bf16.mxu0 %v205
    %218 = vmatpush1.bf16.msra.mxu0 %v204
    %219 = vmatprep.subr.bf16.mxu0 0
    %220 = vmatpush1.bf16.msra.mxu0 0
    %221 = vmatprep.subr.bf16.mxu0 0
    %222 = vmatpush1.bf16.msra.mxu0 0
    %223 = vmatprep.subr.bf16.mxu0 0
    %224 = vmatpush1.bf16.msra.mxu0 0
    %225 = vmatprep.subr.bf16.mxu0 0
    %226 = vmatpush1.bf16.msra.mxu0 0
    %227 = vmatprep.subr.bf16.mxu0 0
    %228 = vmatpush1.bf16.msra.mxu0 0
    %229 = vmatprep.subr.bf16.mxu0 0
    %230 = vmatpush1.bf16.msra.mxu0 0
    %231 = vmatprep.subr.bf16.mxu0 0
    %232 = vmatpush1.bf16.msra.mxu0 0
    %233 = vmatprep.subr.bf16.mxu0 0
    %234 = vmatpush1.bf16.msra.mxu0 0
    %235 = vmatprep.subr.bf16.mxu0 0
    %236 = vmatpush1.bf16.msra.mxu0 0
    %237 = vmatprep.subr.bf16.mxu0 0
    %238 = vmatpush1.bf16.msra.mxu0 0
    %239 = vmatprep.subr.bf16.mxu0 0
    %240 = vmatpush1.bf16.msra.mxu0 0
    %241 = vmatprep.subr.bf16.mxu0 0
    %242 = vmatpush1.bf16.msra.mxu0 0
    %243 = vmatprep.subr.bf16.mxu0 0
    %244 = vmatpush1.bf16.msra.mxu0 0
    %245 = vmatprep.subr.bf16.mxu0 0
    %246 = vmatpush1.bf16.msra.mxu0 0
    %247 = vmatprep.subr.bf16.mxu0 0
    %248 = vmatpush1.bf16.msra.mxu0 0
    %249 = vmatprep.mubr.bf16.mxu0 0
    %250 = vmatmul.mubr.bf16.gmra.mrb[0].mxu0 %v209
    %v251 = vpop.f32.mrb[0].mxu0
    %v252 = vadd.f32 %v191, %v251
    %v253 = vpop.f32.mrb[0].mxu0
    %v254 = vadd.f32 %v195, %v253
    %v255 = vpop.f32.mrb[0].mxu0
    %v256 = vadd.f32 %v191, %v255
    %v257 = vpop.f32.mrb[0].mxu0
    %v258 = vadd.f32 %v195, %v257
    %259 = vmatprep.mubr.bf16.mxu0 0
    %260 = vmatmul.mubr.bf16.gmra.mrb[0].mxu0 %v212
    %v261 = vpop.f32.mrb[0].mxu0
    %v262 = vadd.f32 %v191, %v261
    %v263 = vpop.f32.mrb[0].mxu0
    %v264 = vadd.f32 %v195, %v263
    %v265 = vpop.f32.mrb[0].mxu0
    %v266 = vadd.f32 %v191, %v265
    %v267 = vpop.f32.mrb[0].mxu0
    %v268 = vadd.f32 %v195, %v267
    %269 = vmatprep.mubr.bf16.mxu0 0
    %270 = vmatmul.mubr.bf16.gmra.mrb[0].mxu0 %v215
    %v271 = vpop.f32.mrb[0].mxu0
    %v272 = vadd.f32 %v191, %v271
    %v273 = vpop.f32.mrb[0].mxu0
    %v274 = vadd.f32 %v195, %v273
    %v275 = vpop.f32.mrb[0].mxu0
    %v276 = vpop.f32.mrb[0].mxu0
    %277 = vdwg.mxu0
    %v278 = vmax.f32 %v252, 0.0
    %v279 = vmax.f32 %v254, 0.0
    %v280 = vmax.f32 %v256, 0.0
    %v281 = vmax.f32 %v258, 0.0
    %v282 = vmax.f32 %v262, 0.0
    %v283 = vmax.f32 %v264, 0.0
    %v284 = vmax.f32 %v266, 0.0
    %v285 = vmax.f32 %v268, 0.0
    %v286 = vmax.f32 %v272, 0.0
    %v287 = vmax.f32 %v274, 0.0
    %v288 = vpack.c.bf16 %v280, %v278
    %v289 = vpack.c.bf16 %v281, %v279
    %v290 = vpack.c.bf16 %v284, %v282
    %v291 = vpack.c.bf16 %v285, %v283
    %v292 = vpack.c.bf16 %v286, %v286
    %v293 = vpack.c.bf16 %v287, %v287
    %v300 = vunpack.c.l.b16 %v288
    %v301 = vunpack.c.l.b16 %v289
    %v302 = vunpack.c.h.b16 %v288
    %v303 = vunpack.c.h.b16 %v289
    %v304 = vunpack.c.l.b16 %v290
    %v305 = vunpack.c.l.b16 %v291
    %v306 = vunpack.c.h.b16 %v290
    %v307 = vunpack.c.h.b16 %v291
    %v308 = vunpack.c.l.b16 %v292
    %v309 = vunpack.c.l.b16 %v293
    %v310 = vpack.c.b16 %v301, %v300
    %v311 = vpack.c.b16 %v303, %v302
    %v312 = vpack.c.b16 %v305, %v304
    %v313 = vpack.c.b16 %v307, %v306
    %v314 = vpack.c.b16 %v309, %v308
    %320 = vst [vmem:[#allocation11] sm:$0xff] %v310
    %321 = vst [vmem:[#allocation11 + $0x8] sm:$0xff] %v311
    %322 = vst [vmem:[#allocation11 + $0x10] sm:$0xff] %v312
    %323 = vst [vmem:[#allocation11 + $0x18] sm:$0xff] %v313
    %324 = vst [vmem:[#allocation11 + $0x20] sm:$0x11] %v314
    // Predicated region
    $region42: #{aeformer_forward.49} parent=1 // pred_check
      _
    $region43: #{aeformer_forward.49} parent=1 // pred_check_branch
      %326 = sbr.rel (0) target = $region45
    $region44: #{aeformer_forward.49} parent=1 // pred_region
      %s328 = ssub.s32 640, 640
      %329 = vsyncadd [#allocation4], %s328
      %s330 = sshll.u32 [#allocation11], 4
      %s331 = int_to_ptr.vmem [resolvable:$true] %s330
      %336 = dma.vmem_to_hbm [thread:$0]  %s331, 640, %s5, [#allocation4], 128, 128, 8
    $region45: #{aeformer_forward.49} parent=1 // pred_fallthru
      _
    // Predicated region
    $region46: #{aeformer_forward.49} parent=1 // pred_check
      _
    $region47: #{aeformer_forward.49} parent=1 // pred_check_branch
      %338 = sbr.rel (0) target = $region49
    $region48: #{aeformer_forward.49} parent=1 // pred_region
      %339 = dma.done [#allocation4], 640
    $region49: #{aeformer_forward.49} parent=1 // pred_fallthru
      _
    %340 = vsyncpa [#allocation3], 1
    %341 = vsyncpa [#allocation6], 1
    %342 = vsyncpa [#allocation9], 1
    %343 = vsyncpa [#allocation4], 1

// kernel: aeformer_forward.50
$region0: #{aeformer_forward.50}
  #allocation0 [shape = 'u32[]', space=smem, size = 0x4, offset = 0x4, fixed_abs, tag = 'smem constant byte address 0x4 - core index']
  #allocation1 [shape = 'u32[144,128]{1,0:T(1,128)}', space=vmem, size = 0x12000, scoped, tag = 'internal scratch']
  %s0 = inlined_call_operand.hbm [shape: bf16[34,256], index: 0, kind: input, shape index: {}]
  %s1 = inlined_call_operand.hbm [shape: bf16[256,512], index: 1, kind: input, shape index: {}]
  %s2 = inlined_call_operand.hbm [shape: f32[1,512], index: 2, kind: input, shape index: {}]
  %s3 = inlined_call_operand.hbm [shape: bf16[34,512], index: 3, kind: output, shape index: {}]
  %s4 = sld [smem:[#allocation0]]
  $region34: #{aeformer_forward.50} parent=0
    _
  %s6 = ssub.s32 1, %s4
  %s7 = scalar_select 0, %s6, %s4
  $region1: #{aeformer_forward.50} parent=0
    #allocation2 [shape = 'u8[20480]{0}', space=vmem, size = 0x5000, scoped, tag = 'input window, operand 0, single buffered']
    #allocation3 [shape = 's32[1]{0}', space=sflag, size = 0x4, scoped, tag = 'scoped memory for aeformer_forward.50']
    #allocation4 [shape = 's32[1]{0}', space=sflag, size = 0x4, scoped, tag = 'scoped memory for aeformer_forward.50']
    #allocation5 [shape = 'u8[262144]{0}', space=vmem, size = 0x40000, scoped, tag = 'input window, operand 1, single buffered']
    #allocation6 [shape = 's32[1]{0}', space=sflag, size = 0x4, scoped, tag = 'scoped memory for aeformer_forward.50']
    #allocation7 [shape = 'u8[2048]{0}', space=vmem, size = 0x800, scoped, tag = 'input window, operand 2, single buffered']
    #allocation8 [shape = 'u8[40960]{0}', space=vmem, size = 0xa000, scoped, tag = 'output window, operand 0, single buffered']
    %8 = vsyncpa [#allocation3], 0
    %9 = vsyncpa [#allocation6], 0
    %10 = vsyncpa [#allocation4], 0
    // Predicated region
    $region2: #{aeformer_forward.50} parent=1 // pred_check
      _
    $region3: #{aeformer_forward.50} parent=1 // pred_check_branch
      %12 = sbr.rel (0) target = $region5
    $region4: #{aeformer_forward.50} parent=1 // pred_region
      %s14 = ssub.s32 640, 640
      %15 = vsyncadd [#allocation3], %s14
      %s16 = sshll.u32 [#allocation2], 4
      %s17 = int_to_ptr.vmem [resolvable:$true] %s16
      %22 = dma.hbm_to_vmem [thread:$0]  %s0, 640, %s17, [#allocation3], 128, 128, 8
    $region5: #{aeformer_forward.50} parent=1 // pred_fallthru
      _
    // Predicated region
    $region6: #{aeformer_forward.50} parent=1 // pred_check
      _
    $region7: #{aeformer_forward.50} parent=1 // pred_check_branch
      %24 = sbr.rel (0) target = $region9
    $region8: #{aeformer_forward.50} parent=1 // pred_region
      %s26 = ssub.s32 8192, 8192
      %27 = vsyncadd [#allocation6], %s26
      %s28 = sshll.u32 [#allocation5], 4
      %s29 = int_to_ptr.vmem [resolvable:$true] %s28
      %34 = dma.hbm_to_vmem [thread:$0]  %s1, 8192, %s29, [#allocation6], 256, 256, 16
    $region9: #{aeformer_forward.50} parent=1 // pred_fallthru
      _
    // Predicated region
    $region10: #{aeformer_forward.50} parent=1 // pred_check
      _
    $region11: #{aeformer_forward.50} parent=1 // pred_check_branch
      %36 = sbr.rel (0) target = $region13
    $region12: #{aeformer_forward.50} parent=1 // pred_region
      %s38 = ssub.s32 64, 64
      %39 = vsyncadd [#allocation6], %s38
      %s41 = sshll.u32 [#allocation7], 4
      %s42 = int_to_ptr.vmem [resolvable:$true] %s41
      %44 = dma.hbm_to_vmem [thread:$0]  %s2, 64, %s42, [#allocation6]
    $region13: #{aeformer_forward.50} parent=1 // pred_fallthru
      _
    // Predicated region
    $region14: #{aeformer_forward.50} parent=1 // pred_check
      _
    $region15: #{aeformer_forward.50} parent=1 // pred_check_branch
      %46 = sbr.rel (0) target = $region17
    $region16: #{aeformer_forward.50} parent=1 // pred_region
      %47 = dma.done [#allocation3], 640
    $region17: #{aeformer_forward.50} parent=1 // pred_fallthru
      _
    // Predicated region
    $region18: #{aeformer_forward.50} parent=1 // pred_check
      _
    $region19: #{aeformer_forward.50} parent=1 // pred_check_branch
      %49 = sbr.rel (0) target = $region21
    $region20: #{aeformer_forward.50} parent=1 // pred_region
      %50 = dma.done [#allocation6], 8192
    $region21: #{aeformer_forward.50} parent=1 // pred_fallthru
      _
    // Predicated region
    $region22: #{aeformer_forward.50} parent=1 // pred_check
      _
    $region23: #{aeformer_forward.50} parent=1 // pred_check_branch
      %52 = sbr.rel (0) target = $region25
    $region24: #{aeformer_forward.50} parent=1 // pred_region
      %53 = dma.done [#allocation6], 64
    $region25: #{aeformer_forward.50} parent=1 // pred_fallthru
      _
    %v54 = vld [vmem:[#allocation2] sm:$0xff]
    %v55 = vld [vmem:[#allocation2 + $0x8] sm:$0xff]
    %v56 = vld [vmem:[#allocation2 + $0x10] sm:$0xff]
    %v57 = vld [vmem:[#allocation2 + $0x18] sm:$0xff]
    %v58 = vld [vmem:[#allocation2 + $0x20] sm:$0x11]
    %v59 = vld [vmem:[#allocation5] sm:$0xff]
    %v60 = vld [vmem:[#allocation5 + $0x8] sm:$0xff]
    %v61 = vld [vmem:[#allocation5 + $0x10] sm:$0xff]
    %v62 = vld [vmem:[#allocation5 + $0x18] sm:$0xff]
    %v63 = vld [vmem:[#allocation5 + $0x20] sm:$0xff]
    %v64 = vld [vmem:[#allocation5 + $0x28] sm:$0xff]
    %v65 = vld [vmem:[#allocation5 + $0x30] sm:$0xff]
    %v66 = vld [vmem:[#allocation5 + $0x38] sm:$0xff]
    %v67 = vld [vmem:[#allocation5 + $0x40] sm:$0xff]
    %v68 = vld [vmem:[#allocation5 + $0x48] sm:$0xff]
    %v69 = vld [vmem:[#allocation5 + $0x50] sm:$0xff]
    %v70 = vld [vmem:[#allocation5 + $0x58] sm:$0xff]
    %v71 = vld [vmem:[#allocation5 + $0x60] sm:$0xff]
    %v72 = vld [vmem:[#allocation5 + $0x68] sm:$0xff]
    %v73 = vld [vmem:[#allocation5 + $0x70] sm:$0xff]
    %v74 = vld [vmem:[#allocation5 + $0x78] sm:$0xff]
    %v75 = vld [vmem:[#allocation5 + $0x80] sm:$0xff]
    %v76 = vld [vmem:[#allocation5 + $0x88] sm:$0xff]
    %v77 = vld [vmem:[#allocation5 + $0x90] sm:$0xff]
    %v78 = vld [vmem:[#allocation5 + $0x98] sm:$0xff]
    %v79 = vld [vmem:[#allocation5 + $0xa0] sm:$0xff]
    %v80 = vld [vmem:[#allocation5 + $0xa8] sm:$0xff]
    %v81 = vld [vmem:[#allocation5 + $0xb0] sm:$0xff]
    %v82 = vld [vmem:[#allocation5 + $0xb8] sm:$0xff]
    %v83 = vld [vmem:[#allocation5 + $0xc0] sm:$0xff]
    %v84 = vld [vmem:[#allocation5 + $0xc8] sm:$0xff]
    %v85 = vld [vmem:[#allocation5 + $0xd0] sm:$0xff]
    %v86 = vld [vmem:[#allocation5 + $0xd8] sm:$0xff]
    %v87 = vld [vmem:[#allocation5 + $0xe0] sm:$0xff]
    %v88 = vld [vmem:[#allocation5 + $0xe8] sm:$0xff]
    %v89 = vld [vmem:[#allocation5 + $0xf0] sm:$0xff]
    %v90 = vld [vmem:[#allocation5 + $0xf8] sm:$0xff]
    %v91 = vld [vmem:[#allocation5 + $0x100] sm:$0xff]
    %v92 = vld [vmem:[#allocation5 + $0x108] sm:$0xff]
    %v93 = vld [vmem:[#allocation5 + $0x110] sm:$0xff]
    %v94 = vld [vmem:[#allocation5 + $0x118] sm:$0xff]
    %v95 = vld [vmem:[#allocation5 + $0x120] sm:$0xff]
    %v96 = vld [vmem:[#allocation5 + $0x128] sm:$0xff]
    %v97 = vld [vmem:[#allocation5 + $0x130] sm:$0xff]
    %v98 = vld [vmem:[#allocation5 + $0x138] sm:$0xff]
    %v99 = vld [vmem:[#allocation5 + $0x140] sm:$0xff]
    %v100 = vld [vmem:[#allocation5 + $0x148] sm:$0xff]
    %v101 = vld [vmem:[#allocation5 + $0x150] sm:$0xff]
    %v102 = vld [vmem:[#allocation5 + $0x158] sm:$0xff]
    %v103 = vld [vmem:[#allocation5 + $0x160] sm:$0xff]
    %v104 = vld [vmem:[#allocation5 + $0x168] sm:$0xff]
    %v105 = vld [vmem:[#allocation5 + $0x170] sm:$0xff]
    %v106 = vld [vmem:[#allocation5 + $0x178] sm:$0xff]
    %v107 = vld [vmem:[#allocation5 + $0x180] sm:$0xff]
    %v108 = vld [vmem:[#allocation5 + $0x188] sm:$0xff]
    %v109 = vld [vmem:[#allocation5 + $0x190] sm:$0xff]
    %v110 = vld [vmem:[#allocation5 + $0x198] sm:$0xff]
    %v111 = vld [vmem:[#allocation5 + $0x1a0] sm:$0xff]
    %v112 = vld [vmem:[#allocation5 + $0x1a8] sm:$0xff]
    %v113 = vld [vmem:[#allocation5 + $0x1b0] sm:$0xff]
    %v114 = vld [vmem:[#allocation5 + $0x1b8] sm:$0xff]
    %v115 = vld [vmem:[#allocation5 + $0x1c0] sm:$0xff]
    %v116 = vld [vmem:[#allocation5 + $0x1c8] sm:$0xff]
    %v117 = vld [vmem:[#allocation5 + $0x1d0] sm:$0xff]
    %v118 = vld [vmem:[#allocation5 + $0x1d8] sm:$0xff]
    %v119 = vld [vmem:[#allocation5 + $0x1e0] sm:$0xff]
    %v120 = vld [vmem:[#allocation5 + $0x1e8] sm:$0xff]
    %v121 = vld [vmem:[#allocation5 + $0x1f0] sm:$0xff]
    %v122 = vld [vmem:[#allocation5 + $0x1f8] sm:$0xff]
    %v123 = vld [vmem:[#allocation7] sm:$0xf]
    %v125 = vlaneseq
    %v126 = vshrl.u32 %v125, 7
    %v127 = vsub.s32 0, %v126
    %v128 = vrot.slane %v123, %v127
    %v129 = vlaneseq
    %v130 = vshrl.u32 %v129, 7
    %v131 = vsub.s32 1, %v130
    %v132 = vrot.slane %v123, %v131
    %v133 = vlaneseq
    %v134 = vshrl.u32 %v133, 7
    %v135 = vsub.s32 2, %v134
    %v136 = vrot.slane %v123, %v135
    %v137 = vlaneseq
    %v138 = vshrl.u32 %v137, 7
    %v139 = vsub.s32 3, %v138
    %v140 = vrot.slane %v123, %v139
    %v150 = vunpack.c.l.b16 %v54
    %v151 = vunpack.c.h.b16 %v54
    %v152 = vunpack.c.l.b16 %v55
    %v153 = vunpack.c.h.b16 %v55
    %v154 = vunpack.c.l.b16 %v56
    %v155 = vunpack.c.h.b16 %v56
    %v156 = vunpack.c.l.b16 %v57
    %v157 = vunpack.c.h.b16 %v57
    %v158 = vunpack.c.l.b16 %v58
    %v159 = vunpack.c.h.b16 %v58
    %v160 = vpack.c.b16 %v152, %v150
    %v161 = vpack.c.b16 %v153, %v151
    %v162 = vpack.c.b16 %v156, %v154
    %v163 = vpack.c.b16 %v157, %v155
    %v164 = vpack.c.b16 %v158, %v158
    %v165 = vpack.c.b16 %v159, %v159
    %v236 = vunpack.c.l.b16 %v59
    %v237 = vunpack.c.h.b16 %v59
    %v238 = vunpack.c.l.b16 %v60
    %v239 = vunpack.c.h.b16 %v60
    %v240 = vunpack.c.l.b16 %v61
    %v241 = vunpack.c.h.b16 %v61
    %v242 = vunpack.c.l.b16 %v62
    %v243 = vunpack.c.h.b16 %v62
    %v244 = vunpack.c.l.b16 %v63
    %v245 = vunpack.c.h.b16 %v63
    %v246 = vunpack.c.l.b16 %v64
    %v247 = vunpack.c.h.b16 %v64
    %v248 = vunpack.c.l.b16 %v65
    %v249 = vunpack.c.h.b16 %v65
    %v250 = vunpack.c.l.b16 %v66
    %v251 = vunpack.c.h.b16 %v66
    %v252 = vunpack.c.l.b16 %v67
    %v253 = vunpack.c.h.b16 %v67
    %v254 = vunpack.c.l.b16 %v68
    %v255 = vunpack.c.h.b16 %v68
    %v256 = vunpack.c.l.b16 %v69
    %v257 = vunpack.c.h.b16 %v69
    %v258 = vunpack.c.l.b16 %v70
    %v259 = vunpack.c.h.b16 %v70
    %v260 = vunpack.c.l.b16 %v71
    %v261 = vunpack.c.h.b16 %v71
    %v262 = vunpack.c.l.b16 %v72
    %v263 = vunpack.c.h.b16 %v72
    %v264 = vunpack.c.l.b16 %v73
    %v265 = vunpack.c.h.b16 %v73
    %v266 = vunpack.c.l.b16 %v74
    %v267 = vunpack.c.h.b16 %v74
    %v268 = vunpack.c.l.b16 %v75
    %v269 = vunpack.c.h.b16 %v75
    %v270 = vunpack.c.l.b16 %v76
    %v271 = vunpack.c.h.b16 %v76
    %v272 = vunpack.c.l.b16 %v77
    %v273 = vunpack.c.h.b16 %v77
    %v274 = vunpack.c.l.b16 %v78
    %v275 = vunpack.c.h.b16 %v78
    %v276 = vunpack.c.l.b16 %v79
    %v277 = vunpack.c.h.b16 %v79
    %v278 = vunpack.c.l.b16 %v80
    %v279 = vunpack.c.h.b16 %v80
    %v280 = vunpack.c.l.b16 %v81
    %v281 = vunpack.c.h.b16 %v81
    %v282 = vunpack.c.l.b16 %v82
    %v283 = vunpack.c.h.b16 %v82
    %v284 = vunpack.c.l.b16 %v83
    %v285 = vunpack.c.h.b16 %v83
    %v286 = vunpack.c.l.b16 %v84
    %v287 = vunpack.c.h.b16 %v84
    %v288 = vunpack.c.l.b16 %v85
    %v289 = vunpack.c.h.b16 %v85
    %v290 = vunpack.c.l.b16 %v86
    %v291 = vunpack.c.h.b16 %v86
    %v292 = vunpack.c.l.b16 %v87
    %v293 = vunpack.c.h.b16 %v87
    %v294 = vunpack.c.l.b16 %v88
    %v295 = vunpack.c.h.b16 %v88
    %v296 = vunpack.c.l.b16 %v89
    %v297 = vunpack.c.h.b16 %v89
    %v298 = vunpack.c.l.b16 %v90
    %v299 = vunpack.c.h.b16 %v90
    %v300 = vunpack.c.l.b16 %v91
    %v301 = vunpack.c.h.b16 %v91
    %v302 = vunpack.c.l.b16 %v92
    %v303 = vunpack.c.h.b16 %v92
    %v304 = vunpack.c.l.b16 %v93
    %v305 = vunpack.c.h.b16 %v93
    %v306 = vunpack.c.l.b16 %v94
    %v307 = vunpack.c.h.b16 %v94
    %v308 = vunpack.c.l.b16 %v95
    %v309 = vunpack.c.h.b16 %v95
    %v310 = vunpack.c.l.b16 %v96
    %v311 = vunpack.c.h.b16 %v96
    %v312 = vunpack.c.l.b16 %v97
    %v313 = vunpack.c.h.b16 %v97
    %v314 = vunpack.c.l.b16 %v98
    %v315 = vunpack.c.h.b16 %v98
    %v316 = vunpack.c.l.b16 %v99
    %v317 = vunpack.c.h.b16 %v99
    %v318 = vunpack.c.l.b16 %v100
    %v319 = vunpack.c.h.b16 %v100
    %v320 = vunpack.c.l.b16 %v101
    %v321 = vunpack.c.h.b16 %v101
    %v322 = vunpack.c.l.b16 %v102
    %v323 = vunpack.c.h.b16 %v102
    %v324 = vunpack.c.l.b16 %v103
    %v325 = vunpack.c.h.b16 %v103
    %v326 = vunpack.c.l.b16 %v104
    %v327 = vunpack.c.h.b16 %v104
    %v328 = vunpack.c.l.b16 %v105
    %v329 = vunpack.c.h.b16 %v105
    %v330 = vunpack.c.l.b16 %v106
    %v331 = vunpack.c.h.b16 %v106
    %v332 = vunpack.c.l.b16 %v107
    %v333 = vunpack.c.h.b16 %v107
    %v334 = vunpack.c.l.b16 %v108
    %v335 = vunpack.c.h.b16 %v108
    %v336 = vunpack.c.l.b16 %v109
    %v337 = vunpack.c.h.b16 %v109
    %v338 = vunpack.c.l.b16 %v110
    %v339 = vunpack.c.h.b16 %v110
    %v340 = vunpack.c.l.b16 %v111
    %v341 = vunpack.c.h.b16 %v111
    %v342 = vunpack.c.l.b16 %v112
    %v343 = vunpack.c.h.b16 %v112
    %v344 = vunpack.c.l.b16 %v113
    %v345 = vunpack.c.h.b16 %v113
    %v346 = vunpack.c.l.b16 %v114
    %v347 = vunpack.c.h.b16 %v114
    %v348 = vunpack.c.l.b16 %v115
    %v349 = vunpack.c.h.b16 %v115
    %v350 = vunpack.c.l.b16 %v116
    %v351 = vunpack.c.h.b16 %v116
    %v352 = vunpack.c.l.b16 %v117
    %v353 = vunpack.c.h.b16 %v117
    %v354 = vunpack.c.l.b16 %v118
    %v355 = vunpack.c.h.b16 %v118
    %v356 = vunpack.c.l.b16 %v119
    %v357 = vunpack.c.h.b16 %v119
    %v358 = vunpack.c.l.b16 %v120
    %v359 = vunpack.c.h.b16 %v120
    %v360 = vunpack.c.l.b16 %v121
    %v361 = vunpack.c.h.b16 %v121
    %v362 = vunpack.c.l.b16 %v122
    %v363 = vunpack.c.h.b16 %v122
    %v364 = vpack.c.b16 %v240, %v236
    %v365 = vpack.c.b16 %v241, %v237
    %v366 = vpack.c.b16 %v242, %v238
    %v367 = vpack.c.b16 %v243, %v239
    %v368 = vpack.c.b16 %v248, %v244
    %v369 = vpack.c.b16 %v249, %v245
    %v370 = vpack.c.b16 %v250, %v246
    %v371 = vpack.c.b16 %v251, %v247
    %v372 = vpack.c.b16 %v256, %v252
    %v373 = vpack.c.b16 %v257, %v253
    %v374 = vpack.c.b16 %v258, %v254
    %v375 = vpack.c.b16 %v259, %v255
    %v376 = vpack.c.b16 %v264, %v260
    %v377 = vpack.c.b16 %v265, %v261
    %v378 = vpack.c.b16 %v266, %v262
    %v379 = vpack.c.b16 %v267, %v263
    %v380 = vpack.c.b16 %v272, %v268
    %v381 = vpack.c.b16 %v273, %v269
    %v382 = vpack.c.b16 %v274, %v270
    %v383 = vpack.c.b16 %v275, %v271
    %v384 = vpack.c.b16 %v280, %v276
    %v385 = vpack.c.b16 %v281, %v277
    %v386 = vpack.c.b16 %v282, %v278
    %v387 = vpack.c.b16 %v283, %v279
    %v388 = vpack.c.b16 %v288, %v284
    %v389 = vpack.c.b16 %v289, %v285
    %v390 = vpack.c.b16 %v290, %v286
    %v391 = vpack.c.b16 %v291, %v287
    %v392 = vpack.c.b16 %v296, %v292
    %v393 = vpack.c.b16 %v297, %v293
    %v394 = vpack.c.b16 %v298, %v294
    %v395 = vpack.c.b16 %v299, %v295
    %v396 = vpack.c.b16 %v304, %v300
    %v397 = vpack.c.b16 %v305, %v301
    %v398 = vpack.c.b16 %v306, %v302
    %v399 = vpack.c.b16 %v307, %v303
    %v400 = vpack.c.b16 %v312, %v308
    %v401 = vpack.c.b16 %v313, %v309
    %v402 = vpack.c.b16 %v314, %v310
    %v403 = vpack.c.b16 %v315, %v311
    %v404 = vpack.c.b16 %v320, %v316
    %v405 = vpack.c.b16 %v321, %v317
    %v406 = vpack.c.b16 %v322, %v318
    %v407 = vpack.c.b16 %v323, %v319
    %v408 = vpack.c.b16 %v328, %v324
    %v409 = vpack.c.b16 %v329, %v325
    %v410 = vpack.c.b16 %v330, %v326
    %v411 = vpack.c.b16 %v331, %v327
    %v412 = vpack.c.b16 %v336, %v332
    %v413 = vpack.c.b16 %v337, %v333
    %v414 = vpack.c.b16 %v338, %v334
    %v415 = vpack.c.b16 %v339, %v335
    %v416 = vpack.c.b16 %v344, %v340
    %v417 = vpack.c.b16 %v345, %v341
    %v418 = vpack.c.b16 %v346, %v342
    %v419 = vpack.c.b16 %v347, %v343
    %v420 = vpack.c.b16 %v352, %v348
    %v421 = vpack.c.b16 %v353, %v349
    %v422 = vpack.c.b16 %v354, %v350
    %v423 = vpack.c.b16 %v355, %v351
    %v424 = vpack.c.b16 %v360, %v356
    %v425 = vpack.c.b16 %v361, %v357
    %v426 = vpack.c.b16 %v362, %v358
    %v427 = vpack.c.b16 %v363, %v359
    %492 = vmatprep.subr.bf16.mxu0 %v365
    %493 = vmatpush1.bf16.msra.mxu0 %v364
    %494 = vmatprep.subr.bf16.mxu0 %v369
    %495 = vmatpush1.bf16.msra.mxu0 %v368
    %496 = vmatprep.subr.bf16.mxu0 %v373
    %497 = vmatpush1.bf16.msra.mxu0 %v372
    %498 = vmatprep.subr.bf16.mxu0 %v377
    %499 = vmatpush1.bf16.msra.mxu0 %v376
    %500 = vmatprep.subr.bf16.mxu0 %v381
    %501 = vmatpush1.bf16.msra.mxu0 %v380
    %502 = vmatprep.subr.bf16.mxu0 %v385
    %503 = vmatpush1.bf16.msra.mxu0 %v384
    %504 = vmatprep.subr.bf16.mxu0 %v389
    %505 = vmatpush1.bf16.msra.mxu0 %v388
    %506 = vmatprep.subr.bf16.mxu0 %v393
    %507 = vmatpush1.bf16.msra.mxu0 %v392
    %508 = vmatprep.subr.bf16.mxu0 %v397
    %509 = vmatpush1.bf16.msra.mxu0 %v396
    %510 = vmatprep.subr.bf16.mxu0 %v401
    %511 = vmatpush1.bf16.msra.mxu0 %v400
    %512 = vmatprep.subr.bf16.mxu0 %v405
    %513 = vmatpush1.bf16.msra.mxu0 %v404
    %514 = vmatprep.subr.bf16.mxu0 %v409
    %515 = vmatpush1.bf16.msra.mxu0 %v408
    %516 = vmatprep.subr.bf16.mxu0 %v413
    %517 = vmatpush1.bf16.msra.mxu0 %v412
    %518 = vmatprep.subr.bf16.mxu0 %v417
    %519 = vmatpush1.bf16.msra.mxu0 %v416
    %520 = vmatprep.subr.bf16.mxu0 %v421
    %521 = vmatpush1.bf16.msra.mxu0 %v420
    %522 = vmatprep.subr.bf16.mxu0 %v425
    %523 = vmatpush1.bf16.msra.mxu0 %v424
    %524 = vmatprep.mubr.bf16.mxu0 %v161
    %525 = vmatmul.mubr.bf16.gmra.mrb[0].mxu0 %v160
    %v526 = vpop.f32.mrb[0].mxu0
    %v527 = vadd.f32 %v128, %v526
    %v528 = vpop.f32.mrb[0].mxu0
    %v529 = vadd.f32 %v132, %v528
    %v530 = vpop.f32.mrb[0].mxu0
    %v531 = vadd.f32 %v128, %v530
    %v532 = vpop.f32.mrb[0].mxu0
    %v533 = vadd.f32 %v132, %v532
    %534 = vmatprep.mubr.bf16.mxu0 %v163
    %535 = vmatmul.mubr.bf16.gmra.mrb[0].mxu0 %v162
    %v536 = vpop.f32.mrb[0].mxu0
    %v537 = vadd.f32 %v128, %v536
    %v538 = vpop.f32.mrb[0].mxu0
    %v539 = vadd.f32 %v132, %v538
    %v540 = vpop.f32.mrb[0].mxu0
    %v541 = vadd.f32 %v128, %v540
    %v542 = vpop.f32.mrb[0].mxu0
    %v543 = vadd.f32 %v132, %v542
    %544 = vmatprep.mubr.bf16.mxu0 %v165
    %545 = vmatmul.mubr.bf16.gmra.mrb[0].mxu0 %v164
    %v546 = vpop.f32.mrb[0].mxu0
    %v547 = vadd.f32 %v128, %v546
    %v548 = vpop.f32.mrb[0].mxu0
    %v549 = vadd.f32 %v132, %v548
    %v550 = vpop.f32.mrb[0].mxu0
    %v551 = vpop.f32.mrb[0].mxu0
    %552 = vdwg.mxu0
    %553 = vmatprep.subr.bf16.mxu0 %v367
    %554 = vmatpush1.bf16.msra.mxu0 %v366
    %555 = vmatprep.subr.bf16.mxu0 %v371
    %556 = vmatpush1.bf16.msra.mxu0 %v370
    %557 = vmatprep.subr.bf16.mxu0 %v375
    %558 = vmatpush1.bf16.msra.mxu0 %v374
    %559 = vmatprep.subr.bf16.mxu0 %v379
    %560 = vmatpush1.bf16.msra.mxu0 %v378
    %561 = vmatprep.subr.bf16.mxu0 %v383
    %562 = vmatpush1.bf16.msra.mxu0 %v382
    %563 = vmatprep.subr.bf16.mxu0 %v387
    %564 = vmatpush1.bf16.msra.mxu0 %v386
    %565 = vmatprep.subr.bf16.mxu0 %v391
    %566 = vmatpush1.bf16.msra.mxu0 %v390
    %567 = vmatprep.subr.bf16.mxu0 %v395
    %568 = vmatpush1.bf16.msra.mxu0 %v394
    %569 = vmatprep.subr.bf16.mxu0 %v399
    %570 = vmatpush1.bf16.msra.mxu0 %v398
    %571 = vmatprep.subr.bf16.mxu0 %v403
    %572 = vmatpush1.bf16.msra.mxu0 %v402
    %573 = vmatprep.subr.bf16.mxu0 %v407
    %574 = vmatpush1.bf16.msra.mxu0 %v406
    %575 = vmatprep.subr.bf16.mxu0 %v411
    %576 = vmatpush1.bf16.msra.mxu0 %v410
    %577 = vmatprep.subr.bf16.mxu0 %v415
    %578 = vmatpush1.bf16.msra.mxu0 %v414
    %579 = vmatprep.subr.bf16.mxu0 %v419
    %580 = vmatpush1.bf16.msra.mxu0 %v418
    %581 = vmatprep.subr.bf16.mxu0 %v423
    %582 = vmatpush1.bf16.msra.mxu0 %v422
    %583 = vmatprep.subr.bf16.mxu0 %v427
    %584 = vmatpush1.bf16.msra.mxu0 %v426
    %585 = vmatprep.mubr.bf16.mxu0 %v161
    %586 = vmatmul.mubr.bf16.gmra.mrb[0].mxu0 %v160
    %v587 = vpop.f32.mrb[0].mxu0
    %v588 = vadd.f32 %v136, %v587
    %v589 = vpop.f32.mrb[0].mxu0
    %v590 = vadd.f32 %v140, %v589
    %v591 = vpop.f32.mrb[0].mxu0
    %v592 = vadd.f32 %v136, %v591
    %v593 = vpop.f32.mrb[0].mxu0
    %v594 = vadd.f32 %v140, %v593
    %595 = vmatprep.mubr.bf16.mxu0 %v163
    %596 = vmatmul.mubr.bf16.gmra.mrb[0].mxu0 %v162
    %v597 = vpop.f32.mrb[0].mxu0
    %v598 = vadd.f32 %v136, %v597
    %v599 = vpop.f32.mrb[0].mxu0
    %v600 = vadd.f32 %v140, %v599
    %v601 = vpop.f32.mrb[0].mxu0
    %v602 = vadd.f32 %v136, %v601
    %v603 = vpop.f32.mrb[0].mxu0
    %v604 = vadd.f32 %v140, %v603
    %605 = vmatprep.mubr.bf16.mxu0 %v165
    %606 = vmatmul.mubr.bf16.gmra.mrb[0].mxu0 %v164
    %v607 = vpop.f32.mrb[0].mxu0
    %v608 = vadd.f32 %v136, %v607
    %v609 = vpop.f32.mrb[0].mxu0
    %v610 = vadd.f32 %v140, %v609
    %v611 = vpop.f32.mrb[0].mxu0
    %v612 = vpop.f32.mrb[0].mxu0
    %613 = vdwg.mxu0
    %v614 = vmax.f32 %v527, 0.0
    %v615 = vmax.f32 %v529, 0.0
    %v616 = vmax.f32 %v588, 0.0
    %v617 = vmax.f32 %v590, 0.0
    %v618 = vmax.f32 %v531, 0.0
    %v619 = vmax.f32 %v533, 0.0
    %v620 = vmax.f32 %v592, 0.0
    %v621 = vmax.f32 %v594, 0.0
    %v622 = vmax.f32 %v537, 0.0
    %v623 = vmax.f32 %v539, 0.0
    %v624 = vmax.f32 %v598, 0.0
    %v625 = vmax.f32 %v600, 0.0
    %v626 = vmax.f32 %v541, 0.0
    %v627 = vmax.f32 %v543, 0.0
    %v628 = vmax.f32 %v602, 0.0
    %v629 = vmax.f32 %v604, 0.0
    %v630 = vmax.f32 %v547, 0.0
    %v631 = vmax.f32 %v549, 0.0
    %v632 = vmax.f32 %v608, 0.0
    %v633 = vmax.f32 %v610, 0.0
    %v634 = vpack.c.bf16 %v618, %v614
    %v635 = vpack.c.bf16 %v619, %v615
    %v636 = vpack.c.bf16 %v620, %v616
    %v637 = vpack.c.bf16 %v621, %v617
    %v638 = vpack.c.bf16 %v626, %v622
    %v639 = vpack.c.bf16 %v627, %v623
    %v640 = vpack.c.bf16 %v628, %v624
    %v641 = vpack.c.bf16 %v629, %v625
    %v642 = vpack.c.bf16 %v630, %v630
    %v643 = vpack.c.bf16 %v631, %v631
    %v644 = vpack.c.bf16 %v632, %v632
    %v645 = vpack.c.bf16 %v633, %v633
    %v658 = vunpack.c.l.b16 %v634
    %v659 = vunpack.c.l.b16 %v635
    %v660 = vunpack.c.l.b16 %v636
    %v661 = vunpack.c.l.b16 %v637
    %v662 = vunpack.c.h.b16 %v634
    %v663 = vunpack.c.h.b16 %v635
    %v664 = vunpack.c.h.b16 %v636
    %v665 = vunpack.c.h.b16 %v637
    %v666 = vunpack.c.l.b16 %v638
    %v667 = vunpack.c.l.b16 %v639
    %v668 = vunpack.c.l.b16 %v640
    %v669 = vunpack.c.l.b16 %v641
    %v670 = vunpack.c.h.b16 %v638
    %v671 = vunpack.c.h.b16 %v639
    %v672 = vunpack.c.h.b16 %v640
    %v673 = vunpack.c.h.b16 %v641
    %v674 = vunpack.c.l.b16 %v642
    %v675 = vunpack.c.l.b16 %v643
    %v676 = vunpack.c.l.b16 %v644
    %v677 = vunpack.c.l.b16 %v645
    %v678 = vpack.c.b16 %v659, %v658
    %v679 = vpack.c.b16 %v661, %v660
    %v680 = vpack.c.b16 %v663, %v662
    %v681 = vpack.c.b16 %v665, %v664
    %v682 = vpack.c.b16 %v667, %v666
    %v683 = vpack.c.b16 %v669, %v668
    %v684 = vpack.c.b16 %v671, %v670
    %v685 = vpack.c.b16 %v673, %v672
    %v686 = vpack.c.b16 %v675, %v674
    %v687 = vpack.c.b16 %v677, %v676
    %698 = vst [vmem:[#allocation8] sm:$0xff] %v678
    %699 = vst [vmem:[#allocation8 + $0x8] sm:$0xff] %v679
    %700 = vst [vmem:[#allocation8 + $0x10] sm:$0xff] %v680
    %701 = vst [vmem:[#allocation8 + $0x18] sm:$0xff] %v681
    %702 = vst [vmem:[#allocation8 + $0x20] sm:$0xff] %v682
    %703 = vst [vmem:[#allocation8 + $0x28] sm:$0xff] %v683
    %704 = vst [vmem:[#allocation8 + $0x30] sm:$0xff] %v684
    %705 = vst [vmem:[#allocation8 + $0x38] sm:$0xff] %v685
    %706 = vst [vmem:[#allocation8 + $0x40] sm:$0x11] %v686
    %707 = vst [vmem:[#allocation8 + $0x48] sm:$0x11] %v687
    // Predicated region
    $region26: #{aeformer_forward.50} parent=1 // pred_check
      _
    $region27: #{aeformer_forward.50} parent=1 // pred_check_branch
      %709 = sbr.rel (0) target = $region29
    $region28: #{aeformer_forward.50} parent=1 // pred_region
      %s711 = ssub.s32 1280, 1280
      %712 = vsyncadd [#allocation4], %s711
      %s713 = sshll.u32 [#allocation8], 4
      %s714 = int_to_ptr.vmem [resolvable:$true] %s713
      %719 = dma.vmem_to_hbm [thread:$0]  %s714, 1280, %s3, [#allocation4], 256, 256, 16
    $region29: #{aeformer_forward.50} parent=1 // pred_fallthru
      _
    // Predicated region
    $region30: #{aeformer_forward.50} parent=1 // pred_check
      _
    $region31: #{aeformer_forward.50} parent=1 // pred_check_branch
      %721 = sbr.rel (0) target = $region33
    $region32: #{aeformer_forward.50} parent=1 // pred_region
      %722 = dma.done [#allocation4], 1280
    $region33: #{aeformer_forward.50} parent=1 // pred_fallthru
      _
    %723 = vsyncpa [#allocation3], 1
    %724 = vsyncpa [#allocation6], 1
    %725 = vsyncpa [#allocation4], 1

// kernel: aeformer_forward.51
$region0: #{aeformer_forward.51}
  #allocation0 [shape = 'u32[]', space=smem, size = 0x4, offset = 0x4, fixed_abs, tag = 'smem constant byte address 0x4 - core index']
  #allocation1 [shape = 'u32[144,128]{1,0:T(1,128)}', space=vmem, size = 0x12000, scoped, tag = 'internal scratch']
  %s0 = inlined_call_operand.hbm [shape: bf16[34,512], index: 0, kind: input, shape index: {}]
  %s1 = inlined_call_operand.hbm [shape: bf16[512,48], index: 1, kind: input, shape index: {}]
  %s2 = inlined_call_operand.hbm [shape: f32[1,48], index: 2, kind: input, shape index: {}]
  %s3 = inlined_call_operand.hbm [shape: f32[34,48], index: 3, kind: output, shape index: {}]
  %s4 = sld [smem:[#allocation0]]
  $region34: #{aeformer_forward.51} parent=0
    _
  %s6 = ssub.s32 1, %s4
  %s7 = scalar_select 0, %s6, %s4
  $region1: #{aeformer_forward.51} parent=0
    #allocation2 [shape = 'u8[40960]{0}', space=vmem, size = 0xa000, scoped, tag = 'input window, operand 0, single buffered']
    #allocation3 [shape = 's32[1]{0}', space=sflag, size = 0x4, scoped, tag = 'scoped memory for aeformer_forward.51']
    #allocation4 [shape = 's32[1]{0}', space=sflag, size = 0x4, scoped, tag = 'scoped memory for aeformer_forward.51']
    #allocation5 [shape = 'u8[131072]{0}', space=vmem, size = 0x20000, scoped, tag = 'input window, operand 1, single buffered']
    #allocation6 [shape = 's32[1]{0}', space=sflag, size = 0x4, scoped, tag = 'scoped memory for aeformer_forward.51']
    #allocation7 [shape = 'u8[512]{0}', space=vmem, size = 0x400, scoped, tag = 'input window, operand 2, single buffered']
    #allocation8 [shape = 'u8[20480]{0}', space=vmem, size = 0x5000, scoped, tag = 'output window, operand 0, single buffered']
    %8 = vsyncpa [#allocation3], 0
    %9 = vsyncpa [#allocation6], 0
    %10 = vsyncpa [#allocation4], 0
    // Predicated region
    $region2: #{aeformer_forward.51} parent=1 // pred_check
      _
    $region3: #{aeformer_forward.51} parent=1 // pred_check_branch
      %12 = sbr.rel (0) target = $region5
    $region4: #{aeformer_forward.51} parent=1 // pred_region
      %s14 = ssub.s32 1280, 1280
      %15 = vsyncadd [#allocation3], %s14
      %s16 = sshll.u32 [#allocation2], 4
      %s17 = int_to_ptr.vmem [resolvable:$true] %s16
      %22 = dma.hbm_to_vmem [thread:$0]  %s0, 1280, %s17, [#allocation3], 256, 256, 16
    $region5: #{aeformer_forward.51} parent=1 // pred_fallthru
      _
    // Predicated region
    $region6: #{aeformer_forward.51} parent=1 // pred_check
      _
    $region7: #{aeformer_forward.51} parent=1 // pred_check_branch
      %24 = sbr.rel (0) target = $region9
    $region8: #{aeformer_forward.51} parent=1 // pred_region
      %s26 = ssub.s32 4096, 4096
      %27 = vsyncadd [#allocation6], %s26
      %s28 = sshll.u32 [#allocation5], 4
      %s29 = int_to_ptr.vmem [resolvable:$true] %s28
      %34 = dma.hbm_to_vmem [thread:$0]  %s1, 4096, %s29, [#allocation6], 64, 64, 4
    $region9: #{aeformer_forward.51} parent=1 // pred_fallthru
      _
    // Predicated region
    $region10: #{aeformer_forward.51} parent=1 // pred_check
      _
    $region11: #{aeformer_forward.51} parent=1 // pred_check_branch
      %36 = sbr.rel (0) target = $region13
    $region12: #{aeformer_forward.51} parent=1 // pred_region
      %s38 = ssub.s32 16, 16
      %39 = vsyncadd [#allocation6], %s38
      %s41 = sshll.u32 [#allocation7], 4
      %s42 = int_to_ptr.vmem [resolvable:$true] %s41
      %44 = dma.hbm_to_vmem [thread:$0]  %s2, 16, %s42, [#allocation6]
    $region13: #{aeformer_forward.51} parent=1 // pred_fallthru
      _
    // Predicated region
    $region14: #{aeformer_forward.51} parent=1 // pred_check
      _
    $region15: #{aeformer_forward.51} parent=1 // pred_check_branch
      %46 = sbr.rel (0) target = $region17
    $region16: #{aeformer_forward.51} parent=1 // pred_region
      %47 = dma.done [#allocation3], 1280
    $region17: #{aeformer_forward.51} parent=1 // pred_fallthru
      _
    // Predicated region
    $region18: #{aeformer_forward.51} parent=1 // pred_check
      _
    $region19: #{aeformer_forward.51} parent=1 // pred_check_branch
      %49 = sbr.rel (0) target = $region21
    $region20: #{aeformer_forward.51} parent=1 // pred_region
      %50 = dma.done [#allocation6], 4096
    $region21: #{aeformer_forward.51} parent=1 // pred_fallthru
      _
    // Predicated region
    $region22: #{aeformer_forward.51} parent=1 // pred_check
      _
    $region23: #{aeformer_forward.51} parent=1 // pred_check_branch
      %52 = sbr.rel (0) target = $region25
    $region24: #{aeformer_forward.51} parent=1 // pred_region
      %53 = dma.done [#allocation6], 16
    $region25: #{aeformer_forward.51} parent=1 // pred_fallthru
      _
    %v55 = vld [vmem:[#allocation2] sm:$0xff]
    %v56 = vld [vmem:[#allocation2 + $0x8] sm:$0xff]
    %v57 = vld [vmem:[#allocation2 + $0x10] sm:$0xff]
    %v58 = vld [vmem:[#allocation2 + $0x18] sm:$0xff]
    %v59 = vld [vmem:[#allocation2 + $0x20] sm:$0xff]
    %v60 = vld [vmem:[#allocation2 + $0x28] sm:$0xff]
    %v61 = vld [vmem:[#allocation2 + $0x30] sm:$0xff]
    %v62 = vld [vmem:[#allocation2 + $0x38] sm:$0xff]
    %v63 = vld [vmem:[#allocation2 + $0x40] sm:$0x11]
    %v64 = vld [vmem:[#allocation2 + $0x48] sm:$0x11]
    %v65 = vld [vmem:[#allocation5] sm:$0xf]
    %v66 = vld [vmem:[#allocation5 + $0x4] sm:$0xf]
    %v67 = vld [vmem:[#allocation5 + $0x8] sm:$0xf]
    %v68 = vld [vmem:[#allocation5 + $0xc] sm:$0xf]
    %v69 = vld [vmem:[#allocation5 + $0x10] sm:$0xf]
    %v70 = vld [vmem:[#allocation5 + $0x14] sm:$0xf]
    %v71 = vld [vmem:[#allocation5 + $0x18] sm:$0xf]
    %v72 = vld [vmem:[#allocation5 + $0x1c] sm:$0xf]
    %v73 = vld [vmem:[#allocation5 + $0x20] sm:$0xf]
    %v74 = vld [vmem:[#allocation5 + $0x24] sm:$0xf]
    %v75 = vld [vmem:[#allocation5 + $0x28] sm:$0xf]
    %v76 = vld [vmem:[#allocation5 + $0x2c] sm:$0xf]
    %v77 = vld [vmem:[#allocation5 + $0x30] sm:$0xf]
    %v78 = vld [vmem:[#allocation5 + $0x34] sm:$0xf]
    %v79 = vld [vmem:[#allocation5 + $0x38] sm:$0xf]
    %v80 = vld [vmem:[#allocation5 + $0x3c] sm:$0xf]
    %v81 = vld [vmem:[#allocation5 + $0x40] sm:$0xf]
    %v82 = vld [vmem:[#allocation5 + $0x44] sm:$0xf]
    %v83 = vld [vmem:[#allocation5 + $0x48] sm:$0xf]
    %v84 = vld [vmem:[#allocation5 + $0x4c] sm:$0xf]
    %v85 = vld [vmem:[#allocation5 + $0x50] sm:$0xf]
    %v86 = vld [vmem:[#allocation5 + $0x54] sm:$0xf]
    %v87 = vld [vmem:[#allocation5 + $0x58] sm:$0xf]
    %v88 = vld [vmem:[#allocation5 + $0x5c] sm:$0xf]
    %v89 = vld [vmem:[#allocation5 + $0x60] sm:$0xf]
    %v90 = vld [vmem:[#allocation5 + $0x64] sm:$0xf]
    %v91 = vld [vmem:[#allocation5 + $0x68] sm:$0xf]
    %v92 = vld [vmem:[#allocation5 + $0x6c] sm:$0xf]
    %v93 = vld [vmem:[#allocation5 + $0x70] sm:$0xf]
    %v94 = vld [vmem:[#allocation5 + $0x74] sm:$0xf]
    %v95 = vld [vmem:[#allocation5 + $0x78] sm:$0xf]
    %v96 = vld [vmem:[#allocation5 + $0x7c] sm:$0xf]
    %v97 = vld [vmem:[#allocation5 + $0x80] sm:$0xf]
    %v98 = vld [vmem:[#allocation5 + $0x84] sm:$0xf]
    %v99 = vld [vmem:[#allocation5 + $0x88] sm:$0xf]
    %v100 = vld [vmem:[#allocation5 + $0x8c] sm:$0xf]
    %v101 = vld [vmem:[#allocation5 + $0x90] sm:$0xf]
    %v102 = vld [vmem:[#allocation5 + $0x94] sm:$0xf]
    %v103 = vld [vmem:[#allocation5 + $0x98] sm:$0xf]
    %v104 = vld [vmem:[#allocation5 + $0x9c] sm:$0xf]
    %v105 = vld [vmem:[#allocation5 + $0xa0] sm:$0xf]
    %v106 = vld [vmem:[#allocation5 + $0xa4] sm:$0xf]
    %v107 = vld [vmem:[#allocation5 + $0xa8] sm:$0xf]
    %v108 = vld [vmem:[#allocation5 + $0xac] sm:$0xf]
    %v109 = vld [vmem:[#allocation5 + $0xb0] sm:$0xf]
    %v110 = vld [vmem:[#allocation5 + $0xb4] sm:$0xf]
    %v111 = vld [vmem:[#allocation5 + $0xb8] sm:$0xf]
    %v112 = vld [vmem:[#allocation5 + $0xbc] sm:$0xf]
    %v113 = vld [vmem:[#allocation5 + $0xc0] sm:$0xf]
    %v114 = vld [vmem:[#allocation5 + $0xc4] sm:$0xf]
    %v115 = vld [vmem:[#allocation5 + $0xc8] sm:$0xf]
    %v116 = vld [vmem:[#allocation5 + $0xcc] sm:$0xf]
    %v117 = vld [vmem:[#allocation5 + $0xd0] sm:$0xf]
    %v118 = vld [vmem:[#allocation5 + $0xd4] sm:$0xf]
    %v119 = vld [vmem:[#allocation5 + $0xd8] sm:$0xf]
    %v120 = vld [vmem:[#allocation5 + $0xdc] sm:$0xf]
    %v121 = vld [vmem:[#allocation5 + $0xe0] sm:$0xf]
    %v122 = vld [vmem:[#allocation5 + $0xe4] sm:$0xf]
    %v123 = vld [vmem:[#allocation5 + $0xe8] sm:$0xf]
    %v124 = vld [vmem:[#allocation5 + $0xec] sm:$0xf]
    %v125 = vld [vmem:[#allocation5 + $0xf0] sm:$0xf]
    %v126 = vld [vmem:[#allocation5 + $0xf4] sm:$0xf]
    %v127 = vld [vmem:[#allocation5 + $0xf8] sm:$0xf]
    %v128 = vld [vmem:[#allocation5 + $0xfc] sm:$0xf]
    %v129 = vld [vmem:[#allocation7] sm:$0x1]
    %v131 = vlaneseq
    %v132 = vshrl.u32 %v131, 7
    %v133 = vsub.s32 0, %v132
    %v134 = vrot.slane %v129, %v133
    %v146 = vunpack.c.l.b16 %v55
    %v147 = vunpack.c.h.b16 %v55
    %v148 = vunpack.c.l.b16 %v56
    %v149 = vunpack.c.h.b16 %v56
    %v150 = vunpack.c.l.b16 %v57
    %v151 = vunpack.c.h.b16 %v57
    %v152 = vunpack.c.l.b16 %v58
    %v153 = vunpack.c.h.b16 %v58
    %v154 = vunpack.c.l.b16 %v59
    %v155 = vunpack.c.h.b16 %v59
    %v156 = vunpack.c.l.b16 %v60
    %v157 = vunpack.c.h.b16 %v60
    %v158 = vunpack.c.l.b16 %v61
    %v159 = vunpack.c.h.b16 %v61
    %v160 = vunpack.c.l.b16 %v62
    %v161 = vunpack.c.h.b16 %v62
    %v162 = vunpack.c.l.b16 %v63
    %v163 = vunpack.c.h.b16 %v63
    %v164 = vunpack.c.l.b16 %v64
    %v165 = vunpack.c.h.b16 %v64
    %v166 = vpack.c.b16 %v150, %v146
    %v167 = vpack.c.b16 %v151, %v147
    %v168 = vpack.c.b16 %v152, %v148
    %v169 = vpack.c.b16 %v153, %v149
    %v170 = vpack.c.b16 %v158, %v154
    %v171 = vpack.c.b16 %v159, %v155
    %v172 = vpack.c.b16 %v160, %v156
    %v173 = vpack.c.b16 %v161, %v157
    %v174 = vpack.c.b16 %v162, %v162
    %v175 = vpack.c.b16 %v163, %v163
    %v176 = vpack.c.b16 %v164, %v164
    %v177 = vpack.c.b16 %v165, %v165
    %v254 = vunpack.c.l.b16 %v65
    %v255 = vunpack.c.l.b16 %v66
    %v256 = vunpack.c.l.b16 %v67
    %v257 = vunpack.c.l.b16 %v68
    %v258 = vunpack.c.l.b16 %v69
    %v259 = vunpack.c.l.b16 %v70
    %v260 = vunpack.c.l.b16 %v71
    %v261 = vunpack.c.l.b16 %v72
    %v262 = vunpack.c.l.b16 %v73
    %v263 = vunpack.c.l.b16 %v74
    %v264 = vunpack.c.l.b16 %v75
    %v265 = vunpack.c.l.b16 %v76
    %v266 = vunpack.c.l.b16 %v77
    %v267 = vunpack.c.l.b16 %v78
    %v268 = vunpack.c.l.b16 %v79
    %v269 = vunpack.c.l.b16 %v80
    %v270 = vunpack.c.l.b16 %v81
    %v271 = vunpack.c.l.b16 %v82
    %v272 = vunpack.c.l.b16 %v83
    %v273 = vunpack.c.l.b16 %v84
    %v274 = vunpack.c.l.b16 %v85
    %v275 = vunpack.c.l.b16 %v86
    %v276 = vunpack.c.l.b16 %v87
    %v277 = vunpack.c.l.b16 %v88
    %v278 = vunpack.c.l.b16 %v89
    %v279 = vunpack.c.l.b16 %v90
    %v280 = vunpack.c.l.b16 %v91
    %v281 = vunpack.c.l.b16 %v92
    %v282 = vunpack.c.l.b16 %v93
    %v283 = vunpack.c.l.b16 %v94
    %v284 = vunpack.c.l.b16 %v95
    %v285 = vunpack.c.l.b16 %v96
    %v286 = vunpack.c.l.b16 %v97
    %v287 = vunpack.c.l.b16 %v98
    %v288 = vunpack.c.l.b16 %v99
    %v289 = vunpack.c.l.b16 %v100
    %v290 = vunpack.c.l.b16 %v101
    %v291 = vunpack.c.l.b16 %v102
    %v292 = vunpack.c.l.b16 %v103
    %v293 = vunpack.c.l.b16 %v104
    %v294 = vunpack.c.l.b16 %v105
    %v295 = vunpack.c.l.b16 %v106
    %v296 = vunpack.c.l.b16 %v107
    %v297 = vunpack.c.l.b16 %v108
    %v298 = vunpack.c.l.b16 %v109
    %v299 = vunpack.c.l.b16 %v110
    %v300 = vunpack.c.l.b16 %v111
    %v301 = vunpack.c.l.b16 %v112
    %v302 = vunpack.c.l.b16 %v113
    %v303 = vunpack.c.l.b16 %v114
    %v304 = vunpack.c.l.b16 %v115
    %v305 = vunpack.c.l.b16 %v116
    %v306 = vunpack.c.l.b16 %v117
    %v307 = vunpack.c.l.b16 %v118
    %v308 = vunpack.c.l.b16 %v119
    %v309 = vunpack.c.l.b16 %v120
    %v310 = vunpack.c.l.b16 %v121
    %v311 = vunpack.c.l.b16 %v122
    %v312 = vunpack.c.l.b16 %v123
    %v313 = vunpack.c.l.b16 %v124
    %v314 = vunpack.c.l.b16 %v125
    %v315 = vunpack.c.l.b16 %v126
    %v316 = vunpack.c.l.b16 %v127
    %v317 = vunpack.c.l.b16 %v128
    %v318 = vpack.c.b16 %v255, %v254
    %v319 = vpack.c.b16 %v257, %v256
    %v320 = vpack.c.b16 %v259, %v258
    %v321 = vpack.c.b16 %v261, %v260
    %v322 = vpack.c.b16 %v263, %v262
    %v323 = vpack.c.b16 %v265, %v264
    %v324 = vpack.c.b16 %v267, %v266
    %v325 = vpack.c.b16 %v269, %v268
    %v326 = vpack.c.b16 %v271, %v270
    %v327 = vpack.c.b16 %v273, %v272
    %v328 = vpack.c.b16 %v275, %v274
    %v329 = vpack.c.b16 %v277, %v276
    %v330 = vpack.c.b16 %v279, %v278
    %v331 = vpack.c.b16 %v281, %v280
    %v332 = vpack.c.b16 %v283, %v282
    %v333 = vpack.c.b16 %v285, %v284
    %v334 = vpack.c.b16 %v287, %v286
    %v335 = vpack.c.b16 %v289, %v288
    %v336 = vpack.c.b16 %v291, %v290
    %v337 = vpack.c.b16 %v293, %v292
    %v338 = vpack.c.b16 %v295, %v294
    %v339 = vpack.c.b16 %v297, %v296
    %v340 = vpack.c.b16 %v299, %v298
    %v341 = vpack.c.b16 %v301, %v300
    %v342 = vpack.c.b16 %v303, %v302
    %v343 = vpack.c.b16 %v305, %v304
    %v344 = vpack.c.b16 %v307, %v306
    %v345 = vpack.c.b16 %v309, %v308
    %v346 = vpack.c.b16 %v311, %v310
    %v347 = vpack.c.b16 %v313, %v312
    %v348 = vpack.c.b16 %v315, %v314
    %v349 = vpack.c.b16 %v317, %v316
    %382 = vmatprep.subr.bf16.mxu0 0
    %383 = vmatpush1.bf16.msra.mxu0 %v318
    %384 = vmatprep.subr.bf16.mxu0 0
    %385 = vmatpush1.bf16.msra.mxu0 %v319
    %386 = vmatprep.subr.bf16.mxu0 0
    %387 = vmatpush1.bf16.msra.mxu0 %v320
    %388 = vmatprep.subr.bf16.mxu0 0
    %389 = vmatpush1.bf16.msra.mxu0 %v321
    %390 = vmatprep.subr.bf16.mxu0 0
    %391 = vmatpush1.bf16.msra.mxu0 %v322
    %392 = vmatprep.subr.bf16.mxu0 0
    %393 = vmatpush1.bf16.msra.mxu0 %v323
    %394 = vmatprep.subr.bf16.mxu0 0
    %395 = vmatpush1.bf16.msra.mxu0 %v324
    %396 = vmatprep.subr.bf16.mxu0 0
    %397 = vmatpush1.bf16.msra.mxu0 %v325
    %398 = vmatprep.subr.bf16.mxu0 0
    %399 = vmatpush1.bf16.msra.mxu0 %v326
    %400 = vmatprep.subr.bf16.mxu0 0
    %401 = vmatpush1.bf16.msra.mxu0 %v327
    %402 = vmatprep.subr.bf16.mxu0 0
    %403 = vmatpush1.bf16.msra.mxu0 %v328
    %404 = vmatprep.subr.bf16.mxu0 0
    %405 = vmatpush1.bf16.msra.mxu0 %v329
    %406 = vmatprep.subr.bf16.mxu0 0
    %407 = vmatpush1.bf16.msra.mxu0 %v330
    %408 = vmatprep.subr.bf16.mxu0 0
    %409 = vmatpush1.bf16.msra.mxu0 %v331
    %410 = vmatprep.subr.bf16.mxu0 0
    %411 = vmatpush1.bf16.msra.mxu0 %v332
    %412 = vmatprep.subr.bf16.mxu0 0
    %413 = vmatpush1.bf16.msra.mxu0 %v333
    %414 = vmatprep.mubr.bf16.mxu0 %v167
    %415 = vmatmul.mubr.bf16.gmra.mrb[0].mxu0 %v166
    %v416 = vpop.f32.mrb[0].mxu0
    %v417 = vadd.f32 %v134, %v416
    %v418 = vpop.f32.mrb[0].mxu0
    %v419 = vpop.f32.mrb[0].mxu0
    %v420 = vadd.f32 %v134, %v419
    %v421 = vpop.f32.mrb[0].mxu0
    %422 = vmatprep.mubr.bf16.mxu0 %v171
    %423 = vmatmul.mubr.bf16.gmra.mrb[0].mxu0 %v170
    %v424 = vpop.f32.mrb[0].mxu0
    %v425 = vadd.f32 %v134, %v424
    %v426 = vpop.f32.mrb[0].mxu0
    %v427 = vpop.f32.mrb[0].mxu0
    %v428 = vadd.f32 %v134, %v427
    %v429 = vpop.f32.mrb[0].mxu0
    %430 = vmatprep.mubr.bf16.mxu0 %v175
    %431 = vmatmul.mubr.bf16.gmra.mrb[0].mxu0 %v174
    %v432 = vpop.f32.mrb[0].mxu0
    %v433 = vadd.f32 %v134, %v432
    %v434 = vpop.f32.mrb[0].mxu0
    %v435 = vpop.f32.mrb[0].mxu0
    %v436 = vpop.f32.mrb[0].mxu0
    %437 = vdwg.mxu0
    %438 = vmatprep.subr.bf16.mxu0 0
    %439 = vmatpush1.bf16.msra.mxu0 %v334
    %440 = vmatprep.subr.bf16.mxu0 0
    %441 = vmatpush1.bf16.msra.mxu0 %v335
    %442 = vmatprep.subr.bf16.mxu0 0
    %443 = vmatpush1.bf16.msra.mxu0 %v336
    %444 = vmatprep.subr.bf16.mxu0 0
    %445 = vmatpush1.bf16.msra.mxu0 %v337
    %446 = vmatprep.subr.bf16.mxu0 0
    %447 = vmatpush1.bf16.msra.mxu0 %v338
    %448 = vmatprep.subr.bf16.mxu0 0
    %449 = vmatpush1.bf16.msra.mxu0 %v339
    %450 = vmatprep.subr.bf16.mxu0 0
    %451 = vmatpush1.bf16.msra.mxu0 %v340
    %452 = vmatprep.subr.bf16.mxu0 0
    %453 = vmatpush1.bf16.msra.mxu0 %v341
    %454 = vmatprep.subr.bf16.mxu0 0
    %455 = vmatpush1.bf16.msra.mxu0 %v342
    %456 = vmatprep.subr.bf16.mxu0 0
    %457 = vmatpush1.bf16.msra.mxu0 %v343
    %458 = vmatprep.subr.bf16.mxu0 0
    %459 = vmatpush1.bf16.msra.mxu0 %v344
    %460 = vmatprep.subr.bf16.mxu0 0
    %461 = vmatpush1.bf16.msra.mxu0 %v345
    %462 = vmatprep.subr.bf16.mxu0 0
    %463 = vmatpush1.bf16.msra.mxu0 %v346
    %464 = vmatprep.subr.bf16.mxu0 0
    %465 = vmatpush1.bf16.msra.mxu0 %v347
    %466 = vmatprep.subr.bf16.mxu0 0
    %467 = vmatpush1.bf16.msra.mxu0 %v348
    %468 = vmatprep.subr.bf16.mxu0 0
    %469 = vmatpush1.bf16.msra.mxu0 %v349
    %470 = vmatprep.mubr.bf16.mxu0 %v169
    %471 = vmatmul.mubr.bf16.gmra.mrb[0].mxu0 %v168
    %v472 = vpop.f32.mrb[0].mxu0
    %v473 = vadd.f32 %v417, %v472
    %v474 = vpop.f32.mrb[0].mxu0
    %v475 = vpop.f32.mrb[0].mxu0
    %v476 = vadd.f32 %v420, %v475
    %v477 = vpop.f32.mrb[0].mxu0
    %478 = vmatprep.mubr.bf16.mxu0 %v173
    %479 = vmatmul.mubr.bf16.gmra.mrb[0].mxu0 %v172
    %v480 = vpop.f32.mrb[0].mxu0
    %v481 = vadd.f32 %v425, %v480
    %v482 = vpop.f32.mrb[0].mxu0
    %v483 = vpop.f32.mrb[0].mxu0
    %v484 = vadd.f32 %v428, %v483
    %v485 = vpop.f32.mrb[0].mxu0
    %486 = vmatprep.mubr.bf16.mxu0 %v177
    %487 = vmatmul.mubr.bf16.gmra.mrb[0].mxu0 %v176
    %v488 = vpop.f32.mrb[0].mxu0
    %v489 = vadd.f32 %v433, %v488
    %v490 = vpop.f32.mrb[0].mxu0
    %v491 = vpop.f32.mrb[0].mxu0
    %v492 = vpop.f32.mrb[0].mxu0
    %493 = vdwg.mxu0
    %vm494 = vcmask 392192
    %495 = vst.msk [vmem:[#allocation8] sm:$0xff] %vm494, %v473
    %496 = vst.msk [vmem:[#allocation8 + $0x8] sm:$0xff] %vm494, %v476
    %497 = vst.msk [vmem:[#allocation8 + $0x10] sm:$0xff] %vm494, %v481
    %498 = vst.msk [vmem:[#allocation8 + $0x18] sm:$0xff] %vm494, %v484
    %vm499 = vcmask 386048
    %500 = vst.msk [vmem:[#allocation8 + $0x20] sm:$0x3] %vm499, %v489
    // Predicated region
    $region26: #{aeformer_forward.51} parent=1 // pred_check
      _
    $region27: #{aeformer_forward.51} parent=1 // pred_check_branch
      %502 = sbr.rel (0) target = $region29
    $region28: #{aeformer_forward.51} parent=1 // pred_region
      %s504 = ssub.s32 640, 640
      %505 = vsyncadd [#allocation4], %s504
      %s506 = sshll.u32 [#allocation8], 4
      %s507 = int_to_ptr.vmem [resolvable:$true] %s506
      %512 = dma.vmem_to_hbm [thread:$0]  %s507, 640, %s3, [#allocation4], 128, 128, 8
    $region29: #{aeformer_forward.51} parent=1 // pred_fallthru
      _
    // Predicated region
    $region30: #{aeformer_forward.51} parent=1 // pred_check
      _
    $region31: #{aeformer_forward.51} parent=1 // pred_check_branch
      %514 = sbr.rel (0) target = $region33
    $region32: #{aeformer_forward.51} parent=1 // pred_region
      %515 = dma.done [#allocation4], 640
    $region33: #{aeformer_forward.51} parent=1 // pred_fallthru
      _
    %516 = vsyncpa [#allocation3], 1
    %517 = vsyncpa [#allocation6], 1
    %518 = vsyncpa [#allocation4], 1

</llo_original>
